<compile_context>
chip_gen: v7x
topology: tpu7x:2x2x1
jax: 0.10.0
libtpu: 0.0.40
codegen_flags: <defaults>
</compile_context>

<pallas_src>
import functools
import math

import jax
import jax.numpy as jnp
from jax.experimental import pallas as pl
from jax.experimental.pallas import tpu as pltpu

# ----- small hyperparameters consistent with the module's structure -----
D_MODEL = 32
N_HEAD = 4
D_HEAD = D_MODEL // N_HEAD
FFN_HIDDEN = 64
N_LAYERS = 2
TOTAL_STEPS = 2 * N_LAYERS          # encoder layers then decoder layers
MAX_LEN = 64
ENC_VOCAB = 13
DEC_VOCAB = 11
VOCAB_PAD = 128                      # lane-dense padded logits width (>= DEC_VOCAB)
SRC_PAD_IDX = 0
TGT_PAD_IDX = 0
LN_EPS = 1e-5
NEG_INF = -1e9                       # masked_fill value for masked attention scores


# ------------------------------------------------------------------ in-kernel helpers
def _layer_norm(x, g, b):
    mean = jnp.mean(x, axis=-1, keepdims=True)
    var = jnp.mean((x - mean) ** 2, axis=-1, keepdims=True)
    return (x - mean) * jax.lax.rsqrt(var + LN_EPS) * g + b


def _mha_core(q3, k3, v3, wo, bo, keep, b, lq, lk):
    """All heads + output projection, entirely in VMEM/registers.

    q3: (b, lq, D), k3/v3: (b, lk, D), wo: (D, D), bo: (1, D),
    keep: (b, lq, lk) float (1 = keep, 0 = masked).  Returns (b*lq, D).
    """
    scale = 1.0 / math.sqrt(D_HEAD)
    out = None
    for h in range(N_HEAD):                      # static, H = 4
        sl = slice(h * D_HEAD, (h + 1) * D_HEAD)
        s = jnp.einsum("bqd,bkd->bqk", q3[:, :, sl], k3[:, :, sl],
                       preferred_element_type=jnp.float32) * scale
        s = jnp.where(keep > 0.5, s, jnp.float32(NEG_INF))    # masked_fill
        s = s - jnp.max(s, axis=-1, keepdims=True)             # stable softmax
        p = jnp.exp(s)
        p = p * pl.reciprocal(jnp.sum(p, axis=-1, keepdims=True), approx=True)
        oh = jnp.einsum("bqk,bkd->bqd", p, v3[:, :, sl],
                        preferred_element_type=jnp.float32)
        # fold output projection in: concat_h(oh) @ wo == sum_h oh @ wo[h*Dh:(h+1)*Dh]
        contrib = jnp.dot(oh.reshape(b * lq, D_HEAD), wo[sl, :],
                          preferred_element_type=jnp.float32)
        out = contrib if out is None else out + contrib
    return out + bo


# ------------------------------------------------------------------ fused encoder+decoder kernel
def _transformer_kernel(
        x0_ref, y0_ref, ek_ref, dk_ref, ck_ref,
        # encoder stacked weights (one layer slice per grid step, clamped)
        e_wqkv, e_bqkv, e_wo, e_bo, e_ln1g, e_ln1b,
        e_w1, e_b1, e_w2, e_b2, e_ln2g, e_ln2b,
        # decoder stacked weights (one layer slice per grid step, clamped)
        d_swqkv, d_sbqkv, d_swo, d_sbo, d_ln1g, d_ln1b,
        d_cwq, d_cbq, d_cwkv, d_cbkv, d_cwo, d_cbo, d_ln2g, d_ln2b,
        d_w1, d_b1, d_w2, d_b2, d_ln3g, d_ln3b,
        fcw_ref, fcb_ref,
        o_ref,
        enc_carry, dec_carry, *, b, ls, lt):
    step = pl.program_id(0)

    @pl.when(step == 0)
    def _():
        enc_carry[...] = x0_ref[...]

    @pl.when(step == N_LAYERS)
    def _():
        dec_carry[...] = y0_ref[...]

    # ---------------- encoder phase: steps 0 .. N_LAYERS-1 ----------------
    @pl.when(step < N_LAYERS)
    def _encoder_layer():
        x = enc_carry[...]                                     # (b*ls, D)

        qkv = jnp.dot(x, e_wqkv[0], preferred_element_type=jnp.float32) + e_bqkv[0]
        qkv3 = qkv.reshape(b, ls, 3 * D_MODEL)
        attn = _mha_core(qkv3[:, :, :D_MODEL],
                         qkv3[:, :, D_MODEL:2 * D_MODEL],
                         qkv3[:, :, 2 * D_MODEL:],
                         e_wo[0], e_bo[0], ek_ref[...], b, ls, ls)
        x = _layer_norm(x + attn, e_ln1g[0], e_ln1b[0])

        h = jnp.maximum(
            jnp.dot(x, e_w1[0], preferred_element_type=jnp.float32) + e_b1[0], 0.0)
        f = jnp.dot(h, e_w2[0], preferred_element_type=jnp.float32) + e_b2[0]
        enc_carry[...] = _layer_norm(x + f, e_ln2g[0], e_ln2b[0])

    # ---------------- decoder phase: steps N_LAYERS .. 2*N_LAYERS-1 ----------------
    @pl.when(step >= N_LAYERS)
    def _decoder_layer():
        y = dec_carry[...]                                     # (b*lt, D)
        e = enc_carry[...]                                     # final encoder memory

        # masked self-attention
        qkv = jnp.dot(y, d_swqkv[0], preferred_element_type=jnp.float32) + d_sbqkv[0]
        qkv3 = qkv.reshape(b, lt, 3 * D_MODEL)
        a = _mha_core(qkv3[:, :, :D_MODEL],
                      qkv3[:, :, D_MODEL:2 * D_MODEL],
                      qkv3[:, :, 2 * D_MODEL:],
                      d_swo[0], d_sbo[0], dk_ref[...], b, lt, lt)
        y = _layer_norm(y + a, d_ln1g[0], d_ln1b[0])

        # cross-attention (Q from decoder, fused K/V from encoder memory)
        q = jnp.dot(y, d_cwq[0], preferred_element_type=jnp.float32) + d_cbq[0]
        kv = jnp.dot(e, d_cwkv[0], preferred_element_type=jnp.float32) + d_cbkv[0]
        q3 = q.reshape(b, lt, D_MODEL)
        kv3 = kv.reshape(b, ls, 2 * D_MODEL)
        a = _mha_core(q3, kv3[:, :, :D_MODEL], kv3[:, :, D_MODEL:],
                      d_cwo[0], d_cbo[0], ck_ref[...], b, lt, ls)
        y = _layer_norm(y + a, d_ln2g[0], d_ln2b[0])

        # FFN (ReLU)
        h = jnp.maximum(
            jnp.dot(y, d_w1[0], preferred_element_type=jnp.float32) + d_b1[0], 0.0)
        f = jnp.dot(h, d_w2[0], preferred_element_type=jnp.float32) + d_b2[0]
        dec_carry[...] = _layer_norm(y + f, d_ln3g[0], d_ln3b[0])

    # final vocab projection (lane-dense, padded to 128) on the last grid step
    @pl.when(step == TOTAL_STEPS - 1)
    def _final_projection():
        o_ref[...] = (jnp.dot(dec_carry[...], fcw_ref[...],
                              preferred_element_type=jnp.float32) + fcb_ref[...])


# ------------------------------------------------------------------ BlockSpec helpers
def _enc_stacked_spec(arr):
    """Encoder stacked weight: layer min(step, N_LAYERS-1) per grid step."""
    nd = arr.ndim
    return pl.BlockSpec(
        (1,) + arr.shape[1:],
        lambda l, _nd=nd: (jnp.minimum(l, N_LAYERS - 1),) + (0,) * (_nd - 1))


def _dec_stacked_spec(arr):
    """Decoder stacked weight: layer max(step - N_LAYERS, 0) per grid step."""
    nd = arr.ndim
    return pl.BlockSpec(
        (1,) + arr.shape[1:],
        lambda l, _nd=nd: (jnp.maximum(l - N_LAYERS, 0),) + (0,) * (_nd - 1))


def _shared_spec(arr):
    """Constant input shared across all grid steps (whole array, one block)."""
    nd = arr.ndim
    return pl.BlockSpec(arr.shape, lambda l, _nd=nd: (0,) * _nd)


_ENC_WEIGHT_ORDER = ["wqkv", "bqkv", "wo", "bo", "ln1_g", "ln1_b",
                     "w1", "b1", "w2", "b2", "ln2_g", "ln2_b"]
_DEC_WEIGHT_ORDER = ["s_wqkv", "s_bqkv", "s_wo", "s_bo", "ln1_g", "ln1_b",
                     "c_wq", "c_bq", "c_wkv", "c_bkv", "c_wo", "c_bo",
                     "ln2_g", "ln2_b",
                     "w1", "b1", "w2", "b2", "ln3_g", "ln3_b"]


def transformer_pallas(x0, y0, enc_keep, dec_keep, cross_keep,
                       enc_p, dec_p, fc_w_pad, fc_b_pad, b, ls, lt):
    enc_w = [enc_p[k] for k in _ENC_WEIGHT_ORDER]
    dec_w = [dec_p[k] for k in _DEC_WEIGHT_ORDER]
    kernel = functools.partial(_transformer_kernel, b=b, ls=ls, lt=lt)
    return pl.pallas_call(
        kernel,
        out_shape=jax.ShapeDtypeStruct((b * lt, VOCAB_PAD), jnp.float32),
        grid=(TOTAL_STEPS,),
        in_specs=[_shared_spec(x0), _shared_spec(y0),
                  _shared_spec(enc_keep), _shared_spec(dec_keep),
                  _shared_spec(cross_keep)]
                 + [_enc_stacked_spec(w) for w in enc_w]
                 + [_dec_stacked_spec(w) for w in dec_w]
                 + [_shared_spec(fc_w_pad), _shared_spec(fc_b_pad)],
        out_specs=pl.BlockSpec((b * lt, VOCAB_PAD), lambda l: (0, 0)),
        scratch_shapes=[pltpu.VMEM((b * ls, D_MODEL), jnp.float32),   # encoder carry
                        pltpu.VMEM((b * lt, D_MODEL), jnp.float32)],  # decoder carry
        compiler_params=pltpu.CompilerParams(dimension_semantics=("arbitrary",)),
    )(x0, y0, enc_keep, dec_keep, cross_keep, *enc_w, *dec_w, fc_w_pad, fc_b_pad)


# ------------------------------------------------------------------ model glue (XLA side)
def sinusoidal_pe(max_len, d):
    pos = jnp.arange(max_len, dtype=jnp.float32)[:, None]
    i = jnp.arange(0, d, 2, dtype=jnp.float32)
    div = jnp.power(10000.0, i / d)
    pe = jnp.zeros((max_len, d), jnp.float32)
    pe = pe.at[:, 0::2].set(jnp.sin(pos / div))
    pe = pe.at[:, 1::2].set(jnp.cos(pos / div))
    return pe


def transformer_forward(params, src, tgt):
    b, ls = src.shape
    lt = tgt.shape[1]

    # compact keep-masks (B, Lq, Lk): shared across heads and layers
    src_valid = src != SRC_PAD_IDX
    tgt_valid = tgt != TGT_PAD_IDX
    enc_keep = (src_valid[:, :, None] & src_valid[:, None, :]).astype(jnp.float32)
    causal = jnp.tril(jnp.ones((lt, lt), jnp.bool_))
    dec_keep = (tgt_valid[:, :, None] & tgt_valid[:, None, :]
                & causal[None]).astype(jnp.float32)
    cross_keep = (tgt_valid[:, :, None] & src_valid[:, None, :]).astype(jnp.float32)

    # token embedding + positional encoding (tiny integer gather, kept in XLA)
    x0 = (jnp.take(params["enc_emb"], src, axis=0)
          + params["pe"][:ls]).reshape(b * ls, D_MODEL)
    y0 = (jnp.take(params["dec_emb"], tgt, axis=0)
          + params["pe"][:lt]).reshape(b * lt, D_MODEL)

    logits_pad = transformer_pallas(x0, y0, enc_keep, dec_keep, cross_keep,
                                    params["enc"], params["dec"],
                                    params["fc_w_pad"], params["fc_b_pad"],
                                    b, ls, lt)
    return logits_pad[:, :DEC_VOCAB].reshape(b, lt, DEC_VOCAB)


# ------------------------------------------------------------------ parameter init
def _w(key, shape, scale=0.02):
    return jax.random.normal(key, shape, jnp.float32) * scale


def init_encoder(key):
    k = jax.random.split(key, 4)
    L, D, F = N_LAYERS, D_MODEL, FFN_HIDDEN
    return dict(
        wqkv=_w(k[0], (L, D, 3 * D)), bqkv=jnp.zeros((L, 1, 3 * D), jnp.float32),
        wo=_w(k[1], (L, D, D)), bo=jnp.zeros((L, 1, D), jnp.float32),
        ln1_g=jnp.ones((L, 1, D), jnp.float32), ln1_b=jnp.zeros((L, 1, D), jnp.float32),
        w1=_w(k[2], (L, D, F)), b1=jnp.zeros((L, 1, F), jnp.float32),
        w2=_w(k[3], (L, F, D)), b2=jnp.zeros((L, 1, D), jnp.float32),
        ln2_g=jnp.ones((L, 1, D), jnp.float32), ln2_b=jnp.zeros((L, 1, D), jnp.float32),
    )


def init_decoder(key):
    k = jax.random.split(key, 7)
    L, D, F = N_LAYERS, D_MODEL, FFN_HIDDEN
    return dict(
        s_wqkv=_w(k[0], (L, D, 3 * D)), s_bqkv=jnp.zeros((L, 1, 3 * D), jnp.float32),
        s_wo=_w(k[1], (L, D, D)), s_bo=jnp.zeros((L, 1, D), jnp.float32),
        ln1_g=jnp.ones((L, 1, D), jnp.float32), ln1_b=jnp.zeros((L, 1, D), jnp.float32),
        c_wq=_w(k[2], (L, D, D)), c_bq=jnp.zeros((L, 1, D), jnp.float32),
        c_wkv=_w(k[3], (L, D, 2 * D)), c_bkv=jnp.zeros((L, 1, 2 * D), jnp.float32),
        c_wo=_w(k[4], (L, D, D)), c_bo=jnp.zeros((L, 1, D), jnp.float32),
        ln2_g=jnp.ones((L, 1, D), jnp.float32), ln2_b=jnp.zeros((L, 1, D), jnp.float32),
        w1=_w(k[5], (L, D, F)), b1=jnp.zeros((L, 1, F), jnp.float32),
        w2=_w(k[6], (L, F, D)), b2=jnp.zeros((L, 1, D), jnp.float32),
        ln3_g=jnp.ones((L, 1, D), jnp.float32), ln3_b=jnp.zeros((L, 1, D), jnp.float32),
    )


def init_params(key):
    k_ee, k_de, k_enc, k_dec, k_fc = jax.random.split(key, 5)
    fc_w = _w(k_fc, (D_MODEL, DEC_VOCAB))
    fc_b = jnp.zeros((DEC_VOCAB,), jnp.float32)
    fc_w_pad = jnp.zeros((D_MODEL, VOCAB_PAD), jnp.float32).at[:, :DEC_VOCAB].set(fc_w)
    fc_b_pad = jnp.zeros((1, VOCAB_PAD), jnp.float32).at[0, :DEC_VOCAB].set(fc_b)
    return dict(
        enc_emb=_w(k_ee, (ENC_VOCAB, D_MODEL), scale=1.0),
        dec_emb=_w(k_de, (DEC_VOCAB, D_MODEL), scale=1.0),
        pe=sinusoidal_pe(MAX_LEN, D_MODEL),
        enc=init_encoder(k_enc),
        dec=init_decoder(k_dec),
        fc_w_pad=fc_w_pad,
        fc_b_pad=fc_b_pad,
    )


# ------------------------------------------------------------------ main
if __name__ == "__main__":
    key = jax.random.PRNGKey(0)
    k_params, k_src, k_tgt = jax.random.split(key, 3)
    params = init_params(k_params)

    B, L_SRC, L_TGT = 2, 8, 8
    src = jax.random.randint(k_src, (B, L_SRC), 1, ENC_VOCAB, dtype=jnp.int32)
    tgt = jax.random.randint(k_tgt, (B, L_TGT), 1, DEC_VOCAB, dtype=jnp.int32)
    # add some padding tokens to exercise the padding masks
    src = src.at[:, -2:].set(SRC_PAD_IDX)
    tgt = tgt.at[:, -1:].set(TGT_PAD_IDX)

    fwd = jax.jit(transformer_forward)
    out = fwd(params, src, tgt)
    jax.block_until_ready(out)

    assert out.shape == (B, L_TGT, DEC_VOCAB)
    assert jnp.all(jnp.isfinite(out))
    print("KERNEL_OK")
</pallas_src>

<mosaic_0001>
module attributes {stable_mosaic.version = 11 : i64} {
  func.func @_transformer_kernel(%arg0: i32, %arg1: memref<16x32xf32, #tpu.memory_space<vmem>>, %arg2: memref<16x32xf32, #tpu.memory_space<vmem>>, %arg3: memref<2x8x8xf32, #tpu.memory_space<vmem>>, %arg4: memref<2x8x8xf32, #tpu.memory_space<vmem>>, %arg5: memref<2x8x8xf32, #tpu.memory_space<vmem>>, %arg6: memref<1x32x96xf32, #tpu.memory_space<vmem>>, %arg7: memref<1x1x96xf32, #tpu.memory_space<vmem>>, %arg8: memref<1x32x32xf32, #tpu.memory_space<vmem>>, %arg9: memref<1x1x32xf32, #tpu.memory_space<vmem>>, %arg10: memref<1x1x32xf32, #tpu.memory_space<vmem>>, %arg11: memref<1x1x32xf32, #tpu.memory_space<vmem>>, %arg12: memref<1x32x64xf32, #tpu.memory_space<vmem>>, %arg13: memref<1x1x64xf32, #tpu.memory_space<vmem>>, %arg14: memref<1x64x32xf32, #tpu.memory_space<vmem>>, %arg15: memref<1x1x32xf32, #tpu.memory_space<vmem>>, %arg16: memref<1x1x32xf32, #tpu.memory_space<vmem>>, %arg17: memref<1x1x32xf32, #tpu.memory_space<vmem>>, %arg18: memref<1x32x96xf32, #tpu.memory_space<vmem>>, %arg19: memref<1x1x96xf32, #tpu.memory_space<vmem>>, %arg20: memref<1x32x32xf32, #tpu.memory_space<vmem>>, %arg21: memref<1x1x32xf32, #tpu.memory_space<vmem>>, %arg22: memref<1x1x32xf32, #tpu.memory_space<vmem>>, %arg23: memref<1x1x32xf32, #tpu.memory_space<vmem>>, %arg24: memref<1x32x32xf32, #tpu.memory_space<vmem>>, %arg25: memref<1x1x32xf32, #tpu.memory_space<vmem>>, %arg26: memref<1x32x64xf32, #tpu.memory_space<vmem>>, %arg27: memref<1x1x64xf32, #tpu.memory_space<vmem>>, %arg28: memref<1x32x32xf32, #tpu.memory_space<vmem>>, %arg29: memref<1x1x32xf32, #tpu.memory_space<vmem>>, %arg30: memref<1x1x32xf32, #tpu.memory_space<vmem>>, %arg31: memref<1x1x32xf32, #tpu.memory_space<vmem>>, %arg32: memref<1x32x64xf32, #tpu.memory_space<vmem>>, %arg33: memref<1x1x64xf32, #tpu.memory_space<vmem>>, %arg34: memref<1x64x32xf32, #tpu.memory_space<vmem>>, %arg35: memref<1x1x32xf32, #tpu.memory_space<vmem>>, %arg36: memref<1x1x32xf32, #tpu.memory_space<vmem>>, %arg37: memref<1x1x32xf32, #tpu.memory_space<vmem>>, %arg38: memref<32x128xf32, #tpu.memory_space<vmem>>, %arg39: memref<1x128xf32, #tpu.memory_space<vmem>>, %arg40: memref<16x128xf32, #tpu.memory_space<vmem>>, %arg41: memref<16x32xf32, #tpu.memory_space<vmem>>, %arg42: memref<16x32xf32, #tpu.memory_space<vmem>>) attributes {dimension_semantics = [#tpu.dimension_semantics<arbitrary>], iteration_bounds = array<i64: 4>, scalar_prefetch = 0 : i64, scratch_operands = 2 : i64, tpu.core_type = #tpu.core_type<tc>, window_params = [{pipeline_mode = #tpu.pipeline_mode<synchronous>, transform_indices = @transform_0, window_bounds = array<i64: 16, 32>}, {pipeline_mode = #tpu.pipeline_mode<synchronous>, transform_indices = @transform_1, window_bounds = array<i64: 16, 32>}, {pipeline_mode = #tpu.pipeline_mode<synchronous>, transform_indices = @transform_2, window_bounds = array<i64: 2, 8, 8>}, {pipeline_mode = #tpu.pipeline_mode<synchronous>, transform_indices = @transform_3, window_bounds = array<i64: 2, 8, 8>}, {pipeline_mode = #tpu.pipeline_mode<synchronous>, transform_indices = @transform_4, window_bounds = array<i64: 2, 8, 8>}, {transform_indices = @transform_5, window_bounds = array<i64: 1, 32, 96>}, {transform_indices = @transform_6, window_bounds = array<i64: 1, 1, 96>}, {transform_indices = @transform_7, window_bounds = array<i64: 1, 32, 32>}, {transform_indices = @transform_8, window_bounds = array<i64: 1, 1, 32>}, {transform_indices = @transform_9, window_bounds = array<i64: 1, 1, 32>}, {transform_indices = @transform_10, window_bounds = array<i64: 1, 1, 32>}, {transform_indices = @transform_11, window_bounds = array<i64: 1, 32, 64>}, {transform_indices = @transform_12, window_bounds = array<i64: 1, 1, 64>}, {transform_indices = @transform_13, window_bounds = array<i64: 1, 64, 32>}, {transform_indices = @transform_14, window_bounds = array<i64: 1, 1, 32>}, {transform_indices = @transform_15, window_bounds = array<i64: 1, 1, 32>}, {transform_indices = @transform_16, window_bounds = array<i64: 1, 1, 32>}, {transform_indices = @transform_17, window_bounds = array<i64: 1, 32, 96>}, {transform_indices = @transform_18, window_bounds = array<i64: 1, 1, 96>}, {transform_indices = @transform_19, window_bounds = array<i64: 1, 32, 32>}, {transform_indices = @transform_20, window_bounds = array<i64: 1, 1, 32>}, {transform_indices = @transform_21, window_bounds = array<i64: 1, 1, 32>}, {transform_indices = @transform_22, window_bounds = array<i64: 1, 1, 32>}, {transform_indices = @transform_23, window_bounds = array<i64: 1, 32, 32>}, {transform_indices = @transform_24, window_bounds = array<i64: 1, 1, 32>}, {transform_indices = @transform_25, window_bounds = array<i64: 1, 32, 64>}, {transform_indices = @transform_26, window_bounds = array<i64: 1, 1, 64>}, {transform_indices = @transform_27, window_bounds = array<i64: 1, 32, 32>}, {transform_indices = @transform_28, window_bounds = array<i64: 1, 1, 32>}, {transform_indices = @transform_29, window_bounds = array<i64: 1, 1, 32>}, {transform_indices = @transform_30, window_bounds = array<i64: 1, 1, 32>}, {transform_indices = @transform_31, window_bounds = array<i64: 1, 32, 64>}, {transform_indices = @transform_32, window_bounds = array<i64: 1, 1, 64>}, {transform_indices = @transform_33, window_bounds = array<i64: 1, 64, 32>}, {transform_indices = @transform_34, window_bounds = array<i64: 1, 1, 32>}, {transform_indices = @transform_35, window_bounds = array<i64: 1, 1, 32>}, {transform_indices = @transform_36, window_bounds = array<i64: 1, 1, 32>}, {pipeline_mode = #tpu.pipeline_mode<synchronous>, transform_indices = @transform_37, window_bounds = array<i64: 32, 128>}, {pipeline_mode = #tpu.pipeline_mode<synchronous>, transform_indices = @transform_38, window_bounds = array<i64: 1, 128>}, {pipeline_mode = #tpu.pipeline_mode<synchronous>, transform_indices = @transform_39, window_bounds = array<i64: 16, 128>}]} {
    %c0_i32 = arith.constant 0 : i32
    %0 = arith.cmpi eq, %arg0, %c0_i32 : i32
    %1 = arith.extui %0 : i1 to i32
    %c0_i32_0 = arith.constant 0 : i32
    %2 = arith.cmpi ne, %1, %c0_i32_0 : i32
    scf.if %2 {
      %c0 = arith.constant 0 : index
      %c0_7 = arith.constant 0 : index
      %15 = vector.load %arg1[%c0, %c0_7] : memref<16x32xf32, #tpu.memory_space<vmem>>, vector<16x32xf32>
      %c0_8 = arith.constant 0 : index
      %c0_9 = arith.constant 0 : index
      %16 = vector.load %arg41[%c0_8, %c0_9] : memref<16x32xf32, #tpu.memory_space<vmem>>, vector<16x32xf32>
      tpu.vector_store %arg41[%c0_8, %c0_9], %15 {strides = array<i32>} : memref<16x32xf32, #tpu.memory_space<vmem>>, vector<16x32xf32>,
    } else {
    }
    %c2_i32 = arith.constant 2 : i32
    %3 = arith.cmpi eq, %arg0, %c2_i32 : i32
    %4 = arith.extui %3 : i1 to i32
    %c0_i32_1 = arith.constant 0 : i32
    %5 = arith.cmpi ne, %4, %c0_i32_1 : i32
    scf.if %5 {
      %c0 = arith.constant 0 : index
      %c0_7 = arith.constant 0 : index
      %15 = vector.load %arg2[%c0, %c0_7] : memref<16x32xf32, #tpu.memory_space<vmem>>, vector<16x32xf32>
      %c0_8 = arith.constant 0 : index
      %c0_9 = arith.constant 0 : index
      %16 = vector.load %arg42[%c0_8, %c0_9] : memref<16x32xf32, #tpu.memory_space<vmem>>, vector<16x32xf32>
      tpu.vector_store %arg42[%c0_8, %c0_9], %15 {strides = array<i32>} : memref<16x32xf32, #tpu.memory_space<vmem>>, vector<16x32xf32>,
    } else {
    }
    %c2_i32_2 = arith.constant 2 : i32
    %6 = arith.cmpi slt, %arg0, %c2_i32_2 : i32
    %7 = arith.extui %6 : i1 to i32
    %c0_i32_3 = arith.constant 0 : i32
    %8 = arith.cmpi ne, %7, %c0_i32_3 : i32
    scf.if %8 {
      %c0 = arith.constant 0 : index
      %c0_7 = arith.constant 0 : index
      %15 = vector.load %arg41[%c0, %c0_7] : memref<16x32xf32, #tpu.memory_space<vmem>>, vector<16x32xf32>
      %c0_8 = arith.constant 0 : index
      %c0_9 = arith.constant 0 : index
      %c0_10 = arith.constant 0 : index
      %16 = vector.load %arg6[%c0_8, %c0_9, %c0_10] : memref<1x32x96xf32, #tpu.memory_space<vmem>>, vector<1x32x96xf32>
      %17 = vector.shape_cast %16 : vector<1x32x96xf32> to vector<32x96xf32>
      %cst = arith.constant dense<0.000000e+00> : vector<16x96xf32>
      %18 = tpu.matmul %15, %17, %cst {dimension_numbers = #tpu.dot_dimension_numbers<[1], [0], [0], [1], [0, 0, 1, 1], [], []>} : vector<16x32xf32>, vector<32x96xf32>, vector<16x96xf32> -> vector<16x96xf32>
      %c0_11 = arith.constant 0 : index
      %c0_12 = arith.constant 0 : index
      %c0_13 = arith.constant 0 : index
      %19 = vector.load %arg7[%c0_11, %c0_12, %c0_13] : memref<1x1x96xf32, #tpu.memory_space<vmem>>, vector<1x1x96xf32>
      %20 = vector.shape_cast %19 : vector<1x1x96xf32> to vector<1x96xf32>
      %21 = vector.broadcast %20 : vector<1x96xf32> to vector<16x96xf32>
      %22 = arith.addf %18, %21 : vector<16x96xf32>
      %23 = vector.shape_cast %22 : vector<16x96xf32> to vector<2x8x96xf32>
      %24 = vector.extract_strided_slice %23 {offsets = [0, 0, 0], sizes = [2, 8, 32], strides = [1, 1, 1]} : vector<2x8x96xf32> to vector<2x8x32xf32>
      %25 = vector.extract_strided_slice %23 {offsets = [0, 0, 32], sizes = [2, 8, 32], strides = [1, 1, 1]} : vector<2x8x96xf32> to vector<2x8x32xf32>
      %26 = vector.extract_strided_slice %23 {offsets = [0, 0, 64], sizes = [2, 8, 32], strides = [1, 1, 1]} : vector<2x8x96xf32> to vector<2x8x32xf32>
      %c0_14 = arith.constant 0 : index
      %c0_15 = arith.constant 0 : index
      %c0_16 = arith.constant 0 : index
      %27 = vector.load %arg8[%c0_14, %c0_15, %c0_16] : memref<1x32x32xf32, #tpu.memory_space<vmem>>, vector<1x32x32xf32>
      %28 = vector.shape_cast %27 : vector<1x32x32xf32> to vector<32x32xf32>
      %c0_17 = arith.constant 0 : index
      %c0_18 = arith.constant 0 : index
      %c0_19 = arith.constant 0 : index
      %29 = vector.load %arg9[%c0_17, %c0_18, %c0_19] : memref<1x1x32xf32, #tpu.memory_space<vmem>>, vector<1x1x32xf32>
      %30 = vector.shape_cast %29 : vector<1x1x32xf32> to vector<1x32xf32>
      %c0_20 = arith.constant 0 : index
      %c0_21 = arith.constant 0 : index
      %c0_22 = arith.constant 0 : index
      %31 = vector.load %arg3[%c0_20, %c0_21, %c0_22] : memref<2x8x8xf32, #tpu.memory_space<vmem>>, vector<2x8x8xf32>
      %32 = vector.extract_strided_slice %24 {offsets = [0, 0, 0], sizes = [2, 8, 8], strides = [1, 1, 1]} : vector<2x8x32xf32> to vector<2x8x8xf32>
      %33 = vector.extract_strided_slice %25 {offsets = [0, 0, 0], sizes = [2, 8, 8], strides = [1, 1, 1]} : vector<2x8x32xf32> to vector<2x8x8xf32>
      "tpu.trace_start"() <{level = 10 : i32, message = "bqd,bkd->bqk"}> : () -> ()
      %cst_23 = arith.constant dense<0.000000e+00> : vector<2x8x8xf32>
      %34 = tpu.matmul %32, %33, %cst_23 {dimension_numbers = #tpu.dot_dimension_numbers<[2], [2], [1], [1], [0, 0, 0, 1, 1, 1], [0], [0]>} : vector<2x8x8xf32>, vector<2x8x8xf32>, vector<2x8x8xf32> -> vector<2x8x8xf32>
      "tpu.trace_stop"() : () -> ()
      %cst_24 = arith.constant 0.353553385 : f32
      %35 = vector.broadcast %cst_24 : f32 to vector<2x8x8xf32>
      %36 = arith.mulf %34, %35 : vector<2x8x8xf32>
      %cst_25 = arith.constant 5.000000e-01 : f32
      %37 = vector.broadcast %cst_25 : f32 to vector<2x8x8xf32>
      %38 = arith.cmpf ogt, %31, %37 : vector<2x8x8xf32>
      %cst_26 = arith.constant -1.000000e+09 : f32
      %39 = vector.broadcast %cst_26 : f32 to vector<2x8x8xf32>
      %40 = arith.select %38, %36, %39 : vector<2x8x8xi1>, vector<2x8x8xf32>
      %cst_27 = arith.constant dense<0xFF800000> : vector<2x8xf32>
      %41 = vector.multi_reduction <maximumf>, %40, %cst_27 [2] : vector<2x8x8xf32> to vector<2x8xf32>
      %42 = vector.shape_cast %41 : vector<2x8xf32> to vector<2x8x1xf32>
      %43 = vector.broadcast %42 : vector<2x8x1xf32> to vector<2x8x8xf32>
      %44 = arith.subf %40, %43 : vector<2x8x8xf32>
      %45 = math.exp %44 : vector<2x8x8xf32>
      %cst_28 = arith.constant dense<0.000000e+00> : vector<2x8xf32>
      %46 = vector.multi_reduction <add>, %45, %cst_28 [2] : vector<2x8x8xf32> to vector<2x8xf32>
      %47 = vector.shape_cast %46 : vector<2x8xf32> to vector<2x8x1xf32>
      %48 = tpu.reciprocal %47 {approx = true} : vector<2x8x1xf32> -> vector<2x8x1xf32>
      %49 = vector.broadcast %48 : vector<2x8x1xf32> to vector<2x8x8xf32>
      %50 = arith.mulf %45, %49 : vector<2x8x8xf32>
      %51 = vector.extract_strided_slice %26 {offsets = [0, 0, 0], sizes = [2, 8, 8], strides = [1, 1, 1]} : vector<2x8x32xf32> to vector<2x8x8xf32>
      "tpu.trace_start"() <{level = 10 : i32, message = "bqk,bkd->bqd"}> : () -> ()
      %cst_29 = arith.constant dense<0.000000e+00> : vector<2x8x8xf32>
      %52 = tpu.matmul %50, %51, %cst_29 {dimension_numbers = #tpu.dot_dimension_numbers<[2], [1], [1], [2], [0, 0, 0, 1, 1, 2], [0], [0]>} : vector<2x8x8xf32>, vector<2x8x8xf32>, vector<2x8x8xf32> -> vector<2x8x8xf32>
      "tpu.trace_stop"() : () -> ()
      %53 = vector.shape_cast %52 : vector<2x8x8xf32> to vector<16x8xf32>
      %54 = vector.extract_strided_slice %28 {offsets = [0, 0], sizes = [8, 32], strides = [1, 1]} : vector<32x32xf32> to vector<8x32xf32>
      %cst_30 = arith.constant dense<0.000000e+00> : vector<16x32xf32>
      %55 = tpu.matmul %53, %54, %cst_30 {dimension_numbers = #tpu.dot_dimension_numbers<[1], [0], [0], [1], [0, 0, 1, 1], [], []>} : vector<16x8xf32>, vector<8x32xf32>, vector<16x32xf32> -> vector<16x32xf32>
      %56 = vector.extract_strided_slice %24 {offsets = [0, 0, 8], sizes = [2, 8, 8], strides = [1, 1, 1]} : vector<2x8x32xf32> to vector<2x8x8xf32>
      %57 = vector.extract_strided_slice %25 {offsets = [0, 0, 8], sizes = [2, 8, 8], strides = [1, 1, 1]} : vector<2x8x32xf32> to vector<2x8x8xf32>
      "tpu.trace_start"() <{level = 10 : i32, message = "bqd,bkd->bqk"}> : () -> ()
      %cst_31 = arith.constant dense<0.000000e+00> : vector<2x8x8xf32>
      %58 = tpu.matmul %56, %57, %cst_31 {dimension_numbers = #tpu.dot_dimension_numbers<[2], [2], [1], [1], [0, 0, 0, 1, 1, 1], [0], [0]>} : vector<2x8x8xf32>, vector<2x8x8xf32>, vector<2x8x8xf32> -> vector<2x8x8xf32>
      "tpu.trace_stop"() : () -> ()
      %cst_32 = arith.constant 0.353553385 : f32
      %59 = vector.broadcast %cst_32 : f32 to vector<2x8x8xf32>
      %60 = arith.mulf %58, %59 : vector<2x8x8xf32>
      %cst_33 = arith.constant 5.000000e-01 : f32
      %61 = vector.broadcast %cst_33 : f32 to vector<2x8x8xf32>
      %62 = arith.cmpf ogt, %31, %61 : vector<2x8x8xf32>
      %cst_34 = arith.constant -1.000000e+09 : f32
      %63 = vector.broadcast %cst_34 : f32 to vector<2x8x8xf32>
      %64 = arith.select %62, %60, %63 : vector<2x8x8xi1>, vector<2x8x8xf32>
      %cst_35 = arith.constant dense<0xFF800000> : vector<2x8xf32>
      %65 = vector.multi_reduction <maximumf>, %64, %cst_35 [2] : vector<2x8x8xf32> to vector<2x8xf32>
      %66 = vector.shape_cast %65 : vector<2x8xf32> to vector<2x8x1xf32>
      %67 = vector.broadcast %66 : vector<2x8x1xf32> to vector<2x8x8xf32>
      %68 = arith.subf %64, %67 : vector<2x8x8xf32>
      %69 = math.exp %68 : vector<2x8x8xf32>
      %cst_36 = arith.constant dense<0.000000e+00> : vector<2x8xf32>
      %70 = vector.multi_reduction <add>, %69, %cst_36 [2] : vector<2x8x8xf32> to vector<2x8xf32>
      %71 = vector.shape_cast %70 : vector<2x8xf32> to vector<2x8x1xf32>
      %72 = tpu.reciprocal %71 {approx = true} : vector<2x8x1xf32> -> vector<2x8x1xf32>
      %73 = vector.broadcast %72 : vector<2x8x1xf32> to vector<2x8x8xf32>
      %74 = arith.mulf %69, %73 : vector<2x8x8xf32>
      %75 = vector.extract_strided_slice %26 {offsets = [0, 0, 8], sizes = [2, 8, 8], strides = [1, 1, 1]} : vector<2x8x32xf32> to vector<2x8x8xf32>
      "tpu.trace_start"() <{level = 10 : i32, message = "bqk,bkd->bqd"}> : () -> ()
      %cst_37 = arith.constant dense<0.000000e+00> : vector<2x8x8xf32>
      %76 = tpu.matmul %74, %75, %cst_37 {dimension_numbers = #tpu.dot_dimension_numbers<[2], [1], [1], [2], [0, 0, 0, 1, 1, 2], [0], [0]>} : vector<2x8x8xf32>, vector<2x8x8xf32>, vector<2x8x8xf32> -> vector<2x8x8xf32>
      "tpu.trace_stop"() : () -> ()
      %77 = vector.shape_cast %76 : vector<2x8x8xf32> to vector<16x8xf32>
      %78 = vector.extract_strided_slice %28 {offsets = [8, 0], sizes = [8, 32], strides = [1, 1]} : vector<32x32xf32> to vector<8x32xf32>
      %cst_38 = arith.constant dense<0.000000e+00> : vector<16x32xf32>
      %79 = tpu.matmul %77, %78, %cst_38 {dimension_numbers = #tpu.dot_dimension_numbers<[1], [0], [0], [1], [0, 0, 1, 1], [], []>} : vector<16x8xf32>, vector<8x32xf32>, vector<16x32xf32> -> vector<16x32xf32>
      %80 = arith.addf %55, %79 : vector<16x32xf32>
      %81 = vector.extract_strided_slice %24 {offsets = [0, 0, 16], sizes = [2, 8, 8], strides = [1, 1, 1]} : vector<2x8x32xf32> to vector<2x8x8xf32>
      %82 = vector.extract_strided_slice %25 {offsets = [0, 0, 16], sizes = [2, 8, 8], strides = [1, 1, 1]} : vector<2x8x32xf32> to vector<2x8x8xf32>
      "tpu.trace_start"() <{level = 10 : i32, message = "bqd,bkd->bqk"}> : () -> ()
      %cst_39 = arith.constant dense<0.000000e+00> : vector<2x8x8xf32>
      %83 = tpu.matmul %81, %82, %cst_39 {dimension_numbers = #tpu.dot_dimension_numbers<[2], [2], [1], [1], [0, 0, 0, 1, 1, 1], [0], [0]>} : vector<2x8x8xf32>, vector<2x8x8xf32>, vector<2x8x8xf32> -> vector<2x8x8xf32>
      "tpu.trace_stop"() : () -> ()
      %cst_40 = arith.constant 0.353553385 : f32
      %84 = vector.broadcast %cst_40 : f32 to vector<2x8x8xf32>
      %85 = arith.mulf %83, %84 : vector<2x8x8xf32>
      %cst_41 = arith.constant 5.000000e-01 : f32
      %86 = vector.broadcast %cst_41 : f32 to vector<2x8x8xf32>
      %87 = arith.cmpf ogt, %31, %86 : vector<2x8x8xf32>
      %cst_42 = arith.constant -1.000000e+09 : f32
      %88 = vector.broadcast %cst_42 : f32 to vector<2x8x8xf32>
      %89 = arith.select %87, %85, %88 : vector<2x8x8xi1>, vector<2x8x8xf32>
      %cst_43 = arith.constant dense<0xFF800000> : vector<2x8xf32>
      %90 = vector.multi_reduction <maximumf>, %89, %cst_43 [2] : vector<2x8x8xf32> to vector<2x8xf32>
      %91 = vector.shape_cast %90 : vector<2x8xf32> to vector<2x8x1xf32>
      %92 = vector.broadcast %91 : vector<2x8x1xf32> to vector<2x8x8xf32>
      %93 = arith.subf %89, %92 : vector<2x8x8xf32>
      %94 = math.exp %93 : vector<2x8x8xf32>
      %cst_44 = arith.constant dense<0.000000e+00> : vector<2x8xf32>
      %95 = vector.multi_reduction <add>, %94, %cst_44 [2] : vector<2x8x8xf32> to vector<2x8xf32>
      %96 = vector.shape_cast %95 : vector<2x8xf32> to vector<2x8x1xf32>
      %97 = tpu.reciprocal %96 {approx = true} : vector<2x8x1xf32> -> vector<2x8x1xf32>
      %98 = vector.broadcast %97 : vector<2x8x1xf32> to vector<2x8x8xf32>
      %99 = arith.mulf %94, %98 : vector<2x8x8xf32>
      %100 = vector.extract_strided_slice %26 {offsets = [0, 0, 16], sizes = [2, 8, 8], strides = [1, 1, 1]} : vector<2x8x32xf32> to vector<2x8x8xf32>
      "tpu.trace_start"() <{level = 10 : i32, message = "bqk,bkd->bqd"}> : () -> ()
      %cst_45 = arith.constant dense<0.000000e+00> : vector<2x8x8xf32>
      %101 = tpu.matmul %99, %100, %cst_45 {dimension_numbers = #tpu.dot_dimension_numbers<[2], [1], [1], [2], [0, 0, 0, 1, 1, 2], [0], [0]>} : vector<2x8x8xf32>, vector<2x8x8xf32>, vector<2x8x8xf32> -> vector<2x8x8xf32>
      "tpu.trace_stop"() : () -> ()
      %102 = vector.shape_cast %101 : vector<2x8x8xf32> to vector<16x8xf32>
      %103 = vector.extract_strided_slice %28 {offsets = [16, 0], sizes = [8, 32], strides = [1, 1]} : vector<32x32xf32> to vector<8x32xf32>
      %cst_46 = arith.constant dense<0.000000e+00> : vector<16x32xf32>
      %104 = tpu.matmul %102, %103, %cst_46 {dimension_numbers = #tpu.dot_dimension_numbers<[1], [0], [0], [1], [0, 0, 1, 1], [], []>} : vector<16x8xf32>, vector<8x32xf32>, vector<16x32xf32> -> vector<16x32xf32>
      %105 = arith.addf %80, %104 : vector<16x32xf32>
      %106 = vector.extract_strided_slice %24 {offsets = [0, 0, 24], sizes = [2, 8, 8], strides = [1, 1, 1]} : vector<2x8x32xf32> to vector<2x8x8xf32>
      %107 = vector.extract_strided_slice %25 {offsets = [0, 0, 24], sizes = [2, 8, 8], strides = [1, 1, 1]} : vector<2x8x32xf32> to vector<2x8x8xf32>
      "tpu.trace_start"() <{level = 10 : i32, message = "bqd,bkd->bqk"}> : () -> ()
      %cst_47 = arith.constant dense<0.000000e+00> : vector<2x8x8xf32>
      %108 = tpu.matmul %106, %107, %cst_47 {dimension_numbers = #tpu.dot_dimension_numbers<[2], [2], [1], [1], [0, 0, 0, 1, 1, 1], [0], [0]>} : vector<2x8x8xf32>, vector<2x8x8xf32>, vector<2x8x8xf32> -> vector<2x8x8xf32>
      "tpu.trace_stop"() : () -> ()
      %cst_48 = arith.constant 0.353553385 : f32
      %109 = vector.broadcast %cst_48 : f32 to vector<2x8x8xf32>
      %110 = arith.mulf %108, %109 : vector<2x8x8xf32>
      %cst_49 = arith.constant 5.000000e-01 : f32
      %111 = vector.broadcast %cst_49 : f32 to vector<2x8x8xf32>
      %112 = arith.cmpf ogt, %31, %111 : vector<2x8x8xf32>
      %cst_50 = arith.constant -1.000000e+09 : f32
      %113 = vector.broadcast %cst_50 : f32 to vector<2x8x8xf32>
      %114 = arith.select %112, %110, %113 : vector<2x8x8xi1>, vector<2x8x8xf32>
      %cst_51 = arith.constant dense<0xFF800000> : vector<2x8xf32>
      %115 = vector.multi_reduction <maximumf>, %114, %cst_51 [2] : vector<2x8x8xf32> to vector<2x8xf32>
      %116 = vector.shape_cast %115 : vector<2x8xf32> to vector<2x8x1xf32>
      %117 = vector.broadcast %116 : vector<2x8x1xf32> to vector<2x8x8xf32>
      %118 = arith.subf %114, %117 : vector<2x8x8xf32>
      %119 = math.exp %118 : vector<2x8x8xf32>
      %cst_52 = arith.constant dense<0.000000e+00> : vector<2x8xf32>
      %120 = vector.multi_reduction <add>, %119, %cst_52 [2] : vector<2x8x8xf32> to vector<2x8xf32>
      %121 = vector.shape_cast %120 : vector<2x8xf32> to vector<2x8x1xf32>
      %122 = tpu.reciprocal %121 {approx = true} : vector<2x8x1xf32> -> vector<2x8x1xf32>
      %123 = vector.broadcast %122 : vector<2x8x1xf32> to vector<2x8x8xf32>
      %124 = arith.mulf %119, %123 : vector<2x8x8xf32>
      %125 = vector.extract_strided_slice %26 {offsets = [0, 0, 24], sizes = [2, 8, 8], strides = [1, 1, 1]} : vector<2x8x32xf32> to vector<2x8x8xf32>
      "tpu.trace_start"() <{level = 10 : i32, message = "bqk,bkd->bqd"}> : () -> ()
      %cst_53 = arith.constant dense<0.000000e+00> : vector<2x8x8xf32>
      %126 = tpu.matmul %124, %125, %cst_53 {dimension_numbers = #tpu.dot_dimension_numbers<[2], [1], [1], [2], [0, 0, 0, 1, 1, 2], [0], [0]>} : vector<2x8x8xf32>, vector<2x8x8xf32>, vector<2x8x8xf32> -> vector<2x8x8xf32>
      "tpu.trace_stop"() : () -> ()
      %127 = vector.shape_cast %126 : vector<2x8x8xf32> to vector<16x8xf32>
      %128 = vector.extract_strided_slice %28 {offsets = [24, 0], sizes = [8, 32], strides = [1, 1]} : vector<32x32xf32> to vector<8x32xf32>
      %cst_54 = arith.constant dense<0.000000e+00> : vector<16x32xf32>
      %129 = tpu.matmul %127, %128, %cst_54 {dimension_numbers = #tpu.dot_dimension_numbers<[1], [0], [0], [1], [0, 0, 1, 1], [], []>} : vector<16x8xf32>, vector<8x32xf32>, vector<16x32xf32> -> vector<16x32xf32>
      %130 = arith.addf %105, %129 : vector<16x32xf32>
      %131 = vector.broadcast %30 : vector<1x32xf32> to vector<16x32xf32>
      %132 = arith.addf %130, %131 : vector<16x32xf32>
      %133 = arith.addf %15, %132 : vector<16x32xf32>
      %c0_55 = arith.constant 0 : index
      %c0_56 = arith.constant 0 : index
      %c0_57 = arith.constant 0 : index
      %134 = vector.load %arg10[%c0_55, %c0_56, %c0_57] : memref<1x1x32xf32, #tpu.memory_space<vmem>>, vector<1x1x32xf32>
      %135 = vector.shape_cast %134 : vector<1x1x32xf32> to vector<1x32xf32>
      %c0_58 = arith.constant 0 : index
      %c0_59 = arith.constant 0 : index
      %c0_60 = arith.constant 0 : index
      %136 = vector.load %arg11[%c0_58, %c0_59, %c0_60] : memref<1x1x32xf32, #tpu.memory_space<vmem>>, vector<1x1x32xf32>
      %137 = vector.shape_cast %136 : vector<1x1x32xf32> to vector<1x32xf32>
      %cst_61 = arith.constant dense<0.000000e+00> : vector<16xf32>
      %138 = vector.multi_reduction <add>, %133, %cst_61 [1] : vector<16x32xf32> to vector<16xf32>
      %139 = vector.shape_cast %138 : vector<16xf32> to vector<16x1xf32>
      %cst_62 = arith.constant 3.200000e+01 : f32
      %140 = vector.broadcast %cst_62 : f32 to vector<16x1xf32>
      %141 = arith.divf %139, %140 : vector<16x1xf32>
      %142 = vector.broadcast %141 : vector<16x1xf32> to vector<16x32xf32>
      %143 = arith.subf %133, %142 : vector<16x32xf32>
      %144 = arith.mulf %143, %143 : vector<16x32xf32>
      %cst_63 = arith.constant dense<0.000000e+00> : vector<16xf32>
      %145 = vector.multi_reduction <add>, %144, %cst_63 [1] : vector<16x32xf32> to vector<16xf32>
      %146 = vector.shape_cast %145 : vector<16xf32> to vector<16x1xf32>
      %cst_64 = arith.constant 3.200000e+01 : f32
      %147 = vector.broadcast %cst_64 : f32 to vector<16x1xf32>
      %148 = arith.divf %146, %147 : vector<16x1xf32>
      %149 = vector.broadcast %141 : vector<16x1xf32> to vector<16x32xf32>
      %150 = arith.subf %133, %149 : vector<16x32xf32>
      %cst_65 = arith.constant 9.99999974E-6 : f32
      %151 = vector.broadcast %cst_65 : f32 to vector<16x1xf32>
      %152 = arith.addf %148, %151 : vector<16x1xf32>
      %153 = math.rsqrt %152 : vector<16x1xf32>
      %154 = vector.broadcast %153 : vector<16x1xf32> to vector<16x32xf32>
      %155 = arith.mulf %150, %154 : vector<16x32xf32>
      %156 = vector.broadcast %135 : vector<1x32xf32> to vector<16x32xf32>
      %157 = arith.mulf %155, %156 : vector<16x32xf32>
      %158 = vector.broadcast %137 : vector<1x32xf32> to vector<16x32xf32>
      %159 = arith.addf %157, %158 : vector<16x32xf32>
      %c0_66 = arith.constant 0 : index
      %c0_67 = arith.constant 0 : index
      %c0_68 = arith.constant 0 : index
      %160 = vector.load %arg12[%c0_66, %c0_67, %c0_68] : memref<1x32x64xf32, #tpu.memory_space<vmem>>, vector<1x32x64xf32>
      %161 = vector.shape_cast %160 : vector<1x32x64xf32> to vector<32x64xf32>
      %cst_69 = arith.constant dense<0.000000e+00> : vector<16x64xf32>
      %162 = tpu.matmul %159, %161, %cst_69 {dimension_numbers = #tpu.dot_dimension_numbers<[1], [0], [0], [1], [0, 0, 1, 1], [], []>} : vector<16x32xf32>, vector<32x64xf32>, vector<16x64xf32> -> vector<16x64xf32>
      %c0_70 = arith.constant 0 : index
      %c0_71 = arith.constant 0 : index
      %c0_72 = arith.constant 0 : index
      %163 = vector.load %arg13[%c0_70, %c0_71, %c0_72] : memref<1x1x64xf32, #tpu.memory_space<vmem>>, vector<1x1x64xf32>
      %164 = vector.shape_cast %163 : vector<1x1x64xf32> to vector<1x64xf32>
      %165 = vector.broadcast %164 : vector<1x64xf32> to vector<16x64xf32>
      %166 = arith.addf %162, %165 : vector<16x64xf32>
      %cst_73 = arith.constant 0.000000e+00 : f32
      %167 = vector.broadcast %cst_73 : f32 to vector<16x64xf32>
      %168 = arith.maximumf %166, %167 : vector<16x64xf32>
      %c0_74 = arith.constant 0 : index
      %c0_75 = arith.constant 0 : index
      %c0_76 = arith.constant 0 : index
      %169 = vector.load %arg14[%c0_74, %c0_75, %c0_76] : memref<1x64x32xf32, #tpu.memory_space<vmem>>, vector<1x64x32xf32>
      %170 = vector.shape_cast %169 : vector<1x64x32xf32> to vector<64x32xf32>
      %cst_77 = arith.constant dense<0.000000e+00> : vector<16x32xf32>
      %171 = tpu.matmul %168, %170, %cst_77 {dimension_numbers = #tpu.dot_dimension_numbers<[1], [0], [0], [1], [0, 0, 1, 1], [], []>} : vector<16x64xf32>, vector<64x32xf32>, vector<16x32xf32> -> vector<16x32xf32>
      %c0_78 = arith.constant 0 : index
      %c0_79 = arith.constant 0 : index
      %c0_80 = arith.constant 0 : index
      %172 = vector.load %arg15[%c0_78, %c0_79, %c0_80] : memref<1x1x32xf32, #tpu.memory_space<vmem>>, vector<1x1x32xf32>
      %173 = vector.shape_cast %172 : vector<1x1x32xf32> to vector<1x32xf32>
      %174 = vector.broadcast %173 : vector<1x32xf32> to vector<16x32xf32>
      %175 = arith.addf %171, %174 : vector<16x32xf32>
      %176 = arith.addf %159, %175 : vector<16x32xf32>
      %c0_81 = arith.constant 0 : index
      %c0_82 = arith.constant 0 : index
      %c0_83 = arith.constant 0 : index
      %177 = vector.load %arg16[%c0_81, %c0_82, %c0_83] : memref<1x1x32xf32, #tpu.memory_space<vmem>>, vector<1x1x32xf32>
      %178 = vector.shape_cast %177 : vector<1x1x32xf32> to vector<1x32xf32>
      %c0_84 = arith.constant 0 : index
      %c0_85 = arith.constant 0 : index
      %c0_86 = arith.constant 0 : index
      %179 = vector.load %arg17[%c0_84, %c0_85, %c0_86] : memref<1x1x32xf32, #tpu.memory_space<vmem>>, vector<1x1x32xf32>
      %180 = vector.shape_cast %179 : vector<1x1x32xf32> to vector<1x32xf32>
      %cst_87 = arith.constant dense<0.000000e+00> : vector<16xf32>
      %181 = vector.multi_reduction <add>, %176, %cst_87 [1] : vector<16x32xf32> to vector<16xf32>
      %182 = vector.shape_cast %181 : vector<16xf32> to vector<16x1xf32>
      %cst_88 = arith.constant 3.200000e+01 : f32
      %183 = vector.broadcast %cst_88 : f32 to vector<16x1xf32>
      %184 = arith.divf %182, %183 : vector<16x1xf32>
      %185 = vector.broadcast %184 : vector<16x1xf32> to vector<16x32xf32>
      %186 = arith.subf %176, %185 : vector<16x32xf32>
      %187 = arith.mulf %186, %186 : vector<16x32xf32>
      %cst_89 = arith.constant dense<0.000000e+00> : vector<16xf32>
      %188 = vector.multi_reduction <add>, %187, %cst_89 [1] : vector<16x32xf32> to vector<16xf32>
      %189 = vector.shape_cast %188 : vector<16xf32> to vector<16x1xf32>
      %cst_90 = arith.constant 3.200000e+01 : f32
      %190 = vector.broadcast %cst_90 : f32 to vector<16x1xf32>
      %191 = arith.divf %189, %190 : vector<16x1xf32>
      %192 = vector.broadcast %184 : vector<16x1xf32> to vector<16x32xf32>
      %193 = arith.subf %176, %192 : vector<16x32xf32>
      %cst_91 = arith.constant 9.99999974E-6 : f32
      %194 = vector.broadcast %cst_91 : f32 to vector<16x1xf32>
      %195 = arith.addf %191, %194 : vector<16x1xf32>
      %196 = math.rsqrt %195 : vector<16x1xf32>
      %197 = vector.broadcast %196 : vector<16x1xf32> to vector<16x32xf32>
      %198 = arith.mulf %193, %197 : vector<16x32xf32>
      %199 = vector.broadcast %178 : vector<1x32xf32> to vector<16x32xf32>
      %200 = arith.mulf %198, %199 : vector<16x32xf32>
      %201 = vector.broadcast %180 : vector<1x32xf32> to vector<16x32xf32>
      %202 = arith.addf %200, %201 : vector<16x32xf32>
      %c0_92 = arith.constant 0 : index
      %c0_93 = arith.constant 0 : index
      %203 = vector.load %arg41[%c0_92, %c0_93] : memref<16x32xf32, #tpu.memory_space<vmem>>, vector<16x32xf32>
      tpu.vector_store %arg41[%c0_92, %c0_93], %202 {strides = array<i32>} : memref<16x32xf32, #tpu.memory_space<vmem>>, vector<16x32xf32>,
    } else {
    }
    %c2_i32_4 = arith.constant 2 : i32
    %9 = arith.cmpi sge, %arg0, %c2_i32_4 : i32
    %10 = arith.extui %9 : i1 to i32
    %c0_i32_5 = arith.constant 0 : i32
    %11 = arith.cmpi ne, %10, %c0_i32_5 : i32
    scf.if %11 {
      %c0 = arith.constant 0 : index
      %c0_7 = arith.constant 0 : index
      %15 = vector.load %arg42[%c0, %c0_7] : memref<16x32xf32, #tpu.memory_space<vmem>>, vector<16x32xf32>
      %c0_8 = arith.constant 0 : index
      %c0_9 = arith.constant 0 : index
      %16 = vector.load %arg41[%c0_8, %c0_9] : memref<16x32xf32, #tpu.memory_space<vmem>>, vector<16x32xf32>
      %c0_10 = arith.constant 0 : index
      %c0_11 = arith.constant 0 : index
      %c0_12 = arith.constant 0 : index
      %17 = vector.load %arg18[%c0_10, %c0_11, %c0_12] : memref<1x32x96xf32, #tpu.memory_space<vmem>>, vector<1x32x96xf32>
      %18 = vector.shape_cast %17 : vector<1x32x96xf32> to vector<32x96xf32>
      %cst = arith.constant dense<0.000000e+00> : vector<16x96xf32>
      %19 = tpu.matmul %15, %18, %cst {dimension_numbers = #tpu.dot_dimension_numbers<[1], [0], [0], [1], [0, 0, 1, 1], [], []>} : vector<16x32xf32>, vector<32x96xf32>, vector<16x96xf32> -> vector<16x96xf32>
      %c0_13 = arith.constant 0 : index
      %c0_14 = arith.constant 0 : index
      %c0_15 = arith.constant 0 : index
      %20 = vector.load %arg19[%c0_13, %c0_14, %c0_15] : memref<1x1x96xf32, #tpu.memory_space<vmem>>, vector<1x1x96xf32>
      %21 = vector.shape_cast %20 : vector<1x1x96xf32> to vector<1x96xf32>
      %22 = vector.broadcast %21 : vector<1x96xf32> to vector<16x96xf32>
      %23 = arith.addf %19, %22 : vector<16x96xf32>
      %24 = vector.shape_cast %23 : vector<16x96xf32> to vector<2x8x96xf32>
      %25 = vector.extract_strided_slice %24 {offsets = [0, 0, 0], sizes = [2, 8, 32], strides = [1, 1, 1]} : vector<2x8x96xf32> to vector<2x8x32xf32>
      %26 = vector.extract_strided_slice %24 {offsets = [0, 0, 32], sizes = [2, 8, 32], strides = [1, 1, 1]} : vector<2x8x96xf32> to vector<2x8x32xf32>
      %27 = vector.extract_strided_slice %24 {offsets = [0, 0, 64], sizes = [2, 8, 32], strides = [1, 1, 1]} : vector<2x8x96xf32> to vector<2x8x32xf32>
      %c0_16 = arith.constant 0 : index
      %c0_17 = arith.constant 0 : index
      %c0_18 = arith.constant 0 : index
      %28 = vector.load %arg20[%c0_16, %c0_17, %c0_18] : memref<1x32x32xf32, #tpu.memory_space<vmem>>, vector<1x32x32xf32>
      %29 = vector.shape_cast %28 : vector<1x32x32xf32> to vector<32x32xf32>
      %c0_19 = arith.constant 0 : index
      %c0_20 = arith.constant 0 : index
      %c0_21 = arith.constant 0 : index
      %30 = vector.load %arg21[%c0_19, %c0_20, %c0_21] : memref<1x1x32xf32, #tpu.memory_space<vmem>>, vector<1x1x32xf32>
      %31 = vector.shape_cast %30 : vector<1x1x32xf32> to vector<1x32xf32>
      %c0_22 = arith.constant 0 : index
      %c0_23 = arith.constant 0 : index
      %c0_24 = arith.constant 0 : index
      %32 = vector.load %arg4[%c0_22, %c0_23, %c0_24] : memref<2x8x8xf32, #tpu.memory_space<vmem>>, vector<2x8x8xf32>
      %33 = vector.extract_strided_slice %25 {offsets = [0, 0, 0], sizes = [2, 8, 8], strides = [1, 1, 1]} : vector<2x8x32xf32> to vector<2x8x8xf32>
      %34 = vector.extract_strided_slice %26 {offsets = [0, 0, 0], sizes = [2, 8, 8], strides = [1, 1, 1]} : vector<2x8x32xf32> to vector<2x8x8xf32>
      "tpu.trace_start"() <{level = 10 : i32, message = "bqd,bkd->bqk"}> : () -> ()
      %cst_25 = arith.constant dense<0.000000e+00> : vector<2x8x8xf32>
      %35 = tpu.matmul %33, %34, %cst_25 {dimension_numbers = #tpu.dot_dimension_numbers<[2], [2], [1], [1], [0, 0, 0, 1, 1, 1], [0], [0]>} : vector<2x8x8xf32>, vector<2x8x8xf32>, vector<2x8x8xf32> -> vector<2x8x8xf32>
      "tpu.trace_stop"() : () -> ()
      %cst_26 = arith.constant 0.353553385 : f32
      %36 = vector.broadcast %cst_26 : f32 to vector<2x8x8xf32>
      %37 = arith.mulf %35, %36 : vector<2x8x8xf32>
      %cst_27 = arith.constant 5.000000e-01 : f32
      %38 = vector.broadcast %cst_27 : f32 to vector<2x8x8xf32>
      %39 = arith.cmpf ogt, %32, %38 : vector<2x8x8xf32>
      %cst_28 = arith.constant -1.000000e+09 : f32
      %40 = vector.broadcast %cst_28 : f32 to vector<2x8x8xf32>
      %41 = arith.select %39, %37, %40 : vector<2x8x8xi1>, vector<2x8x8xf32>
      %cst_29 = arith.constant dense<0xFF800000> : vector<2x8xf32>
      %42 = vector.multi_reduction <maximumf>, %41, %cst_29 [2] : vector<2x8x8xf32> to vector<2x8xf32>
      %43 = vector.shape_cast %42 : vector<2x8xf32> to vector<2x8x1xf32>
      %44 = vector.broadcast %43 : vector<2x8x1xf32> to vector<2x8x8xf32>
      %45 = arith.subf %41, %44 : vector<2x8x8xf32>
      %46 = math.exp %45 : vector<2x8x8xf32>
      %cst_30 = arith.constant dense<0.000000e+00> : vector<2x8xf32>
      %47 = vector.multi_reduction <add>, %46, %cst_30 [2] : vector<2x8x8xf32> to vector<2x8xf32>
      %48 = vector.shape_cast %47 : vector<2x8xf32> to vector<2x8x1xf32>
      %49 = tpu.reciprocal %48 {approx = true} : vector<2x8x1xf32> -> vector<2x8x1xf32>
      %50 = vector.broadcast %49 : vector<2x8x1xf32> to vector<2x8x8xf32>
      %51 = arith.mulf %46, %50 : vector<2x8x8xf32>
      %52 = vector.extract_strided_slice %27 {offsets = [0, 0, 0], sizes = [2, 8, 8], strides = [1, 1, 1]} : vector<2x8x32xf32> to vector<2x8x8xf32>
      "tpu.trace_start"() <{level = 10 : i32, message = "bqk,bkd->bqd"}> : () -> ()
      %cst_31 = arith.constant dense<0.000000e+00> : vector<2x8x8xf32>
      %53 = tpu.matmul %51, %52, %cst_31 {dimension_numbers = #tpu.dot_dimension_numbers<[2], [1], [1], [2], [0, 0, 0, 1, 1, 2], [0], [0]>} : vector<2x8x8xf32>, vector<2x8x8xf32>, vector<2x8x8xf32> -> vector<2x8x8xf32>
      "tpu.trace_stop"() : () -> ()
      %54 = vector.shape_cast %53 : vector<2x8x8xf32> to vector<16x8xf32>
      %55 = vector.extract_strided_slice %29 {offsets = [0, 0], sizes = [8, 32], strides = [1, 1]} : vector<32x32xf32> to vector<8x32xf32>
      %cst_32 = arith.constant dense<0.000000e+00> : vector<16x32xf32>
      %56 = tpu.matmul %54, %55, %cst_32 {dimension_numbers = #tpu.dot_dimension_numbers<[1], [0], [0], [1], [0, 0, 1, 1], [], []>} : vector<16x8xf32>, vector<8x32xf32>, vector<16x32xf32> -> vector<16x32xf32>
      %57 = vector.extract_strided_slice %25 {offsets = [0, 0, 8], sizes = [2, 8, 8], strides = [1, 1, 1]} : vector<2x8x32xf32> to vector<2x8x8xf32>
      %58 = vector.extract_strided_slice %26 {offsets = [0, 0, 8], sizes = [2, 8, 8], strides = [1, 1, 1]} : vector<2x8x32xf32> to vector<2x8x8xf32>
      "tpu.trace_start"() <{level = 10 : i32, message = "bqd,bkd->bqk"}> : () -> ()
      %cst_33 = arith.constant dense<0.000000e+00> : vector<2x8x8xf32>
      %59 = tpu.matmul %57, %58, %cst_33 {dimension_numbers = #tpu.dot_dimension_numbers<[2], [2], [1], [1], [0, 0, 0, 1, 1, 1], [0], [0]>} : vector<2x8x8xf32>, vector<2x8x8xf32>, vector<2x8x8xf32> -> vector<2x8x8xf32>
      "tpu.trace_stop"() : () -> ()
      %cst_34 = arith.constant 0.353553385 : f32
      %60 = vector.broadcast %cst_34 : f32 to vector<2x8x8xf32>
      %61 = arith.mulf %59, %60 : vector<2x8x8xf32>
      %cst_35 = arith.constant 5.000000e-01 : f32
      %62 = vector.broadcast %cst_35 : f32 to vector<2x8x8xf32>
      %63 = arith.cmpf ogt, %32, %62 : vector<2x8x8xf32>
      %cst_36 = arith.constant -1.000000e+09 : f32
      %64 = vector.broadcast %cst_36 : f32 to vector<2x8x8xf32>
      %65 = arith.select %63, %61, %64 : vector<2x8x8xi1>, vector<2x8x8xf32>
      %cst_37 = arith.constant dense<0xFF800000> : vector<2x8xf32>
      %66 = vector.multi_reduction <maximumf>, %65, %cst_37 [2] : vector<2x8x8xf32> to vector<2x8xf32>
      %67 = vector.shape_cast %66 : vector<2x8xf32> to vector<2x8x1xf32>
      %68 = vector.broadcast %67 : vector<2x8x1xf32> to vector<2x8x8xf32>
      %69 = arith.subf %65, %68 : vector<2x8x8xf32>
      %70 = math.exp %69 : vector<2x8x8xf32>
      %cst_38 = arith.constant dense<0.000000e+00> : vector<2x8xf32>
      %71 = vector.multi_reduction <add>, %70, %cst_38 [2] : vector<2x8x8xf32> to vector<2x8xf32>
      %72 = vector.shape_cast %71 : vector<2x8xf32> to vector<2x8x1xf32>
      %73 = tpu.reciprocal %72 {approx = true} : vector<2x8x1xf32> -> vector<2x8x1xf32>
      %74 = vector.broadcast %73 : vector<2x8x1xf32> to vector<2x8x8xf32>
      %75 = arith.mulf %70, %74 : vector<2x8x8xf32>
      %76 = vector.extract_strided_slice %27 {offsets = [0, 0, 8], sizes = [2, 8, 8], strides = [1, 1, 1]} : vector<2x8x32xf32> to vector<2x8x8xf32>
      "tpu.trace_start"() <{level = 10 : i32, message = "bqk,bkd->bqd"}> : () -> ()
      %cst_39 = arith.constant dense<0.000000e+00> : vector<2x8x8xf32>
      %77 = tpu.matmul %75, %76, %cst_39 {dimension_numbers = #tpu.dot_dimension_numbers<[2], [1], [1], [2], [0, 0, 0, 1, 1, 2], [0], [0]>} : vector<2x8x8xf32>, vector<2x8x8xf32>, vector<2x8x8xf32> -> vector<2x8x8xf32>
      "tpu.trace_stop"() : () -> ()
      %78 = vector.shape_cast %77 : vector<2x8x8xf32> to vector<16x8xf32>
      %79 = vector.extract_strided_slice %29 {offsets = [8, 0], sizes = [8, 32], strides = [1, 1]} : vector<32x32xf32> to vector<8x32xf32>
      %cst_40 = arith.constant dense<0.000000e+00> : vector<16x32xf32>
      %80 = tpu.matmul %78, %79, %cst_40 {dimension_numbers = #tpu.dot_dimension_numbers<[1], [0], [0], [1], [0, 0, 1, 1], [], []>} : vector<16x8xf32>, vector<8x32xf32>, vector<16x32xf32> -> vector<16x32xf32>
      %81 = arith.addf %56, %80 : vector<16x32xf32>
      %82 = vector.extract_strided_slice %25 {offsets = [0, 0, 16], sizes = [2, 8, 8], strides = [1, 1, 1]} : vector<2x8x32xf32> to vector<2x8x8xf32>
      %83 = vector.extract_strided_slice %26 {offsets = [0, 0, 16], sizes = [2, 8, 8], strides = [1, 1, 1]} : vector<2x8x32xf32> to vector<2x8x8xf32>
      "tpu.trace_start"() <{level = 10 : i32, message = "bqd,bkd->bqk"}> : () -> ()
      %cst_41 = arith.constant dense<0.000000e+00> : vector<2x8x8xf32>
      %84 = tpu.matmul %82, %83, %cst_41 {dimension_numbers = #tpu.dot_dimension_numbers<[2], [2], [1], [1], [0, 0, 0, 1, 1, 1], [0], [0]>} : vector<2x8x8xf32>, vector<2x8x8xf32>, vector<2x8x8xf32> -> vector<2x8x8xf32>
      "tpu.trace_stop"() : () -> ()
      %cst_42 = arith.constant 0.353553385 : f32
      %85 = vector.broadcast %cst_42 : f32 to vector<2x8x8xf32>
      %86 = arith.mulf %84, %85 : vector<2x8x8xf32>
      %cst_43 = arith.constant 5.000000e-01 : f32
      %87 = vector.broadcast %cst_43 : f32 to vector<2x8x8xf32>
      %88 = arith.cmpf ogt, %32, %87 : vector<2x8x8xf32>
      %cst_44 = arith.constant -1.000000e+09 : f32
      %89 = vector.broadcast %cst_44 : f32 to vector<2x8x8xf32>
      %90 = arith.select %88, %86, %89 : vector<2x8x8xi1>, vector<2x8x8xf32>
      %cst_45 = arith.constant dense<0xFF800000> : vector<2x8xf32>
      %91 = vector.multi_reduction <maximumf>, %90, %cst_45 [2] : vector<2x8x8xf32> to vector<2x8xf32>
      %92 = vector.shape_cast %91 : vector<2x8xf32> to vector<2x8x1xf32>
      %93 = vector.broadcast %92 : vector<2x8x1xf32> to vector<2x8x8xf32>
      %94 = arith.subf %90, %93 : vector<2x8x8xf32>
      %95 = math.exp %94 : vector<2x8x8xf32>
      %cst_46 = arith.constant dense<0.000000e+00> : vector<2x8xf32>
      %96 = vector.multi_reduction <add>, %95, %cst_46 [2] : vector<2x8x8xf32> to vector<2x8xf32>
      %97 = vector.shape_cast %96 : vector<2x8xf32> to vector<2x8x1xf32>
      %98 = tpu.reciprocal %97 {approx = true} : vector<2x8x1xf32> -> vector<2x8x1xf32>
      %99 = vector.broadcast %98 : vector<2x8x1xf32> to vector<2x8x8xf32>
      %100 = arith.mulf %95, %99 : vector<2x8x8xf32>
      %101 = vector.extract_strided_slice %27 {offsets = [0, 0, 16], sizes = [2, 8, 8], strides = [1, 1, 1]} : vector<2x8x32xf32> to vector<2x8x8xf32>
      "tpu.trace_start"() <{level = 10 : i32, message = "bqk,bkd->bqd"}> : () -> ()
      %cst_47 = arith.constant dense<0.000000e+00> : vector<2x8x8xf32>
      %102 = tpu.matmul %100, %101, %cst_47 {dimension_numbers = #tpu.dot_dimension_numbers<[2], [1], [1], [2], [0, 0, 0, 1, 1, 2], [0], [0]>} : vector<2x8x8xf32>, vector<2x8x8xf32>, vector<2x8x8xf32> -> vector<2x8x8xf32>
      "tpu.trace_stop"() : () -> ()
      %103 = vector.shape_cast %102 : vector<2x8x8xf32> to vector<16x8xf32>
      %104 = vector.extract_strided_slice %29 {offsets = [16, 0], sizes = [8, 32], strides = [1, 1]} : vector<32x32xf32> to vector<8x32xf32>
      %cst_48 = arith.constant dense<0.000000e+00> : vector<16x32xf32>
      %105 = tpu.matmul %103, %104, %cst_48 {dimension_numbers = #tpu.dot_dimension_numbers<[1], [0], [0], [1], [0, 0, 1, 1], [], []>} : vector<16x8xf32>, vector<8x32xf32>, vector<16x32xf32> -> vector<16x32xf32>
      %106 = arith.addf %81, %105 : vector<16x32xf32>
      %107 = vector.extract_strided_slice %25 {offsets = [0, 0, 24], sizes = [2, 8, 8], strides = [1, 1, 1]} : vector<2x8x32xf32> to vector<2x8x8xf32>
      %108 = vector.extract_strided_slice %26 {offsets = [0, 0, 24], sizes = [2, 8, 8], strides = [1, 1, 1]} : vector<2x8x32xf32> to vector<2x8x8xf32>
      "tpu.trace_start"() <{level = 10 : i32, message = "bqd,bkd->bqk"}> : () -> ()
      %cst_49 = arith.constant dense<0.000000e+00> : vector<2x8x8xf32>
      %109 = tpu.matmul %107, %108, %cst_49 {dimension_numbers = #tpu.dot_dimension_numbers<[2], [2], [1], [1], [0, 0, 0, 1, 1, 1], [0], [0]>} : vector<2x8x8xf32>, vector<2x8x8xf32>, vector<2x8x8xf32> -> vector<2x8x8xf32>
      "tpu.trace_stop"() : () -> ()
      %cst_50 = arith.constant 0.353553385 : f32
      %110 = vector.broadcast %cst_50 : f32 to vector<2x8x8xf32>
      %111 = arith.mulf %109, %110 : vector<2x8x8xf32>
      %cst_51 = arith.constant 5.000000e-01 : f32
      %112 = vector.broadcast %cst_51 : f32 to vector<2x8x8xf32>
      %113 = arith.cmpf ogt, %32, %112 : vector<2x8x8xf32>
      %cst_52 = arith.constant -1.000000e+09 : f32
      %114 = vector.broadcast %cst_52 : f32 to vector<2x8x8xf32>
      %115 = arith.select %113, %111, %114 : vector<2x8x8xi1>, vector<2x8x8xf32>
      %cst_53 = arith.constant dense<0xFF800000> : vector<2x8xf32>
      %116 = vector.multi_reduction <maximumf>, %115, %cst_53 [2] : vector<2x8x8xf32> to vector<2x8xf32>
      %117 = vector.shape_cast %116 : vector<2x8xf32> to vector<2x8x1xf32>
      %118 = vector.broadcast %117 : vector<2x8x1xf32> to vector<2x8x8xf32>
      %119 = arith.subf %115, %118 : vector<2x8x8xf32>
      %120 = math.exp %119 : vector<2x8x8xf32>
      %cst_54 = arith.constant dense<0.000000e+00> : vector<2x8xf32>
      %121 = vector.multi_reduction <add>, %120, %cst_54 [2] : vector<2x8x8xf32> to vector<2x8xf32>
      %122 = vector.shape_cast %121 : vector<2x8xf32> to vector<2x8x1xf32>
      %123 = tpu.reciprocal %122 {approx = true} : vector<2x8x1xf32> -> vector<2x8x1xf32>
      %124 = vector.broadcast %123 : vector<2x8x1xf32> to vector<2x8x8xf32>
      %125 = arith.mulf %120, %124 : vector<2x8x8xf32>
      %126 = vector.extract_strided_slice %27 {offsets = [0, 0, 24], sizes = [2, 8, 8], strides = [1, 1, 1]} : vector<2x8x32xf32> to vector<2x8x8xf32>
      "tpu.trace_start"() <{level = 10 : i32, message = "bqk,bkd->bqd"}> : () -> ()
      %cst_55 = arith.constant dense<0.000000e+00> : vector<2x8x8xf32>
      %127 = tpu.matmul %125, %126, %cst_55 {dimension_numbers = #tpu.dot_dimension_numbers<[2], [1], [1], [2], [0, 0, 0, 1, 1, 2], [0], [0]>} : vector<2x8x8xf32>, vector<2x8x8xf32>, vector<2x8x8xf32> -> vector<2x8x8xf32>
      "tpu.trace_stop"() : () -> ()
      %128 = vector.shape_cast %127 : vector<2x8x8xf32> to vector<16x8xf32>
      %129 = vector.extract_strided_slice %29 {offsets = [24, 0], sizes = [8, 32], strides = [1, 1]} : vector<32x32xf32> to vector<8x32xf32>
      %cst_56 = arith.constant dense<0.000000e+00> : vector<16x32xf32>
      %130 = tpu.matmul %128, %129, %cst_56 {dimension_numbers = #tpu.dot_dimension_numbers<[1], [0], [0], [1], [0, 0, 1, 1], [], []>} : vector<16x8xf32>, vector<8x32xf32>, vector<16x32xf32> -> vector<16x32xf32>
      %131 = arith.addf %106, %130 : vector<16x32xf32>
      %132 = vector.broadcast %31 : vector<1x32xf32> to vector<16x32xf32>
      %133 = arith.addf %131, %132 : vector<16x32xf32>
      %134 = arith.addf %15, %133 : vector<16x32xf32>
      %c0_57 = arith.constant 0 : index
      %c0_58 = arith.constant 0 : index
      %c0_59 = arith.constant 0 : index
      %135 = vector.load %arg22[%c0_57, %c0_58, %c0_59] : memref<1x1x32xf32, #tpu.memory_space<vmem>>, vector<1x1x32xf32>
      %136 = vector.shape_cast %135 : vector<1x1x32xf32> to vector<1x32xf32>
      %c0_60 = arith.constant 0 : index
      %c0_61 = arith.constant 0 : index
      %c0_62 = arith.constant 0 : index
      %137 = vector.load %arg23[%c0_60, %c0_61, %c0_62] : memref<1x1x32xf32, #tpu.memory_space<vmem>>, vector<1x1x32xf32>
      %138 = vector.shape_cast %137 : vector<1x1x32xf32> to vector<1x32xf32>
      %cst_63 = arith.constant dense<0.000000e+00> : vector<16xf32>
      %139 = vector.multi_reduction <add>, %134, %cst_63 [1] : vector<16x32xf32> to vector<16xf32>
      %140 = vector.shape_cast %139 : vector<16xf32> to vector<16x1xf32>
      %cst_64 = arith.constant 3.200000e+01 : f32
      %141 = vector.broadcast %cst_64 : f32 to vector<16x1xf32>
      %142 = arith.divf %140, %141 : vector<16x1xf32>
      %143 = vector.broadcast %142 : vector<16x1xf32> to vector<16x32xf32>
      %144 = arith.subf %134, %143 : vector<16x32xf32>
      %145 = arith.mulf %144, %144 : vector<16x32xf32>
      %cst_65 = arith.constant dense<0.000000e+00> : vector<16xf32>
      %146 = vector.multi_reduction <add>, %145, %cst_65 [1] : vector<16x32xf32> to vector<16xf32>
      %147 = vector.shape_cast %146 : vector<16xf32> to vector<16x1xf32>
      %cst_66 = arith.constant 3.200000e+01 : f32
      %148 = vector.broadcast %cst_66 : f32 to vector<16x1xf32>
      %149 = arith.divf %147, %148 : vector<16x1xf32>
      %150 = vector.broadcast %142 : vector<16x1xf32> to vector<16x32xf32>
      %151 = arith.subf %134, %150 : vector<16x32xf32>
      %cst_67 = arith.constant 9.99999974E-6 : f32
      %152 = vector.broadcast %cst_67 : f32 to vector<16x1xf32>
      %153 = arith.addf %149, %152 : vector<16x1xf32>
      %154 = math.rsqrt %153 : vector<16x1xf32>
      %155 = vector.broadcast %154 : vector<16x1xf32> to vector<16x32xf32>
      %156 = arith.mulf %151, %155 : vector<16x32xf32>
      %157 = vector.broadcast %136 : vector<1x32xf32> to vector<16x32xf32>
      %158 = arith.mulf %156, %157 : vector<16x32xf32>
      %159 = vector.broadcast %138 : vector<1x32xf32> to vector<16x32xf32>
      %160 = arith.addf %158, %159 : vector<16x32xf32>
      %c0_68 = arith.constant 0 : index
      %c0_69 = arith.constant 0 : index
      %c0_70 = arith.constant 0 : index
      %161 = vector.load %arg24[%c0_68, %c0_69, %c0_70] : memref<1x32x32xf32, #tpu.memory_space<vmem>>, vector<1x32x32xf32>
      %162 = vector.shape_cast %161 : vector<1x32x32xf32> to vector<32x32xf32>
      %cst_71 = arith.constant dense<0.000000e+00> : vector<16x32xf32>
      %163 = tpu.matmul %160, %162, %cst_71 {dimension_numbers = #tpu.dot_dimension_numbers<[1], [0], [0], [1], [0, 0, 1, 1], [], []>} : vector<16x32xf32>, vector<32x32xf32>, vector<16x32xf32> -> vector<16x32xf32>
      %c0_72 = arith.constant 0 : index
      %c0_73 = arith.constant 0 : index
      %c0_74 = arith.constant 0 : index
      %164 = vector.load %arg25[%c0_72, %c0_73, %c0_74] : memref<1x1x32xf32, #tpu.memory_space<vmem>>, vector<1x1x32xf32>
      %165 = vector.shape_cast %164 : vector<1x1x32xf32> to vector<1x32xf32>
      %166 = vector.broadcast %165 : vector<1x32xf32> to vector<16x32xf32>
      %167 = arith.addf %163, %166 : vector<16x32xf32>
      %c0_75 = arith.constant 0 : index
      %c0_76 = arith.constant 0 : index
      %c0_77 = arith.constant 0 : index
      %168 = vector.load %arg26[%c0_75, %c0_76, %c0_77] : memref<1x32x64xf32, #tpu.memory_space<vmem>>, vector<1x32x64xf32>
      %169 = vector.shape_cast %168 : vector<1x32x64xf32> to vector<32x64xf32>
      %cst_78 = arith.constant dense<0.000000e+00> : vector<16x64xf32>
      %170 = tpu.matmul %16, %169, %cst_78 {dimension_numbers = #tpu.dot_dimension_numbers<[1], [0], [0], [1], [0, 0, 1, 1], [], []>} : vector<16x32xf32>, vector<32x64xf32>, vector<16x64xf32> -> vector<16x64xf32>
      %c0_79 = arith.constant 0 : index
      %c0_80 = arith.constant 0 : index
      %c0_81 = arith.constant 0 : index
      %171 = vector.load %arg27[%c0_79, %c0_80, %c0_81] : memref<1x1x64xf32, #tpu.memory_space<vmem>>, vector<1x1x64xf32>
      %172 = vector.shape_cast %171 : vector<1x1x64xf32> to vector<1x64xf32>
      %173 = vector.broadcast %172 : vector<1x64xf32> to vector<16x64xf32>
      %174 = arith.addf %170, %173 : vector<16x64xf32>
      %175 = vector.shape_cast %167 : vector<16x32xf32> to vector<2x8x32xf32>
      %176 = vector.shape_cast %174 : vector<16x64xf32> to vector<2x8x64xf32>
      %177 = vector.extract_strided_slice %176 {offsets = [0, 0, 0], sizes = [2, 8, 32], strides = [1, 1, 1]} : vector<2x8x64xf32> to vector<2x8x32xf32>
      %178 = vector.extract_strided_slice %176 {offsets = [0, 0, 32], sizes = [2, 8, 32], strides = [1, 1, 1]} : vector<2x8x64xf32> to vector<2x8x32xf32>
      %c0_82 = arith.constant 0 : index
      %c0_83 = arith.constant 0 : index
      %c0_84 = arith.constant 0 : index
      %179 = vector.load %arg28[%c0_82, %c0_83, %c0_84] : memref<1x32x32xf32, #tpu.memory_space<vmem>>, vector<1x32x32xf32>
      %180 = vector.shape_cast %179 : vector<1x32x32xf32> to vector<32x32xf32>
      %c0_85 = arith.constant 0 : index
      %c0_86 = arith.constant 0 : index
      %c0_87 = arith.constant 0 : index
      %181 = vector.load %arg29[%c0_85, %c0_86, %c0_87] : memref<1x1x32xf32, #tpu.memory_space<vmem>>, vector<1x1x32xf32>
      %182 = vector.shape_cast %181 : vector<1x1x32xf32> to vector<1x32xf32>
      %c0_88 = arith.constant 0 : index
      %c0_89 = arith.constant 0 : index
      %c0_90 = arith.constant 0 : index
      %183 = vector.load %arg5[%c0_88, %c0_89, %c0_90] : memref<2x8x8xf32, #tpu.memory_space<vmem>>, vector<2x8x8xf32>
      %184 = vector.extract_strided_slice %175 {offsets = [0, 0, 0], sizes = [2, 8, 8], strides = [1, 1, 1]} : vector<2x8x32xf32> to vector<2x8x8xf32>
      %185 = vector.extract_strided_slice %177 {offsets = [0, 0, 0], sizes = [2, 8, 8], strides = [1, 1, 1]} : vector<2x8x32xf32> to vector<2x8x8xf32>
      "tpu.trace_start"() <{level = 10 : i32, message = "bqd,bkd->bqk"}> : () -> ()
      %cst_91 = arith.constant dense<0.000000e+00> : vector<2x8x8xf32>
      %186 = tpu.matmul %184, %185, %cst_91 {dimension_numbers = #tpu.dot_dimension_numbers<[2], [2], [1], [1], [0, 0, 0, 1, 1, 1], [0], [0]>} : vector<2x8x8xf32>, vector<2x8x8xf32>, vector<2x8x8xf32> -> vector<2x8x8xf32>
      "tpu.trace_stop"() : () -> ()
      %cst_92 = arith.constant 0.353553385 : f32
      %187 = vector.broadcast %cst_92 : f32 to vector<2x8x8xf32>
      %188 = arith.mulf %186, %187 : vector<2x8x8xf32>
      %cst_93 = arith.constant 5.000000e-01 : f32
      %189 = vector.broadcast %cst_93 : f32 to vector<2x8x8xf32>
      %190 = arith.cmpf ogt, %183, %189 : vector<2x8x8xf32>
      %cst_94 = arith.constant -1.000000e+09 : f32
      %191 = vector.broadcast %cst_94 : f32 to vector<2x8x8xf32>
      %192 = arith.select %190, %188, %191 : vector<2x8x8xi1>, vector<2x8x8xf32>
      %cst_95 = arith.constant dense<0xFF800000> : vector<2x8xf32>
      %193 = vector.multi_reduction <maximumf>, %192, %cst_95 [2] : vector<2x8x8xf32> to vector<2x8xf32>
      %194 = vector.shape_cast %193 : vector<2x8xf32> to vector<2x8x1xf32>
      %195 = vector.broadcast %194 : vector<2x8x1xf32> to vector<2x8x8xf32>
      %196 = arith.subf %192, %195 : vector<2x8x8xf32>
      %197 = math.exp %196 : vector<2x8x8xf32>
      %cst_96 = arith.constant dense<0.000000e+00> : vector<2x8xf32>
      %198 = vector.multi_reduction <add>, %197, %cst_96 [2] : vector<2x8x8xf32> to vector<2x8xf32>
      %199 = vector.shape_cast %198 : vector<2x8xf32> to vector<2x8x1xf32>
      %200 = tpu.reciprocal %199 {approx = true} : vector<2x8x1xf32> -> vector<2x8x1xf32>
      %201 = vector.broadcast %200 : vector<2x8x1xf32> to vector<2x8x8xf32>
      %202 = arith.mulf %197, %201 : vector<2x8x8xf32>
      %203 = vector.extract_strided_slice %178 {offsets = [0, 0, 0], sizes = [2, 8, 8], strides = [1, 1, 1]} : vector<2x8x32xf32> to vector<2x8x8xf32>
      "tpu.trace_start"() <{level = 10 : i32, message = "bqk,bkd->bqd"}> : () -> ()
      %cst_97 = arith.constant dense<0.000000e+00> : vector<2x8x8xf32>
      %204 = tpu.matmul %202, %203, %cst_97 {dimension_numbers = #tpu.dot_dimension_numbers<[2], [1], [1], [2], [0, 0, 0, 1, 1, 2], [0], [0]>} : vector<2x8x8xf32>, vector<2x8x8xf32>, vector<2x8x8xf32> -> vector<2x8x8xf32>
      "tpu.trace_stop"() : () -> ()
      %205 = vector.shape_cast %204 : vector<2x8x8xf32> to vector<16x8xf32>
      %206 = vector.extract_strided_slice %180 {offsets = [0, 0], sizes = [8, 32], strides = [1, 1]} : vector<32x32xf32> to vector<8x32xf32>
      %cst_98 = arith.constant dense<0.000000e+00> : vector<16x32xf32>
      %207 = tpu.matmul %205, %206, %cst_98 {dimension_numbers = #tpu.dot_dimension_numbers<[1], [0], [0], [1], [0, 0, 1, 1], [], []>} : vector<16x8xf32>, vector<8x32xf32>, vector<16x32xf32> -> vector<16x32xf32>
      %208 = vector.extract_strided_slice %175 {offsets = [0, 0, 8], sizes = [2, 8, 8], strides = [1, 1, 1]} : vector<2x8x32xf32> to vector<2x8x8xf32>
      %209 = vector.extract_strided_slice %177 {offsets = [0, 0, 8], sizes = [2, 8, 8], strides = [1, 1, 1]} : vector<2x8x32xf32> to vector<2x8x8xf32>
      "tpu.trace_start"() <{level = 10 : i32, message = "bqd,bkd->bqk"}> : () -> ()
      %cst_99 = arith.constant dense<0.000000e+00> : vector<2x8x8xf32>
      %210 = tpu.matmul %208, %209, %cst_99 {dimension_numbers = #tpu.dot_dimension_numbers<[2], [2], [1], [1], [0, 0, 0, 1, 1, 1], [0], [0]>} : vector<2x8x8xf32>, vector<2x8x8xf32>, vector<2x8x8xf32> -> vector<2x8x8xf32>
      "tpu.trace_stop"() : () -> ()
      %cst_100 = arith.constant 0.353553385 : f32
      %211 = vector.broadcast %cst_100 : f32 to vector<2x8x8xf32>
      %212 = arith.mulf %210, %211 : vector<2x8x8xf32>
      %cst_101 = arith.constant 5.000000e-01 : f32
      %213 = vector.broadcast %cst_101 : f32 to vector<2x8x8xf32>
      %214 = arith.cmpf ogt, %183, %213 : vector<2x8x8xf32>
      %cst_102 = arith.constant -1.000000e+09 : f32
      %215 = vector.broadcast %cst_102 : f32 to vector<2x8x8xf32>
      %216 = arith.select %214, %212, %215 : vector<2x8x8xi1>, vector<2x8x8xf32>
      %cst_103 = arith.constant dense<0xFF800000> : vector<2x8xf32>
      %217 = vector.multi_reduction <maximumf>, %216, %cst_103 [2] : vector<2x8x8xf32> to vector<2x8xf32>
      %218 = vector.shape_cast %217 : vector<2x8xf32> to vector<2x8x1xf32>
      %219 = vector.broadcast %218 : vector<2x8x1xf32> to vector<2x8x8xf32>
      %220 = arith.subf %216, %219 : vector<2x8x8xf32>
      %221 = math.exp %220 : vector<2x8x8xf32>
      %cst_104 = arith.constant dense<0.000000e+00> : vector<2x8xf32>
      %222 = vector.multi_reduction <add>, %221, %cst_104 [2] : vector<2x8x8xf32> to vector<2x8xf32>
      %223 = vector.shape_cast %222 : vector<2x8xf32> to vector<2x8x1xf32>
      %224 = tpu.reciprocal %223 {approx = true} : vector<2x8x1xf32> -> vector<2x8x1xf32>
      %225 = vector.broadcast %224 : vector<2x8x1xf32> to vector<2x8x8xf32>
      %226 = arith.mulf %221, %225 : vector<2x8x8xf32>
      %227 = vector.extract_strided_slice %178 {offsets = [0, 0, 8], sizes = [2, 8, 8], strides = [1, 1, 1]} : vector<2x8x32xf32> to vector<2x8x8xf32>
      "tpu.trace_start"() <{level = 10 : i32, message = "bqk,bkd->bqd"}> : () -> ()
      %cst_105 = arith.constant dense<0.000000e+00> : vector<2x8x8xf32>
      %228 = tpu.matmul %226, %227, %cst_105 {dimension_numbers = #tpu.dot_dimension_numbers<[2], [1], [1], [2], [0, 0, 0, 1, 1, 2], [0], [0]>} : vector<2x8x8xf32>, vector<2x8x8xf32>, vector<2x8x8xf32> -> vector<2x8x8xf32>
      "tpu.trace_stop"() : () -> ()
      %229 = vector.shape_cast %228 : vector<2x8x8xf32> to vector<16x8xf32>
      %230 = vector.extract_strided_slice %180 {offsets = [8, 0], sizes = [8, 32], strides = [1, 1]} : vector<32x32xf32> to vector<8x32xf32>
      %cst_106 = arith.constant dense<0.000000e+00> : vector<16x32xf32>
      %231 = tpu.matmul %229, %230, %cst_106 {dimension_numbers = #tpu.dot_dimension_numbers<[1], [0], [0], [1], [0, 0, 1, 1], [], []>} : vector<16x8xf32>, vector<8x32xf32>, vector<16x32xf32> -> vector<16x32xf32>
      %232 = arith.addf %207, %231 : vector<16x32xf32>
      %233 = vector.extract_strided_slice %175 {offsets = [0, 0, 16], sizes = [2, 8, 8], strides = [1, 1, 1]} : vector<2x8x32xf32> to vector<2x8x8xf32>
      %234 = vector.extract_strided_slice %177 {offsets = [0, 0, 16], sizes = [2, 8, 8], strides = [1, 1, 1]} : vector<2x8x32xf32> to vector<2x8x8xf32>
      "tpu.trace_start"() <{level = 10 : i32, message = "bqd,bkd->bqk"}> : () -> ()
      %cst_107 = arith.constant dense<0.000000e+00> : vector<2x8x8xf32>
      %235 = tpu.matmul %233, %234, %cst_107 {dimension_numbers = #tpu.dot_dimension_numbers<[2], [2], [1], [1], [0, 0, 0, 1, 1, 1], [0], [0]>} : vector<2x8x8xf32>, vector<2x8x8xf32>, vector<2x8x8xf32> -> vector<2x8x8xf32>
      "tpu.trace_stop"() : () -> ()
      %cst_108 = arith.constant 0.353553385 : f32
      %236 = vector.broadcast %cst_108 : f32 to vector<2x8x8xf32>
      %237 = arith.mulf %235, %236 : vector<2x8x8xf32>
      %cst_109 = arith.constant 5.000000e-01 : f32
      %238 = vector.broadcast %cst_109 : f32 to vector<2x8x8xf32>
      %239 = arith.cmpf ogt, %183, %238 : vector<2x8x8xf32>
      %cst_110 = arith.constant -1.000000e+09 : f32
      %240 = vector.broadcast %cst_110 : f32 to vector<2x8x8xf32>
      %241 = arith.select %239, %237, %240 : vector<2x8x8xi1>, vector<2x8x8xf32>
      %cst_111 = arith.constant dense<0xFF800000> : vector<2x8xf32>
      %242 = vector.multi_reduction <maximumf>, %241, %cst_111 [2] : vector<2x8x8xf32> to vector<2x8xf32>
      %243 = vector.shape_cast %242 : vector<2x8xf32> to vector<2x8x1xf32>
      %244 = vector.broadcast %243 : vector<2x8x1xf32> to vector<2x8x8xf32>
      %245 = arith.subf %241, %244 : vector<2x8x8xf32>
      %246 = math.exp %245 : vector<2x8x8xf32>
      %cst_112 = arith.constant dense<0.000000e+00> : vector<2x8xf32>
      %247 = vector.multi_reduction <add>, %246, %cst_112 [2] : vector<2x8x8xf32> to vector<2x8xf32>
      %248 = vector.shape_cast %247 : vector<2x8xf32> to vector<2x8x1xf32>
      %249 = tpu.reciprocal %248 {approx = true} : vector<2x8x1xf32> -> vector<2x8x1xf32>
      %250 = vector.broadcast %249 : vector<2x8x1xf32> to vector<2x8x8xf32>
      %251 = arith.mulf %246, %250 : vector<2x8x8xf32>
      %252 = vector.extract_strided_slice %178 {offsets = [0, 0, 16], sizes = [2, 8, 8], strides = [1, 1, 1]} : vector<2x8x32xf32> to vector<2x8x8xf32>
      "tpu.trace_start"() <{level = 10 : i32, message = "bqk,bkd->bqd"}> : () -> ()
      %cst_113 = arith.constant dense<0.000000e+00> : vector<2x8x8xf32>
      %253 = tpu.matmul %251, %252, %cst_113 {dimension_numbers = #tpu.dot_dimension_numbers<[2], [1], [1], [2], [0, 0, 0, 1, 1, 2], [0], [0]>} : vector<2x8x8xf32>, vector<2x8x8xf32>, vector<2x8x8xf32> -> vector<2x8x8xf32>
      "tpu.trace_stop"() : () -> ()
      %254 = vector.shape_cast %253 : vector<2x8x8xf32> to vector<16x8xf32>
      %255 = vector.extract_strided_slice %180 {offsets = [16, 0], sizes = [8, 32], strides = [1, 1]} : vector<32x32xf32> to vector<8x32xf32>
      %cst_114 = arith.constant dense<0.000000e+00> : vector<16x32xf32>
      %256 = tpu.matmul %254, %255, %cst_114 {dimension_numbers = #tpu.dot_dimension_numbers<[1], [0], [0], [1], [0, 0, 1, 1], [], []>} : vector<16x8xf32>, vector<8x32xf32>, vector<16x32xf32> -> vector<16x32xf32>
      %257 = arith.addf %232, %256 : vector<16x32xf32>
      %258 = vector.extract_strided_slice %175 {offsets = [0, 0, 24], sizes = [2, 8, 8], strides = [1, 1, 1]} : vector<2x8x32xf32> to vector<2x8x8xf32>
      %259 = vector.extract_strided_slice %177 {offsets = [0, 0, 24], sizes = [2, 8, 8], strides = [1, 1, 1]} : vector<2x8x32xf32> to vector<2x8x8xf32>
      "tpu.trace_start"() <{level = 10 : i32, message = "bqd,bkd->bqk"}> : () -> ()
      %cst_115 = arith.constant dense<0.000000e+00> : vector<2x8x8xf32>
      %260 = tpu.matmul %258, %259, %cst_115 {dimension_numbers = #tpu.dot_dimension_numbers<[2], [2], [1], [1], [0, 0, 0, 1, 1, 1], [0], [0]>} : vector<2x8x8xf32>, vector<2x8x8xf32>, vector<2x8x8xf32> -> vector<2x8x8xf32>
      "tpu.trace_stop"() : () -> ()
      %cst_116 = arith.constant 0.353553385 : f32
      %261 = vector.broadcast %cst_116 : f32 to vector<2x8x8xf32>
      %262 = arith.mulf %260, %261 : vector<2x8x8xf32>
      %cst_117 = arith.constant 5.000000e-01 : f32
      %263 = vector.broadcast %cst_117 : f32 to vector<2x8x8xf32>
      %264 = arith.cmpf ogt, %183, %263 : vector<2x8x8xf32>
      %cst_118 = arith.constant -1.000000e+09 : f32
      %265 = vector.broadcast %cst_118 : f32 to vector<2x8x8xf32>
      %266 = arith.select %264, %262, %265 : vector<2x8x8xi1>, vector<2x8x8xf32>
      %cst_119 = arith.constant dense<0xFF800000> : vector<2x8xf32>
      %267 = vector.multi_reduction <maximumf>, %266, %cst_119 [2] : vector<2x8x8xf32> to vector<2x8xf32>
      %268 = vector.shape_cast %267 : vector<2x8xf32> to vector<2x8x1xf32>
      %269 = vector.broadcast %268 : vector<2x8x1xf32> to vector<2x8x8xf32>
      %270 = arith.subf %266, %269 : vector<2x8x8xf32>
      %271 = math.exp %270 : vector<2x8x8xf32>
      %cst_120 = arith.constant dense<0.000000e+00> : vector<2x8xf32>
      %272 = vector.multi_reduction <add>, %271, %cst_120 [2] : vector<2x8x8xf32> to vector<2x8xf32>
      %273 = vector.shape_cast %272 : vector<2x8xf32> to vector<2x8x1xf32>
      %274 = tpu.reciprocal %273 {approx = true} : vector<2x8x1xf32> -> vector<2x8x1xf32>
      %275 = vector.broadcast %274 : vector<2x8x1xf32> to vector<2x8x8xf32>
      %276 = arith.mulf %271, %275 : vector<2x8x8xf32>
      %277 = vector.extract_strided_slice %178 {offsets = [0, 0, 24], sizes = [2, 8, 8], strides = [1, 1, 1]} : vector<2x8x32xf32> to vector<2x8x8xf32>
      "tpu.trace_start"() <{level = 10 : i32, message = "bqk,bkd->bqd"}> : () -> ()
      %cst_121 = arith.constant dense<0.000000e+00> : vector<2x8x8xf32>
      %278 = tpu.matmul %276, %277, %cst_121 {dimension_numbers = #tpu.dot_dimension_numbers<[2], [1], [1], [2], [0, 0, 0, 1, 1, 2], [0], [0]>} : vector<2x8x8xf32>, vector<2x8x8xf32>, vector<2x8x8xf32> -> vector<2x8x8xf32>
      "tpu.trace_stop"() : () -> ()
      %279 = vector.shape_cast %278 : vector<2x8x8xf32> to vector<16x8xf32>
      %280 = vector.extract_strided_slice %180 {offsets = [24, 0], sizes = [8, 32], strides = [1, 1]} : vector<32x32xf32> to vector<8x32xf32>
      %cst_122 = arith.constant dense<0.000000e+00> : vector<16x32xf32>
      %281 = tpu.matmul %279, %280, %cst_122 {dimension_numbers = #tpu.dot_dimension_numbers<[1], [0], [0], [1], [0, 0, 1, 1], [], []>} : vector<16x8xf32>, vector<8x32xf32>, vector<16x32xf32> -> vector<16x32xf32>
      %282 = arith.addf %257, %281 : vector<16x32xf32>
      %283 = vector.broadcast %182 : vector<1x32xf32> to vector<16x32xf32>
      %284 = arith.addf %282, %283 : vector<16x32xf32>
      %285 = arith.addf %160, %284 : vector<16x32xf32>
      %c0_123 = arith.constant 0 : index
      %c0_124 = arith.constant 0 : index
      %c0_125 = arith.constant 0 : index
      %286 = vector.load %arg30[%c0_123, %c0_124, %c0_125] : memref<1x1x32xf32, #tpu.memory_space<vmem>>, vector<1x1x32xf32>
      %287 = vector.shape_cast %286 : vector<1x1x32xf32> to vector<1x32xf32>
      %c0_126 = arith.constant 0 : index
      %c0_127 = arith.constant 0 : index
      %c0_128 = arith.constant 0 : index
      %288 = vector.load %arg31[%c0_126, %c0_127, %c0_128] : memref<1x1x32xf32, #tpu.memory_space<vmem>>, vector<1x1x32xf32>
      %289 = vector.shape_cast %288 : vector<1x1x32xf32> to vector<1x32xf32>
      %cst_129 = arith.constant dense<0.000000e+00> : vector<16xf32>
      %290 = vector.multi_reduction <add>, %285, %cst_129 [1] : vector<16x32xf32> to vector<16xf32>
      %291 = vector.shape_cast %290 : vector<16xf32> to vector<16x1xf32>
      %cst_130 = arith.constant 3.200000e+01 : f32
      %292 = vector.broadcast %cst_130 : f32 to vector<16x1xf32>
      %293 = arith.divf %291, %292 : vector<16x1xf32>
      %294 = vector.broadcast %293 : vector<16x1xf32> to vector<16x32xf32>
      %295 = arith.subf %285, %294 : vector<16x32xf32>
      %296 = arith.mulf %295, %295 : vector<16x32xf32>
      %cst_131 = arith.constant dense<0.000000e+00> : vector<16xf32>
      %297 = vector.multi_reduction <add>, %296, %cst_131 [1] : vector<16x32xf32> to vector<16xf32>
      %298 = vector.shape_cast %297 : vector<16xf32> to vector<16x1xf32>
      %cst_132 = arith.constant 3.200000e+01 : f32
      %299 = vector.broadcast %cst_132 : f32 to vector<16x1xf32>
      %300 = arith.divf %298, %299 : vector<16x1xf32>
      %301 = vector.broadcast %293 : vector<16x1xf32> to vector<16x32xf32>
      %302 = arith.subf %285, %301 : vector<16x32xf32>
      %cst_133 = arith.constant 9.99999974E-6 : f32
      %303 = vector.broadcast %cst_133 : f32 to vector<16x1xf32>
      %304 = arith.addf %300, %303 : vector<16x1xf32>
      %305 = math.rsqrt %304 : vector<16x1xf32>
      %306 = vector.broadcast %305 : vector<16x1xf32> to vector<16x32xf32>
      %307 = arith.mulf %302, %306 : vector<16x32xf32>
      %308 = vector.broadcast %287 : vector<1x32xf32> to vector<16x32xf32>
      %309 = arith.mulf %307, %308 : vector<16x32xf32>
      %310 = vector.broadcast %289 : vector<1x32xf32> to vector<16x32xf32>
      %311 = arith.addf %309, %310 : vector<16x32xf32>
      %c0_134 = arith.constant 0 : index
      %c0_135 = arith.constant 0 : index
      %c0_136 = arith.constant 0 : index
      %312 = vector.load %arg32[%c0_134, %c0_135, %c0_136] : memref<1x32x64xf32, #tpu.memory_space<vmem>>, vector<1x32x64xf32>
      %313 = vector.shape_cast %312 : vector<1x32x64xf32> to vector<32x64xf32>
      %cst_137 = arith.constant dense<0.000000e+00> : vector<16x64xf32>
      %314 = tpu.matmul %311, %313, %cst_137 {dimension_numbers = #tpu.dot_dimension_numbers<[1], [0], [0], [1], [0, 0, 1, 1], [], []>} : vector<16x32xf32>, vector<32x64xf32>, vector<16x64xf32> -> vector<16x64xf32>
      %c0_138 = arith.constant 0 : index
      %c0_139 = arith.constant 0 : index
      %c0_140 = arith.constant 0 : index
      %315 = vector.load %arg33[%c0_138, %c0_139, %c0_140] : memref<1x1x64xf32, #tpu.memory_space<vmem>>, vector<1x1x64xf32>
      %316 = vector.shape_cast %315 : vector<1x1x64xf32> to vector<1x64xf32>
      %317 = vector.broadcast %316 : vector<1x64xf32> to vector<16x64xf32>
      %318 = arith.addf %314, %317 : vector<16x64xf32>
      %cst_141 = arith.constant 0.000000e+00 : f32
      %319 = vector.broadcast %cst_141 : f32 to vector<16x64xf32>
      %320 = arith.maximumf %318, %319 : vector<16x64xf32>
      %c0_142 = arith.constant 0 : index
      %c0_143 = arith.constant 0 : index
      %c0_144 = arith.constant 0 : index
      %321 = vector.load %arg34[%c0_142, %c0_143, %c0_144] : memref<1x64x32xf32, #tpu.memory_space<vmem>>, vector<1x64x32xf32>
      %322 = vector.shape_cast %321 : vector<1x64x32xf32> to vector<64x32xf32>
      %cst_145 = arith.constant dense<0.000000e+00> : vector<16x32xf32>
      %323 = tpu.matmul %320, %322, %cst_145 {dimension_numbers = #tpu.dot_dimension_numbers<[1], [0], [0], [1], [0, 0, 1, 1], [], []>} : vector<16x64xf32>, vector<64x32xf32>, vector<16x32xf32> -> vector<16x32xf32>
      %c0_146 = arith.constant 0 : index
      %c0_147 = arith.constant 0 : index
      %c0_148 = arith.constant 0 : index
      %324 = vector.load %arg35[%c0_146, %c0_147, %c0_148] : memref<1x1x32xf32, #tpu.memory_space<vmem>>, vector<1x1x32xf32>
      %325 = vector.shape_cast %324 : vector<1x1x32xf32> to vector<1x32xf32>
      %326 = vector.broadcast %325 : vector<1x32xf32> to vector<16x32xf32>
      %327 = arith.addf %323, %326 : vector<16x32xf32>
      %328 = arith.addf %311, %327 : vector<16x32xf32>
      %c0_149 = arith.constant 0 : index
      %c0_150 = arith.constant 0 : index
      %c0_151 = arith.constant 0 : index
      %329 = vector.load %arg36[%c0_149, %c0_150, %c0_151] : memref<1x1x32xf32, #tpu.memory_space<vmem>>, vector<1x1x32xf32>
      %330 = vector.shape_cast %329 : vector<1x1x32xf32> to vector<1x32xf32>
      %c0_152 = arith.constant 0 : index
      %c0_153 = arith.constant 0 : index
      %c0_154 = arith.constant 0 : index
      %331 = vector.load %arg37[%c0_152, %c0_153, %c0_154] : memref<1x1x32xf32, #tpu.memory_space<vmem>>, vector<1x1x32xf32>
      %332 = vector.shape_cast %331 : vector<1x1x32xf32> to vector<1x32xf32>
      %cst_155 = arith.constant dense<0.000000e+00> : vector<16xf32>
      %333 = vector.multi_reduction <add>, %328, %cst_155 [1] : vector<16x32xf32> to vector<16xf32>
      %334 = vector.shape_cast %333 : vector<16xf32> to vector<16x1xf32>
      %cst_156 = arith.constant 3.200000e+01 : f32
      %335 = vector.broadcast %cst_156 : f32 to vector<16x1xf32>
      %336 = arith.divf %334, %335 : vector<16x1xf32>
      %337 = vector.broadcast %336 : vector<16x1xf32> to vector<16x32xf32>
      %338 = arith.subf %328, %337 : vector<16x32xf32>
      %339 = arith.mulf %338, %338 : vector<16x32xf32>
      %cst_157 = arith.constant dense<0.000000e+00> : vector<16xf32>
      %340 = vector.multi_reduction <add>, %339, %cst_157 [1] : vector<16x32xf32> to vector<16xf32>
      %341 = vector.shape_cast %340 : vector<16xf32> to vector<16x1xf32>
      %cst_158 = arith.constant 3.200000e+01 : f32
      %342 = vector.broadcast %cst_158 : f32 to vector<16x1xf32>
      %343 = arith.divf %341, %342 : vector<16x1xf32>
      %344 = vector.broadcast %336 : vector<16x1xf32> to vector<16x32xf32>
      %345 = arith.subf %328, %344 : vector<16x32xf32>
      %cst_159 = arith.constant 9.99999974E-6 : f32
      %346 = vector.broadcast %cst_159 : f32 to vector<16x1xf32>
      %347 = arith.addf %343, %346 : vector<16x1xf32>
      %348 = math.rsqrt %347 : vector<16x1xf32>
      %349 = vector.broadcast %348 : vector<16x1xf32> to vector<16x32xf32>
      %350 = arith.mulf %345, %349 : vector<16x32xf32>
      %351 = vector.broadcast %330 : vector<1x32xf32> to vector<16x32xf32>
      %352 = arith.mulf %350, %351 : vector<16x32xf32>
      %353 = vector.broadcast %332 : vector<1x32xf32> to vector<16x32xf32>
      %354 = arith.addf %352, %353 : vector<16x32xf32>
      %c0_160 = arith.constant 0 : index
      %c0_161 = arith.constant 0 : index
      %355 = vector.load %arg42[%c0_160, %c0_161] : memref<16x32xf32, #tpu.memory_space<vmem>>, vector<16x32xf32>
      tpu.vector_store %arg42[%c0_160, %c0_161], %354 {strides = array<i32>} : memref<16x32xf32, #tpu.memory_space<vmem>>, vector<16x32xf32>,
    } else {
    }
    %c3_i32 = arith.constant 3 : i32
    %12 = arith.cmpi eq, %arg0, %c3_i32 : i32
    %13 = arith.extui %12 : i1 to i32
    %c0_i32_6 = arith.constant 0 : i32
    %14 = arith.cmpi ne, %13, %c0_i32_6 : i32
    scf.if %14 {
      %c0 = arith.constant 0 : index
      %c0_7 = arith.constant 0 : index
      %15 = vector.load %arg42[%c0, %c0_7] : memref<16x32xf32, #tpu.memory_space<vmem>>, vector<16x32xf32>
      %c0_8 = arith.constant 0 : index
      %c0_9 = arith.constant 0 : index
      %16 = vector.load %arg38[%c0_8, %c0_9] : memref<32x128xf32, #tpu.memory_space<vmem>>, vector<32x128xf32>
      %cst = arith.constant dense<0.000000e+00> : vector<16x128xf32>
      %17 = tpu.matmul %15, %16, %cst {dimension_numbers = #tpu.dot_dimension_numbers<[1], [0], [0], [1], [0, 0, 1, 1], [], []>} : vector<16x32xf32>, vector<32x128xf32>, vector<16x128xf32> -> vector<16x128xf32>
      %c0_10 = arith.constant 0 : index
      %c0_11 = arith.constant 0 : index
      %18 = vector.load %arg39[%c0_10, %c0_11] : memref<1x128xf32, #tpu.memory_space<vmem>>, vector<1x128xf32>
      %19 = vector.broadcast %18 : vector<1x128xf32> to vector<16x128xf32>
      %20 = arith.addf %17, %19 : vector<16x128xf32>
      %c0_12 = arith.constant 0 : index
      %c0_13 = arith.constant 0 : index
      %21 = vector.load %arg40[%c0_12, %c0_13] : memref<16x128xf32, #tpu.memory_space<vmem>>, vector<16x128xf32>
      tpu.vector_store %arg40[%c0_12, %c0_13], %20 {strides = array<i32>} : memref<16x128xf32, #tpu.memory_space<vmem>>, vector<16x128xf32>,
    } else {
    }
    return
  }
  func.func @transform_0(%arg0: i32) -> (i32, i32) {
    %c0_i32 = arith.constant 0 : i32
    %c0_i32_0 = arith.constant 0 : i32
    %c0_i32_1 = arith.constant 0 : i32
    return %c0_i32, %c0_i32_0 : i32, i32
  }
  func.func @transform_1(%arg0: i32) -> (i32, i32) {
    %c0_i32 = arith.constant 0 : i32
    %c0_i32_0 = arith.constant 0 : i32
    %c0_i32_1 = arith.constant 0 : i32
    return %c0_i32, %c0_i32_0 : i32, i32
  }
  func.func @transform_2(%arg0: i32) -> (i32, i32, i32) {
    %c0_i32 = arith.constant 0 : i32
    %c0_i32_0 = arith.constant 0 : i32
    %c0_i32_1 = arith.constant 0 : i32
    %c0_i32_2 = arith.constant 0 : i32
    return %c0_i32, %c0_i32_0, %c0_i32_1 : i32, i32, i32
  }
  func.func @transform_3(%arg0: i32) -> (i32, i32, i32) {
    %c0_i32 = arith.constant 0 : i32
    %c0_i32_0 = arith.constant 0 : i32
    %c0_i32_1 = arith.constant 0 : i32
    %c0_i32_2 = arith.constant 0 : i32
    return %c0_i32, %c0_i32_0, %c0_i32_1 : i32, i32, i32
  }
  func.func @transform_4(%arg0: i32) -> (i32, i32, i32) {
    %c0_i32 = arith.constant 0 : i32
    %c0_i32_0 = arith.constant 0 : i32
    %c0_i32_1 = arith.constant 0 : i32
    %c0_i32_2 = arith.constant 0 : i32
    return %c0_i32, %c0_i32_0, %c0_i32_1 : i32, i32, i32
  }
  func.func @transform_5(%arg0: i32) -> (i32, i32, i32) {
    %c1_i32 = arith.constant 1 : i32
    %0 = arith.minsi %arg0, %c1_i32 : i32
    %c0_i32 = arith.constant 0 : i32
    %c0_i32_0 = arith.constant 0 : i32
    %c0_i32_1 = arith.constant 0 : i32
    return %0, %c0_i32, %c0_i32_0 : i32, i32, i32
  }
  func.func @transform_6(%arg0: i32) -> (i32, i32, i32) {
    %c1_i32 = arith.constant 1 : i32
    %0 = arith.minsi %arg0, %c1_i32 : i32
    %c0_i32 = arith.constant 0 : i32
    %c0_i32_0 = arith.constant 0 : i32
    %c0_i32_1 = arith.constant 0 : i32
    return %0, %c0_i32, %c0_i32_0 : i32, i32, i32
  }
  func.func @transform_7(%arg0: i32) -> (i32, i32, i32) {
    %c1_i32 = arith.constant 1 : i32
    %0 = arith.minsi %arg0, %c1_i32 : i32
    %c0_i32 = arith.constant 0 : i32
    %c0_i32_0 = arith.constant 0 : i32
    %c0_i32_1 = arith.constant 0 : i32
    return %0, %c0_i32, %c0_i32_0 : i32, i32, i32
  }
  func.func @transform_8(%arg0: i32) -> (i32, i32, i32) {
    %c1_i32 = arith.constant 1 : i32
    %0 = arith.minsi %arg0, %c1_i32 : i32
    %c0_i32 = arith.constant 0 : i32
    %c0_i32_0 = arith.constant 0 : i32
    %c0_i32_1 = arith.constant 0 : i32
    return %0, %c0_i32, %c0_i32_0 : i32, i32, i32
  }
  func.func @transform_9(%arg0: i32) -> (i32, i32, i32) {
    %c1_i32 = arith.constant 1 : i32
    %0 = arith.minsi %arg0, %c1_i32 : i32
    %c0_i32 = arith.constant 0 : i32
    %c0_i32_0 = arith.constant 0 : i32
    %c0_i32_1 = arith.constant 0 : i32
    return %0, %c0_i32, %c0_i32_0 : i32, i32, i32
  }
  func.func @transform_10(%arg0: i32) -> (i32, i32, i32) {
    %c1_i32 = arith.constant 1 : i32
    %0 = arith.minsi %arg0, %c1_i32 : i32
    %c0_i32 = arith.constant 0 : i32
    %c0_i32_0 = arith.constant 0 : i32
    %c0_i32_1 = arith.constant 0 : i32
    return %0, %c0_i32, %c0_i32_0 : i32, i32, i32
  }
  func.func @transform_11(%arg0: i32) -> (i32, i32, i32) {
    %c1_i32 = arith.constant 1 : i32
    %0 = arith.minsi %arg0, %c1_i32 : i32
    %c0_i32 = arith.constant 0 : i32
    %c0_i32_0 = arith.constant 0 : i32
    %c0_i32_1 = arith.constant 0 : i32
    return %0, %c0_i32, %c0_i32_0 : i32, i32, i32
  }
  func.func @transform_12(%arg0: i32) -> (i32, i32, i32) {
    %c1_i32 = arith.constant 1 : i32
    %0 = arith.minsi %arg0, %c1_i32 : i32
    %c0_i32 = arith.constant 0 : i32
    %c0_i32_0 = arith.constant 0 : i32
    %c0_i32_1 = arith.constant 0 : i32
    return %0, %c0_i32, %c0_i32_0 : i32, i32, i32
  }
  func.func @transform_13(%arg0: i32) -> (i32, i32, i32) {
    %c1_i32 = arith.constant 1 : i32
    %0 = arith.minsi %arg0, %c1_i32 : i32
    %c0_i32 = arith.constant 0 : i32
    %c0_i32_0 = arith.constant 0 : i32
    %c0_i32_1 = arith.constant 0 : i32
    return %0, %c0_i32, %c0_i32_0 : i32, i32, i32
  }
  func.func @transform_14(%arg0: i32) -> (i32, i32, i32) {
    %c1_i32 = arith.constant 1 : i32
    %0 = arith.minsi %arg0, %c1_i32 : i32
    %c0_i32 = arith.constant 0 : i32
    %c0_i32_0 = arith.constant 0 : i32
    %c0_i32_1 = arith.constant 0 : i32
    return %0, %c0_i32, %c0_i32_0 : i32, i32, i32
  }
  func.func @transform_15(%arg0: i32) -> (i32, i32, i32) {
    %c1_i32 = arith.constant 1 : i32
    %0 = arith.minsi %arg0, %c1_i32 : i32
    %c0_i32 = arith.constant 0 : i32
    %c0_i32_0 = arith.constant 0 : i32
    %c0_i32_1 = arith.constant 0 : i32
    return %0, %c0_i32, %c0_i32_0 : i32, i32, i32
  }
  func.func @transform_16(%arg0: i32) -> (i32, i32, i32) {
    %c1_i32 = arith.constant 1 : i32
    %0 = arith.minsi %arg0, %c1_i32 : i32
    %c0_i32 = arith.constant 0 : i32
    %c0_i32_0 = arith.constant 0 : i32
    %c0_i32_1 = arith.constant 0 : i32
    return %0, %c0_i32, %c0_i32_0 : i32, i32, i32
  }
  func.func @transform_17(%arg0: i32) -> (i32, i32, i32) {
    %c2_i32 = arith.constant 2 : i32
    %0 = arith.subi %arg0, %c2_i32 : i32
    %c0_i32 = arith.constant 0 : i32
    %1 = arith.maxsi %0, %c0_i32 : i32
    %c0_i32_0 = arith.constant 0 : i32
    %c0_i32_1 = arith.constant 0 : i32
    %c0_i32_2 = arith.constant 0 : i32
    return %1, %c0_i32_0, %c0_i32_1 : i32, i32, i32
  }
  func.func @transform_18(%arg0: i32) -> (i32, i32, i32) {
    %c2_i32 = arith.constant 2 : i32
    %0 = arith.subi %arg0, %c2_i32 : i32
    %c0_i32 = arith.constant 0 : i32
    %1 = arith.maxsi %0, %c0_i32 : i32
    %c0_i32_0 = arith.constant 0 : i32
    %c0_i32_1 = arith.constant 0 : i32
    %c0_i32_2 = arith.constant 0 : i32
    return %1, %c0_i32_0, %c0_i32_1 : i32, i32, i32
  }
  func.func @transform_19(%arg0: i32) -> (i32, i32, i32) {
    %c2_i32 = arith.constant 2 : i32
    %0 = arith.subi %arg0, %c2_i32 : i32
    %c0_i32 = arith.constant 0 : i32
    %1 = arith.maxsi %0, %c0_i32 : i32
    %c0_i32_0 = arith.constant 0 : i32
    %c0_i32_1 = arith.constant 0 : i32
    %c0_i32_2 = arith.constant 0 : i32
    return %1, %c0_i32_0, %c0_i32_1 : i32, i32, i32
  }
  func.func @transform_20(%arg0: i32) -> (i32, i32, i32) {
    %c2_i32 = arith.constant 2 : i32
    %0 = arith.subi %arg0, %c2_i32 : i32
    %c0_i32 = arith.constant 0 : i32
    %1 = arith.maxsi %0, %c0_i32 : i32
    %c0_i32_0 = arith.constant 0 : i32
    %c0_i32_1 = arith.constant 0 : i32
    %c0_i32_2 = arith.constant 0 : i32
    return %1, %c0_i32_0, %c0_i32_1 : i32, i32, i32
  }
  func.func @transform_21(%arg0: i32) -> (i32, i32, i32) {
    %c2_i32 = arith.constant 2 : i32
    %0 = arith.subi %arg0, %c2_i32 : i32
    %c0_i32 = arith.constant 0 : i32
    %1 = arith.maxsi %0, %c0_i32 : i32
    %c0_i32_0 = arith.constant 0 : i32
    %c0_i32_1 = arith.constant 0 : i32
    %c0_i32_2 = arith.constant 0 : i32
    return %1, %c0_i32_0, %c0_i32_1 : i32, i32, i32
  }
  func.func @transform_22(%arg0: i32) -> (i32, i32, i32) {
    %c2_i32 = arith.constant 2 : i32
    %0 = arith.subi %arg0, %c2_i32 : i32
    %c0_i32 = arith.constant 0 : i32
    %1 = arith.maxsi %0, %c0_i32 : i32
    %c0_i32_0 = arith.constant 0 : i32
    %c0_i32_1 = arith.constant 0 : i32
    %c0_i32_2 = arith.constant 0 : i32
    return %1, %c0_i32_0, %c0_i32_1 : i32, i32, i32
  }
  func.func @transform_23(%arg0: i32) -> (i32, i32, i32) {
    %c2_i32 = arith.constant 2 : i32
    %0 = arith.subi %arg0, %c2_i32 : i32
    %c0_i32 = arith.constant 0 : i32
    %1 = arith.maxsi %0, %c0_i32 : i32
    %c0_i32_0 = arith.constant 0 : i32
    %c0_i32_1 = arith.constant 0 : i32
    %c0_i32_2 = arith.constant 0 : i32
    return %1, %c0_i32_0, %c0_i32_1 : i32, i32, i32
  }
  func.func @transform_24(%arg0: i32) -> (i32, i32, i32) {
    %c2_i32 = arith.constant 2 : i32
    %0 = arith.subi %arg0, %c2_i32 : i32
    %c0_i32 = arith.constant 0 : i32
    %1 = arith.maxsi %0, %c0_i32 : i32
    %c0_i32_0 = arith.constant 0 : i32
    %c0_i32_1 = arith.constant 0 : i32
    %c0_i32_2 = arith.constant 0 : i32
    return %1, %c0_i32_0, %c0_i32_1 : i32, i32, i32
  }
  func.func @transform_25(%arg0: i32) -> (i32, i32, i32) {
    %c2_i32 = arith.constant 2 : i32
    %0 = arith.subi %arg0, %c2_i32 : i32
    %c0_i32 = arith.constant 0 : i32
    %1 = arith.maxsi %0, %c0_i32 : i32
    %c0_i32_0 = arith.constant 0 : i32
    %c0_i32_1 = arith.constant 0 : i32
    %c0_i32_2 = arith.constant 0 : i32
    return %1, %c0_i32_0, %c0_i32_1 : i32, i32, i32
  }
  func.func @transform_26(%arg0: i32) -> (i32, i32, i32) {
    %c2_i32 = arith.constant 2 : i32
    %0 = arith.subi %arg0, %c2_i32 : i32
    %c0_i32 = arith.constant 0 : i32
    %1 = arith.maxsi %0, %c0_i32 : i32
    %c0_i32_0 = arith.constant 0 : i32
    %c0_i32_1 = arith.constant 0 : i32
    %c0_i32_2 = arith.constant 0 : i32
    return %1, %c0_i32_0, %c0_i32_1 : i32, i32, i32
  }
  func.func @transform_27(%arg0: i32) -> (i32, i32, i32) {
    %c2_i32 = arith.constant 2 : i32
    %0 = arith.subi %arg0, %c2_i32 : i32
    %c0_i32 = arith.constant 0 : i32
    %1 = arith.maxsi %0, %c0_i32 : i32
    %c0_i32_0 = arith.constant 0 : i32
    %c0_i32_1 = arith.constant 0 : i32
    %c0_i32_2 = arith.constant 0 : i32
    return %1, %c0_i32_0, %c0_i32_1 : i32, i32, i32
  }
  func.func @transform_28(%arg0: i32) -> (i32, i32, i32) {
    %c2_i32 = arith.constant 2 : i32
    %0 = arith.subi %arg0, %c2_i32 : i32
    %c0_i32 = arith.constant 0 : i32
    %1 = arith.maxsi %0, %c0_i32 : i32
    %c0_i32_0 = arith.constant 0 : i32
    %c0_i32_1 = arith.constant 0 : i32
    %c0_i32_2 = arith.constant 0 : i32
    return %1, %c0_i32_0, %c0_i32_1 : i32, i32, i32
  }
  func.func @transform_29(%arg0: i32) -> (i32, i32, i32) {
    %c2_i32 = arith.constant 2 : i32
    %0 = arith.subi %arg0, %c2_i32 : i32
    %c0_i32 = arith.constant 0 : i32
    %1 = arith.maxsi %0, %c0_i32 : i32
    %c0_i32_0 = arith.constant 0 : i32
    %c0_i32_1 = arith.constant 0 : i32
    %c0_i32_2 = arith.constant 0 : i32
    return %1, %c0_i32_0, %c0_i32_1 : i32, i32, i32
  }
  func.func @transform_30(%arg0: i32) -> (i32, i32, i32) {
    %c2_i32 = arith.constant 2 : i32
    %0 = arith.subi %arg0, %c2_i32 : i32
    %c0_i32 = arith.constant 0 : i32
    %1 = arith.maxsi %0, %c0_i32 : i32
    %c0_i32_0 = arith.constant 0 : i32
    %c0_i32_1 = arith.constant 0 : i32
    %c0_i32_2 = arith.constant 0 : i32
    return %1, %c0_i32_0, %c0_i32_1 : i32, i32, i32
  }
  func.func @transform_31(%arg0: i32) -> (i32, i32, i32) {
    %c2_i32 = arith.constant 2 : i32
    %0 = arith.subi %arg0, %c2_i32 : i32
    %c0_i32 = arith.constant 0 : i32
    %1 = arith.maxsi %0, %c0_i32 : i32
    %c0_i32_0 = arith.constant 0 : i32
    %c0_i32_1 = arith.constant 0 : i32
    %c0_i32_2 = arith.constant 0 : i32
    return %1, %c0_i32_0, %c0_i32_1 : i32, i32, i32
  }
  func.func @transform_32(%arg0: i32) -> (i32, i32, i32) {
    %c2_i32 = arith.constant 2 : i32
    %0 = arith.subi %arg0, %c2_i32 : i32
    %c0_i32 = arith.constant 0 : i32
    %1 = arith.maxsi %0, %c0_i32 : i32
    %c0_i32_0 = arith.constant 0 : i32
    %c0_i32_1 = arith.constant 0 : i32
    %c0_i32_2 = arith.constant 0 : i32
    return %1, %c0_i32_0, %c0_i32_1 : i32, i32, i32
  }
  func.func @transform_33(%arg0: i32) -> (i32, i32, i32) {
    %c2_i32 = arith.constant 2 : i32
    %0 = arith.subi %arg0, %c2_i32 : i32
    %c0_i32 = arith.constant 0 : i32
    %1 = arith.maxsi %0, %c0_i32 : i32
    %c0_i32_0 = arith.constant 0 : i32
    %c0_i32_1 = arith.constant 0 : i32
    %c0_i32_2 = arith.constant 0 : i32
    return %1, %c0_i32_0, %c0_i32_1 : i32, i32, i32
  }
  func.func @transform_34(%arg0: i32) -> (i32, i32, i32) {
    %c2_i32 = arith.constant 2 : i32
    %0 = arith.subi %arg0, %c2_i32 : i32
    %c0_i32 = arith.constant 0 : i32
    %1 = arith.maxsi %0, %c0_i32 : i32
    %c0_i32_0 = arith.constant 0 : i32
    %c0_i32_1 = arith.constant 0 : i32
    %c0_i32_2 = arith.constant 0 : i32
    return %1, %c0_i32_0, %c0_i32_1 : i32, i32, i32
  }
  func.func @transform_35(%arg0: i32) -> (i32, i32, i32) {
    %c2_i32 = arith.constant 2 : i32
    %0 = arith.subi %arg0, %c2_i32 : i32
    %c0_i32 = arith.constant 0 : i32
    %1 = arith.maxsi %0, %c0_i32 : i32
    %c0_i32_0 = arith.constant 0 : i32
    %c0_i32_1 = arith.constant 0 : i32
    %c0_i32_2 = arith.constant 0 : i32
    return %1, %c0_i32_0, %c0_i32_1 : i32, i32, i32
  }
  func.func @transform_36(%arg0: i32) -> (i32, i32, i32) {
    %c2_i32 = arith.constant 2 : i32
    %0 = arith.subi %arg0, %c2_i32 : i32
    %c0_i32 = arith.constant 0 : i32
    %1 = arith.maxsi %0, %c0_i32 : i32
    %c0_i32_0 = arith.constant 0 : i32
    %c0_i32_1 = arith.constant 0 : i32
    %c0_i32_2 = arith.constant 0 : i32
    return %1, %c0_i32_0, %c0_i32_1 : i32, i32, i32
  }
  func.func @transform_37(%arg0: i32) -> (i32, i32) {
    %c0_i32 = arith.constant 0 : i32
    %c0_i32_0 = arith.constant 0 : i32
    %c0_i32_1 = arith.constant 0 : i32
    return %c0_i32, %c0_i32_0 : i32, i32
  }
  func.func @transform_38(%arg0: i32) -> (i32, i32) {
    %c0_i32 = arith.constant 0 : i32
    %c0_i32_0 = arith.constant 0 : i32
    %c0_i32_1 = arith.constant 0 : i32
    return %c0_i32, %c0_i32_0 : i32, i32
  }
  func.func @transform_39(%arg0: i32) -> (i32, i32) {
    %c0_i32 = arith.constant 0 : i32
    %c0_i32_0 = arith.constant 0 : i32
    %c0_i32_1 = arith.constant 0 : i32
    return %c0_i32, %c0_i32_0 : i32, i32
  }
}

</mosaic_0001>

<llo_original>
// kernel: transformer_forward.1
$region0: #{transformer_forward.1}
  #allocation0 [shape = 'u32[]', space=smem, size = 0x4, offset = 0x4, fixed_abs, tag = 'smem constant byte address 0x4 - core index']
  #allocation1 [shape = 'u32[144,128]{1,0:T(1,128)}', space=vmem, size = 0x12000, scoped, tag = 'internal scratch']
  #allocation2 [shape = 'f32[16,32]{1,0:T(8,128)}', space=vmem, size = 0x2000, scoped, tag = 'scratch operand']
  #allocation3 [shape = 'f32[16,32]{1,0:T(8,128)}', space=vmem, size = 0x2000, scoped, tag = 'scratch operand']
  %s0 = inlined_call_operand.smem [shape: u32[40], index: -1, kind: input, shape index: {}]
  %s1 = sld [smem:[%s0]]
  %s2 = scalar_lea.smem %s0, 1
  %s3 = sld [smem:[%s2]]
  %s4 = scalar_lea.smem %s0, 2
  %s5 = sld [smem:[%s4]]
  %s6 = scalar_lea.smem %s0, 3
  %s7 = sld [smem:[%s6]]
  %s8 = scalar_lea.smem %s0, 4
  %s9 = sld [smem:[%s8]]
  %s10 = scalar_lea.smem %s0, 5
  %s11 = sld [smem:[%s10]]
  %s12 = scalar_lea.smem %s0, 6
  %s13 = sld [smem:[%s12]]
  %s14 = scalar_lea.smem %s0, 7
  %s15 = sld [smem:[%s14]]
  %s16 = scalar_lea.smem %s0, 8
  %s17 = sld [smem:[%s16]]
  %s18 = scalar_lea.smem %s0, 9
  %s19 = sld [smem:[%s18]]
  %s20 = scalar_lea.smem %s0, 10
  %s21 = sld [smem:[%s20]]
  %s22 = scalar_lea.smem %s0, 11
  %s23 = sld [smem:[%s22]]
  %s24 = scalar_lea.smem %s0, 12
  %s25 = sld [smem:[%s24]]
  %s26 = scalar_lea.smem %s0, 13
  %s27 = sld [smem:[%s26]]
  %s28 = scalar_lea.smem %s0, 14
  %s29 = sld [smem:[%s28]]
  %s30 = scalar_lea.smem %s0, 15
  %s31 = sld [smem:[%s30]]
  %s32 = scalar_lea.smem %s0, 16
  %s33 = sld [smem:[%s32]]
  %s34 = scalar_lea.smem %s0, 17
  %s35 = sld [smem:[%s34]]
  %s36 = scalar_lea.smem %s0, 18
  %s37 = sld [smem:[%s36]]
  %s38 = scalar_lea.smem %s0, 19
  %s39 = sld [smem:[%s38]]
  %s40 = scalar_lea.smem %s0, 20
  %s41 = sld [smem:[%s40]]
  %s42 = scalar_lea.smem %s0, 21
  %s43 = sld [smem:[%s42]]
  %s44 = scalar_lea.smem %s0, 22
  %s45 = sld [smem:[%s44]]
  %s46 = scalar_lea.smem %s0, 23
  %s47 = sld [smem:[%s46]]
  %s48 = scalar_lea.smem %s0, 24
  %s49 = sld [smem:[%s48]]
  %s50 = scalar_lea.smem %s0, 25
  %s51 = sld [smem:[%s50]]
  %s52 = scalar_lea.smem %s0, 26
  %s53 = sld [smem:[%s52]]
  %s54 = scalar_lea.smem %s0, 27
  %s55 = sld [smem:[%s54]]
  %s56 = scalar_lea.smem %s0, 28
  %s57 = sld [smem:[%s56]]
  %s58 = scalar_lea.smem %s0, 29
  %s59 = sld [smem:[%s58]]
  %s60 = scalar_lea.smem %s0, 30
  %s61 = sld [smem:[%s60]]
  %s62 = scalar_lea.smem %s0, 31
  %s63 = sld [smem:[%s62]]
  %s64 = scalar_lea.smem %s0, 32
  %s65 = sld [smem:[%s64]]
  %s66 = scalar_lea.smem %s0, 33
  %s67 = sld [smem:[%s66]]
  %s68 = scalar_lea.smem %s0, 34
  %s69 = sld [smem:[%s68]]
  %s70 = scalar_lea.smem %s0, 35
  %s71 = sld [smem:[%s70]]
  %s72 = scalar_lea.smem %s0, 36
  %s73 = sld [smem:[%s72]]
  %s74 = scalar_lea.smem %s0, 37
  %s75 = sld [smem:[%s74]]
  %s76 = scalar_lea.smem %s0, 38
  %s77 = sld [smem:[%s76]]
  %s78 = scalar_lea.smem %s0, 39
  %s79 = sld [smem:[%s78]]
  %s80 = sld [smem:[#allocation0]]
  $region209: #{transformer_forward.1} parent=0
    _
  %s82 = ssub.s32 1, %s80
  %s83 = scalar_select 0, %s82, %s80
  loop: start=0, step=1, limit=6
  $region2: #{transformer_forward.1} parent=0 // loop_pre_header
    _
  $region3: #{transformer_forward.1} parent=0 // loop_header
    %s85 = sphi 0, %s89
    %p86 = scmp.ge.s32.totalorder %s85, 6
    %s93 = sphi 0, %s93
    %s95 = sphi 0, %s93
    %s96 = sphi 0, %s95
    %s110 = sphi 0, %s96
    %s114 = sphi 0, %s114
    %s116 = sphi 0, %s114
    %s117 = sphi 0, %s116
    %s131 = sphi 0, %s117
    %s135 = sphi 0, %s135
    %s137 = sphi 0, %s135
    %s138 = sphi 0, %s137
    %s152 = sphi 0, %s138
    %s156 = sphi 0, %s156
    %s158 = sphi 0, %s156
    %s159 = sphi 0, %s158
    %s173 = sphi 0, %s159
    %s177 = sphi 0, %s177
    %s179 = sphi 0, %s177
    %s180 = sphi 0, %s179
    %s194 = sphi 0, %s180
    %s204 = sphi 0, %s206
    %s207 = sphi 0, %s204
    %s208 = sphi 0, %s207
    %s224 = sphi 0, %s208
    %s234 = sphi 0, %s236
    %s237 = sphi 0, %s234
    %s238 = sphi 0, %s237
    %s254 = sphi 0, %s238
    %s264 = sphi 0, %s266
    %s267 = sphi 0, %s264
    %s268 = sphi 0, %s267
    %s284 = sphi 0, %s268
    %s294 = sphi 0, %s296
    %s297 = sphi 0, %s294
    %s298 = sphi 0, %s297
    %s314 = sphi 0, %s298
    %s324 = sphi 0, %s326
    %s327 = sphi 0, %s324
    %s328 = sphi 0, %s327
    %s344 = sphi 0, %s328
    %s354 = sphi 0, %s356
    %s357 = sphi 0, %s354
    %s358 = sphi 0, %s357
    %s374 = sphi 0, %s358
    %s384 = sphi 0, %s386
    %s387 = sphi 0, %s384
    %s388 = sphi 0, %s387
    %s404 = sphi 0, %s388
    %s414 = sphi 0, %s416
    %s417 = sphi 0, %s414
    %s418 = sphi 0, %s417
    %s434 = sphi 0, %s418
    %s444 = sphi 0, %s446
    %s447 = sphi 0, %s444
    %s448 = sphi 0, %s447
    %s464 = sphi 0, %s448
    %s474 = sphi 0, %s476
    %s477 = sphi 0, %s474
    %s478 = sphi 0, %s477
    %s494 = sphi 0, %s478
    %s504 = sphi 0, %s506
    %s507 = sphi 0, %s504
    %s508 = sphi 0, %s507
    %s524 = sphi 0, %s508
    %s534 = sphi 0, %s536
    %s537 = sphi 0, %s534
    %s538 = sphi 0, %s537
    %s554 = sphi 0, %s538
    %s566 = sphi 0, %s568
    %s569 = sphi 0, %s566
    %s570 = sphi 0, %s569
    %s586 = sphi 0, %s570
    %s598 = sphi 0, %s600
    %s601 = sphi 0, %s598
    %s602 = sphi 0, %s601
    %s618 = sphi 0, %s602
    %s630 = sphi 0, %s632
    %s633 = sphi 0, %s630
    %s634 = sphi 0, %s633
    %s650 = sphi 0, %s634
    %s662 = sphi 0, %s664
    %s665 = sphi 0, %s662
    %s666 = sphi 0, %s665
    %s682 = sphi 0, %s666
    %s694 = sphi 0, %s696
    %s697 = sphi 0, %s694
    %s698 = sphi 0, %s697
    %s714 = sphi 0, %s698
    %s726 = sphi 0, %s728
    %s729 = sphi 0, %s726
    %s730 = sphi 0, %s729
    %s746 = sphi 0, %s730
    %s758 = sphi 0, %s760
    %s761 = sphi 0, %s758
    %s762 = sphi 0, %s761
    %s778 = sphi 0, %s762
    %s790 = sphi 0, %s792
    %s793 = sphi 0, %s790
    %s794 = sphi 0, %s793
    %s810 = sphi 0, %s794
    %s822 = sphi 0, %s824
    %s825 = sphi 0, %s822
    %s826 = sphi 0, %s825
    %s842 = sphi 0, %s826
    %s854 = sphi 0, %s856
    %s857 = sphi 0, %s854
    %s858 = sphi 0, %s857
    %s874 = sphi 0, %s858
    %s886 = sphi 0, %s888
    %s889 = sphi 0, %s886
    %s890 = sphi 0, %s889
    %s906 = sphi 0, %s890
    %s918 = sphi 0, %s920
    %s921 = sphi 0, %s918
    %s922 = sphi 0, %s921
    %s938 = sphi 0, %s922
    %s950 = sphi 0, %s952
    %s953 = sphi 0, %s950
    %s954 = sphi 0, %s953
    %s970 = sphi 0, %s954
    %s982 = sphi 0, %s984
    %s985 = sphi 0, %s982
    %s986 = sphi 0, %s985
    %s1002 = sphi 0, %s986
    %s1014 = sphi 0, %s1016
    %s1017 = sphi 0, %s1014
    %s1018 = sphi 0, %s1017
    %s1034 = sphi 0, %s1018
    %s1046 = sphi 0, %s1048
    %s1049 = sphi 0, %s1046
    %s1050 = sphi 0, %s1049
    %s1066 = sphi 0, %s1050
    %s1078 = sphi 0, %s1080
    %s1081 = sphi 0, %s1078
    %s1082 = sphi 0, %s1081
    %s1098 = sphi 0, %s1082
    %s1110 = sphi 0, %s1112
    %s1113 = sphi 0, %s1110
    %s1114 = sphi 0, %s1113
    %s1130 = sphi 0, %s1114
    %s1142 = sphi 0, %s1144
    %s1145 = sphi 0, %s1142
    %s1146 = sphi 0, %s1145
    %s1162 = sphi 0, %s1146
    %s1174 = sphi 0, %s1176
    %s1177 = sphi 0, %s1174
    %s1178 = sphi 0, %s1177
    %s1194 = sphi 0, %s1178
    %s1198 = sphi 0, %s1198
    %s1200 = sphi 0, %s1198
    %s1201 = sphi 0, %s1200
    %s1215 = sphi 0, %s1201
    %s1219 = sphi 0, %s1219
    %s1221 = sphi 0, %s1219
    %s1222 = sphi 0, %s1221
    %s1236 = sphi 0, %s1222
    %s1240 = sphi 0, %s1240
    %s1242 = sphi 0, %s1240
    %s1243 = sphi 0, %s1242
    %s1257 = sphi 0, %s1243
  $region4: #{transformer_forward.1} parent=0 // loop_header_branch
    %88 = sbr.rel (%p86) target = $region8
  $region5: #{transformer_forward.1} parent=0 // loop_body
    %s90 = ssub.s32 %s85, 1
    %s91 = ssub.s32 %s85, 2
    %s92 = sadd.s32 %s85, 1
    %s94 = sadd.s32 %s93, 1
    %p97 = scmp.eq.s32.totalorder %s85, 3
    %p98 = scmp.ne.s32.totalorder %s93, %s95
    %p99 = scmp.eq.s32.totalorder %s85, 0
    %p100 = por %p98, %p99
    %p101 = scmp.ne.s32.totalorder %s93, %s95
    %p102 = scmp.eq.s32.totalorder %s90, 3
    %p103 = por %p101, %p102
    %p104 = scmp.ne.s32.totalorder %s95, %s96
    %p105 = scmp.eq.s32.totalorder %s90, 0
    %p106 = por %p104, %p105
    %p107 = scmp.ne.s32.totalorder %s95, %s96
    %p108 = scmp.eq.s32.totalorder %s91, 3
    %p109 = por %p107, %p108
    %p111 = scmp.ne.s32.totalorder %s96, %s110
    %p112 = scmp.eq.s32.totalorder %s91, 0
    %p113 = por %p111, %p112
    %s115 = sadd.s32 %s114, 1
    %p118 = scmp.eq.s32.totalorder %s85, 3
    %p119 = scmp.ne.s32.totalorder %s114, %s116
    %p120 = scmp.eq.s32.totalorder %s85, 0
    %p121 = por %p119, %p120
    %p122 = scmp.ne.s32.totalorder %s114, %s116
    %p123 = scmp.eq.s32.totalorder %s90, 3
    %p124 = por %p122, %p123
    %p125 = scmp.ne.s32.totalorder %s116, %s117
    %p126 = scmp.eq.s32.totalorder %s90, 0
    %p127 = por %p125, %p126
    %p128 = scmp.ne.s32.totalorder %s116, %s117
    %p129 = scmp.eq.s32.totalorder %s91, 3
    %p130 = por %p128, %p129
    %p132 = scmp.ne.s32.totalorder %s117, %s131
    %p133 = scmp.eq.s32.totalorder %s91, 0
    %p134 = por %p132, %p133
    %s136 = sadd.s32 %s135, 1
    %p139 = scmp.eq.s32.totalorder %s85, 3
    %p140 = scmp.ne.s32.totalorder %s135, %s137
    %p141 = scmp.eq.s32.totalorder %s85, 0
    %p142 = por %p140, %p141
    %p143 = scmp.ne.s32.totalorder %s135, %s137
    %p144 = scmp.eq.s32.totalorder %s90, 3
    %p145 = por %p143, %p144
    %p146 = scmp.ne.s32.totalorder %s137, %s138
    %p147 = scmp.eq.s32.totalorder %s90, 0
    %p148 = por %p146, %p147
    %p149 = scmp.ne.s32.totalorder %s137, %s138
    %p150 = scmp.eq.s32.totalorder %s91, 3
    %p151 = por %p149, %p150
    %p153 = scmp.ne.s32.totalorder %s138, %s152
    %p154 = scmp.eq.s32.totalorder %s91, 0
    %p155 = por %p153, %p154
    %s157 = sadd.s32 %s156, 1
    %p160 = scmp.eq.s32.totalorder %s85, 3
    %p161 = scmp.ne.s32.totalorder %s156, %s158
    %p162 = scmp.eq.s32.totalorder %s85, 0
    %p163 = por %p161, %p162
    %p164 = scmp.ne.s32.totalorder %s156, %s158
    %p165 = scmp.eq.s32.totalorder %s90, 3
    %p166 = por %p164, %p165
    %p167 = scmp.ne.s32.totalorder %s158, %s159
    %p168 = scmp.eq.s32.totalorder %s90, 0
    %p169 = por %p167, %p168
    %p170 = scmp.ne.s32.totalorder %s158, %s159
    %p171 = scmp.eq.s32.totalorder %s91, 3
    %p172 = por %p170, %p171
    %p174 = scmp.ne.s32.totalorder %s159, %s173
    %p175 = scmp.eq.s32.totalorder %s91, 0
    %p176 = por %p174, %p175
    %s178 = sadd.s32 %s177, 1
    %p181 = scmp.eq.s32.totalorder %s85, 3
    %p182 = scmp.ne.s32.totalorder %s177, %s179
    %p183 = scmp.eq.s32.totalorder %s85, 0
    %p184 = por %p182, %p183
    %p185 = scmp.ne.s32.totalorder %s177, %s179
    %p186 = scmp.eq.s32.totalorder %s90, 3
    %p187 = por %p185, %p186
    %p188 = scmp.ne.s32.totalorder %s179, %s180
    %p189 = scmp.eq.s32.totalorder %s90, 0
    %p190 = por %p188, %p189
    %p191 = scmp.ne.s32.totalorder %s179, %s180
    %p192 = scmp.eq.s32.totalorder %s91, 3
    %p193 = por %p191, %p192
    %p195 = scmp.ne.s32.totalorder %s180, %s194
    %p196 = scmp.eq.s32.totalorder %s91, 0
    %p197 = por %p195, %p196
    %p198 = scmp.lt.s32.totalorder %s85, 1
    %s199 = scalar_select %p198, %s85, 1
    %p200 = scmp.lt.s32.totalorder %s92, 1
    %s201 = scalar_select %p200, %s92, 1
    %s202 = ssub.s32 %s199, %s201
    %p203 = scmp.eq.s32.totalorder %s202, 0
    %s205 = sadd.s32 %s204, 1
    %s206 = scalar_select %p203, %s204, %s205
    %p209 = pneg %p203
    %p210 = scmp.eq.s32.totalorder %s85, 3
    %p211 = por %p209, %p210
    %p212 = scmp.ne.s32.totalorder %s204, %s207
    %p213 = scmp.eq.s32.totalorder %s85, 0
    %p214 = por %p212, %p213
    %p215 = scmp.ne.s32.totalorder %s204, %s207
    %p216 = scmp.eq.s32.totalorder %s90, 3
    %p217 = por %p215, %p216
    %p218 = scmp.ne.s32.totalorder %s207, %s208
    %p219 = scmp.eq.s32.totalorder %s90, 0
    %p220 = por %p218, %p219
    %p221 = scmp.ne.s32.totalorder %s207, %s208
    %p222 = scmp.eq.s32.totalorder %s91, 3
    %p223 = por %p221, %p222
    %p225 = scmp.ne.s32.totalorder %s208, %s224
    %p226 = scmp.eq.s32.totalorder %s91, 0
    %p227 = por %p225, %p226
    %p228 = scmp.lt.s32.totalorder %s85, 1
    %s229 = scalar_select %p228, %s85, 1
    %p230 = scmp.lt.s32.totalorder %s92, 1
    %s231 = scalar_select %p230, %s92, 1
    %s232 = ssub.s32 %s229, %s231
    %p233 = scmp.eq.s32.totalorder %s232, 0
    %s235 = sadd.s32 %s234, 1
    %s236 = scalar_select %p233, %s234, %s235
    %p239 = pneg %p233
    %p240 = scmp.eq.s32.totalorder %s85, 3
    %p241 = por %p239, %p240
    %p242 = scmp.ne.s32.totalorder %s234, %s237
    %p243 = scmp.eq.s32.totalorder %s85, 0
    %p244 = por %p242, %p243
    %p245 = scmp.ne.s32.totalorder %s234, %s237
    %p246 = scmp.eq.s32.totalorder %s90, 3
    %p247 = por %p245, %p246
    %p248 = scmp.ne.s32.totalorder %s237, %s238
    %p249 = scmp.eq.s32.totalorder %s90, 0
    %p250 = por %p248, %p249
    %p251 = scmp.ne.s32.totalorder %s237, %s238
    %p252 = scmp.eq.s32.totalorder %s91, 3
    %p253 = por %p251, %p252
    %p255 = scmp.ne.s32.totalorder %s238, %s254
    %p256 = scmp.eq.s32.totalorder %s91, 0
    %p257 = por %p255, %p256
    %p258 = scmp.lt.s32.totalorder %s85, 1
    %s259 = scalar_select %p258, %s85, 1
    %p260 = scmp.lt.s32.totalorder %s92, 1
    %s261 = scalar_select %p260, %s92, 1
    %s262 = ssub.s32 %s259, %s261
    %p263 = scmp.eq.s32.totalorder %s262, 0
    %s265 = sadd.s32 %s264, 1
    %s266 = scalar_select %p263, %s264, %s265
    %p269 = pneg %p263
    %p270 = scmp.eq.s32.totalorder %s85, 3
    %p271 = por %p269, %p270
    %p272 = scmp.ne.s32.totalorder %s264, %s267
    %p273 = scmp.eq.s32.totalorder %s85, 0
    %p274 = por %p272, %p273
    %p275 = scmp.ne.s32.totalorder %s264, %s267
    %p276 = scmp.eq.s32.totalorder %s90, 3
    %p277 = por %p275, %p276
    %p278 = scmp.ne.s32.totalorder %s267, %s268
    %p279 = scmp.eq.s32.totalorder %s90, 0
    %p280 = por %p278, %p279
    %p281 = scmp.ne.s32.totalorder %s267, %s268
    %p282 = scmp.eq.s32.totalorder %s91, 3
    %p283 = por %p281, %p282
    %p285 = scmp.ne.s32.totalorder %s268, %s284
    %p286 = scmp.eq.s32.totalorder %s91, 0
    %p287 = por %p285, %p286
    %p288 = scmp.lt.s32.totalorder %s85, 1
    %s289 = scalar_select %p288, %s85, 1
    %p290 = scmp.lt.s32.totalorder %s92, 1
    %s291 = scalar_select %p290, %s92, 1
    %s292 = ssub.s32 %s289, %s291
    %p293 = scmp.eq.s32.totalorder %s292, 0
    %s295 = sadd.s32 %s294, 1
    %s296 = scalar_select %p293, %s294, %s295
    %p299 = pneg %p293
    %p300 = scmp.eq.s32.totalorder %s85, 3
    %p301 = por %p299, %p300
    %p302 = scmp.ne.s32.totalorder %s294, %s297
    %p303 = scmp.eq.s32.totalorder %s85, 0
    %p304 = por %p302, %p303
    %p305 = scmp.ne.s32.totalorder %s294, %s297
    %p306 = scmp.eq.s32.totalorder %s90, 3
    %p307 = por %p305, %p306
    %p308 = scmp.ne.s32.totalorder %s297, %s298
    %p309 = scmp.eq.s32.totalorder %s90, 0
    %p310 = por %p308, %p309
    %p311 = scmp.ne.s32.totalorder %s297, %s298
    %p312 = scmp.eq.s32.totalorder %s91, 3
    %p313 = por %p311, %p312
    %p315 = scmp.ne.s32.totalorder %s298, %s314
    %p316 = scmp.eq.s32.totalorder %s91, 0
    %p317 = por %p315, %p316
    %p318 = scmp.lt.s32.totalorder %s85, 1
    %s319 = scalar_select %p318, %s85, 1
    %p320 = scmp.lt.s32.totalorder %s92, 1
    %s321 = scalar_select %p320, %s92, 1
    %s322 = ssub.s32 %s319, %s321
    %p323 = scmp.eq.s32.totalorder %s322, 0
    %s325 = sadd.s32 %s324, 1
    %s326 = scalar_select %p323, %s324, %s325
    %p329 = pneg %p323
    %p330 = scmp.eq.s32.totalorder %s85, 3
    %p331 = por %p329, %p330
    %p332 = scmp.ne.s32.totalorder %s324, %s327
    %p333 = scmp.eq.s32.totalorder %s85, 0
    %p334 = por %p332, %p333
    %p335 = scmp.ne.s32.totalorder %s324, %s327
    %p336 = scmp.eq.s32.totalorder %s90, 3
    %p337 = por %p335, %p336
    %p338 = scmp.ne.s32.totalorder %s327, %s328
    %p339 = scmp.eq.s32.totalorder %s90, 0
    %p340 = por %p338, %p339
    %p341 = scmp.ne.s32.totalorder %s327, %s328
    %p342 = scmp.eq.s32.totalorder %s91, 3
    %p343 = por %p341, %p342
    %p345 = scmp.ne.s32.totalorder %s328, %s344
    %p346 = scmp.eq.s32.totalorder %s91, 0
    %p347 = por %p345, %p346
    %p348 = scmp.lt.s32.totalorder %s85, 1
    %s349 = scalar_select %p348, %s85, 1
    %p350 = scmp.lt.s32.totalorder %s92, 1
    %s351 = scalar_select %p350, %s92, 1
    %s352 = ssub.s32 %s349, %s351
    %p353 = scmp.eq.s32.totalorder %s352, 0
    %s355 = sadd.s32 %s354, 1
    %s356 = scalar_select %p353, %s354, %s355
    %p359 = pneg %p353
    %p360 = scmp.eq.s32.totalorder %s85, 3
    %p361 = por %p359, %p360
    %p362 = scmp.ne.s32.totalorder %s354, %s357
    %p363 = scmp.eq.s32.totalorder %s85, 0
    %p364 = por %p362, %p363
    %p365 = scmp.ne.s32.totalorder %s354, %s357
    %p366 = scmp.eq.s32.totalorder %s90, 3
    %p367 = por %p365, %p366
    %p368 = scmp.ne.s32.totalorder %s357, %s358
    %p369 = scmp.eq.s32.totalorder %s90, 0
    %p370 = por %p368, %p369
    %p371 = scmp.ne.s32.totalorder %s357, %s358
    %p372 = scmp.eq.s32.totalorder %s91, 3
    %p373 = por %p371, %p372
    %p375 = scmp.ne.s32.totalorder %s358, %s374
    %p376 = scmp.eq.s32.totalorder %s91, 0
    %p377 = por %p375, %p376
    %p378 = scmp.lt.s32.totalorder %s85, 1
    %s379 = scalar_select %p378, %s85, 1
    %p380 = scmp.lt.s32.totalorder %s92, 1
    %s381 = scalar_select %p380, %s92, 1
    %s382 = ssub.s32 %s379, %s381
    %p383 = scmp.eq.s32.totalorder %s382, 0
    %s385 = sadd.s32 %s384, 1
    %s386 = scalar_select %p383, %s384, %s385
    %p389 = pneg %p383
    %p390 = scmp.eq.s32.totalorder %s85, 3
    %p391 = por %p389, %p390
    %p392 = scmp.ne.s32.totalorder %s384, %s387
    %p393 = scmp.eq.s32.totalorder %s85, 0
    %p394 = por %p392, %p393
    %p395 = scmp.ne.s32.totalorder %s384, %s387
    %p396 = scmp.eq.s32.totalorder %s90, 3
    %p397 = por %p395, %p396
    %p398 = scmp.ne.s32.totalorder %s387, %s388
    %p399 = scmp.eq.s32.totalorder %s90, 0
    %p400 = por %p398, %p399
    %p401 = scmp.ne.s32.totalorder %s387, %s388
    %p402 = scmp.eq.s32.totalorder %s91, 3
    %p403 = por %p401, %p402
    %p405 = scmp.ne.s32.totalorder %s388, %s404
    %p406 = scmp.eq.s32.totalorder %s91, 0
    %p407 = por %p405, %p406
    %p408 = scmp.lt.s32.totalorder %s85, 1
    %s409 = scalar_select %p408, %s85, 1
    %p410 = scmp.lt.s32.totalorder %s92, 1
    %s411 = scalar_select %p410, %s92, 1
    %s412 = ssub.s32 %s409, %s411
    %p413 = scmp.eq.s32.totalorder %s412, 0
    %s415 = sadd.s32 %s414, 1
    %s416 = scalar_select %p413, %s414, %s415
    %p419 = pneg %p413
    %p420 = scmp.eq.s32.totalorder %s85, 3
    %p421 = por %p419, %p420
    %p422 = scmp.ne.s32.totalorder %s414, %s417
    %p423 = scmp.eq.s32.totalorder %s85, 0
    %p424 = por %p422, %p423
    %p425 = scmp.ne.s32.totalorder %s414, %s417
    %p426 = scmp.eq.s32.totalorder %s90, 3
    %p427 = por %p425, %p426
    %p428 = scmp.ne.s32.totalorder %s417, %s418
    %p429 = scmp.eq.s32.totalorder %s90, 0
    %p430 = por %p428, %p429
    %p431 = scmp.ne.s32.totalorder %s417, %s418
    %p432 = scmp.eq.s32.totalorder %s91, 3
    %p433 = por %p431, %p432
    %p435 = scmp.ne.s32.totalorder %s418, %s434
    %p436 = scmp.eq.s32.totalorder %s91, 0
    %p437 = por %p435, %p436
    %p438 = scmp.lt.s32.totalorder %s85, 1
    %s439 = scalar_select %p438, %s85, 1
    %p440 = scmp.lt.s32.totalorder %s92, 1
    %s441 = scalar_select %p440, %s92, 1
    %s442 = ssub.s32 %s439, %s441
    %p443 = scmp.eq.s32.totalorder %s442, 0
    %s445 = sadd.s32 %s444, 1
    %s446 = scalar_select %p443, %s444, %s445
    %p449 = pneg %p443
    %p450 = scmp.eq.s32.totalorder %s85, 3
    %p451 = por %p449, %p450
    %p452 = scmp.ne.s32.totalorder %s444, %s447
    %p453 = scmp.eq.s32.totalorder %s85, 0
    %p454 = por %p452, %p453
    %p455 = scmp.ne.s32.totalorder %s444, %s447
    %p456 = scmp.eq.s32.totalorder %s90, 3
    %p457 = por %p455, %p456
    %p458 = scmp.ne.s32.totalorder %s447, %s448
    %p459 = scmp.eq.s32.totalorder %s90, 0
    %p460 = por %p458, %p459
    %p461 = scmp.ne.s32.totalorder %s447, %s448
    %p462 = scmp.eq.s32.totalorder %s91, 3
    %p463 = por %p461, %p462
    %p465 = scmp.ne.s32.totalorder %s448, %s464
    %p466 = scmp.eq.s32.totalorder %s91, 0
    %p467 = por %p465, %p466
    %p468 = scmp.lt.s32.totalorder %s85, 1
    %s469 = scalar_select %p468, %s85, 1
    %p470 = scmp.lt.s32.totalorder %s92, 1
    %s471 = scalar_select %p470, %s92, 1
    %s472 = ssub.s32 %s469, %s471
    %p473 = scmp.eq.s32.totalorder %s472, 0
    %s475 = sadd.s32 %s474, 1
    %s476 = scalar_select %p473, %s474, %s475
    %p479 = pneg %p473
    %p480 = scmp.eq.s32.totalorder %s85, 3
    %p481 = por %p479, %p480
    %p482 = scmp.ne.s32.totalorder %s474, %s477
    %p483 = scmp.eq.s32.totalorder %s85, 0
    %p484 = por %p482, %p483
    %p485 = scmp.ne.s32.totalorder %s474, %s477
    %p486 = scmp.eq.s32.totalorder %s90, 3
    %p487 = por %p485, %p486
    %p488 = scmp.ne.s32.totalorder %s477, %s478
    %p489 = scmp.eq.s32.totalorder %s90, 0
    %p490 = por %p488, %p489
    %p491 = scmp.ne.s32.totalorder %s477, %s478
    %p492 = scmp.eq.s32.totalorder %s91, 3
    %p493 = por %p491, %p492
    %p495 = scmp.ne.s32.totalorder %s478, %s494
    %p496 = scmp.eq.s32.totalorder %s91, 0
    %p497 = por %p495, %p496
    %p498 = scmp.lt.s32.totalorder %s85, 1
    %s499 = scalar_select %p498, %s85, 1
    %p500 = scmp.lt.s32.totalorder %s92, 1
    %s501 = scalar_select %p500, %s92, 1
    %s502 = ssub.s32 %s499, %s501
    %p503 = scmp.eq.s32.totalorder %s502, 0
    %s505 = sadd.s32 %s504, 1
    %s506 = scalar_select %p503, %s504, %s505
    %p509 = pneg %p503
    %p510 = scmp.eq.s32.totalorder %s85, 3
    %p511 = por %p509, %p510
    %p512 = scmp.ne.s32.totalorder %s504, %s507
    %p513 = scmp.eq.s32.totalorder %s85, 0
    %p514 = por %p512, %p513
    %p515 = scmp.ne.s32.totalorder %s504, %s507
    %p516 = scmp.eq.s32.totalorder %s90, 3
    %p517 = por %p515, %p516
    %p518 = scmp.ne.s32.totalorder %s507, %s508
    %p519 = scmp.eq.s32.totalorder %s90, 0
    %p520 = por %p518, %p519
    %p521 = scmp.ne.s32.totalorder %s507, %s508
    %p522 = scmp.eq.s32.totalorder %s91, 3
    %p523 = por %p521, %p522
    %p525 = scmp.ne.s32.totalorder %s508, %s524
    %p526 = scmp.eq.s32.totalorder %s91, 0
    %p527 = por %p525, %p526
    %p528 = scmp.lt.s32.totalorder %s85, 1
    %s529 = scalar_select %p528, %s85, 1
    %p530 = scmp.lt.s32.totalorder %s92, 1
    %s531 = scalar_select %p530, %s92, 1
    %s532 = ssub.s32 %s529, %s531
    %p533 = scmp.eq.s32.totalorder %s532, 0
    %s535 = sadd.s32 %s534, 1
    %s536 = scalar_select %p533, %s534, %s535
    %p539 = pneg %p533
    %p540 = scmp.eq.s32.totalorder %s85, 3
    %p541 = por %p539, %p540
    %p542 = scmp.ne.s32.totalorder %s534, %s537
    %p543 = scmp.eq.s32.totalorder %s85, 0
    %p544 = por %p542, %p543
    %p545 = scmp.ne.s32.totalorder %s534, %s537
    %p546 = scmp.eq.s32.totalorder %s90, 3
    %p547 = por %p545, %p546
    %p548 = scmp.ne.s32.totalorder %s537, %s538
    %p549 = scmp.eq.s32.totalorder %s90, 0
    %p550 = por %p548, %p549
    %p551 = scmp.ne.s32.totalorder %s537, %s538
    %p552 = scmp.eq.s32.totalorder %s91, 3
    %p553 = por %p551, %p552
    %p555 = scmp.ne.s32.totalorder %s538, %s554
    %p556 = scmp.eq.s32.totalorder %s91, 0
    %p557 = por %p555, %p556
    %s558 = ssub.s32 %s85, 2
    %p559 = scmp.gt.s32.totalorder %s558, 0
    %s560 = scalar_select %p559, %s558, 0
    %s561 = ssub.s32 %s92, 2
    %p562 = scmp.gt.s32.totalorder %s561, 0
    %s563 = scalar_select %p562, %s561, 0
    %s564 = ssub.s32 %s560, %s563
    %p565 = scmp.eq.s32.totalorder %s564, 0
    %s567 = sadd.s32 %s566, 1
    %s568 = scalar_select %p565, %s566, %s567
    %p571 = pneg %p565
    %p572 = scmp.eq.s32.totalorder %s85, 3
    %p573 = por %p571, %p572
    %p574 = scmp.ne.s32.totalorder %s566, %s569
    %p575 = scmp.eq.s32.totalorder %s85, 0
    %p576 = por %p574, %p575
    %p577 = scmp.ne.s32.totalorder %s566, %s569
    %p578 = scmp.eq.s32.totalorder %s90, 3
    %p579 = por %p577, %p578
    %p580 = scmp.ne.s32.totalorder %s569, %s570
    %p581 = scmp.eq.s32.totalorder %s90, 0
    %p582 = por %p580, %p581
    %p583 = scmp.ne.s32.totalorder %s569, %s570
    %p584 = scmp.eq.s32.totalorder %s91, 3
    %p585 = por %p583, %p584
    %p587 = scmp.ne.s32.totalorder %s570, %s586
    %p588 = scmp.eq.s32.totalorder %s91, 0
    %p589 = por %p587, %p588
    %s590 = ssub.s32 %s85, 2
    %p591 = scmp.gt.s32.totalorder %s590, 0
    %s592 = scalar_select %p591, %s590, 0
    %s593 = ssub.s32 %s92, 2
    %p594 = scmp.gt.s32.totalorder %s593, 0
    %s595 = scalar_select %p594, %s593, 0
    %s596 = ssub.s32 %s592, %s595
    %p597 = scmp.eq.s32.totalorder %s596, 0
    %s599 = sadd.s32 %s598, 1
    %s600 = scalar_select %p597, %s598, %s599
    %p603 = pneg %p597
    %p604 = scmp.eq.s32.totalorder %s85, 3
    %p605 = por %p603, %p604
    %p606 = scmp.ne.s32.totalorder %s598, %s601
    %p607 = scmp.eq.s32.totalorder %s85, 0
    %p608 = por %p606, %p607
    %p609 = scmp.ne.s32.totalorder %s598, %s601
    %p610 = scmp.eq.s32.totalorder %s90, 3
    %p611 = por %p609, %p610
    %p612 = scmp.ne.s32.totalorder %s601, %s602
    %p613 = scmp.eq.s32.totalorder %s90, 0
    %p614 = por %p612, %p613
    %p615 = scmp.ne.s32.totalorder %s601, %s602
    %p616 = scmp.eq.s32.totalorder %s91, 3
    %p617 = por %p615, %p616
    %p619 = scmp.ne.s32.totalorder %s602, %s618
    %p620 = scmp.eq.s32.totalorder %s91, 0
    %p621 = por %p619, %p620
    %s622 = ssub.s32 %s85, 2
    %p623 = scmp.gt.s32.totalorder %s622, 0
    %s624 = scalar_select %p623, %s622, 0
    %s625 = ssub.s32 %s92, 2
    %p626 = scmp.gt.s32.totalorder %s625, 0
    %s627 = scalar_select %p626, %s625, 0
    %s628 = ssub.s32 %s624, %s627
    %p629 = scmp.eq.s32.totalorder %s628, 0
    %s631 = sadd.s32 %s630, 1
    %s632 = scalar_select %p629, %s630, %s631
    %p635 = pneg %p629
    %p636 = scmp.eq.s32.totalorder %s85, 3
    %p637 = por %p635, %p636
    %p638 = scmp.ne.s32.totalorder %s630, %s633
    %p639 = scmp.eq.s32.totalorder %s85, 0
    %p640 = por %p638, %p639
    %p641 = scmp.ne.s32.totalorder %s630, %s633
    %p642 = scmp.eq.s32.totalorder %s90, 3
    %p643 = por %p641, %p642
    %p644 = scmp.ne.s32.totalorder %s633, %s634
    %p645 = scmp.eq.s32.totalorder %s90, 0
    %p646 = por %p644, %p645
    %p647 = scmp.ne.s32.totalorder %s633, %s634
    %p648 = scmp.eq.s32.totalorder %s91, 3
    %p649 = por %p647, %p648
    %p651 = scmp.ne.s32.totalorder %s634, %s650
    %p652 = scmp.eq.s32.totalorder %s91, 0
    %p653 = por %p651, %p652
    %s654 = ssub.s32 %s85, 2
    %p655 = scmp.gt.s32.totalorder %s654, 0
    %s656 = scalar_select %p655, %s654, 0
    %s657 = ssub.s32 %s92, 2
    %p658 = scmp.gt.s32.totalorder %s657, 0
    %s659 = scalar_select %p658, %s657, 0
    %s660 = ssub.s32 %s656, %s659
    %p661 = scmp.eq.s32.totalorder %s660, 0
    %s663 = sadd.s32 %s662, 1
    %s664 = scalar_select %p661, %s662, %s663
    %p667 = pneg %p661
    %p668 = scmp.eq.s32.totalorder %s85, 3
    %p669 = por %p667, %p668
    %p670 = scmp.ne.s32.totalorder %s662, %s665
    %p671 = scmp.eq.s32.totalorder %s85, 0
    %p672 = por %p670, %p671
    %p673 = scmp.ne.s32.totalorder %s662, %s665
    %p674 = scmp.eq.s32.totalorder %s90, 3
    %p675 = por %p673, %p674
    %p676 = scmp.ne.s32.totalorder %s665, %s666
    %p677 = scmp.eq.s32.totalorder %s90, 0
    %p678 = por %p676, %p677
    %p679 = scmp.ne.s32.totalorder %s665, %s666
    %p680 = scmp.eq.s32.totalorder %s91, 3
    %p681 = por %p679, %p680
    %p683 = scmp.ne.s32.totalorder %s666, %s682
    %p684 = scmp.eq.s32.totalorder %s91, 0
    %p685 = por %p683, %p684
    %s686 = ssub.s32 %s85, 2
    %p687 = scmp.gt.s32.totalorder %s686, 0
    %s688 = scalar_select %p687, %s686, 0
    %s689 = ssub.s32 %s92, 2
    %p690 = scmp.gt.s32.totalorder %s689, 0
    %s691 = scalar_select %p690, %s689, 0
    %s692 = ssub.s32 %s688, %s691
    %p693 = scmp.eq.s32.totalorder %s692, 0
    %s695 = sadd.s32 %s694, 1
    %s696 = scalar_select %p693, %s694, %s695
    %p699 = pneg %p693
    %p700 = scmp.eq.s32.totalorder %s85, 3
    %p701 = por %p699, %p700
    %p702 = scmp.ne.s32.totalorder %s694, %s697
    %p703 = scmp.eq.s32.totalorder %s85, 0
    %p704 = por %p702, %p703
    %p705 = scmp.ne.s32.totalorder %s694, %s697
    %p706 = scmp.eq.s32.totalorder %s90, 3
    %p707 = por %p705, %p706
    %p708 = scmp.ne.s32.totalorder %s697, %s698
    %p709 = scmp.eq.s32.totalorder %s90, 0
    %p710 = por %p708, %p709
    %p711 = scmp.ne.s32.totalorder %s697, %s698
    %p712 = scmp.eq.s32.totalorder %s91, 3
    %p713 = por %p711, %p712
    %p715 = scmp.ne.s32.totalorder %s698, %s714
    %p716 = scmp.eq.s32.totalorder %s91, 0
    %p717 = por %p715, %p716
    %s718 = ssub.s32 %s85, 2
    %p719 = scmp.gt.s32.totalorder %s718, 0
    %s720 = scalar_select %p719, %s718, 0
    %s721 = ssub.s32 %s92, 2
    %p722 = scmp.gt.s32.totalorder %s721, 0
    %s723 = scalar_select %p722, %s721, 0
    %s724 = ssub.s32 %s720, %s723
    %p725 = scmp.eq.s32.totalorder %s724, 0
    %s727 = sadd.s32 %s726, 1
    %s728 = scalar_select %p725, %s726, %s727
    %p731 = pneg %p725
    %p732 = scmp.eq.s32.totalorder %s85, 3
    %p733 = por %p731, %p732
    %p734 = scmp.ne.s32.totalorder %s726, %s729
    %p735 = scmp.eq.s32.totalorder %s85, 0
    %p736 = por %p734, %p735
    %p737 = scmp.ne.s32.totalorder %s726, %s729
    %p738 = scmp.eq.s32.totalorder %s90, 3
    %p739 = por %p737, %p738
    %p740 = scmp.ne.s32.totalorder %s729, %s730
    %p741 = scmp.eq.s32.totalorder %s90, 0
    %p742 = por %p740, %p741
    %p743 = scmp.ne.s32.totalorder %s729, %s730
    %p744 = scmp.eq.s32.totalorder %s91, 3
    %p745 = por %p743, %p744
    %p747 = scmp.ne.s32.totalorder %s730, %s746
    %p748 = scmp.eq.s32.totalorder %s91, 0
    %p749 = por %p747, %p748
    %s750 = ssub.s32 %s85, 2
    %p751 = scmp.gt.s32.totalorder %s750, 0
    %s752 = scalar_select %p751, %s750, 0
    %s753 = ssub.s32 %s92, 2
    %p754 = scmp.gt.s32.totalorder %s753, 0
    %s755 = scalar_select %p754, %s753, 0
    %s756 = ssub.s32 %s752, %s755
    %p757 = scmp.eq.s32.totalorder %s756, 0
    %s759 = sadd.s32 %s758, 1
    %s760 = scalar_select %p757, %s758, %s759
    %p763 = pneg %p757
    %p764 = scmp.eq.s32.totalorder %s85, 3
    %p765 = por %p763, %p764
    %p766 = scmp.ne.s32.totalorder %s758, %s761
    %p767 = scmp.eq.s32.totalorder %s85, 0
    %p768 = por %p766, %p767
    %p769 = scmp.ne.s32.totalorder %s758, %s761
    %p770 = scmp.eq.s32.totalorder %s90, 3
    %p771 = por %p769, %p770
    %p772 = scmp.ne.s32.totalorder %s761, %s762
    %p773 = scmp.eq.s32.totalorder %s90, 0
    %p774 = por %p772, %p773
    %p775 = scmp.ne.s32.totalorder %s761, %s762
    %p776 = scmp.eq.s32.totalorder %s91, 3
    %p777 = por %p775, %p776
    %p779 = scmp.ne.s32.totalorder %s762, %s778
    %p780 = scmp.eq.s32.totalorder %s91, 0
    %p781 = por %p779, %p780
    %s782 = ssub.s32 %s85, 2
    %p783 = scmp.gt.s32.totalorder %s782, 0
    %s784 = scalar_select %p783, %s782, 0
    %s785 = ssub.s32 %s92, 2
    %p786 = scmp.gt.s32.totalorder %s785, 0
    %s787 = scalar_select %p786, %s785, 0
    %s788 = ssub.s32 %s784, %s787
    %p789 = scmp.eq.s32.totalorder %s788, 0
    %s791 = sadd.s32 %s790, 1
    %s792 = scalar_select %p789, %s790, %s791
    %p795 = pneg %p789
    %p796 = scmp.eq.s32.totalorder %s85, 3
    %p797 = por %p795, %p796
    %p798 = scmp.ne.s32.totalorder %s790, %s793
    %p799 = scmp.eq.s32.totalorder %s85, 0
    %p800 = por %p798, %p799
    %p801 = scmp.ne.s32.totalorder %s790, %s793
    %p802 = scmp.eq.s32.totalorder %s90, 3
    %p803 = por %p801, %p802
    %p804 = scmp.ne.s32.totalorder %s793, %s794
    %p805 = scmp.eq.s32.totalorder %s90, 0
    %p806 = por %p804, %p805
    %p807 = scmp.ne.s32.totalorder %s793, %s794
    %p808 = scmp.eq.s32.totalorder %s91, 3
    %p809 = por %p807, %p808
    %p811 = scmp.ne.s32.totalorder %s794, %s810
    %p812 = scmp.eq.s32.totalorder %s91, 0
    %p813 = por %p811, %p812
    %s814 = ssub.s32 %s85, 2
    %p815 = scmp.gt.s32.totalorder %s814, 0
    %s816 = scalar_select %p815, %s814, 0
    %s817 = ssub.s32 %s92, 2
    %p818 = scmp.gt.s32.totalorder %s817, 0
    %s819 = scalar_select %p818, %s817, 0
    %s820 = ssub.s32 %s816, %s819
    %p821 = scmp.eq.s32.totalorder %s820, 0
    %s823 = sadd.s32 %s822, 1
    %s824 = scalar_select %p821, %s822, %s823
    %p827 = pneg %p821
    %p828 = scmp.eq.s32.totalorder %s85, 3
    %p829 = por %p827, %p828
    %p830 = scmp.ne.s32.totalorder %s822, %s825
    %p831 = scmp.eq.s32.totalorder %s85, 0
    %p832 = por %p830, %p831
    %p833 = scmp.ne.s32.totalorder %s822, %s825
    %p834 = scmp.eq.s32.totalorder %s90, 3
    %p835 = por %p833, %p834
    %p836 = scmp.ne.s32.totalorder %s825, %s826
    %p837 = scmp.eq.s32.totalorder %s90, 0
    %p838 = por %p836, %p837
    %p839 = scmp.ne.s32.totalorder %s825, %s826
    %p840 = scmp.eq.s32.totalorder %s91, 3
    %p841 = por %p839, %p840
    %p843 = scmp.ne.s32.totalorder %s826, %s842
    %p844 = scmp.eq.s32.totalorder %s91, 0
    %p845 = por %p843, %p844
    %s846 = ssub.s32 %s85, 2
    %p847 = scmp.gt.s32.totalorder %s846, 0
    %s848 = scalar_select %p847, %s846, 0
    %s849 = ssub.s32 %s92, 2
    %p850 = scmp.gt.s32.totalorder %s849, 0
    %s851 = scalar_select %p850, %s849, 0
    %s852 = ssub.s32 %s848, %s851
    %p853 = scmp.eq.s32.totalorder %s852, 0
    %s855 = sadd.s32 %s854, 1
    %s856 = scalar_select %p853, %s854, %s855
    %p859 = pneg %p853
    %p860 = scmp.eq.s32.totalorder %s85, 3
    %p861 = por %p859, %p860
    %p862 = scmp.ne.s32.totalorder %s854, %s857
    %p863 = scmp.eq.s32.totalorder %s85, 0
    %p864 = por %p862, %p863
    %p865 = scmp.ne.s32.totalorder %s854, %s857
    %p866 = scmp.eq.s32.totalorder %s90, 3
    %p867 = por %p865, %p866
    %p868 = scmp.ne.s32.totalorder %s857, %s858
    %p869 = scmp.eq.s32.totalorder %s90, 0
    %p870 = por %p868, %p869
    %p871 = scmp.ne.s32.totalorder %s857, %s858
    %p872 = scmp.eq.s32.totalorder %s91, 3
    %p873 = por %p871, %p872
    %p875 = scmp.ne.s32.totalorder %s858, %s874
    %p876 = scmp.eq.s32.totalorder %s91, 0
    %p877 = por %p875, %p876
    %s878 = ssub.s32 %s85, 2
    %p879 = scmp.gt.s32.totalorder %s878, 0
    %s880 = scalar_select %p879, %s878, 0
    %s881 = ssub.s32 %s92, 2
    %p882 = scmp.gt.s32.totalorder %s881, 0
    %s883 = scalar_select %p882, %s881, 0
    %s884 = ssub.s32 %s880, %s883
    %p885 = scmp.eq.s32.totalorder %s884, 0
    %s887 = sadd.s32 %s886, 1
    %s888 = scalar_select %p885, %s886, %s887
    %p891 = pneg %p885
    %p892 = scmp.eq.s32.totalorder %s85, 3
    %p893 = por %p891, %p892
    %p894 = scmp.ne.s32.totalorder %s886, %s889
    %p895 = scmp.eq.s32.totalorder %s85, 0
    %p896 = por %p894, %p895
    %p897 = scmp.ne.s32.totalorder %s886, %s889
    %p898 = scmp.eq.s32.totalorder %s90, 3
    %p899 = por %p897, %p898
    %p900 = scmp.ne.s32.totalorder %s889, %s890
    %p901 = scmp.eq.s32.totalorder %s90, 0
    %p902 = por %p900, %p901
    %p903 = scmp.ne.s32.totalorder %s889, %s890
    %p904 = scmp.eq.s32.totalorder %s91, 3
    %p905 = por %p903, %p904
    %p907 = scmp.ne.s32.totalorder %s890, %s906
    %p908 = scmp.eq.s32.totalorder %s91, 0
    %p909 = por %p907, %p908
    %s910 = ssub.s32 %s85, 2
    %p911 = scmp.gt.s32.totalorder %s910, 0
    %s912 = scalar_select %p911, %s910, 0
    %s913 = ssub.s32 %s92, 2
    %p914 = scmp.gt.s32.totalorder %s913, 0
    %s915 = scalar_select %p914, %s913, 0
    %s916 = ssub.s32 %s912, %s915
    %p917 = scmp.eq.s32.totalorder %s916, 0
    %s919 = sadd.s32 %s918, 1
    %s920 = scalar_select %p917, %s918, %s919
    %p923 = pneg %p917
    %p924 = scmp.eq.s32.totalorder %s85, 3
    %p925 = por %p923, %p924
    %p926 = scmp.ne.s32.totalorder %s918, %s921
    %p927 = scmp.eq.s32.totalorder %s85, 0
    %p928 = por %p926, %p927
    %p929 = scmp.ne.s32.totalorder %s918, %s921
    %p930 = scmp.eq.s32.totalorder %s90, 3
    %p931 = por %p929, %p930
    %p932 = scmp.ne.s32.totalorder %s921, %s922
    %p933 = scmp.eq.s32.totalorder %s90, 0
    %p934 = por %p932, %p933
    %p935 = scmp.ne.s32.totalorder %s921, %s922
    %p936 = scmp.eq.s32.totalorder %s91, 3
    %p937 = por %p935, %p936
    %p939 = scmp.ne.s32.totalorder %s922, %s938
    %p940 = scmp.eq.s32.totalorder %s91, 0
    %p941 = por %p939, %p940
    %s942 = ssub.s32 %s85, 2
    %p943 = scmp.gt.s32.totalorder %s942, 0
    %s944 = scalar_select %p943, %s942, 0
    %s945 = ssub.s32 %s92, 2
    %p946 = scmp.gt.s32.totalorder %s945, 0
    %s947 = scalar_select %p946, %s945, 0
    %s948 = ssub.s32 %s944, %s947
    %p949 = scmp.eq.s32.totalorder %s948, 0
    %s951 = sadd.s32 %s950, 1
    %s952 = scalar_select %p949, %s950, %s951
    %p955 = pneg %p949
    %p956 = scmp.eq.s32.totalorder %s85, 3
    %p957 = por %p955, %p956
    %p958 = scmp.ne.s32.totalorder %s950, %s953
    %p959 = scmp.eq.s32.totalorder %s85, 0
    %p960 = por %p958, %p959
    %p961 = scmp.ne.s32.totalorder %s950, %s953
    %p962 = scmp.eq.s32.totalorder %s90, 3
    %p963 = por %p961, %p962
    %p964 = scmp.ne.s32.totalorder %s953, %s954
    %p965 = scmp.eq.s32.totalorder %s90, 0
    %p966 = por %p964, %p965
    %p967 = scmp.ne.s32.totalorder %s953, %s954
    %p968 = scmp.eq.s32.totalorder %s91, 3
    %p969 = por %p967, %p968
    %p971 = scmp.ne.s32.totalorder %s954, %s970
    %p972 = scmp.eq.s32.totalorder %s91, 0
    %p973 = por %p971, %p972
    %s974 = ssub.s32 %s85, 2
    %p975 = scmp.gt.s32.totalorder %s974, 0
    %s976 = scalar_select %p975, %s974, 0
    %s977 = ssub.s32 %s92, 2
    %p978 = scmp.gt.s32.totalorder %s977, 0
    %s979 = scalar_select %p978, %s977, 0
    %s980 = ssub.s32 %s976, %s979
    %p981 = scmp.eq.s32.totalorder %s980, 0
    %s983 = sadd.s32 %s982, 1
    %s984 = scalar_select %p981, %s982, %s983
    %p987 = pneg %p981
    %p988 = scmp.eq.s32.totalorder %s85, 3
    %p989 = por %p987, %p988
    %p990 = scmp.ne.s32.totalorder %s982, %s985
    %p991 = scmp.eq.s32.totalorder %s85, 0
    %p992 = por %p990, %p991
    %p993 = scmp.ne.s32.totalorder %s982, %s985
    %p994 = scmp.eq.s32.totalorder %s90, 3
    %p995 = por %p993, %p994
    %p996 = scmp.ne.s32.totalorder %s985, %s986
    %p997 = scmp.eq.s32.totalorder %s90, 0
    %p998 = por %p996, %p997
    %p999 = scmp.ne.s32.totalorder %s985, %s986
    %p1000 = scmp.eq.s32.totalorder %s91, 3
    %p1001 = por %p999, %p1000
    %p1003 = scmp.ne.s32.totalorder %s986, %s1002
    %p1004 = scmp.eq.s32.totalorder %s91, 0
    %p1005 = por %p1003, %p1004
    %s1006 = ssub.s32 %s85, 2
    %p1007 = scmp.gt.s32.totalorder %s1006, 0
    %s1008 = scalar_select %p1007, %s1006, 0
    %s1009 = ssub.s32 %s92, 2
    %p1010 = scmp.gt.s32.totalorder %s1009, 0
    %s1011 = scalar_select %p1010, %s1009, 0
    %s1012 = ssub.s32 %s1008, %s1011
    %p1013 = scmp.eq.s32.totalorder %s1012, 0
    %s1015 = sadd.s32 %s1014, 1
    %s1016 = scalar_select %p1013, %s1014, %s1015
    %p1019 = pneg %p1013
    %p1020 = scmp.eq.s32.totalorder %s85, 3
    %p1021 = por %p1019, %p1020
    %p1022 = scmp.ne.s32.totalorder %s1014, %s1017
    %p1023 = scmp.eq.s32.totalorder %s85, 0
    %p1024 = por %p1022, %p1023
    %p1025 = scmp.ne.s32.totalorder %s1014, %s1017
    %p1026 = scmp.eq.s32.totalorder %s90, 3
    %p1027 = por %p1025, %p1026
    %p1028 = scmp.ne.s32.totalorder %s1017, %s1018
    %p1029 = scmp.eq.s32.totalorder %s90, 0
    %p1030 = por %p1028, %p1029
    %p1031 = scmp.ne.s32.totalorder %s1017, %s1018
    %p1032 = scmp.eq.s32.totalorder %s91, 3
    %p1033 = por %p1031, %p1032
    %p1035 = scmp.ne.s32.totalorder %s1018, %s1034
    %p1036 = scmp.eq.s32.totalorder %s91, 0
    %p1037 = por %p1035, %p1036
    %s1038 = ssub.s32 %s85, 2
    %p1039 = scmp.gt.s32.totalorder %s1038, 0
    %s1040 = scalar_select %p1039, %s1038, 0
    %s1041 = ssub.s32 %s92, 2
    %p1042 = scmp.gt.s32.totalorder %s1041, 0
    %s1043 = scalar_select %p1042, %s1041, 0
    %s1044 = ssub.s32 %s1040, %s1043
    %p1045 = scmp.eq.s32.totalorder %s1044, 0
    %s1047 = sadd.s32 %s1046, 1
    %s1048 = scalar_select %p1045, %s1046, %s1047
    %p1051 = pneg %p1045
    %p1052 = scmp.eq.s32.totalorder %s85, 3
    %p1053 = por %p1051, %p1052
    %p1054 = scmp.ne.s32.totalorder %s1046, %s1049
    %p1055 = scmp.eq.s32.totalorder %s85, 0
    %p1056 = por %p1054, %p1055
    %p1057 = scmp.ne.s32.totalorder %s1046, %s1049
    %p1058 = scmp.eq.s32.totalorder %s90, 3
    %p1059 = por %p1057, %p1058
    %p1060 = scmp.ne.s32.totalorder %s1049, %s1050
    %p1061 = scmp.eq.s32.totalorder %s90, 0
    %p1062 = por %p1060, %p1061
    %p1063 = scmp.ne.s32.totalorder %s1049, %s1050
    %p1064 = scmp.eq.s32.totalorder %s91, 3
    %p1065 = por %p1063, %p1064
    %p1067 = scmp.ne.s32.totalorder %s1050, %s1066
    %p1068 = scmp.eq.s32.totalorder %s91, 0
    %p1069 = por %p1067, %p1068
    %s1070 = ssub.s32 %s85, 2
    %p1071 = scmp.gt.s32.totalorder %s1070, 0
    %s1072 = scalar_select %p1071, %s1070, 0
    %s1073 = ssub.s32 %s92, 2
    %p1074 = scmp.gt.s32.totalorder %s1073, 0
    %s1075 = scalar_select %p1074, %s1073, 0
    %s1076 = ssub.s32 %s1072, %s1075
    %p1077 = scmp.eq.s32.totalorder %s1076, 0
    %s1079 = sadd.s32 %s1078, 1
    %s1080 = scalar_select %p1077, %s1078, %s1079
    %p1083 = pneg %p1077
    %p1084 = scmp.eq.s32.totalorder %s85, 3
    %p1085 = por %p1083, %p1084
    %p1086 = scmp.ne.s32.totalorder %s1078, %s1081
    %p1087 = scmp.eq.s32.totalorder %s85, 0
    %p1088 = por %p1086, %p1087
    %p1089 = scmp.ne.s32.totalorder %s1078, %s1081
    %p1090 = scmp.eq.s32.totalorder %s90, 3
    %p1091 = por %p1089, %p1090
    %p1092 = scmp.ne.s32.totalorder %s1081, %s1082
    %p1093 = scmp.eq.s32.totalorder %s90, 0
    %p1094 = por %p1092, %p1093
    %p1095 = scmp.ne.s32.totalorder %s1081, %s1082
    %p1096 = scmp.eq.s32.totalorder %s91, 3
    %p1097 = por %p1095, %p1096
    %p1099 = scmp.ne.s32.totalorder %s1082, %s1098
    %p1100 = scmp.eq.s32.totalorder %s91, 0
    %p1101 = por %p1099, %p1100
    %s1102 = ssub.s32 %s85, 2
    %p1103 = scmp.gt.s32.totalorder %s1102, 0
    %s1104 = scalar_select %p1103, %s1102, 0
    %s1105 = ssub.s32 %s92, 2
    %p1106 = scmp.gt.s32.totalorder %s1105, 0
    %s1107 = scalar_select %p1106, %s1105, 0
    %s1108 = ssub.s32 %s1104, %s1107
    %p1109 = scmp.eq.s32.totalorder %s1108, 0
    %s1111 = sadd.s32 %s1110, 1
    %s1112 = scalar_select %p1109, %s1110, %s1111
    %p1115 = pneg %p1109
    %p1116 = scmp.eq.s32.totalorder %s85, 3
    %p1117 = por %p1115, %p1116
    %p1118 = scmp.ne.s32.totalorder %s1110, %s1113
    %p1119 = scmp.eq.s32.totalorder %s85, 0
    %p1120 = por %p1118, %p1119
    %p1121 = scmp.ne.s32.totalorder %s1110, %s1113
    %p1122 = scmp.eq.s32.totalorder %s90, 3
    %p1123 = por %p1121, %p1122
    %p1124 = scmp.ne.s32.totalorder %s1113, %s1114
    %p1125 = scmp.eq.s32.totalorder %s90, 0
    %p1126 = por %p1124, %p1125
    %p1127 = scmp.ne.s32.totalorder %s1113, %s1114
    %p1128 = scmp.eq.s32.totalorder %s91, 3
    %p1129 = por %p1127, %p1128
    %p1131 = scmp.ne.s32.totalorder %s1114, %s1130
    %p1132 = scmp.eq.s32.totalorder %s91, 0
    %p1133 = por %p1131, %p1132
    %s1134 = ssub.s32 %s85, 2
    %p1135 = scmp.gt.s32.totalorder %s1134, 0
    %s1136 = scalar_select %p1135, %s1134, 0
    %s1137 = ssub.s32 %s92, 2
    %p1138 = scmp.gt.s32.totalorder %s1137, 0
    %s1139 = scalar_select %p1138, %s1137, 0
    %s1140 = ssub.s32 %s1136, %s1139
    %p1141 = scmp.eq.s32.totalorder %s1140, 0
    %s1143 = sadd.s32 %s1142, 1
    %s1144 = scalar_select %p1141, %s1142, %s1143
    %p1147 = pneg %p1141
    %p1148 = scmp.eq.s32.totalorder %s85, 3
    %p1149 = por %p1147, %p1148
    %p1150 = scmp.ne.s32.totalorder %s1142, %s1145
    %p1151 = scmp.eq.s32.totalorder %s85, 0
    %p1152 = por %p1150, %p1151
    %p1153 = scmp.ne.s32.totalorder %s1142, %s1145
    %p1154 = scmp.eq.s32.totalorder %s90, 3
    %p1155 = por %p1153, %p1154
    %p1156 = scmp.ne.s32.totalorder %s1145, %s1146
    %p1157 = scmp.eq.s32.totalorder %s90, 0
    %p1158 = por %p1156, %p1157
    %p1159 = scmp.ne.s32.totalorder %s1145, %s1146
    %p1160 = scmp.eq.s32.totalorder %s91, 3
    %p1161 = por %p1159, %p1160
    %p1163 = scmp.ne.s32.totalorder %s1146, %s1162
    %p1164 = scmp.eq.s32.totalorder %s91, 0
    %p1165 = por %p1163, %p1164
    %s1166 = ssub.s32 %s85, 2
    %p1167 = scmp.gt.s32.totalorder %s1166, 0
    %s1168 = scalar_select %p1167, %s1166, 0
    %s1169 = ssub.s32 %s92, 2
    %p1170 = scmp.gt.s32.totalorder %s1169, 0
    %s1171 = scalar_select %p1170, %s1169, 0
    %s1172 = ssub.s32 %s1168, %s1171
    %p1173 = scmp.eq.s32.totalorder %s1172, 0
    %s1175 = sadd.s32 %s1174, 1
    %s1176 = scalar_select %p1173, %s1174, %s1175
    %p1179 = pneg %p1173
    %p1180 = scmp.eq.s32.totalorder %s85, 3
    %p1181 = por %p1179, %p1180
    %p1182 = scmp.ne.s32.totalorder %s1174, %s1177
    %p1183 = scmp.eq.s32.totalorder %s85, 0
    %p1184 = por %p1182, %p1183
    %p1185 = scmp.ne.s32.totalorder %s1174, %s1177
    %p1186 = scmp.eq.s32.totalorder %s90, 3
    %p1187 = por %p1185, %p1186
    %p1188 = scmp.ne.s32.totalorder %s1177, %s1178
    %p1189 = scmp.eq.s32.totalorder %s90, 0
    %p1190 = por %p1188, %p1189
    %p1191 = scmp.ne.s32.totalorder %s1177, %s1178
    %p1192 = scmp.eq.s32.totalorder %s91, 3
    %p1193 = por %p1191, %p1192
    %p1195 = scmp.ne.s32.totalorder %s1178, %s1194
    %p1196 = scmp.eq.s32.totalorder %s91, 0
    %p1197 = por %p1195, %p1196
    %s1199 = sadd.s32 %s1198, 1
    %p1202 = scmp.eq.s32.totalorder %s85, 3
    %p1203 = scmp.ne.s32.totalorder %s1198, %s1200
    %p1204 = scmp.eq.s32.totalorder %s85, 0
    %p1205 = por %p1203, %p1204
    %p1206 = scmp.ne.s32.totalorder %s1198, %s1200
    %p1207 = scmp.eq.s32.totalorder %s90, 3
    %p1208 = por %p1206, %p1207
    %p1209 = scmp.ne.s32.totalorder %s1200, %s1201
    %p1210 = scmp.eq.s32.totalorder %s90, 0
    %p1211 = por %p1209, %p1210
    %p1212 = scmp.ne.s32.totalorder %s1200, %s1201
    %p1213 = scmp.eq.s32.totalorder %s91, 3
    %p1214 = por %p1212, %p1213
    %p1216 = scmp.ne.s32.totalorder %s1201, %s1215
    %p1217 = scmp.eq.s32.totalorder %s91, 0
    %p1218 = por %p1216, %p1217
    %s1220 = sadd.s32 %s1219, 1
    %p1223 = scmp.eq.s32.totalorder %s85, 3
    %p1224 = scmp.ne.s32.totalorder %s1219, %s1221
    %p1225 = scmp.eq.s32.totalorder %s85, 0
    %p1226 = por %p1224, %p1225
    %p1227 = scmp.ne.s32.totalorder %s1219, %s1221
    %p1228 = scmp.eq.s32.totalorder %s90, 3
    %p1229 = por %p1227, %p1228
    %p1230 = scmp.ne.s32.totalorder %s1221, %s1222
    %p1231 = scmp.eq.s32.totalorder %s90, 0
    %p1232 = por %p1230, %p1231
    %p1233 = scmp.ne.s32.totalorder %s1221, %s1222
    %p1234 = scmp.eq.s32.totalorder %s91, 3
    %p1235 = por %p1233, %p1234
    %p1237 = scmp.ne.s32.totalorder %s1222, %s1236
    %p1238 = scmp.eq.s32.totalorder %s91, 0
    %p1239 = por %p1237, %p1238
    %s1241 = sadd.s32 %s1240, 1
    %p1244 = scmp.eq.s32.totalorder %s85, 3
    %p1245 = scmp.ne.s32.totalorder %s1240, %s1242
    %p1246 = scmp.eq.s32.totalorder %s85, 0
    %p1247 = por %p1245, %p1246
    %p1248 = scmp.ne.s32.totalorder %s1240, %s1242
    %p1249 = scmp.eq.s32.totalorder %s90, 3
    %p1250 = por %p1248, %p1249
    %p1251 = scmp.ne.s32.totalorder %s1242, %s1243
    %p1252 = scmp.eq.s32.totalorder %s90, 0
    %p1253 = por %p1251, %p1252
    %p1254 = scmp.ne.s32.totalorder %s1242, %s1243
    %p1255 = scmp.eq.s32.totalorder %s91, 3
    %p1256 = por %p1254, %p1255
    %p1258 = scmp.ne.s32.totalorder %s1243, %s1257
    %p1259 = scmp.eq.s32.totalorder %s91, 0
    %p1260 = por %p1258, %p1259
    %p1261 = scmp.le.s32.totalorder 1, %s85
    %p1262 = scmp.lt.s32.totalorder %s85, 5
    %p1263 = pnand %p1261, %p1262
    %p1264 = pneg %p1263
    // Predicated region
    $region9: #{transformer_forward.1} parent=5 // pred_check
      _
    $region10: #{transformer_forward.1} parent=5 // pred_check_branch
      %1266 = sbr.rel (%p1263) target = $region12
    $region11: #{transformer_forward.1} parent=5 // pred_region
      %s1267 = ssub.s32 %s85, 1
      // Predicated region
      $region13: #{transformer_forward.1} parent=11 // pred_check
        %p1268 = pneg %p106
      $region14: #{transformer_forward.1} parent=11 // pred_check_branch
        %1270 = sbr.rel (%p1268) target = $region16
      $region15: #{transformer_forward.1} parent=11 // pred_region
        _
      $region16: #{transformer_forward.1} parent=11 // pred_fallthru
        _
      // Predicated region
      $region17: #{transformer_forward.1} parent=11 // pred_check
        %p1271 = pneg %p127
      $region18: #{transformer_forward.1} parent=11 // pred_check_branch
        %1273 = sbr.rel (%p1271) target = $region20
      $region19: #{transformer_forward.1} parent=11 // pred_region
        _
      $region20: #{transformer_forward.1} parent=11 // pred_fallthru
        _
      // Predicated region
      $region21: #{transformer_forward.1} parent=11 // pred_check
        %p1274 = pneg %p148
      $region22: #{transformer_forward.1} parent=11 // pred_check_branch
        %1276 = sbr.rel (%p1274) target = $region24
      $region23: #{transformer_forward.1} parent=11 // pred_region
        _
      $region24: #{transformer_forward.1} parent=11 // pred_fallthru
        _
      // Predicated region
      $region25: #{transformer_forward.1} parent=11 // pred_check
        %p1277 = pneg %p169
      $region26: #{transformer_forward.1} parent=11 // pred_check_branch
        %1279 = sbr.rel (%p1277) target = $region28
      $region27: #{transformer_forward.1} parent=11 // pred_region
        _
      $region28: #{transformer_forward.1} parent=11 // pred_fallthru
        _
      // Predicated region
      $region29: #{transformer_forward.1} parent=11 // pred_check
        %p1280 = pneg %p190
      $region30: #{transformer_forward.1} parent=11 // pred_check_branch
        %1282 = sbr.rel (%p1280) target = $region32
      $region31: #{transformer_forward.1} parent=11 // pred_region
        _
      $region32: #{transformer_forward.1} parent=11 // pred_fallthru
        _
      // Predicated region
      $region33: #{transformer_forward.1} parent=11 // pred_check
        %p1283 = pneg %p1211
      $region34: #{transformer_forward.1} parent=11 // pred_check_branch
        %1285 = sbr.rel (%p1283) target = $region36
      $region35: #{transformer_forward.1} parent=11 // pred_region
        _
      $region36: #{transformer_forward.1} parent=11 // pred_fallthru
        _
      // Predicated region
      $region37: #{transformer_forward.1} parent=11 // pred_check
        %p1286 = pneg %p1232
      $region38: #{transformer_forward.1} parent=11 // pred_check_branch
        %1288 = sbr.rel (%p1286) target = $region40
      $region39: #{transformer_forward.1} parent=11 // pred_region
        _
      $region40: #{transformer_forward.1} parent=11 // pred_fallthru
        _
    $region12: #{transformer_forward.1} parent=5 // pred_fallthru
      _
    %p1289 = scmp.lt.s32.totalorder %s85, 4
    // Predicated region
    $region41: #{transformer_forward.1} parent=5 // pred_check
      %p1290 = pneg %p1289
    $region42: #{transformer_forward.1} parent=5 // pred_check_branch
      %1292 = sbr.rel (%p1290) target = $region44
    $region43: #{transformer_forward.1} parent=5 // pred_region
      // Predicated region
      $region45: #{transformer_forward.1} parent=43 // pred_check
        %p1293 = pneg %p214
      $region46: #{transformer_forward.1} parent=43 // pred_check_branch
        %1295 = sbr.rel (%p1293) target = $region48
      $region47: #{transformer_forward.1} parent=43 // pred_region
        %p1296 = scmp.lt.s32.totalorder %s85, 1
        %s1297 = scalar_select %p1296, %s85, 1
        %p1298 = scmp.lt.s32.totalorder %s1297, 1
        %s1299 = scalar_select %p1298, %s1297, 1
        %s1300 = smul.addr %s1299, 4
        %s1301 = smul.addr %s1300, 8
        %s1302 = scalar_lea.vmem %s11, %s1301
        %p1303 = scmp.lt.s32.totalorder %s85, 1
        %s1304 = scalar_select %p1303, %s85, 1
      $region48: #{transformer_forward.1} parent=43 // pred_fallthru
        _
      // Predicated region
      $region49: #{transformer_forward.1} parent=43 // pred_check
        %p1305 = pneg %p244
      $region50: #{transformer_forward.1} parent=43 // pred_check_branch
        %1307 = sbr.rel (%p1305) target = $region52
      $region51: #{transformer_forward.1} parent=43 // pred_region
        %p1308 = scmp.lt.s32.totalorder %s85, 1
        %s1309 = scalar_select %p1308, %s85, 1
        %p1310 = scmp.lt.s32.totalorder %s1309, 1
        %s1311 = scalar_select %p1310, %s1309, 1
        %s1312 = scalar_lea.vmem %s13, %s1311
        %p1313 = scmp.lt.s32.totalorder %s85, 1
        %s1314 = scalar_select %p1313, %s85, 1
      $region52: #{transformer_forward.1} parent=43 // pred_fallthru
        _
      // Predicated region
      $region53: #{transformer_forward.1} parent=43 // pred_check
        %p1315 = pneg %p274
      $region54: #{transformer_forward.1} parent=43 // pred_check_branch
        %1317 = sbr.rel (%p1315) target = $region56
      $region55: #{transformer_forward.1} parent=43 // pred_region
        %p1318 = scmp.lt.s32.totalorder %s85, 1
        %s1319 = scalar_select %p1318, %s85, 1
        %p1320 = scmp.lt.s32.totalorder %s1319, 1
        %s1321 = scalar_select %p1320, %s1319, 1
        %s1322 = smul.addr %s1321, 4
        %s1323 = smul.addr %s1322, 8
        %s1324 = scalar_lea.vmem %s15, %s1323
        %p1325 = scmp.lt.s32.totalorder %s85, 1
        %s1326 = scalar_select %p1325, %s85, 1
      $region56: #{transformer_forward.1} parent=43 // pred_fallthru
        _
      // Predicated region
      $region57: #{transformer_forward.1} parent=43 // pred_check
        %p1327 = pneg %p304
      $region58: #{transformer_forward.1} parent=43 // pred_check_branch
        %1329 = sbr.rel (%p1327) target = $region60
      $region59: #{transformer_forward.1} parent=43 // pred_region
        %p1330 = scmp.lt.s32.totalorder %s85, 1
        %s1331 = scalar_select %p1330, %s85, 1
        %p1332 = scmp.lt.s32.totalorder %s1331, 1
        %s1333 = scalar_select %p1332, %s1331, 1
        %s1334 = scalar_lea.vmem %s17, %s1333
        %p1335 = scmp.lt.s32.totalorder %s85, 1
        %s1336 = scalar_select %p1335, %s85, 1
      $region60: #{transformer_forward.1} parent=43 // pred_fallthru
        _
      // Predicated region
      $region61: #{transformer_forward.1} parent=43 // pred_check
        %p1337 = pneg %p334
      $region62: #{transformer_forward.1} parent=43 // pred_check_branch
        %1339 = sbr.rel (%p1337) target = $region64
      $region63: #{transformer_forward.1} parent=43 // pred_region
        %p1340 = scmp.lt.s32.totalorder %s85, 1
        %s1341 = scalar_select %p1340, %s85, 1
        %p1342 = scmp.lt.s32.totalorder %s1341, 1
        %s1343 = scalar_select %p1342, %s1341, 1
        %s1344 = scalar_lea.vmem %s19, %s1343
        %p1345 = scmp.lt.s32.totalorder %s85, 1
        %s1346 = scalar_select %p1345, %s85, 1
      $region64: #{transformer_forward.1} parent=43 // pred_fallthru
        _
      // Predicated region
      $region65: #{transformer_forward.1} parent=43 // pred_check
        %p1347 = pneg %p364
      $region66: #{transformer_forward.1} parent=43 // pred_check_branch
        %1349 = sbr.rel (%p1347) target = $region68
      $region67: #{transformer_forward.1} parent=43 // pred_region
        %p1350 = scmp.lt.s32.totalorder %s85, 1
        %s1351 = scalar_select %p1350, %s85, 1
        %p1352 = scmp.lt.s32.totalorder %s1351, 1
        %s1353 = scalar_select %p1352, %s1351, 1
        %s1354 = scalar_lea.vmem %s21, %s1353
        %p1355 = scmp.lt.s32.totalorder %s85, 1
        %s1356 = scalar_select %p1355, %s85, 1
      $region68: #{transformer_forward.1} parent=43 // pred_fallthru
        _
      // Predicated region
      $region69: #{transformer_forward.1} parent=43 // pred_check
        %p1357 = pneg %p394
      $region70: #{transformer_forward.1} parent=43 // pred_check_branch
        %1359 = sbr.rel (%p1357) target = $region72
      $region71: #{transformer_forward.1} parent=43 // pred_region
        %p1360 = scmp.lt.s32.totalorder %s85, 1
        %s1361 = scalar_select %p1360, %s85, 1
        %p1362 = scmp.lt.s32.totalorder %s1361, 1
        %s1363 = scalar_select %p1362, %s1361, 1
        %s1364 = smul.addr %s1363, 4
        %s1365 = smul.addr %s1364, 8
        %s1366 = scalar_lea.vmem %s23, %s1365
        %p1367 = scmp.lt.s32.totalorder %s85, 1
        %s1368 = scalar_select %p1367, %s85, 1
      $region72: #{transformer_forward.1} parent=43 // pred_fallthru
        _
      // Predicated region
      $region73: #{transformer_forward.1} parent=43 // pred_check
        %p1369 = pneg %p424
      $region74: #{transformer_forward.1} parent=43 // pred_check_branch
        %1371 = sbr.rel (%p1369) target = $region76
      $region75: #{transformer_forward.1} parent=43 // pred_region
        %p1372 = scmp.lt.s32.totalorder %s85, 1
        %s1373 = scalar_select %p1372, %s85, 1
        %p1374 = scmp.lt.s32.totalorder %s1373, 1
        %s1375 = scalar_select %p1374, %s1373, 1
        %s1376 = scalar_lea.vmem %s25, %s1375
        %p1377 = scmp.lt.s32.totalorder %s85, 1
        %s1378 = scalar_select %p1377, %s85, 1
      $region76: #{transformer_forward.1} parent=43 // pred_fallthru
        _
      // Predicated region
      $region77: #{transformer_forward.1} parent=43 // pred_check
        %p1379 = pneg %p454
      $region78: #{transformer_forward.1} parent=43 // pred_check_branch
        %1381 = sbr.rel (%p1379) target = $region80
      $region79: #{transformer_forward.1} parent=43 // pred_region
        %p1382 = scmp.lt.s32.totalorder %s85, 1
        %s1383 = scalar_select %p1382, %s85, 1
        %p1384 = scmp.lt.s32.totalorder %s1383, 1
        %s1385 = scalar_select %p1384, %s1383, 1
        %s1386 = smul.addr %s1385, 8
        %s1387 = smul.addr %s1386, 8
        %s1388 = scalar_lea.vmem %s27, %s1387
        %p1389 = scmp.lt.s32.totalorder %s85, 1
        %s1390 = scalar_select %p1389, %s85, 1
      $region80: #{transformer_forward.1} parent=43 // pred_fallthru
        _
      // Predicated region
      $region81: #{transformer_forward.1} parent=43 // pred_check
        %p1391 = pneg %p484
      $region82: #{transformer_forward.1} parent=43 // pred_check_branch
        %1393 = sbr.rel (%p1391) target = $region84
      $region83: #{transformer_forward.1} parent=43 // pred_region
        %p1394 = scmp.lt.s32.totalorder %s85, 1
        %s1395 = scalar_select %p1394, %s85, 1
        %p1396 = scmp.lt.s32.totalorder %s1395, 1
        %s1397 = scalar_select %p1396, %s1395, 1
        %s1398 = scalar_lea.vmem %s29, %s1397
        %p1399 = scmp.lt.s32.totalorder %s85, 1
        %s1400 = scalar_select %p1399, %s85, 1
      $region84: #{transformer_forward.1} parent=43 // pred_fallthru
        _
      // Predicated region
      $region85: #{transformer_forward.1} parent=43 // pred_check
        %p1401 = pneg %p514
      $region86: #{transformer_forward.1} parent=43 // pred_check_branch
        %1403 = sbr.rel (%p1401) target = $region88
      $region87: #{transformer_forward.1} parent=43 // pred_region
        %p1404 = scmp.lt.s32.totalorder %s85, 1
        %s1405 = scalar_select %p1404, %s85, 1
        %p1406 = scmp.lt.s32.totalorder %s1405, 1
        %s1407 = scalar_select %p1406, %s1405, 1
        %s1408 = scalar_lea.vmem %s31, %s1407
        %p1409 = scmp.lt.s32.totalorder %s85, 1
        %s1410 = scalar_select %p1409, %s85, 1
      $region88: #{transformer_forward.1} parent=43 // pred_fallthru
        _
      // Predicated region
      $region89: #{transformer_forward.1} parent=43 // pred_check
        %p1411 = pneg %p544
      $region90: #{transformer_forward.1} parent=43 // pred_check_branch
        %1413 = sbr.rel (%p1411) target = $region92
      $region91: #{transformer_forward.1} parent=43 // pred_region
        %p1414 = scmp.lt.s32.totalorder %s85, 1
        %s1415 = scalar_select %p1414, %s85, 1
        %p1416 = scmp.lt.s32.totalorder %s1415, 1
        %s1417 = scalar_select %p1416, %s1415, 1
        %s1418 = scalar_lea.vmem %s33, %s1417
        %p1419 = scmp.lt.s32.totalorder %s85, 1
        %s1420 = scalar_select %p1419, %s85, 1
      $region92: #{transformer_forward.1} parent=43 // pred_fallthru
        _
      // Predicated region
      $region93: #{transformer_forward.1} parent=43 // pred_check
        %p1421 = pneg %p576
      $region94: #{transformer_forward.1} parent=43 // pred_check_branch
        %1423 = sbr.rel (%p1421) target = $region96
      $region95: #{transformer_forward.1} parent=43 // pred_region
        %s1424 = ssub.s32 %s85, 2
        %p1425 = scmp.gt.s32.totalorder %s1424, 0
        %s1426 = scalar_select %p1425, %s1424, 0
        %p1427 = scmp.lt.s32.totalorder %s1426, 1
        %s1428 = scalar_select %p1427, %s1426, 1
        %s1429 = smul.addr %s1428, 4
        %s1430 = smul.addr %s1429, 8
        %s1431 = scalar_lea.vmem %s35, %s1430
        %s1432 = ssub.s32 %s85, 2
        %p1433 = scmp.gt.s32.totalorder %s1432, 0
        %s1434 = scalar_select %p1433, %s1432, 0
      $region96: #{transformer_forward.1} parent=43 // pred_fallthru
        _
      // Predicated region
      $region97: #{transformer_forward.1} parent=43 // pred_check
        %p1435 = pneg %p608
      $region98: #{transformer_forward.1} parent=43 // pred_check_branch
        %1437 = sbr.rel (%p1435) target = $region100
      $region99: #{transformer_forward.1} parent=43 // pred_region
        %s1438 = ssub.s32 %s85, 2
        %p1439 = scmp.gt.s32.totalorder %s1438, 0
        %s1440 = scalar_select %p1439, %s1438, 0
        %p1441 = scmp.lt.s32.totalorder %s1440, 1
        %s1442 = scalar_select %p1441, %s1440, 1
        %s1443 = scalar_lea.vmem %s37, %s1442
        %s1444 = ssub.s32 %s85, 2
        %p1445 = scmp.gt.s32.totalorder %s1444, 0
        %s1446 = scalar_select %p1445, %s1444, 0
      $region100: #{transformer_forward.1} parent=43 // pred_fallthru
        _
      // Predicated region
      $region101: #{transformer_forward.1} parent=43 // pred_check
        %p1447 = pneg %p640
      $region102: #{transformer_forward.1} parent=43 // pred_check_branch
        %1449 = sbr.rel (%p1447) target = $region104
      $region103: #{transformer_forward.1} parent=43 // pred_region
        %s1450 = ssub.s32 %s85, 2
        %p1451 = scmp.gt.s32.totalorder %s1450, 0
        %s1452 = scalar_select %p1451, %s1450, 0
        %p1453 = scmp.lt.s32.totalorder %s1452, 1
        %s1454 = scalar_select %p1453, %s1452, 1
        %s1455 = smul.addr %s1454, 4
        %s1456 = smul.addr %s1455, 8
        %s1457 = scalar_lea.vmem %s39, %s1456
        %s1458 = ssub.s32 %s85, 2
        %p1459 = scmp.gt.s32.totalorder %s1458, 0
        %s1460 = scalar_select %p1459, %s1458, 0
      $region104: #{transformer_forward.1} parent=43 // pred_fallthru
        _
      // Predicated region
      $region105: #{transformer_forward.1} parent=43 // pred_check
        %p1461 = pneg %p672
      $region106: #{transformer_forward.1} parent=43 // pred_check_branch
        %1463 = sbr.rel (%p1461) target = $region108
      $region107: #{transformer_forward.1} parent=43 // pred_region
        %s1464 = ssub.s32 %s85, 2
        %p1465 = scmp.gt.s32.totalorder %s1464, 0
        %s1466 = scalar_select %p1465, %s1464, 0
        %p1467 = scmp.lt.s32.totalorder %s1466, 1
        %s1468 = scalar_select %p1467, %s1466, 1
        %s1469 = scalar_lea.vmem %s41, %s1468
        %s1470 = ssub.s32 %s85, 2
        %p1471 = scmp.gt.s32.totalorder %s1470, 0
        %s1472 = scalar_select %p1471, %s1470, 0
      $region108: #{transformer_forward.1} parent=43 // pred_fallthru
        _
      // Predicated region
      $region109: #{transformer_forward.1} parent=43 // pred_check
        %p1473 = pneg %p704
      $region110: #{transformer_forward.1} parent=43 // pred_check_branch
        %1475 = sbr.rel (%p1473) target = $region112
      $region111: #{transformer_forward.1} parent=43 // pred_region
        %s1476 = ssub.s32 %s85, 2
        %p1477 = scmp.gt.s32.totalorder %s1476, 0
        %s1478 = scalar_select %p1477, %s1476, 0
        %p1479 = scmp.lt.s32.totalorder %s1478, 1
        %s1480 = scalar_select %p1479, %s1478, 1
        %s1481 = scalar_lea.vmem %s43, %s1480
        %s1482 = ssub.s32 %s85, 2
        %p1483 = scmp.gt.s32.totalorder %s1482, 0
        %s1484 = scalar_select %p1483, %s1482, 0
      $region112: #{transformer_forward.1} parent=43 // pred_fallthru
        _
      // Predicated region
      $region113: #{transformer_forward.1} parent=43 // pred_check
        %p1485 = pneg %p736
      $region114: #{transformer_forward.1} parent=43 // pred_check_branch
        %1487 = sbr.rel (%p1485) target = $region116
      $region115: #{transformer_forward.1} parent=43 // pred_region
        %s1488 = ssub.s32 %s85, 2
        %p1489 = scmp.gt.s32.totalorder %s1488, 0
        %s1490 = scalar_select %p1489, %s1488, 0
        %p1491 = scmp.lt.s32.totalorder %s1490, 1
        %s1492 = scalar_select %p1491, %s1490, 1
        %s1493 = scalar_lea.vmem %s45, %s1492
        %s1494 = ssub.s32 %s85, 2
        %p1495 = scmp.gt.s32.totalorder %s1494, 0
        %s1496 = scalar_select %p1495, %s1494, 0
      $region116: #{transformer_forward.1} parent=43 // pred_fallthru
        _
      // Predicated region
      $region117: #{transformer_forward.1} parent=43 // pred_check
        %p1497 = pneg %p768
      $region118: #{transformer_forward.1} parent=43 // pred_check_branch
        %1499 = sbr.rel (%p1497) target = $region120
      $region119: #{transformer_forward.1} parent=43 // pred_region
        %s1500 = ssub.s32 %s85, 2
        %p1501 = scmp.gt.s32.totalorder %s1500, 0
        %s1502 = scalar_select %p1501, %s1500, 0
        %p1503 = scmp.lt.s32.totalorder %s1502, 1
        %s1504 = scalar_select %p1503, %s1502, 1
        %s1505 = smul.addr %s1504, 4
        %s1506 = smul.addr %s1505, 8
        %s1507 = scalar_lea.vmem %s47, %s1506
        %s1508 = ssub.s32 %s85, 2
        %p1509 = scmp.gt.s32.totalorder %s1508, 0
        %s1510 = scalar_select %p1509, %s1508, 0
      $region120: #{transformer_forward.1} parent=43 // pred_fallthru
        _
      // Predicated region
      $region121: #{transformer_forward.1} parent=43 // pred_check
        %p1511 = pneg %p800
      $region122: #{transformer_forward.1} parent=43 // pred_check_branch
        %1513 = sbr.rel (%p1511) target = $region124
      $region123: #{transformer_forward.1} parent=43 // pred_region
        %s1514 = ssub.s32 %s85, 2
        %p1515 = scmp.gt.s32.totalorder %s1514, 0
        %s1516 = scalar_select %p1515, %s1514, 0
        %p1517 = scmp.lt.s32.totalorder %s1516, 1
        %s1518 = scalar_select %p1517, %s1516, 1
        %s1519 = scalar_lea.vmem %s49, %s1518
        %s1520 = ssub.s32 %s85, 2
        %p1521 = scmp.gt.s32.totalorder %s1520, 0
        %s1522 = scalar_select %p1521, %s1520, 0
      $region124: #{transformer_forward.1} parent=43 // pred_fallthru
        _
      // Predicated region
      $region125: #{transformer_forward.1} parent=43 // pred_check
        %p1523 = pneg %p832
      $region126: #{transformer_forward.1} parent=43 // pred_check_branch
        %1525 = sbr.rel (%p1523) target = $region128
      $region127: #{transformer_forward.1} parent=43 // pred_region
        %s1526 = ssub.s32 %s85, 2
        %p1527 = scmp.gt.s32.totalorder %s1526, 0
        %s1528 = scalar_select %p1527, %s1526, 0
        %p1529 = scmp.lt.s32.totalorder %s1528, 1
        %s1530 = scalar_select %p1529, %s1528, 1
        %s1531 = smul.addr %s1530, 4
        %s1532 = smul.addr %s1531, 8
        %s1533 = scalar_lea.vmem %s51, %s1532
        %s1534 = ssub.s32 %s85, 2
        %p1535 = scmp.gt.s32.totalorder %s1534, 0
        %s1536 = scalar_select %p1535, %s1534, 0
      $region128: #{transformer_forward.1} parent=43 // pred_fallthru
        _
      // Predicated region
      $region129: #{transformer_forward.1} parent=43 // pred_check
        %p1537 = pneg %p864
      $region130: #{transformer_forward.1} parent=43 // pred_check_branch
        %1539 = sbr.rel (%p1537) target = $region132
      $region131: #{transformer_forward.1} parent=43 // pred_region
        %s1540 = ssub.s32 %s85, 2
        %p1541 = scmp.gt.s32.totalorder %s1540, 0
        %s1542 = scalar_select %p1541, %s1540, 0
        %p1543 = scmp.lt.s32.totalorder %s1542, 1
        %s1544 = scalar_select %p1543, %s1542, 1
        %s1545 = scalar_lea.vmem %s53, %s1544
        %s1546 = ssub.s32 %s85, 2
        %p1547 = scmp.gt.s32.totalorder %s1546, 0
        %s1548 = scalar_select %p1547, %s1546, 0
      $region132: #{transformer_forward.1} parent=43 // pred_fallthru
        _
      // Predicated region
      $region133: #{transformer_forward.1} parent=43 // pred_check
        %p1549 = pneg %p896
      $region134: #{transformer_forward.1} parent=43 // pred_check_branch
        %1551 = sbr.rel (%p1549) target = $region136
      $region135: #{transformer_forward.1} parent=43 // pred_region
        %s1552 = ssub.s32 %s85, 2
        %p1553 = scmp.gt.s32.totalorder %s1552, 0
        %s1554 = scalar_select %p1553, %s1552, 0
        %p1555 = scmp.lt.s32.totalorder %s1554, 1
        %s1556 = scalar_select %p1555, %s1554, 1
        %s1557 = smul.addr %s1556, 4
        %s1558 = smul.addr %s1557, 8
        %s1559 = scalar_lea.vmem %s55, %s1558
        %s1560 = ssub.s32 %s85, 2
        %p1561 = scmp.gt.s32.totalorder %s1560, 0
        %s1562 = scalar_select %p1561, %s1560, 0
      $region136: #{transformer_forward.1} parent=43 // pred_fallthru
        _
      // Predicated region
      $region137: #{transformer_forward.1} parent=43 // pred_check
        %p1563 = pneg %p928
      $region138: #{transformer_forward.1} parent=43 // pred_check_branch
        %1565 = sbr.rel (%p1563) target = $region140
      $region139: #{transformer_forward.1} parent=43 // pred_region
        %s1566 = ssub.s32 %s85, 2
        %p1567 = scmp.gt.s32.totalorder %s1566, 0
        %s1568 = scalar_select %p1567, %s1566, 0
        %p1569 = scmp.lt.s32.totalorder %s1568, 1
        %s1570 = scalar_select %p1569, %s1568, 1
        %s1571 = scalar_lea.vmem %s57, %s1570
        %s1572 = ssub.s32 %s85, 2
        %p1573 = scmp.gt.s32.totalorder %s1572, 0
        %s1574 = scalar_select %p1573, %s1572, 0
      $region140: #{transformer_forward.1} parent=43 // pred_fallthru
        _
      // Predicated region
      $region141: #{transformer_forward.1} parent=43 // pred_check
        %p1575 = pneg %p960
      $region142: #{transformer_forward.1} parent=43 // pred_check_branch
        %1577 = sbr.rel (%p1575) target = $region144
      $region143: #{transformer_forward.1} parent=43 // pred_region
        %s1578 = ssub.s32 %s85, 2
        %p1579 = scmp.gt.s32.totalorder %s1578, 0
        %s1580 = scalar_select %p1579, %s1578, 0
        %p1581 = scmp.lt.s32.totalorder %s1580, 1
        %s1582 = scalar_select %p1581, %s1580, 1
        %s1583 = scalar_lea.vmem %s59, %s1582
        %s1584 = ssub.s32 %s85, 2
        %p1585 = scmp.gt.s32.totalorder %s1584, 0
        %s1586 = scalar_select %p1585, %s1584, 0
      $region144: #{transformer_forward.1} parent=43 // pred_fallthru
        _
      // Predicated region
      $region145: #{transformer_forward.1} parent=43 // pred_check
        %p1587 = pneg %p992
      $region146: #{transformer_forward.1} parent=43 // pred_check_branch
        %1589 = sbr.rel (%p1587) target = $region148
      $region147: #{transformer_forward.1} parent=43 // pred_region
        %s1590 = ssub.s32 %s85, 2
        %p1591 = scmp.gt.s32.totalorder %s1590, 0
        %s1592 = scalar_select %p1591, %s1590, 0
        %p1593 = scmp.lt.s32.totalorder %s1592, 1
        %s1594 = scalar_select %p1593, %s1592, 1
        %s1595 = scalar_lea.vmem %s61, %s1594
        %s1596 = ssub.s32 %s85, 2
        %p1597 = scmp.gt.s32.totalorder %s1596, 0
        %s1598 = scalar_select %p1597, %s1596, 0
      $region148: #{transformer_forward.1} parent=43 // pred_fallthru
        _
      // Predicated region
      $region149: #{transformer_forward.1} parent=43 // pred_check
        %p1599 = pneg %p1024
      $region150: #{transformer_forward.1} parent=43 // pred_check_branch
        %1601 = sbr.rel (%p1599) target = $region152
      $region151: #{transformer_forward.1} parent=43 // pred_region
        %s1602 = ssub.s32 %s85, 2
        %p1603 = scmp.gt.s32.totalorder %s1602, 0
        %s1604 = scalar_select %p1603, %s1602, 0
        %p1605 = scmp.lt.s32.totalorder %s1604, 1
        %s1606 = scalar_select %p1605, %s1604, 1
        %s1607 = smul.addr %s1606, 4
        %s1608 = smul.addr %s1607, 8
        %s1609 = scalar_lea.vmem %s63, %s1608
        %s1610 = ssub.s32 %s85, 2
        %p1611 = scmp.gt.s32.totalorder %s1610, 0
        %s1612 = scalar_select %p1611, %s1610, 0
      $region152: #{transformer_forward.1} parent=43 // pred_fallthru
        _
      // Predicated region
      $region153: #{transformer_forward.1} parent=43 // pred_check
        %p1613 = pneg %p1056
      $region154: #{transformer_forward.1} parent=43 // pred_check_branch
        %1615 = sbr.rel (%p1613) target = $region156
      $region155: #{transformer_forward.1} parent=43 // pred_region
        %s1616 = ssub.s32 %s85, 2
        %p1617 = scmp.gt.s32.totalorder %s1616, 0
        %s1618 = scalar_select %p1617, %s1616, 0
        %p1619 = scmp.lt.s32.totalorder %s1618, 1
        %s1620 = scalar_select %p1619, %s1618, 1
        %s1621 = scalar_lea.vmem %s65, %s1620
        %s1622 = ssub.s32 %s85, 2
        %p1623 = scmp.gt.s32.totalorder %s1622, 0
        %s1624 = scalar_select %p1623, %s1622, 0
      $region156: #{transformer_forward.1} parent=43 // pred_fallthru
        _
      // Predicated region
      $region157: #{transformer_forward.1} parent=43 // pred_check
        %p1625 = pneg %p1088
      $region158: #{transformer_forward.1} parent=43 // pred_check_branch
        %1627 = sbr.rel (%p1625) target = $region160
      $region159: #{transformer_forward.1} parent=43 // pred_region
        %s1628 = ssub.s32 %s85, 2
        %p1629 = scmp.gt.s32.totalorder %s1628, 0
        %s1630 = scalar_select %p1629, %s1628, 0
        %p1631 = scmp.lt.s32.totalorder %s1630, 1
        %s1632 = scalar_select %p1631, %s1630, 1
        %s1633 = smul.addr %s1632, 8
        %s1634 = smul.addr %s1633, 8
        %s1635 = scalar_lea.vmem %s67, %s1634
        %s1636 = ssub.s32 %s85, 2
        %p1637 = scmp.gt.s32.totalorder %s1636, 0
        %s1638 = scalar_select %p1637, %s1636, 0
      $region160: #{transformer_forward.1} parent=43 // pred_fallthru
        _
      // Predicated region
      $region161: #{transformer_forward.1} parent=43 // pred_check
        %p1639 = pneg %p1120
      $region162: #{transformer_forward.1} parent=43 // pred_check_branch
        %1641 = sbr.rel (%p1639) target = $region164
      $region163: #{transformer_forward.1} parent=43 // pred_region
        %s1642 = ssub.s32 %s85, 2
        %p1643 = scmp.gt.s32.totalorder %s1642, 0
        %s1644 = scalar_select %p1643, %s1642, 0
        %p1645 = scmp.lt.s32.totalorder %s1644, 1
        %s1646 = scalar_select %p1645, %s1644, 1
        %s1647 = scalar_lea.vmem %s69, %s1646
        %s1648 = ssub.s32 %s85, 2
        %p1649 = scmp.gt.s32.totalorder %s1648, 0
        %s1650 = scalar_select %p1649, %s1648, 0
      $region164: #{transformer_forward.1} parent=43 // pred_fallthru
        _
      // Predicated region
      $region165: #{transformer_forward.1} parent=43 // pred_check
        %p1651 = pneg %p1152
      $region166: #{transformer_forward.1} parent=43 // pred_check_branch
        %1653 = sbr.rel (%p1651) target = $region168
      $region167: #{transformer_forward.1} parent=43 // pred_region
        %s1654 = ssub.s32 %s85, 2
        %p1655 = scmp.gt.s32.totalorder %s1654, 0
        %s1656 = scalar_select %p1655, %s1654, 0
        %p1657 = scmp.lt.s32.totalorder %s1656, 1
        %s1658 = scalar_select %p1657, %s1656, 1
        %s1659 = scalar_lea.vmem %s71, %s1658
        %s1660 = ssub.s32 %s85, 2
        %p1661 = scmp.gt.s32.totalorder %s1660, 0
        %s1662 = scalar_select %p1661, %s1660, 0
      $region168: #{transformer_forward.1} parent=43 // pred_fallthru
        _
      // Predicated region
      $region169: #{transformer_forward.1} parent=43 // pred_check
        %p1663 = pneg %p1184
      $region170: #{transformer_forward.1} parent=43 // pred_check_branch
        %1665 = sbr.rel (%p1663) target = $region172
      $region171: #{transformer_forward.1} parent=43 // pred_region
        %s1666 = ssub.s32 %s85, 2
        %p1667 = scmp.gt.s32.totalorder %s1666, 0
        %s1668 = scalar_select %p1667, %s1666, 0
        %p1669 = scmp.lt.s32.totalorder %s1668, 1
        %s1670 = scalar_select %p1669, %s1668, 1
        %s1671 = scalar_lea.vmem %s73, %s1670
        %s1672 = ssub.s32 %s85, 2
        %p1673 = scmp.gt.s32.totalorder %s1672, 0
        %s1674 = scalar_select %p1673, %s1672, 0
      $region172: #{transformer_forward.1} parent=43 // pred_fallthru
        _
    $region44: #{transformer_forward.1} parent=5 // pred_fallthru
      _
    %p1675 = scmp.le.s32.totalorder 1, %s85
    %p1676 = scmp.lt.s32.totalorder %s85, 5
    %p1677 = pnand %p1675, %p1676
    %p1678 = pneg %p1677
    // Predicated region
    $region173: #{transformer_forward.1} parent=5 // pred_check
      _
    $region174: #{transformer_forward.1} parent=5 // pred_check_branch
      %1680 = sbr.rel (%p1677) target = $region176
    $region175: #{transformer_forward.1} parent=5 // pred_region
      %s1681 = ssub.s32 %s85, 1
      %p1682 = pneg %p106
      %p1683 = pneg %p103
      %p1684 = pneg %p127
      %p1685 = pneg %p124
      %p1686 = pneg %p148
      %p1687 = pneg %p145
      %p1688 = pneg %p169
      %p1689 = pneg %p166
      %p1690 = pneg %p190
      %p1691 = pneg %p187
      %p1692 = scmp.lt.s32.totalorder %s90, 1
      %s1693 = scalar_select %p1692, %s90, 1
      %p1694 = scmp.lt.s32.totalorder %s1693, 1
      %s1695 = scalar_select %p1694, %s1693, 1
      %s1696 = smul.addr %s1695, 4
      %s1697 = smul.addr %s1696, 8
      %s1698 = scalar_lea.vmem %s11, %s1697
      %p1699 = pneg %p220
      %p1700 = pneg %p217
      %p1701 = scmp.lt.s32.totalorder %s90, 1
      %s1702 = scalar_select %p1701, %s90, 1
      %p1703 = scmp.lt.s32.totalorder %s1702, 1
      %s1704 = scalar_select %p1703, %s1702, 1
      %s1705 = scalar_lea.vmem %s13, %s1704
      %p1706 = pneg %p250
      %p1707 = pneg %p247
      %p1708 = scmp.lt.s32.totalorder %s90, 1
      %s1709 = scalar_select %p1708, %s90, 1
      %p1710 = scmp.lt.s32.totalorder %s1709, 1
      %s1711 = scalar_select %p1710, %s1709, 1
      %s1712 = smul.addr %s1711, 4
      %s1713 = smul.addr %s1712, 8
      %s1714 = scalar_lea.vmem %s15, %s1713
      %p1715 = pneg %p280
      %p1716 = pneg %p277
      %p1717 = scmp.lt.s32.totalorder %s90, 1
      %s1718 = scalar_select %p1717, %s90, 1
      %p1719 = scmp.lt.s32.totalorder %s1718, 1
      %s1720 = scalar_select %p1719, %s1718, 1
      %s1721 = scalar_lea.vmem %s17, %s1720
      %p1722 = pneg %p310
      %p1723 = pneg %p307
      %p1724 = scmp.lt.s32.totalorder %s90, 1
      %s1725 = scalar_select %p1724, %s90, 1
      %p1726 = scmp.lt.s32.totalorder %s1725, 1
      %s1727 = scalar_select %p1726, %s1725, 1
      %s1728 = scalar_lea.vmem %s19, %s1727
      %p1729 = pneg %p340
      %p1730 = pneg %p337
      %p1731 = scmp.lt.s32.totalorder %s90, 1
      %s1732 = scalar_select %p1731, %s90, 1
      %p1733 = scmp.lt.s32.totalorder %s1732, 1
      %s1734 = scalar_select %p1733, %s1732, 1
      %s1735 = scalar_lea.vmem %s21, %s1734
      %p1736 = pneg %p370
      %p1737 = pneg %p367
      %p1738 = scmp.lt.s32.totalorder %s90, 1
      %s1739 = scalar_select %p1738, %s90, 1
      %p1740 = scmp.lt.s32.totalorder %s1739, 1
      %s1741 = scalar_select %p1740, %s1739, 1
      %s1742 = smul.addr %s1741, 4
      %s1743 = smul.addr %s1742, 8
      %s1744 = scalar_lea.vmem %s23, %s1743
      %p1745 = pneg %p400
      %p1746 = pneg %p397
      %p1747 = scmp.lt.s32.totalorder %s90, 1
      %s1748 = scalar_select %p1747, %s90, 1
      %p1749 = scmp.lt.s32.totalorder %s1748, 1
      %s1750 = scalar_select %p1749, %s1748, 1
      %s1751 = scalar_lea.vmem %s25, %s1750
      %p1752 = pneg %p430
      %p1753 = pneg %p427
      %p1754 = scmp.lt.s32.totalorder %s90, 1
      %s1755 = scalar_select %p1754, %s90, 1
      %p1756 = scmp.lt.s32.totalorder %s1755, 1
      %s1757 = scalar_select %p1756, %s1755, 1
      %s1758 = smul.addr %s1757, 8
      %s1759 = smul.addr %s1758, 8
      %s1760 = scalar_lea.vmem %s27, %s1759
      %p1761 = pneg %p460
      %p1762 = pneg %p457
      %p1763 = scmp.lt.s32.totalorder %s90, 1
      %s1764 = scalar_select %p1763, %s90, 1
      %p1765 = scmp.lt.s32.totalorder %s1764, 1
      %s1766 = scalar_select %p1765, %s1764, 1
      %s1767 = scalar_lea.vmem %s29, %s1766
      %p1768 = pneg %p490
      %p1769 = pneg %p487
      %p1770 = scmp.lt.s32.totalorder %s90, 1
      %s1771 = scalar_select %p1770, %s90, 1
      %p1772 = scmp.lt.s32.totalorder %s1771, 1
      %s1773 = scalar_select %p1772, %s1771, 1
      %s1774 = scalar_lea.vmem %s31, %s1773
      %p1775 = pneg %p520
      %p1776 = pneg %p517
      %p1777 = scmp.lt.s32.totalorder %s90, 1
      %s1778 = scalar_select %p1777, %s90, 1
      %p1779 = scmp.lt.s32.totalorder %s1778, 1
      %s1780 = scalar_select %p1779, %s1778, 1
      %s1781 = scalar_lea.vmem %s33, %s1780
      %p1782 = pneg %p550
      %p1783 = pneg %p547
      %s1784 = ssub.s32 %s90, 2
      %p1785 = scmp.gt.s32.totalorder %s1784, 0
      %s1786 = scalar_select %p1785, %s1784, 0
      %p1787 = scmp.lt.s32.totalorder %s1786, 1
      %s1788 = scalar_select %p1787, %s1786, 1
      %s1789 = smul.addr %s1788, 4
      %s1790 = smul.addr %s1789, 8
      %s1791 = scalar_lea.vmem %s35, %s1790
      %p1792 = pneg %p582
      %p1793 = pneg %p579
      %s1794 = ssub.s32 %s90, 2
      %p1795 = scmp.gt.s32.totalorder %s1794, 0
      %s1796 = scalar_select %p1795, %s1794, 0
      %p1797 = scmp.lt.s32.totalorder %s1796, 1
      %s1798 = scalar_select %p1797, %s1796, 1
      %s1799 = scalar_lea.vmem %s37, %s1798
      %p1800 = pneg %p614
      %p1801 = pneg %p611
      %s1802 = ssub.s32 %s90, 2
      %p1803 = scmp.gt.s32.totalorder %s1802, 0
      %s1804 = scalar_select %p1803, %s1802, 0
      %p1805 = scmp.lt.s32.totalorder %s1804, 1
      %s1806 = scalar_select %p1805, %s1804, 1
      %s1807 = smul.addr %s1806, 4
      %s1808 = smul.addr %s1807, 8
      %s1809 = scalar_lea.vmem %s39, %s1808
      %p1810 = pneg %p646
      %p1811 = pneg %p643
      %s1812 = ssub.s32 %s90, 2
      %p1813 = scmp.gt.s32.totalorder %s1812, 0
      %s1814 = scalar_select %p1813, %s1812, 0
      %p1815 = scmp.lt.s32.totalorder %s1814, 1
      %s1816 = scalar_select %p1815, %s1814, 1
      %s1817 = scalar_lea.vmem %s41, %s1816
      %p1818 = pneg %p678
      %p1819 = pneg %p675
      %s1820 = ssub.s32 %s90, 2
      %p1821 = scmp.gt.s32.totalorder %s1820, 0
      %s1822 = scalar_select %p1821, %s1820, 0
      %p1823 = scmp.lt.s32.totalorder %s1822, 1
      %s1824 = scalar_select %p1823, %s1822, 1
      %s1825 = scalar_lea.vmem %s43, %s1824
      %p1826 = pneg %p710
      %p1827 = pneg %p707
      %s1828 = ssub.s32 %s90, 2
      %p1829 = scmp.gt.s32.totalorder %s1828, 0
      %s1830 = scalar_select %p1829, %s1828, 0
      %p1831 = scmp.lt.s32.totalorder %s1830, 1
      %s1832 = scalar_select %p1831, %s1830, 1
      %s1833 = scalar_lea.vmem %s45, %s1832
      %p1834 = pneg %p742
      %p1835 = pneg %p739
      %s1836 = ssub.s32 %s90, 2
      %p1837 = scmp.gt.s32.totalorder %s1836, 0
      %s1838 = scalar_select %p1837, %s1836, 0
      %p1839 = scmp.lt.s32.totalorder %s1838, 1
      %s1840 = scalar_select %p1839, %s1838, 1
      %s1841 = smul.addr %s1840, 4
      %s1842 = smul.addr %s1841, 8
      %s1843 = scalar_lea.vmem %s47, %s1842
      %p1844 = pneg %p774
      %p1845 = pneg %p771
      %s1846 = ssub.s32 %s90, 2
      %p1847 = scmp.gt.s32.totalorder %s1846, 0
      %s1848 = scalar_select %p1847, %s1846, 0
      %p1849 = scmp.lt.s32.totalorder %s1848, 1
      %s1850 = scalar_select %p1849, %s1848, 1
      %s1851 = scalar_lea.vmem %s49, %s1850
      %p1852 = pneg %p806
      %p1853 = pneg %p803
      %s1854 = ssub.s32 %s90, 2
      %p1855 = scmp.gt.s32.totalorder %s1854, 0
      %s1856 = scalar_select %p1855, %s1854, 0
      %p1857 = scmp.lt.s32.totalorder %s1856, 1
      %s1858 = scalar_select %p1857, %s1856, 1
      %s1859 = smul.addr %s1858, 4
      %s1860 = smul.addr %s1859, 8
      %s1861 = scalar_lea.vmem %s51, %s1860
      %p1862 = pneg %p838
      %p1863 = pneg %p835
      %s1864 = ssub.s32 %s90, 2
      %p1865 = scmp.gt.s32.totalorder %s1864, 0
      %s1866 = scalar_select %p1865, %s1864, 0
      %p1867 = scmp.lt.s32.totalorder %s1866, 1
      %s1868 = scalar_select %p1867, %s1866, 1
      %s1869 = scalar_lea.vmem %s53, %s1868
      %p1870 = pneg %p870
      %p1871 = pneg %p867
      %s1872 = ssub.s32 %s90, 2
      %p1873 = scmp.gt.s32.totalorder %s1872, 0
      %s1874 = scalar_select %p1873, %s1872, 0
      %p1875 = scmp.lt.s32.totalorder %s1874, 1
      %s1876 = scalar_select %p1875, %s1874, 1
      %s1877 = smul.addr %s1876, 4
      %s1878 = smul.addr %s1877, 8
      %s1879 = scalar_lea.vmem %s55, %s1878
      %p1880 = pneg %p902
      %p1881 = pneg %p899
      %s1882 = ssub.s32 %s90, 2
      %p1883 = scmp.gt.s32.totalorder %s1882, 0
      %s1884 = scalar_select %p1883, %s1882, 0
      %p1885 = scmp.lt.s32.totalorder %s1884, 1
      %s1886 = scalar_select %p1885, %s1884, 1
      %s1887 = scalar_lea.vmem %s57, %s1886
      %p1888 = pneg %p934
      %p1889 = pneg %p931
      %s1890 = ssub.s32 %s90, 2
      %p1891 = scmp.gt.s32.totalorder %s1890, 0
      %s1892 = scalar_select %p1891, %s1890, 0
      %p1893 = scmp.lt.s32.totalorder %s1892, 1
      %s1894 = scalar_select %p1893, %s1892, 1
      %s1895 = scalar_lea.vmem %s59, %s1894
      %p1896 = pneg %p966
      %p1897 = pneg %p963
      %s1898 = ssub.s32 %s90, 2
      %p1899 = scmp.gt.s32.totalorder %s1898, 0
      %s1900 = scalar_select %p1899, %s1898, 0
      %p1901 = scmp.lt.s32.totalorder %s1900, 1
      %s1902 = scalar_select %p1901, %s1900, 1
      %s1903 = scalar_lea.vmem %s61, %s1902
      %p1904 = pneg %p998
      %p1905 = pneg %p995
      %s1906 = ssub.s32 %s90, 2
      %p1907 = scmp.gt.s32.totalorder %s1906, 0
      %s1908 = scalar_select %p1907, %s1906, 0
      %p1909 = scmp.lt.s32.totalorder %s1908, 1
      %s1910 = scalar_select %p1909, %s1908, 1
      %s1911 = smul.addr %s1910, 4
      %s1912 = smul.addr %s1911, 8
      %s1913 = scalar_lea.vmem %s63, %s1912
      %p1914 = pneg %p1030
      %p1915 = pneg %p1027
      %s1916 = ssub.s32 %s90, 2
      %p1917 = scmp.gt.s32.totalorder %s1916, 0
      %s1918 = scalar_select %p1917, %s1916, 0
      %p1919 = scmp.lt.s32.totalorder %s1918, 1
      %s1920 = scalar_select %p1919, %s1918, 1
      %s1921 = scalar_lea.vmem %s65, %s1920
      %p1922 = pneg %p1062
      %p1923 = pneg %p1059
      %s1924 = ssub.s32 %s90, 2
      %p1925 = scmp.gt.s32.totalorder %s1924, 0
      %s1926 = scalar_select %p1925, %s1924, 0
      %p1927 = scmp.lt.s32.totalorder %s1926, 1
      %s1928 = scalar_select %p1927, %s1926, 1
      %s1929 = smul.addr %s1928, 8
      %s1930 = smul.addr %s1929, 8
      %s1931 = scalar_lea.vmem %s67, %s1930
      %p1932 = pneg %p1094
      %p1933 = pneg %p1091
      %s1934 = ssub.s32 %s90, 2
      %p1935 = scmp.gt.s32.totalorder %s1934, 0
      %s1936 = scalar_select %p1935, %s1934, 0
      %p1937 = scmp.lt.s32.totalorder %s1936, 1
      %s1938 = scalar_select %p1937, %s1936, 1
      %s1939 = scalar_lea.vmem %s69, %s1938
      %p1940 = pneg %p1126
      %p1941 = pneg %p1123
      %s1942 = ssub.s32 %s90, 2
      %p1943 = scmp.gt.s32.totalorder %s1942, 0
      %s1944 = scalar_select %p1943, %s1942, 0
      %p1945 = scmp.lt.s32.totalorder %s1944, 1
      %s1946 = scalar_select %p1945, %s1944, 1
      %s1947 = scalar_lea.vmem %s71, %s1946
      %p1948 = pneg %p1158
      %p1949 = pneg %p1155
      %s1950 = ssub.s32 %s90, 2
      %p1951 = scmp.gt.s32.totalorder %s1950, 0
      %s1952 = scalar_select %p1951, %s1950, 0
      %p1953 = scmp.lt.s32.totalorder %s1952, 1
      %s1954 = scalar_select %p1953, %s1952, 1
      %s1955 = scalar_lea.vmem %s73, %s1954
      %p1956 = pneg %p1190
      %p1957 = pneg %p1187
      %p1958 = pneg %p1211
      %p1959 = pneg %p1208
      %p1960 = pneg %p1232
      %p1961 = pneg %p1229
      %p1962 = pneg %p1253
      %p1963 = pneg %p1250
      %p1964 = scmp.lt.s32.totalorder %s90, 1
      %s1965 = scalar_select %p1964, %s90, 1
      %p1966 = scmp.lt.s32.totalorder %s1965, 1
      %s1967 = scalar_select %p1966, %s1965, 1
      %s1968 = smul.addr %s1967, 4
      %s1969 = smul.addr %s1968, 8
      %s1970 = scalar_lea.vmem %s11, %s1969
      %p1971 = scmp.lt.s32.totalorder %s90, 1
      %s1972 = scalar_select %p1971, %s90, 1
      %p1973 = scmp.lt.s32.totalorder %s90, 1
      %s1974 = scalar_select %p1973, %s90, 1
      %p1975 = scmp.lt.s32.totalorder %s1974, 1
      %s1976 = scalar_select %p1975, %s1974, 1
      %s1977 = scalar_lea.vmem %s13, %s1976
      %p1978 = scmp.lt.s32.totalorder %s90, 1
      %s1979 = scalar_select %p1978, %s90, 1
      %p1980 = scmp.lt.s32.totalorder %s90, 1
      %s1981 = scalar_select %p1980, %s90, 1
      %p1982 = scmp.lt.s32.totalorder %s1981, 1
      %s1983 = scalar_select %p1982, %s1981, 1
      %s1984 = smul.addr %s1983, 4
      %s1985 = smul.addr %s1984, 8
      %s1986 = scalar_lea.vmem %s15, %s1985
      %p1987 = scmp.lt.s32.totalorder %s90, 1
      %s1988 = scalar_select %p1987, %s90, 1
      %p1989 = scmp.lt.s32.totalorder %s90, 1
      %s1990 = scalar_select %p1989, %s90, 1
      %p1991 = scmp.lt.s32.totalorder %s1990, 1
      %s1992 = scalar_select %p1991, %s1990, 1
      %s1993 = scalar_lea.vmem %s17, %s1992
      %p1994 = scmp.lt.s32.totalorder %s90, 1
      %s1995 = scalar_select %p1994, %s90, 1
      %p1996 = scmp.lt.s32.totalorder %s90, 1
      %s1997 = scalar_select %p1996, %s90, 1
      %p1998 = scmp.lt.s32.totalorder %s1997, 1
      %s1999 = scalar_select %p1998, %s1997, 1
      %s2000 = scalar_lea.vmem %s19, %s1999
      %p2001 = scmp.lt.s32.totalorder %s90, 1
      %s2002 = scalar_select %p2001, %s90, 1
      %p2003 = scmp.lt.s32.totalorder %s90, 1
      %s2004 = scalar_select %p2003, %s90, 1
      %p2005 = scmp.lt.s32.totalorder %s2004, 1
      %s2006 = scalar_select %p2005, %s2004, 1
      %s2007 = scalar_lea.vmem %s21, %s2006
      %p2008 = scmp.lt.s32.totalorder %s90, 1
      %s2009 = scalar_select %p2008, %s90, 1
      %p2010 = scmp.lt.s32.totalorder %s90, 1
      %s2011 = scalar_select %p2010, %s90, 1
      %p2012 = scmp.lt.s32.totalorder %s2011, 1
      %s2013 = scalar_select %p2012, %s2011, 1
      %s2014 = smul.addr %s2013, 4
      %s2015 = smul.addr %s2014, 8
      %s2016 = scalar_lea.vmem %s23, %s2015
      %p2017 = scmp.lt.s32.totalorder %s90, 1
      %s2018 = scalar_select %p2017, %s90, 1
      %p2019 = scmp.lt.s32.totalorder %s90, 1
      %s2020 = scalar_select %p2019, %s90, 1
      %p2021 = scmp.lt.s32.totalorder %s2020, 1
      %s2022 = scalar_select %p2021, %s2020, 1
      %s2023 = scalar_lea.vmem %s25, %s2022
      %p2024 = scmp.lt.s32.totalorder %s90, 1
      %s2025 = scalar_select %p2024, %s90, 1
      %p2026 = scmp.lt.s32.totalorder %s90, 1
      %s2027 = scalar_select %p2026, %s90, 1
      %p2028 = scmp.lt.s32.totalorder %s2027, 1
      %s2029 = scalar_select %p2028, %s2027, 1
      %s2030 = smul.addr %s2029, 8
      %s2031 = smul.addr %s2030, 8
      %s2032 = scalar_lea.vmem %s27, %s2031
      %p2033 = scmp.lt.s32.totalorder %s90, 1
      %s2034 = scalar_select %p2033, %s90, 1
      %p2035 = scmp.lt.s32.totalorder %s90, 1
      %s2036 = scalar_select %p2035, %s90, 1
      %p2037 = scmp.lt.s32.totalorder %s2036, 1
      %s2038 = scalar_select %p2037, %s2036, 1
      %s2039 = scalar_lea.vmem %s29, %s2038
      %p2040 = scmp.lt.s32.totalorder %s90, 1
      %s2041 = scalar_select %p2040, %s90, 1
      %p2042 = scmp.lt.s32.totalorder %s90, 1
      %s2043 = scalar_select %p2042, %s90, 1
      %p2044 = scmp.lt.s32.totalorder %s2043, 1
      %s2045 = scalar_select %p2044, %s2043, 1
      %s2046 = scalar_lea.vmem %s31, %s2045
      %p2047 = scmp.lt.s32.totalorder %s90, 1
      %s2048 = scalar_select %p2047, %s90, 1
      %p2049 = scmp.lt.s32.totalorder %s90, 1
      %s2050 = scalar_select %p2049, %s90, 1
      %p2051 = scmp.lt.s32.totalorder %s2050, 1
      %s2052 = scalar_select %p2051, %s2050, 1
      %s2053 = scalar_lea.vmem %s33, %s2052
      %p2054 = scmp.lt.s32.totalorder %s90, 1
      %s2055 = scalar_select %p2054, %s90, 1
      %s2056 = ssub.s32 %s90, 2
      %p2057 = scmp.gt.s32.totalorder %s2056, 0
      %s2058 = scalar_select %p2057, %s2056, 0
      %p2059 = scmp.lt.s32.totalorder %s2058, 1
      %s2060 = scalar_select %p2059, %s2058, 1
      %s2061 = smul.addr %s2060, 4
      %s2062 = smul.addr %s2061, 8
      %s2063 = scalar_lea.vmem %s35, %s2062
      %s2064 = ssub.s32 %s90, 2
      %p2065 = scmp.gt.s32.totalorder %s2064, 0
      %s2066 = scalar_select %p2065, %s2064, 0
      %s2067 = ssub.s32 %s90, 2
      %p2068 = scmp.gt.s32.totalorder %s2067, 0
      %s2069 = scalar_select %p2068, %s2067, 0
      %p2070 = scmp.lt.s32.totalorder %s2069, 1
      %s2071 = scalar_select %p2070, %s2069, 1
      %s2072 = scalar_lea.vmem %s37, %s2071
      %s2073 = ssub.s32 %s90, 2
      %p2074 = scmp.gt.s32.totalorder %s2073, 0
      %s2075 = scalar_select %p2074, %s2073, 0
      %s2076 = ssub.s32 %s90, 2
      %p2077 = scmp.gt.s32.totalorder %s2076, 0
      %s2078 = scalar_select %p2077, %s2076, 0
      %p2079 = scmp.lt.s32.totalorder %s2078, 1
      %s2080 = scalar_select %p2079, %s2078, 1
      %s2081 = smul.addr %s2080, 4
      %s2082 = smul.addr %s2081, 8
      %s2083 = scalar_lea.vmem %s39, %s2082
      %s2084 = ssub.s32 %s90, 2
      %p2085 = scmp.gt.s32.totalorder %s2084, 0
      %s2086 = scalar_select %p2085, %s2084, 0
      %s2087 = ssub.s32 %s90, 2
      %p2088 = scmp.gt.s32.totalorder %s2087, 0
      %s2089 = scalar_select %p2088, %s2087, 0
      %p2090 = scmp.lt.s32.totalorder %s2089, 1
      %s2091 = scalar_select %p2090, %s2089, 1
      %s2092 = scalar_lea.vmem %s41, %s2091
      %s2093 = ssub.s32 %s90, 2
      %p2094 = scmp.gt.s32.totalorder %s2093, 0
      %s2095 = scalar_select %p2094, %s2093, 0
      %s2096 = ssub.s32 %s90, 2
      %p2097 = scmp.gt.s32.totalorder %s2096, 0
      %s2098 = scalar_select %p2097, %s2096, 0
      %p2099 = scmp.lt.s32.totalorder %s2098, 1
      %s2100 = scalar_select %p2099, %s2098, 1
      %s2101 = scalar_lea.vmem %s43, %s2100
      %s2102 = ssub.s32 %s90, 2
      %p2103 = scmp.gt.s32.totalorder %s2102, 0
      %s2104 = scalar_select %p2103, %s2102, 0
      %s2105 = ssub.s32 %s90, 2
      %p2106 = scmp.gt.s32.totalorder %s2105, 0
      %s2107 = scalar_select %p2106, %s2105, 0
      %p2108 = scmp.lt.s32.totalorder %s2107, 1
      %s2109 = scalar_select %p2108, %s2107, 1
      %s2110 = scalar_lea.vmem %s45, %s2109
      %s2111 = ssub.s32 %s90, 2
      %p2112 = scmp.gt.s32.totalorder %s2111, 0
      %s2113 = scalar_select %p2112, %s2111, 0
      %s2114 = ssub.s32 %s90, 2
      %p2115 = scmp.gt.s32.totalorder %s2114, 0
      %s2116 = scalar_select %p2115, %s2114, 0
      %p2117 = scmp.lt.s32.totalorder %s2116, 1
      %s2118 = scalar_select %p2117, %s2116, 1
      %s2119 = smul.addr %s2118, 4
      %s2120 = smul.addr %s2119, 8
      %s2121 = scalar_lea.vmem %s47, %s2120
      %s2122 = ssub.s32 %s90, 2
      %p2123 = scmp.gt.s32.totalorder %s2122, 0
      %s2124 = scalar_select %p2123, %s2122, 0
      %s2125 = ssub.s32 %s90, 2
      %p2126 = scmp.gt.s32.totalorder %s2125, 0
      %s2127 = scalar_select %p2126, %s2125, 0
      %p2128 = scmp.lt.s32.totalorder %s2127, 1
      %s2129 = scalar_select %p2128, %s2127, 1
      %s2130 = scalar_lea.vmem %s49, %s2129
      %s2131 = ssub.s32 %s90, 2
      %p2132 = scmp.gt.s32.totalorder %s2131, 0
      %s2133 = scalar_select %p2132, %s2131, 0
      %s2134 = ssub.s32 %s90, 2
      %p2135 = scmp.gt.s32.totalorder %s2134, 0
      %s2136 = scalar_select %p2135, %s2134, 0
      %p2137 = scmp.lt.s32.totalorder %s2136, 1
      %s2138 = scalar_select %p2137, %s2136, 1
      %s2139 = smul.addr %s2138, 4
      %s2140 = smul.addr %s2139, 8
      %s2141 = scalar_lea.vmem %s51, %s2140
      %s2142 = ssub.s32 %s90, 2
      %p2143 = scmp.gt.s32.totalorder %s2142, 0
      %s2144 = scalar_select %p2143, %s2142, 0
      %s2145 = ssub.s32 %s90, 2
      %p2146 = scmp.gt.s32.totalorder %s2145, 0
      %s2147 = scalar_select %p2146, %s2145, 0
      %p2148 = scmp.lt.s32.totalorder %s2147, 1
      %s2149 = scalar_select %p2148, %s2147, 1
      %s2150 = scalar_lea.vmem %s53, %s2149
      %s2151 = ssub.s32 %s90, 2
      %p2152 = scmp.gt.s32.totalorder %s2151, 0
      %s2153 = scalar_select %p2152, %s2151, 0
      %s2154 = ssub.s32 %s90, 2
      %p2155 = scmp.gt.s32.totalorder %s2154, 0
      %s2156 = scalar_select %p2155, %s2154, 0
      %p2157 = scmp.lt.s32.totalorder %s2156, 1
      %s2158 = scalar_select %p2157, %s2156, 1
      %s2159 = smul.addr %s2158, 4
      %s2160 = smul.addr %s2159, 8
      %s2161 = scalar_lea.vmem %s55, %s2160
      %s2162 = ssub.s32 %s90, 2
      %p2163 = scmp.gt.s32.totalorder %s2162, 0
      %s2164 = scalar_select %p2163, %s2162, 0
      %s2165 = ssub.s32 %s90, 2
      %p2166 = scmp.gt.s32.totalorder %s2165, 0
      %s2167 = scalar_select %p2166, %s2165, 0
      %p2168 = scmp.lt.s32.totalorder %s2167, 1
      %s2169 = scalar_select %p2168, %s2167, 1
      %s2170 = scalar_lea.vmem %s57, %s2169
      %s2171 = ssub.s32 %s90, 2
      %p2172 = scmp.gt.s32.totalorder %s2171, 0
      %s2173 = scalar_select %p2172, %s2171, 0
      %s2174 = ssub.s32 %s90, 2
      %p2175 = scmp.gt.s32.totalorder %s2174, 0
      %s2176 = scalar_select %p2175, %s2174, 0
      %p2177 = scmp.lt.s32.totalorder %s2176, 1
      %s2178 = scalar_select %p2177, %s2176, 1
      %s2179 = scalar_lea.vmem %s59, %s2178
      %s2180 = ssub.s32 %s90, 2
      %p2181 = scmp.gt.s32.totalorder %s2180, 0
      %s2182 = scalar_select %p2181, %s2180, 0
      %s2183 = ssub.s32 %s90, 2
      %p2184 = scmp.gt.s32.totalorder %s2183, 0
      %s2185 = scalar_select %p2184, %s2183, 0
      %p2186 = scmp.lt.s32.totalorder %s2185, 1
      %s2187 = scalar_select %p2186, %s2185, 1
      %s2188 = scalar_lea.vmem %s61, %s2187
      %s2189 = ssub.s32 %s90, 2
      %p2190 = scmp.gt.s32.totalorder %s2189, 0
      %s2191 = scalar_select %p2190, %s2189, 0
      %s2192 = ssub.s32 %s90, 2
      %p2193 = scmp.gt.s32.totalorder %s2192, 0
      %s2194 = scalar_select %p2193, %s2192, 0
      %p2195 = scmp.lt.s32.totalorder %s2194, 1
      %s2196 = scalar_select %p2195, %s2194, 1
      %s2197 = smul.addr %s2196, 4
      %s2198 = smul.addr %s2197, 8
      %s2199 = scalar_lea.vmem %s63, %s2198
      %s2200 = ssub.s32 %s90, 2
      %p2201 = scmp.gt.s32.totalorder %s2200, 0
      %s2202 = scalar_select %p2201, %s2200, 0
      %s2203 = ssub.s32 %s90, 2
      %p2204 = scmp.gt.s32.totalorder %s2203, 0
      %s2205 = scalar_select %p2204, %s2203, 0
      %p2206 = scmp.lt.s32.totalorder %s2205, 1
      %s2207 = scalar_select %p2206, %s2205, 1
      %s2208 = scalar_lea.vmem %s65, %s2207
      %s2209 = ssub.s32 %s90, 2
      %p2210 = scmp.gt.s32.totalorder %s2209, 0
      %s2211 = scalar_select %p2210, %s2209, 0
      %s2212 = ssub.s32 %s90, 2
      %p2213 = scmp.gt.s32.totalorder %s2212, 0
      %s2214 = scalar_select %p2213, %s2212, 0
      %p2215 = scmp.lt.s32.totalorder %s2214, 1
      %s2216 = scalar_select %p2215, %s2214, 1
      %s2217 = smul.addr %s2216, 8
      %s2218 = smul.addr %s2217, 8
      %s2219 = scalar_lea.vmem %s67, %s2218
      %s2220 = ssub.s32 %s90, 2
      %p2221 = scmp.gt.s32.totalorder %s2220, 0
      %s2222 = scalar_select %p2221, %s2220, 0
      %s2223 = ssub.s32 %s90, 2
      %p2224 = scmp.gt.s32.totalorder %s2223, 0
      %s2225 = scalar_select %p2224, %s2223, 0
      %p2226 = scmp.lt.s32.totalorder %s2225, 1
      %s2227 = scalar_select %p2226, %s2225, 1
      %s2228 = scalar_lea.vmem %s69, %s2227
      %s2229 = ssub.s32 %s90, 2
      %p2230 = scmp.gt.s32.totalorder %s2229, 0
      %s2231 = scalar_select %p2230, %s2229, 0
      %s2232 = ssub.s32 %s90, 2
      %p2233 = scmp.gt.s32.totalorder %s2232, 0
      %s2234 = scalar_select %p2233, %s2232, 0
      %p2235 = scmp.lt.s32.totalorder %s2234, 1
      %s2236 = scalar_select %p2235, %s2234, 1
      %s2237 = scalar_lea.vmem %s71, %s2236
      %s2238 = ssub.s32 %s90, 2
      %p2239 = scmp.gt.s32.totalorder %s2238, 0
      %s2240 = scalar_select %p2239, %s2238, 0
      %s2241 = ssub.s32 %s90, 2
      %p2242 = scmp.gt.s32.totalorder %s2241, 0
      %s2243 = scalar_select %p2242, %s2241, 0
      %p2244 = scmp.lt.s32.totalorder %s2243, 1
      %s2245 = scalar_select %p2244, %s2243, 1
      %s2246 = scalar_lea.vmem %s73, %s2245
      %s2247 = ssub.s32 %s90, 2
      %p2248 = scmp.gt.s32.totalorder %s2247, 0
      %s2249 = scalar_select %p2248, %s2247, 0
      %p2250 = scmp.eq.s32.totalorder %s90, 0
      // Predicated region
      $region177: #{transformer_forward.1} parent=175 // pred_check
        %p2251 = pneg %p2250
      $region178: #{transformer_forward.1} parent=175 // pred_check_branch
        %2253 = sbr.rel (%p2251) target = $region180
      $region179: #{transformer_forward.1} parent=175 // pred_region
        %v2254 = vld [vmem:[%s1] sm:$0xff]
        %v2255 = vld [vmem:[%s1 + $0x8] sm:$0xff]
        %vm2256 = vcmask 261120
        %2257 = vst.msk [vmem:[#allocation2] sm:$0xff] %vm2256, %v2254
        %2258 = vst.msk [vmem:[#allocation2 + $0x8] sm:$0xff] %vm2256, %v2255
      $region180: #{transformer_forward.1} parent=175 // pred_fallthru
        _
      %p2259 = scmp.eq.s32.totalorder %s90, 2
      // Predicated region
      $region181: #{transformer_forward.1} parent=175 // pred_check
        %p2260 = pneg %p2259
      $region182: #{transformer_forward.1} parent=175 // pred_check_branch
        %2262 = sbr.rel (%p2260) target = $region184
      $region183: #{transformer_forward.1} parent=175 // pred_region
        %v2263 = vld [vmem:[%s3] sm:$0xff]
        %v2264 = vld [vmem:[%s3 + $0x8] sm:$0xff]
        %vm2265 = vcmask 261120
        %2266 = vst.msk [vmem:[#allocation3] sm:$0xff] %vm2265, %v2263
        %2267 = vst.msk [vmem:[#allocation3 + $0x8] sm:$0xff] %vm2265, %v2264
      $region184: #{transformer_forward.1} parent=175 // pred_fallthru
        _
      %p2268 = scmp.lt.s32.totalorder %s90, 2
      // Predicated region
      $region185: #{transformer_forward.1} parent=175 // pred_check
        %p2269 = pneg %p2268
      $region186: #{transformer_forward.1} parent=175 // pred_check_branch
        %2271 = sbr.rel (%p2269) target = $region188
      $region187: #{transformer_forward.1} parent=175 // pred_region
        %v2272 = vld [vmem:[#allocation2] sm:$0xff]
        %v2273 = vld [vmem:[#allocation2 + $0x8] sm:$0xff]
        %v2274 = vld [vmem:[%s1970] sm:$0xff]
        %v2275 = vld [vmem:[%s1970 + $0x8] sm:$0xff]
        %v2276 = vld [vmem:[%s1970 + $0x10] sm:$0xff]
        %v2277 = vld [vmem:[%s1970 + $0x18] sm:$0xff]
        %v2278 = vld [vmem:[%s1977] sm:$0x1]
        %v2280 = vlaneseq
        %v2281 = vshrl.u32 %v2280, 7
        %v2282 = vsub.s32 0, %v2281
        %v2283 = vrot.slane %v2278, %v2282
        %vm2285 = vcmask 261120
        %v2287 = vsel %vm2285, %v2272, 0
        %v2290 = vsel %vm2285, %v2273, 0
        %2292 = vmatprep.subr.mxu0 0.0
        %2293 = vmatpush1.msra.mxu0 %v2274
        %2294 = vmatprep.subr.mxu0 0.0
        %2295 = vmatpush1.msra.mxu0 %v2275
        %2296 = vmatprep.subr.mxu0 0.0
        %2297 = vmatpush1.msra.mxu0 %v2276
        %2298 = vmatprep.subr.mxu0 0.0
        %2299 = vmatpush1.msra.mxu0 %v2277
        %2300 = vmatprep.subr.mxu0 0.0
        %2301 = vmatpush1.msra.mxu0 0.0
        %2302 = vmatprep.subr.mxu0 0.0
        %2303 = vmatpush1.msra.mxu0 0.0
        %2304 = vmatprep.subr.mxu0 0.0
        %2305 = vmatpush1.msra.mxu0 0.0
        %2306 = vmatprep.subr.mxu0 0.0
        %2307 = vmatpush1.msra.mxu0 0.0
        %2308 = vmatprep.subr.mxu0 0.0
        %2309 = vmatpush1.msra.mxu0 0.0
        %2310 = vmatprep.subr.mxu0 0.0
        %2311 = vmatpush1.msra.mxu0 0.0
        %2312 = vmatprep.subr.mxu0 0.0
        %2313 = vmatpush1.msra.mxu0 0.0
        %2314 = vmatprep.subr.mxu0 0.0
        %2315 = vmatpush1.msra.mxu0 0.0
        %2316 = vmatprep.subr.mxu0 0.0
        %2317 = vmatpush1.msra.mxu0 0.0
        %2318 = vmatprep.subr.mxu0 0.0
        %2319 = vmatpush1.msra.mxu0 0.0
        %2320 = vmatprep.subr.mxu0 0.0
        %2321 = vmatpush1.msra.mxu0 0.0
        %2322 = vmatprep.subr.mxu0 0.0
        %2323 = vmatpush1.msra.mxu0 0.0
        %2324 = vmatprep.subr.mxu0 0.0
        %2325 = vmatpush1.msra.mxu0 0.0
        %2326 = vmatprep.subr.mxu0 0.0
        %2327 = vmatpush1.msra.mxu0 0.0
        %2328 = vmatprep.subr.mxu0 0.0
        %2329 = vmatpush1.msra.mxu0 0.0
        %2330 = vmatprep.subr.mxu0 0.0
        %2331 = vmatpush1.msra.mxu0 0.0
        %2332 = vmatprep.subr.mxu0 0.0
        %2333 = vmatpush1.msra.mxu0 0.0
        %2334 = vmatprep.subr.mxu0 0.0
        %2335 = vmatpush1.msra.mxu0 0.0
        %2336 = vmatprep.subr.mxu0 0.0
        %2337 = vmatpush1.msra.mxu0 0.0
        %2338 = vmatprep.subr.mxu0 0.0
        %2339 = vmatpush1.msra.mxu0 0.0
        %2340 = vmatprep.subr.mxu0 0.0
        %2341 = vmatpush1.msra.mxu0 0.0
        %2342 = vmatprep.subr.mxu0 0.0
        %2343 = vmatpush1.msra.mxu0 0.0
        %2344 = vmatprep.subr.mxu0 0.0
        %2345 = vmatpush1.msra.mxu0 0.0
        %2346 = vmatprep.subr.mxu0 0.0
        %2347 = vmatpush1.msra.mxu0 0.0
        %2348 = vmatprep.subr.mxu0 0.0
        %2349 = vmatpush1.msra.mxu0 0.0
        %2350 = vmatprep.subr.mxu0 0.0
        %2351 = vmatpush1.msra.mxu0 0.0
        %2352 = vmatprep.subr.mxu0 0.0
        %2353 = vmatpush1.msra.mxu0 0.0
        %2354 = vmatprep.subr.mxu0 0.0
        %2355 = vmatpush1.msra.mxu0 0.0
        %2356 = vmatprep.mubr.f32.mxu0 0.0
        %2357 = vmatmul.mubr.f32.gmra.mrb[0].mxu0 %v2287
        %v2358 = vpop.f32.mrb[0].mxu0
        %v2359 = vadd.f32 %v2283, %v2358
        %v2360 = vpop.f32.mrb[0].mxu0
        %2361 = vmatprep.mubr.f32.mxu0 0.0
        %2362 = vmatmul.mubr.f32.gmra.mrb[0].mxu0 %v2290
        %v2363 = vpop.f32.mrb[0].mxu0
        %v2364 = vadd.f32 %v2283, %v2363
        %v2365 = vpop.f32.mrb[0].mxu0
        %2366 = vdwg.mxu0
        %v2367 = vld [vmem:[%s1986] sm:$0xff]
        %v2368 = vld [vmem:[%s1986 + $0x8] sm:$0xff]
        %v2369 = vld [vmem:[%s1986 + $0x10] sm:$0xff]
        %v2370 = vld [vmem:[%s1986 + $0x18] sm:$0xff]
        %v2371 = vld [vmem:[%s1993] sm:$0x1]
        %v2372 = vld [vmem:[%s5] sm:$0xff]
        %v2373 = vld [vmem:[%s5 + $0x8] sm:$0xff]
        %2375 = vrot.lane.b32.xlu0 %v2359, 96
        %v2376 = vpop.permute.xlu0 %2375
        %vm2377 = vcmask 64512
        %v2378 = vsel %vm2377, %v2359, 0
        %v2380 = vsel %vm2377, %v2376, 0
        %2382 = vmatprep.subr.mxu0 0.0
        %2383 = vmatpush1.xpose.msra.mxu0 %v2380
        %2384 = vmatprep.subr.mxu0 0.0
        %2385 = vmatpush1.xpose.msra.mxu0 0.0
        %2386 = vmatprep.subr.mxu0 0.0
        %2387 = vmatpush1.xpose.msra.mxu0 0.0
        %2388 = vmatprep.subr.mxu0 0.0
        %2389 = vmatpush1.xpose.msra.mxu0 0.0
        %2390 = vmatprep.subr.mxu0 0.0
        %2391 = vmatpush1.xpose.msra.mxu0 0.0
        %2392 = vmatprep.subr.mxu0 0.0
        %2393 = vmatpush1.xpose.msra.mxu0 0.0
        %2394 = vmatprep.subr.mxu0 0.0
        %2395 = vmatpush1.xpose.msra.mxu0 0.0
        %2396 = vmatprep.subr.mxu0 0.0
        %2397 = vmatpush1.xpose.msra.mxu0 0.0
        %2398 = vmatprep.subr.mxu0 0.0
        %2399 = vmatpush1.xpose.msra.mxu0 0.0
        %2400 = vmatprep.subr.mxu0 0.0
        %2401 = vmatpush1.xpose.msra.mxu0 0.0
        %2402 = vmatprep.subr.mxu0 0.0
        %2403 = vmatpush1.xpose.msra.mxu0 0.0
        %2404 = vmatprep.subr.mxu0 0.0
        %2405 = vmatpush1.xpose.msra.mxu0 0.0
        %2406 = vmatprep.subr.mxu0 0.0
        %2407 = vmatpush1.xpose.msra.mxu0 0.0
        %2408 = vmatprep.subr.mxu0 0.0
        %2409 = vmatpush1.xpose.msra.mxu0 0.0
        %2410 = vmatprep.subr.mxu0 0.0
        %2411 = vmatpush1.xpose.msra.mxu0 0.0
        %2412 = vmatprep.subr.mxu0 0.0
        %2413 = vmatpush1.xpose.msra.mxu0 0.0
        %2414 = vmatprep.subr.mxu0 0.0
        %2415 = vmatpush1.xpose.msra.mxu0 0.0
        %2416 = vmatprep.subr.mxu0 0.0
        %2417 = vmatpush1.xpose.msra.mxu0 0.0
        %2418 = vmatprep.subr.mxu0 0.0
        %2419 = vmatpush1.xpose.msra.mxu0 0.0
        %2420 = vmatprep.subr.mxu0 0.0
        %2421 = vmatpush1.xpose.msra.mxu0 0.0
        %2422 = vmatprep.subr.mxu0 0.0
        %2423 = vmatpush1.xpose.msra.mxu0 0.0
        %2424 = vmatprep.subr.mxu0 0.0
        %2425 = vmatpush1.xpose.msra.mxu0 0.0
        %2426 = vmatprep.subr.mxu0 0.0
        %2427 = vmatpush1.xpose.msra.mxu0 0.0
        %2428 = vmatprep.subr.mxu0 0.0
        %2429 = vmatpush1.xpose.msra.mxu0 0.0
        %2430 = vmatprep.subr.mxu0 0.0
        %2431 = vmatpush1.xpose.msra.mxu0 0.0
        %2432 = vmatprep.subr.mxu0 0.0
        %2433 = vmatpush1.xpose.msra.mxu0 0.0
        %2434 = vmatprep.subr.mxu0 0.0
        %2435 = vmatpush1.xpose.msra.mxu0 0.0
        %2436 = vmatprep.subr.mxu0 0.0
        %2437 = vmatpush1.xpose.msra.mxu0 0.0
        %2438 = vmatprep.subr.mxu0 0.0
        %2439 = vmatpush1.xpose.msra.mxu0 0.0
        %2440 = vmatprep.subr.mxu0 0.0
        %2441 = vmatpush1.xpose.msra.mxu0 0.0
        %2442 = vmatprep.subr.mxu0 0.0
        %2443 = vmatpush1.xpose.msra.mxu0 0.0
        %2444 = vmatprep.subr.mxu0 0.0
        %2445 = vmatpush1.xpose.msra.mxu0 0.0
        %2446 = vmatprep.mubr.f32.mxu0 0.0
        %2447 = vmatmul.mubr.f32.gmra.mrb[0].mxu0 %v2378
        %v2448 = vpop.f32.mrb[0].mxu0
        %v2449 = vadd.f32 0.0, %v2448
        %v2450 = vpop.f32.mrb[0].mxu0
        %2451 = vdwg.mxu0
        %2453 = vrot.lane.b32.xlu0 %v2364, 96
        %v2454 = vpop.permute.xlu0 %2453
        %v2455 = vsel %vm2377, %v2364, 0
        %v2457 = vsel %vm2377, %v2454, 0
        %2459 = vmatprep.subr.mxu0 0.0
        %2460 = vmatpush1.xpose.msra.mxu0 %v2457
        %2461 = vmatprep.subr.mxu0 0.0
        %2462 = vmatpush1.xpose.msra.mxu0 0.0
        %2463 = vmatprep.subr.mxu0 0.0
        %2464 = vmatpush1.xpose.msra.mxu0 0.0
        %2465 = vmatprep.subr.mxu0 0.0
        %2466 = vmatpush1.xpose.msra.mxu0 0.0
        %2467 = vmatprep.subr.mxu0 0.0
        %2468 = vmatpush1.xpose.msra.mxu0 0.0
        %2469 = vmatprep.subr.mxu0 0.0
        %2470 = vmatpush1.xpose.msra.mxu0 0.0
        %2471 = vmatprep.subr.mxu0 0.0
        %2472 = vmatpush1.xpose.msra.mxu0 0.0
        %2473 = vmatprep.subr.mxu0 0.0
        %2474 = vmatpush1.xpose.msra.mxu0 0.0
        %2475 = vmatprep.subr.mxu0 0.0
        %2476 = vmatpush1.xpose.msra.mxu0 0.0
        %2477 = vmatprep.subr.mxu0 0.0
        %2478 = vmatpush1.xpose.msra.mxu0 0.0
        %2479 = vmatprep.subr.mxu0 0.0
        %2480 = vmatpush1.xpose.msra.mxu0 0.0
        %2481 = vmatprep.subr.mxu0 0.0
        %2482 = vmatpush1.xpose.msra.mxu0 0.0
        %2483 = vmatprep.subr.mxu0 0.0
        %2484 = vmatpush1.xpose.msra.mxu0 0.0
        %2485 = vmatprep.subr.mxu0 0.0
        %2486 = vmatpush1.xpose.msra.mxu0 0.0
        %2487 = vmatprep.subr.mxu0 0.0
        %2488 = vmatpush1.xpose.msra.mxu0 0.0
        %2489 = vmatprep.subr.mxu0 0.0
        %2490 = vmatpush1.xpose.msra.mxu0 0.0
        %2491 = vmatprep.subr.mxu0 0.0
        %2492 = vmatpush1.xpose.msra.mxu0 0.0
        %2493 = vmatprep.subr.mxu0 0.0
        %2494 = vmatpush1.xpose.msra.mxu0 0.0
        %2495 = vmatprep.subr.mxu0 0.0
        %2496 = vmatpush1.xpose.msra.mxu0 0.0
        %2497 = vmatprep.subr.mxu0 0.0
        %2498 = vmatpush1.xpose.msra.mxu0 0.0
        %2499 = vmatprep.subr.mxu0 0.0
        %2500 = vmatpush1.xpose.msra.mxu0 0.0
        %2501 = vmatprep.subr.mxu0 0.0
        %2502 = vmatpush1.xpose.msra.mxu0 0.0
        %2503 = vmatprep.subr.mxu0 0.0
        %2504 = vmatpush1.xpose.msra.mxu0 0.0
        %2505 = vmatprep.subr.mxu0 0.0
        %2506 = vmatpush1.xpose.msra.mxu0 0.0
        %2507 = vmatprep.subr.mxu0 0.0
        %2508 = vmatpush1.xpose.msra.mxu0 0.0
        %2509 = vmatprep.subr.mxu0 0.0
        %2510 = vmatpush1.xpose.msra.mxu0 0.0
        %2511 = vmatprep.subr.mxu0 0.0
        %2512 = vmatpush1.xpose.msra.mxu0 0.0
        %2513 = vmatprep.subr.mxu0 0.0
        %2514 = vmatpush1.xpose.msra.mxu0 0.0
        %2515 = vmatprep.subr.mxu0 0.0
        %2516 = vmatpush1.xpose.msra.mxu0 0.0
        %2517 = vmatprep.subr.mxu0 0.0
        %2518 = vmatpush1.xpose.msra.mxu0 0.0
        %2519 = vmatprep.subr.mxu0 0.0
        %2520 = vmatpush1.xpose.msra.mxu0 0.0
        %2521 = vmatprep.subr.mxu0 0.0
        %2522 = vmatpush1.xpose.msra.mxu0 0.0
        %2523 = vmatprep.mubr.f32.mxu0 0.0
        %2524 = vmatmul.mubr.f32.gmra.mrb[0].mxu0 %v2455
        %v2525 = vpop.f32.mrb[0].mxu0
        %v2526 = vadd.f32 0.0, %v2525
        %v2527 = vpop.f32.mrb[0].mxu0
        %2528 = vdwg.mxu0
        %v2529 = vmul.f32 %v2449, 0.35355338
        %v2530 = vmul.f32 %v2526, 0.35355338
        %vm2531 = vcmp.gt.f32.partialorder %v2372, 0.5
        %vm2532 = vcmp.gt.f32.partialorder %v2373, 0.5
        %v2533 = vsel %vm2531, %v2529, -1e+09
        %v2534 = vsel %vm2532, %v2530, -1e+09
        %v2535 = vsel %vm2377, %v2533, -inf
        %2536 = vmax.xlane.f32.xlu0 %v2535
        %v2537 = vpop.xlane.xlu0 %2536
        %v2538 = vsel %vm2377, %v2534, -inf
        %2539 = vmax.xlane.f32.xlu0 %v2538
        %v2540 = vpop.xlane.xlu0 %2539
        %v2541 = vsub.f32 %v2533, %v2537
        %v2542 = vsub.f32 %v2534, %v2540
        %v2543 = vmul.f32 %v2541, 1.442695
        %v2544 = vpow.pop %v2543
        %v2545 = vmul.f32 %v2542, 1.442695
        %v2546 = vpow.pop %v2545
        %v2547 = vsel %vm2377, %v2544, 0.0
        %2548 = vadd.xlane.f32.xlu0 %v2547
        %v2549 = vpop.xlane.xlu0 %2548
        %v2550 = vsel %vm2377, %v2546, 0.0
        %2551 = vadd.xlane.f32.xlu0 %v2550
        %v2552 = vpop.xlane.xlu0 %2551
        %v2553 = vrcp.pop %v2549
        %v2554 = vrcp.pop %v2552
        %v2555 = vmul.f32 %v2544, %v2553
        %v2556 = vmul.f32 %v2546, %v2554
        %2557 = vrot.lane.b32.xlu0 %v2359, 64
        %v2558 = vpop.permute.xlu0 %2557
        %v2561 = vsel %vm2377, %v2555, 0
        %2563 = vmatprep.subr.mxu0 0.0
        %2564 = vmatpush1.msra.mxu0 %v2558
        %2565 = vmatprep.subr.mxu0 0.0
        %2566 = vmatpush1.msra.mxu0 0.0
        %2567 = vmatprep.subr.mxu0 0.0
        %2568 = vmatpush1.msra.mxu0 0.0
        %2569 = vmatprep.subr.mxu0 0.0
        %2570 = vmatpush1.msra.mxu0 0.0
        %2571 = vmatprep.subr.mxu0 0.0
        %2572 = vmatpush1.msra.mxu0 0.0
        %2573 = vmatprep.subr.mxu0 0.0
        %2574 = vmatpush1.msra.mxu0 0.0
        %2575 = vmatprep.subr.mxu0 0.0
        %2576 = vmatpush1.msra.mxu0 0.0
        %2577 = vmatprep.subr.mxu0 0.0
        %2578 = vmatpush1.msra.mxu0 0.0
        %2579 = vmatprep.subr.mxu0 0.0
        %2580 = vmatpush1.msra.mxu0 0.0
        %2581 = vmatprep.subr.mxu0 0.0
        %2582 = vmatpush1.msra.mxu0 0.0
        %2583 = vmatprep.subr.mxu0 0.0
        %2584 = vmatpush1.msra.mxu0 0.0
        %2585 = vmatprep.subr.mxu0 0.0
        %2586 = vmatpush1.msra.mxu0 0.0
        %2587 = vmatprep.subr.mxu0 0.0
        %2588 = vmatpush1.msra.mxu0 0.0
        %2589 = vmatprep.subr.mxu0 0.0
        %2590 = vmatpush1.msra.mxu0 0.0
        %2591 = vmatprep.subr.mxu0 0.0
        %2592 = vmatpush1.msra.mxu0 0.0
        %2593 = vmatprep.subr.mxu0 0.0
        %2594 = vmatpush1.msra.mxu0 0.0
        %2595 = vmatprep.subr.mxu0 0.0
        %2596 = vmatpush1.msra.mxu0 0.0
        %2597 = vmatprep.subr.mxu0 0.0
        %2598 = vmatpush1.msra.mxu0 0.0
        %2599 = vmatprep.subr.mxu0 0.0
        %2600 = vmatpush1.msra.mxu0 0.0
        %2601 = vmatprep.subr.mxu0 0.0
        %2602 = vmatpush1.msra.mxu0 0.0
        %2603 = vmatprep.subr.mxu0 0.0
        %2604 = vmatpush1.msra.mxu0 0.0
        %2605 = vmatprep.subr.mxu0 0.0
        %2606 = vmatpush1.msra.mxu0 0.0
        %2607 = vmatprep.subr.mxu0 0.0
        %2608 = vmatpush1.msra.mxu0 0.0
        %2609 = vmatprep.subr.mxu0 0.0
        %2610 = vmatpush1.msra.mxu0 0.0
        %2611 = vmatprep.subr.mxu0 0.0
        %2612 = vmatpush1.msra.mxu0 0.0
        %2613 = vmatprep.subr.mxu0 0.0
        %2614 = vmatpush1.msra.mxu0 0.0
        %2615 = vmatprep.subr.mxu0 0.0
        %2616 = vmatpush1.msra.mxu0 0.0
        %2617 = vmatprep.subr.mxu0 0.0
        %2618 = vmatpush1.msra.mxu0 0.0
        %2619 = vmatprep.subr.mxu0 0.0
        %2620 = vmatpush1.msra.mxu0 0.0
        %2621 = vmatprep.subr.mxu0 0.0
        %2622 = vmatpush1.msra.mxu0 0.0
        %2623 = vmatprep.subr.mxu0 0.0
        %2624 = vmatpush1.msra.mxu0 0.0
        %2625 = vmatprep.subr.mxu0 0.0
        %2626 = vmatpush1.msra.mxu0 0.0
        %2627 = vmatprep.mubr.f32.mxu0 0.0
        %2628 = vmatmul.mubr.f32.gmra.mrb[0].mxu0 %v2561
        %v2629 = vpop.f32.mrb[0].mxu0
        %v2630 = vadd.f32 0.0, %v2629
        %v2631 = vpop.f32.mrb[0].mxu0
        %2632 = vdwg.mxu0
        %2633 = vrot.lane.b32.xlu0 %v2364, 64
        %v2634 = vpop.permute.xlu0 %2633
        %v2637 = vsel %vm2377, %v2556, 0
        %2639 = vmatprep.subr.mxu0 0.0
        %2640 = vmatpush1.msra.mxu0 %v2634
        %2641 = vmatprep.subr.mxu0 0.0
        %2642 = vmatpush1.msra.mxu0 0.0
        %2643 = vmatprep.subr.mxu0 0.0
        %2644 = vmatpush1.msra.mxu0 0.0
        %2645 = vmatprep.subr.mxu0 0.0
        %2646 = vmatpush1.msra.mxu0 0.0
        %2647 = vmatprep.subr.mxu0 0.0
        %2648 = vmatpush1.msra.mxu0 0.0
        %2649 = vmatprep.subr.mxu0 0.0
        %2650 = vmatpush1.msra.mxu0 0.0
        %2651 = vmatprep.subr.mxu0 0.0
        %2652 = vmatpush1.msra.mxu0 0.0
        %2653 = vmatprep.subr.mxu0 0.0
        %2654 = vmatpush1.msra.mxu0 0.0
        %2655 = vmatprep.subr.mxu0 0.0
        %2656 = vmatpush1.msra.mxu0 0.0
        %2657 = vmatprep.subr.mxu0 0.0
        %2658 = vmatpush1.msra.mxu0 0.0
        %2659 = vmatprep.subr.mxu0 0.0
        %2660 = vmatpush1.msra.mxu0 0.0
        %2661 = vmatprep.subr.mxu0 0.0
        %2662 = vmatpush1.msra.mxu0 0.0
        %2663 = vmatprep.subr.mxu0 0.0
        %2664 = vmatpush1.msra.mxu0 0.0
        %2665 = vmatprep.subr.mxu0 0.0
        %2666 = vmatpush1.msra.mxu0 0.0
        %2667 = vmatprep.subr.mxu0 0.0
        %2668 = vmatpush1.msra.mxu0 0.0
        %2669 = vmatprep.subr.mxu0 0.0
        %2670 = vmatpush1.msra.mxu0 0.0
        %2671 = vmatprep.subr.mxu0 0.0
        %2672 = vmatpush1.msra.mxu0 0.0
        %2673 = vmatprep.subr.mxu0 0.0
        %2674 = vmatpush1.msra.mxu0 0.0
        %2675 = vmatprep.subr.mxu0 0.0
        %2676 = vmatpush1.msra.mxu0 0.0
        %2677 = vmatprep.subr.mxu0 0.0
        %2678 = vmatpush1.msra.mxu0 0.0
        %2679 = vmatprep.subr.mxu0 0.0
        %2680 = vmatpush1.msra.mxu0 0.0
        %2681 = vmatprep.subr.mxu0 0.0
        %2682 = vmatpush1.msra.mxu0 0.0
        %2683 = vmatprep.subr.mxu0 0.0
        %2684 = vmatpush1.msra.mxu0 0.0
        %2685 = vmatprep.subr.mxu0 0.0
        %2686 = vmatpush1.msra.mxu0 0.0
        %2687 = vmatprep.subr.mxu0 0.0
        %2688 = vmatpush1.msra.mxu0 0.0
        %2689 = vmatprep.subr.mxu0 0.0
        %2690 = vmatpush1.msra.mxu0 0.0
        %2691 = vmatprep.subr.mxu0 0.0
        %2692 = vmatpush1.msra.mxu0 0.0
        %2693 = vmatprep.subr.mxu0 0.0
        %2694 = vmatpush1.msra.mxu0 0.0
        %2695 = vmatprep.subr.mxu0 0.0
        %2696 = vmatpush1.msra.mxu0 0.0
        %2697 = vmatprep.subr.mxu0 0.0
        %2698 = vmatpush1.msra.mxu0 0.0
        %2699 = vmatprep.subr.mxu0 0.0
        %2700 = vmatpush1.msra.mxu0 0.0
        %2701 = vmatprep.subr.mxu0 0.0
        %2702 = vmatpush1.msra.mxu0 0.0
        %2703 = vmatprep.mubr.f32.mxu0 0.0
        %2704 = vmatmul.mubr.f32.gmra.mrb[0].mxu0 %v2637
        %v2705 = vpop.f32.mrb[0].mxu0
        %v2706 = vadd.f32 0.0, %v2705
        %v2707 = vpop.f32.mrb[0].mxu0
        %2708 = vdwg.mxu0
        %2709 = vrot.lane.b32.xlu0 %v2359, 120
        %v2710 = vpop.permute.xlu0 %2709
        %2711 = vrot.lane.b32.xlu0 %v2359, 88
        %v2712 = vpop.permute.xlu0 %2711
        %v2713 = vsel %vm2377, %v2710, 0
        %v2715 = vsel %vm2377, %v2712, 0
        %2717 = vmatprep.subr.mxu0 0.0
        %2718 = vmatpush1.xpose.msra.mxu0 %v2715
        %2719 = vmatprep.subr.mxu0 0.0
        %2720 = vmatpush1.xpose.msra.mxu0 0.0
        %2721 = vmatprep.subr.mxu0 0.0
        %2722 = vmatpush1.xpose.msra.mxu0 0.0
        %2723 = vmatprep.subr.mxu0 0.0
        %2724 = vmatpush1.xpose.msra.mxu0 0.0
        %2725 = vmatprep.subr.mxu0 0.0
        %2726 = vmatpush1.xpose.msra.mxu0 0.0
        %2727 = vmatprep.subr.mxu0 0.0
        %2728 = vmatpush1.xpose.msra.mxu0 0.0
        %2729 = vmatprep.subr.mxu0 0.0
        %2730 = vmatpush1.xpose.msra.mxu0 0.0
        %2731 = vmatprep.subr.mxu0 0.0
        %2732 = vmatpush1.xpose.msra.mxu0 0.0
        %2733 = vmatprep.subr.mxu0 0.0
        %2734 = vmatpush1.xpose.msra.mxu0 0.0
        %2735 = vmatprep.subr.mxu0 0.0
        %2736 = vmatpush1.xpose.msra.mxu0 0.0
        %2737 = vmatprep.subr.mxu0 0.0
        %2738 = vmatpush1.xpose.msra.mxu0 0.0
        %2739 = vmatprep.subr.mxu0 0.0
        %2740 = vmatpush1.xpose.msra.mxu0 0.0
        %2741 = vmatprep.subr.mxu0 0.0
        %2742 = vmatpush1.xpose.msra.mxu0 0.0
        %2743 = vmatprep.subr.mxu0 0.0
        %2744 = vmatpush1.xpose.msra.mxu0 0.0
        %2745 = vmatprep.subr.mxu0 0.0
        %2746 = vmatpush1.xpose.msra.mxu0 0.0
        %2747 = vmatprep.subr.mxu0 0.0
        %2748 = vmatpush1.xpose.msra.mxu0 0.0
        %2749 = vmatprep.subr.mxu0 0.0
        %2750 = vmatpush1.xpose.msra.mxu0 0.0
        %2751 = vmatprep.subr.mxu0 0.0
        %2752 = vmatpush1.xpose.msra.mxu0 0.0
        %2753 = vmatprep.subr.mxu0 0.0
        %2754 = vmatpush1.xpose.msra.mxu0 0.0
        %2755 = vmatprep.subr.mxu0 0.0
        %2756 = vmatpush1.xpose.msra.mxu0 0.0
        %2757 = vmatprep.subr.mxu0 0.0
        %2758 = vmatpush1.xpose.msra.mxu0 0.0
        %2759 = vmatprep.subr.mxu0 0.0
        %2760 = vmatpush1.xpose.msra.mxu0 0.0
        %2761 = vmatprep.subr.mxu0 0.0
        %2762 = vmatpush1.xpose.msra.mxu0 0.0
        %2763 = vmatprep.subr.mxu0 0.0
        %2764 = vmatpush1.xpose.msra.mxu0 0.0
        %2765 = vmatprep.subr.mxu0 0.0
        %2766 = vmatpush1.xpose.msra.mxu0 0.0
        %2767 = vmatprep.subr.mxu0 0.0
        %2768 = vmatpush1.xpose.msra.mxu0 0.0
        %2769 = vmatprep.subr.mxu0 0.0
        %2770 = vmatpush1.xpose.msra.mxu0 0.0
        %2771 = vmatprep.subr.mxu0 0.0
        %2772 = vmatpush1.xpose.msra.mxu0 0.0
        %2773 = vmatprep.subr.mxu0 0.0
        %2774 = vmatpush1.xpose.msra.mxu0 0.0
        %2775 = vmatprep.subr.mxu0 0.0
        %2776 = vmatpush1.xpose.msra.mxu0 0.0
        %2777 = vmatprep.subr.mxu0 0.0
        %2778 = vmatpush1.xpose.msra.mxu0 0.0
        %2779 = vmatprep.subr.mxu0 0.0
        %2780 = vmatpush1.xpose.msra.mxu0 0.0
        %2781 = vmatprep.mubr.f32.mxu0 0.0
        %2782 = vmatmul.mubr.f32.gmra.mrb[0].mxu0 %v2713
        %v2783 = vpop.f32.mrb[0].mxu0
        %v2784 = vadd.f32 0.0, %v2783
        %v2785 = vpop.f32.mrb[0].mxu0
        %2786 = vdwg.mxu0
        %2787 = vrot.lane.b32.xlu0 %v2364, 120
        %v2788 = vpop.permute.xlu0 %2787
        %2789 = vrot.lane.b32.xlu0 %v2364, 88
        %v2790 = vpop.permute.xlu0 %2789
        %v2791 = vsel %vm2377, %v2788, 0
        %v2793 = vsel %vm2377, %v2790, 0
        %2795 = vmatprep.subr.mxu0 0.0
        %2796 = vmatpush1.xpose.msra.mxu0 %v2793
        %2797 = vmatprep.subr.mxu0 0.0
        %2798 = vmatpush1.xpose.msra.mxu0 0.0
        %2799 = vmatprep.subr.mxu0 0.0
        %2800 = vmatpush1.xpose.msra.mxu0 0.0
        %2801 = vmatprep.subr.mxu0 0.0
        %2802 = vmatpush1.xpose.msra.mxu0 0.0
        %2803 = vmatprep.subr.mxu0 0.0
        %2804 = vmatpush1.xpose.msra.mxu0 0.0
        %2805 = vmatprep.subr.mxu0 0.0
        %2806 = vmatpush1.xpose.msra.mxu0 0.0
        %2807 = vmatprep.subr.mxu0 0.0
        %2808 = vmatpush1.xpose.msra.mxu0 0.0
        %2809 = vmatprep.subr.mxu0 0.0
        %2810 = vmatpush1.xpose.msra.mxu0 0.0
        %2811 = vmatprep.subr.mxu0 0.0
        %2812 = vmatpush1.xpose.msra.mxu0 0.0
        %2813 = vmatprep.subr.mxu0 0.0
        %2814 = vmatpush1.xpose.msra.mxu0 0.0
        %2815 = vmatprep.subr.mxu0 0.0
        %2816 = vmatpush1.xpose.msra.mxu0 0.0
        %2817 = vmatprep.subr.mxu0 0.0
        %2818 = vmatpush1.xpose.msra.mxu0 0.0
        %2819 = vmatprep.subr.mxu0 0.0
        %2820 = vmatpush1.xpose.msra.mxu0 0.0
        %2821 = vmatprep.subr.mxu0 0.0
        %2822 = vmatpush1.xpose.msra.mxu0 0.0
        %2823 = vmatprep.subr.mxu0 0.0
        %2824 = vmatpush1.xpose.msra.mxu0 0.0
        %2825 = vmatprep.subr.mxu0 0.0
        %2826 = vmatpush1.xpose.msra.mxu0 0.0
        %2827 = vmatprep.subr.mxu0 0.0
        %2828 = vmatpush1.xpose.msra.mxu0 0.0
        %2829 = vmatprep.subr.mxu0 0.0
        %2830 = vmatpush1.xpose.msra.mxu0 0.0
        %2831 = vmatprep.subr.mxu0 0.0
        %2832 = vmatpush1.xpose.msra.mxu0 0.0
        %2833 = vmatprep.subr.mxu0 0.0
        %2834 = vmatpush1.xpose.msra.mxu0 0.0
        %2835 = vmatprep.subr.mxu0 0.0
        %2836 = vmatpush1.xpose.msra.mxu0 0.0
        %2837 = vmatprep.subr.mxu0 0.0
        %2838 = vmatpush1.xpose.msra.mxu0 0.0
        %2839 = vmatprep.subr.mxu0 0.0
        %2840 = vmatpush1.xpose.msra.mxu0 0.0
        %2841 = vmatprep.subr.mxu0 0.0
        %2842 = vmatpush1.xpose.msra.mxu0 0.0
        %2843 = vmatprep.subr.mxu0 0.0
        %2844 = vmatpush1.xpose.msra.mxu0 0.0
        %2845 = vmatprep.subr.mxu0 0.0
        %2846 = vmatpush1.xpose.msra.mxu0 0.0
        %2847 = vmatprep.subr.mxu0 0.0
        %2848 = vmatpush1.xpose.msra.mxu0 0.0
        %2849 = vmatprep.subr.mxu0 0.0
        %2850 = vmatpush1.xpose.msra.mxu0 0.0
        %2851 = vmatprep.subr.mxu0 0.0
        %2852 = vmatpush1.xpose.msra.mxu0 0.0
        %2853 = vmatprep.subr.mxu0 0.0
        %2854 = vmatpush1.xpose.msra.mxu0 0.0
        %2855 = vmatprep.subr.mxu0 0.0
        %2856 = vmatpush1.xpose.msra.mxu0 0.0
        %2857 = vmatprep.subr.mxu0 0.0
        %2858 = vmatpush1.xpose.msra.mxu0 0.0
        %2859 = vmatprep.mubr.f32.mxu0 0.0
        %2860 = vmatmul.mubr.f32.gmra.mrb[0].mxu0 %v2791
        %v2861 = vpop.f32.mrb[0].mxu0
        %v2862 = vadd.f32 0.0, %v2861
        %v2863 = vpop.f32.mrb[0].mxu0
        %2864 = vdwg.mxu0
        %v2865 = vmul.f32 %v2784, 0.35355338
        %v2866 = vmul.f32 %v2862, 0.35355338
        %v2867 = vsel %vm2531, %v2865, -1e+09
        %v2868 = vsel %vm2532, %v2866, -1e+09
        %v2869 = vsel %vm2377, %v2867, -inf
        %2870 = vmax.xlane.f32.xlu0 %v2869
        %v2871 = vpop.xlane.xlu0 %2870
        %v2872 = vsel %vm2377, %v2868, -inf
        %2873 = vmax.xlane.f32.xlu0 %v2872
        %v2874 = vpop.xlane.xlu0 %2873
        %v2875 = vsub.f32 %v2867, %v2871
        %v2876 = vsub.f32 %v2868, %v2874
        %v2877 = vmul.f32 %v2875, 1.442695
        %v2878 = vpow.pop %v2877
        %v2879 = vmul.f32 %v2876, 1.442695
        %v2880 = vpow.pop %v2879
        %v2881 = vsel %vm2377, %v2878, 0.0
        %2882 = vadd.xlane.f32.xlu0 %v2881
        %v2883 = vpop.xlane.xlu0 %2882
        %v2884 = vsel %vm2377, %v2880, 0.0
        %2885 = vadd.xlane.f32.xlu0 %v2884
        %v2886 = vpop.xlane.xlu0 %2885
        %v2887 = vrcp.pop %v2883
        %v2888 = vrcp.pop %v2886
        %v2889 = vmul.f32 %v2878, %v2887
        %v2890 = vmul.f32 %v2880, %v2888
        %2891 = vrot.lane.b32.xlu0 %v2359, 56
        %v2892 = vpop.permute.xlu0 %2891
        %v2895 = vsel %vm2377, %v2889, 0
        %2897 = vmatprep.subr.mxu0 0.0
        %2898 = vmatpush1.msra.mxu0 %v2892
        %2899 = vmatprep.subr.mxu0 0.0
        %2900 = vmatpush1.msra.mxu0 0.0
        %2901 = vmatprep.subr.mxu0 0.0
        %2902 = vmatpush1.msra.mxu0 0.0
        %2903 = vmatprep.subr.mxu0 0.0
        %2904 = vmatpush1.msra.mxu0 0.0
        %2905 = vmatprep.subr.mxu0 0.0
        %2906 = vmatpush1.msra.mxu0 0.0
        %2907 = vmatprep.subr.mxu0 0.0
        %2908 = vmatpush1.msra.mxu0 0.0
        %2909 = vmatprep.subr.mxu0 0.0
        %2910 = vmatpush1.msra.mxu0 0.0
        %2911 = vmatprep.subr.mxu0 0.0
        %2912 = vmatpush1.msra.mxu0 0.0
        %2913 = vmatprep.subr.mxu0 0.0
        %2914 = vmatpush1.msra.mxu0 0.0
        %2915 = vmatprep.subr.mxu0 0.0
        %2916 = vmatpush1.msra.mxu0 0.0
        %2917 = vmatprep.subr.mxu0 0.0
        %2918 = vmatpush1.msra.mxu0 0.0
        %2919 = vmatprep.subr.mxu0 0.0
        %2920 = vmatpush1.msra.mxu0 0.0
        %2921 = vmatprep.subr.mxu0 0.0
        %2922 = vmatpush1.msra.mxu0 0.0
        %2923 = vmatprep.subr.mxu0 0.0
        %2924 = vmatpush1.msra.mxu0 0.0
        %2925 = vmatprep.subr.mxu0 0.0
        %2926 = vmatpush1.msra.mxu0 0.0
        %2927 = vmatprep.subr.mxu0 0.0
        %2928 = vmatpush1.msra.mxu0 0.0
        %2929 = vmatprep.subr.mxu0 0.0
        %2930 = vmatpush1.msra.mxu0 0.0
        %2931 = vmatprep.subr.mxu0 0.0
        %2932 = vmatpush1.msra.mxu0 0.0
        %2933 = vmatprep.subr.mxu0 0.0
        %2934 = vmatpush1.msra.mxu0 0.0
        %2935 = vmatprep.subr.mxu0 0.0
        %2936 = vmatpush1.msra.mxu0 0.0
        %2937 = vmatprep.subr.mxu0 0.0
        %2938 = vmatpush1.msra.mxu0 0.0
        %2939 = vmatprep.subr.mxu0 0.0
        %2940 = vmatpush1.msra.mxu0 0.0
        %2941 = vmatprep.subr.mxu0 0.0
        %2942 = vmatpush1.msra.mxu0 0.0
        %2943 = vmatprep.subr.mxu0 0.0
        %2944 = vmatpush1.msra.mxu0 0.0
        %2945 = vmatprep.subr.mxu0 0.0
        %2946 = vmatpush1.msra.mxu0 0.0
        %2947 = vmatprep.subr.mxu0 0.0
        %2948 = vmatpush1.msra.mxu0 0.0
        %2949 = vmatprep.subr.mxu0 0.0
        %2950 = vmatpush1.msra.mxu0 0.0
        %2951 = vmatprep.subr.mxu0 0.0
        %2952 = vmatpush1.msra.mxu0 0.0
        %2953 = vmatprep.subr.mxu0 0.0
        %2954 = vmatpush1.msra.mxu0 0.0
        %2955 = vmatprep.subr.mxu0 0.0
        %2956 = vmatpush1.msra.mxu0 0.0
        %2957 = vmatprep.subr.mxu0 0.0
        %2958 = vmatpush1.msra.mxu0 0.0
        %2959 = vmatprep.subr.mxu0 0.0
        %2960 = vmatpush1.msra.mxu0 0.0
        %2961 = vmatprep.mubr.f32.mxu0 0.0
        %2962 = vmatmul.mubr.f32.gmra.mrb[0].mxu0 %v2895
        %v2963 = vpop.f32.mrb[0].mxu0
        %v2964 = vadd.f32 0.0, %v2963
        %v2965 = vpop.f32.mrb[0].mxu0
        %2966 = vdwg.mxu0
        %2967 = vrot.lane.b32.xlu0 %v2364, 56
        %v2968 = vpop.permute.xlu0 %2967
        %v2971 = vsel %vm2377, %v2890, 0
        %2973 = vmatprep.subr.mxu0 0.0
        %2974 = vmatpush1.msra.mxu0 %v2968
        %2975 = vmatprep.subr.mxu0 0.0
        %2976 = vmatpush1.msra.mxu0 0.0
        %2977 = vmatprep.subr.mxu0 0.0
        %2978 = vmatpush1.msra.mxu0 0.0
        %2979 = vmatprep.subr.mxu0 0.0
        %2980 = vmatpush1.msra.mxu0 0.0
        %2981 = vmatprep.subr.mxu0 0.0
        %2982 = vmatpush1.msra.mxu0 0.0
        %2983 = vmatprep.subr.mxu0 0.0
        %2984 = vmatpush1.msra.mxu0 0.0
        %2985 = vmatprep.subr.mxu0 0.0
        %2986 = vmatpush1.msra.mxu0 0.0
        %2987 = vmatprep.subr.mxu0 0.0
        %2988 = vmatpush1.msra.mxu0 0.0
        %2989 = vmatprep.subr.mxu0 0.0
        %2990 = vmatpush1.msra.mxu0 0.0
        %2991 = vmatprep.subr.mxu0 0.0
        %2992 = vmatpush1.msra.mxu0 0.0
        %2993 = vmatprep.subr.mxu0 0.0
        %2994 = vmatpush1.msra.mxu0 0.0
        %2995 = vmatprep.subr.mxu0 0.0
        %2996 = vmatpush1.msra.mxu0 0.0
        %2997 = vmatprep.subr.mxu0 0.0
        %2998 = vmatpush1.msra.mxu0 0.0
        %2999 = vmatprep.subr.mxu0 0.0
        %3000 = vmatpush1.msra.mxu0 0.0
        %3001 = vmatprep.subr.mxu0 0.0
        %3002 = vmatpush1.msra.mxu0 0.0
        %3003 = vmatprep.subr.mxu0 0.0
        %3004 = vmatpush1.msra.mxu0 0.0
        %3005 = vmatprep.subr.mxu0 0.0
        %3006 = vmatpush1.msra.mxu0 0.0
        %3007 = vmatprep.subr.mxu0 0.0
        %3008 = vmatpush1.msra.mxu0 0.0
        %3009 = vmatprep.subr.mxu0 0.0
        %3010 = vmatpush1.msra.mxu0 0.0
        %3011 = vmatprep.subr.mxu0 0.0
        %3012 = vmatpush1.msra.mxu0 0.0
        %3013 = vmatprep.subr.mxu0 0.0
        %3014 = vmatpush1.msra.mxu0 0.0
        %3015 = vmatprep.subr.mxu0 0.0
        %3016 = vmatpush1.msra.mxu0 0.0
        %3017 = vmatprep.subr.mxu0 0.0
        %3018 = vmatpush1.msra.mxu0 0.0
        %3019 = vmatprep.subr.mxu0 0.0
        %3020 = vmatpush1.msra.mxu0 0.0
        %3021 = vmatprep.subr.mxu0 0.0
        %3022 = vmatpush1.msra.mxu0 0.0
        %3023 = vmatprep.subr.mxu0 0.0
        %3024 = vmatpush1.msra.mxu0 0.0
        %3025 = vmatprep.subr.mxu0 0.0
        %3026 = vmatpush1.msra.mxu0 0.0
        %3027 = vmatprep.subr.mxu0 0.0
        %3028 = vmatpush1.msra.mxu0 0.0
        %3029 = vmatprep.subr.mxu0 0.0
        %3030 = vmatpush1.msra.mxu0 0.0
        %3031 = vmatprep.subr.mxu0 0.0
        %3032 = vmatpush1.msra.mxu0 0.0
        %3033 = vmatprep.subr.mxu0 0.0
        %3034 = vmatpush1.msra.mxu0 0.0
        %3035 = vmatprep.subr.mxu0 0.0
        %3036 = vmatpush1.msra.mxu0 0.0
        %3037 = vmatprep.mubr.f32.mxu0 0.0
        %3038 = vmatmul.mubr.f32.gmra.mrb[0].mxu0 %v2971
        %v3039 = vpop.f32.mrb[0].mxu0
        %v3040 = vadd.f32 0.0, %v3039
        %v3041 = vpop.f32.mrb[0].mxu0
        %3042 = vdwg.mxu0
        %v3044 = vsel %vm2377, %v2964, 0
        %v3047 = vsel %vm2377, %v3040, 0
        %3049 = vmatprep.subr.mxu0 0.0
        %3050 = vmatpush1.msra.mxu0 %v2368
        %3051 = vmatprep.subr.mxu0 0.0
        %3052 = vmatpush1.msra.mxu0 0.0
        %3053 = vmatprep.subr.mxu0 0.0
        %3054 = vmatpush1.msra.mxu0 0.0
        %3055 = vmatprep.subr.mxu0 0.0
        %3056 = vmatpush1.msra.mxu0 0.0
        %3057 = vmatprep.subr.mxu0 0.0
        %3058 = vmatpush1.msra.mxu0 0.0
        %3059 = vmatprep.subr.mxu0 0.0
        %3060 = vmatpush1.msra.mxu0 0.0
        %3061 = vmatprep.subr.mxu0 0.0
        %3062 = vmatpush1.msra.mxu0 0.0
        %3063 = vmatprep.subr.mxu0 0.0
        %3064 = vmatpush1.msra.mxu0 0.0
        %3065 = vmatprep.subr.mxu0 0.0
        %3066 = vmatpush1.msra.mxu0 0.0
        %3067 = vmatprep.subr.mxu0 0.0
        %3068 = vmatpush1.msra.mxu0 0.0
        %3069 = vmatprep.subr.mxu0 0.0
        %3070 = vmatpush1.msra.mxu0 0.0
        %3071 = vmatprep.subr.mxu0 0.0
        %3072 = vmatpush1.msra.mxu0 0.0
        %3073 = vmatprep.subr.mxu0 0.0
        %3074 = vmatpush1.msra.mxu0 0.0
        %3075 = vmatprep.subr.mxu0 0.0
        %3076 = vmatpush1.msra.mxu0 0.0
        %3077 = vmatprep.subr.mxu0 0.0
        %3078 = vmatpush1.msra.mxu0 0.0
        %3079 = vmatprep.subr.mxu0 0.0
        %3080 = vmatpush1.msra.mxu0 0.0
        %3081 = vmatprep.subr.mxu0 0.0
        %3082 = vmatpush1.msra.mxu0 0.0
        %3083 = vmatprep.subr.mxu0 0.0
        %3084 = vmatpush1.msra.mxu0 0.0
        %3085 = vmatprep.subr.mxu0 0.0
        %3086 = vmatpush1.msra.mxu0 0.0
        %3087 = vmatprep.subr.mxu0 0.0
        %3088 = vmatpush1.msra.mxu0 0.0
        %3089 = vmatprep.subr.mxu0 0.0
        %3090 = vmatpush1.msra.mxu0 0.0
        %3091 = vmatprep.subr.mxu0 0.0
        %3092 = vmatpush1.msra.mxu0 0.0
        %3093 = vmatprep.subr.mxu0 0.0
        %3094 = vmatpush1.msra.mxu0 0.0
        %3095 = vmatprep.subr.mxu0 0.0
        %3096 = vmatpush1.msra.mxu0 0.0
        %3097 = vmatprep.subr.mxu0 0.0
        %3098 = vmatpush1.msra.mxu0 0.0
        %3099 = vmatprep.subr.mxu0 0.0
        %3100 = vmatpush1.msra.mxu0 0.0
        %3101 = vmatprep.subr.mxu0 0.0
        %3102 = vmatpush1.msra.mxu0 0.0
        %3103 = vmatprep.subr.mxu0 0.0
        %3104 = vmatpush1.msra.mxu0 0.0
        %3105 = vmatprep.subr.mxu0 0.0
        %3106 = vmatpush1.msra.mxu0 0.0
        %3107 = vmatprep.subr.mxu0 0.0
        %3108 = vmatpush1.msra.mxu0 0.0
        %3109 = vmatprep.subr.mxu0 0.0
        %3110 = vmatpush1.msra.mxu0 0.0
        %3111 = vmatprep.subr.mxu0 0.0
        %3112 = vmatpush1.msra.mxu0 0.0
        %3113 = vmatprep.mubr.f32.mxu0 0.0
        %3114 = vmatmul.mubr.f32.gmra.mrb[0].mxu0 %v3044
        %v3115 = vpop.f32.mrb[0].mxu0
        %v3116 = vadd.f32 0.0, %v3115
        %v3117 = vpop.f32.mrb[0].mxu0
        %3118 = vmatprep.mubr.f32.mxu0 0.0
        %3119 = vmatmul.mubr.f32.gmra.mrb[0].mxu0 %v3047
        %v3120 = vpop.f32.mrb[0].mxu0
        %v3121 = vadd.f32 0.0, %v3120
        %v3122 = vpop.f32.mrb[0].mxu0
        %3123 = vdwg.mxu0
        %v3125 = vsel %vm2377, %v2630, 0
        %v3128 = vsel %vm2377, %v2706, 0
        %3130 = vmatprep.subr.mxu0 0.0
        %3131 = vmatpush1.msra.mxu0 %v2367
        %3132 = vmatprep.subr.mxu0 0.0
        %3133 = vmatpush1.msra.mxu0 0.0
        %3134 = vmatprep.subr.mxu0 0.0
        %3135 = vmatpush1.msra.mxu0 0.0
        %3136 = vmatprep.subr.mxu0 0.0
        %3137 = vmatpush1.msra.mxu0 0.0
        %3138 = vmatprep.subr.mxu0 0.0
        %3139 = vmatpush1.msra.mxu0 0.0
        %3140 = vmatprep.subr.mxu0 0.0
        %3141 = vmatpush1.msra.mxu0 0.0
        %3142 = vmatprep.subr.mxu0 0.0
        %3143 = vmatpush1.msra.mxu0 0.0
        %3144 = vmatprep.subr.mxu0 0.0
        %3145 = vmatpush1.msra.mxu0 0.0
        %3146 = vmatprep.subr.mxu0 0.0
        %3147 = vmatpush1.msra.mxu0 0.0
        %3148 = vmatprep.subr.mxu0 0.0
        %3149 = vmatpush1.msra.mxu0 0.0
        %3150 = vmatprep.subr.mxu0 0.0
        %3151 = vmatpush1.msra.mxu0 0.0
        %3152 = vmatprep.subr.mxu0 0.0
        %3153 = vmatpush1.msra.mxu0 0.0
        %3154 = vmatprep.subr.mxu0 0.0
        %3155 = vmatpush1.msra.mxu0 0.0
        %3156 = vmatprep.subr.mxu0 0.0
        %3157 = vmatpush1.msra.mxu0 0.0
        %3158 = vmatprep.subr.mxu0 0.0
        %3159 = vmatpush1.msra.mxu0 0.0
        %3160 = vmatprep.subr.mxu0 0.0
        %3161 = vmatpush1.msra.mxu0 0.0
        %3162 = vmatprep.subr.mxu0 0.0
        %3163 = vmatpush1.msra.mxu0 0.0
        %3164 = vmatprep.subr.mxu0 0.0
        %3165 = vmatpush1.msra.mxu0 0.0
        %3166 = vmatprep.subr.mxu0 0.0
        %3167 = vmatpush1.msra.mxu0 0.0
        %3168 = vmatprep.subr.mxu0 0.0
        %3169 = vmatpush1.msra.mxu0 0.0
        %3170 = vmatprep.subr.mxu0 0.0
        %3171 = vmatpush1.msra.mxu0 0.0
        %3172 = vmatprep.subr.mxu0 0.0
        %3173 = vmatpush1.msra.mxu0 0.0
        %3174 = vmatprep.subr.mxu0 0.0
        %3175 = vmatpush1.msra.mxu0 0.0
        %3176 = vmatprep.subr.mxu0 0.0
        %3177 = vmatpush1.msra.mxu0 0.0
        %3178 = vmatprep.subr.mxu0 0.0
        %3179 = vmatpush1.msra.mxu0 0.0
        %3180 = vmatprep.subr.mxu0 0.0
        %3181 = vmatpush1.msra.mxu0 0.0
        %3182 = vmatprep.subr.mxu0 0.0
        %3183 = vmatpush1.msra.mxu0 0.0
        %3184 = vmatprep.subr.mxu0 0.0
        %3185 = vmatpush1.msra.mxu0 0.0
        %3186 = vmatprep.subr.mxu0 0.0
        %3187 = vmatpush1.msra.mxu0 0.0
        %3188 = vmatprep.subr.mxu0 0.0
        %3189 = vmatpush1.msra.mxu0 0.0
        %3190 = vmatprep.subr.mxu0 0.0
        %3191 = vmatpush1.msra.mxu0 0.0
        %3192 = vmatprep.subr.mxu0 0.0
        %3193 = vmatpush1.msra.mxu0 0.0
        %3194 = vmatprep.mubr.f32.mxu0 0.0
        %3195 = vmatmul.mubr.f32.gmra.mrb[0].mxu0 %v3125
        %v3196 = vpop.f32.mrb[0].mxu0
        %v3197 = vadd.f32 %v3116, %v3196
        %v3198 = vpop.f32.mrb[0].mxu0
        %3199 = vmatprep.mubr.f32.mxu0 0.0
        %3200 = vmatmul.mubr.f32.gmra.mrb[0].mxu0 %v3128
        %v3201 = vpop.f32.mrb[0].mxu0
        %v3202 = vadd.f32 %v3121, %v3201
        %v3203 = vpop.f32.mrb[0].mxu0
        %3204 = vdwg.mxu0
        %3205 = vrot.lane.b32.xlu0 %v2359, 112
        %v3206 = vpop.permute.xlu0 %3205
        %3207 = vrot.lane.b32.xlu0 %v2359, 80
        %v3208 = vpop.permute.xlu0 %3207
        %v3209 = vsel %vm2377, %v3206, 0
        %v3211 = vsel %vm2377, %v3208, 0
        %3213 = vmatprep.subr.mxu0 0.0
        %3214 = vmatpush1.xpose.msra.mxu0 %v3211
        %3215 = vmatprep.subr.mxu0 0.0
        %3216 = vmatpush1.xpose.msra.mxu0 0.0
        %3217 = vmatprep.subr.mxu0 0.0
        %3218 = vmatpush1.xpose.msra.mxu0 0.0
        %3219 = vmatprep.subr.mxu0 0.0
        %3220 = vmatpush1.xpose.msra.mxu0 0.0
        %3221 = vmatprep.subr.mxu0 0.0
        %3222 = vmatpush1.xpose.msra.mxu0 0.0
        %3223 = vmatprep.subr.mxu0 0.0
        %3224 = vmatpush1.xpose.msra.mxu0 0.0
        %3225 = vmatprep.subr.mxu0 0.0
        %3226 = vmatpush1.xpose.msra.mxu0 0.0
        %3227 = vmatprep.subr.mxu0 0.0
        %3228 = vmatpush1.xpose.msra.mxu0 0.0
        %3229 = vmatprep.subr.mxu0 0.0
        %3230 = vmatpush1.xpose.msra.mxu0 0.0
        %3231 = vmatprep.subr.mxu0 0.0
        %3232 = vmatpush1.xpose.msra.mxu0 0.0
        %3233 = vmatprep.subr.mxu0 0.0
        %3234 = vmatpush1.xpose.msra.mxu0 0.0
        %3235 = vmatprep.subr.mxu0 0.0
        %3236 = vmatpush1.xpose.msra.mxu0 0.0
        %3237 = vmatprep.subr.mxu0 0.0
        %3238 = vmatpush1.xpose.msra.mxu0 0.0
        %3239 = vmatprep.subr.mxu0 0.0
        %3240 = vmatpush1.xpose.msra.mxu0 0.0
        %3241 = vmatprep.subr.mxu0 0.0
        %3242 = vmatpush1.xpose.msra.mxu0 0.0
        %3243 = vmatprep.subr.mxu0 0.0
        %3244 = vmatpush1.xpose.msra.mxu0 0.0
        %3245 = vmatprep.subr.mxu0 0.0
        %3246 = vmatpush1.xpose.msra.mxu0 0.0
        %3247 = vmatprep.subr.mxu0 0.0
        %3248 = vmatpush1.xpose.msra.mxu0 0.0
        %3249 = vmatprep.subr.mxu0 0.0
        %3250 = vmatpush1.xpose.msra.mxu0 0.0
        %3251 = vmatprep.subr.mxu0 0.0
        %3252 = vmatpush1.xpose.msra.mxu0 0.0
        %3253 = vmatprep.subr.mxu0 0.0
        %3254 = vmatpush1.xpose.msra.mxu0 0.0
        %3255 = vmatprep.subr.mxu0 0.0
        %3256 = vmatpush1.xpose.msra.mxu0 0.0
        %3257 = vmatprep.subr.mxu0 0.0
        %3258 = vmatpush1.xpose.msra.mxu0 0.0
        %3259 = vmatprep.subr.mxu0 0.0
        %3260 = vmatpush1.xpose.msra.mxu0 0.0
        %3261 = vmatprep.subr.mxu0 0.0
        %3262 = vmatpush1.xpose.msra.mxu0 0.0
        %3263 = vmatprep.subr.mxu0 0.0
        %3264 = vmatpush1.xpose.msra.mxu0 0.0
        %3265 = vmatprep.subr.mxu0 0.0
        %3266 = vmatpush1.xpose.msra.mxu0 0.0
        %3267 = vmatprep.subr.mxu0 0.0
        %3268 = vmatpush1.xpose.msra.mxu0 0.0
        %3269 = vmatprep.subr.mxu0 0.0
        %3270 = vmatpush1.xpose.msra.mxu0 0.0
        %3271 = vmatprep.subr.mxu0 0.0
        %3272 = vmatpush1.xpose.msra.mxu0 0.0
        %3273 = vmatprep.subr.mxu0 0.0
        %3274 = vmatpush1.xpose.msra.mxu0 0.0
        %3275 = vmatprep.subr.mxu0 0.0
        %3276 = vmatpush1.xpose.msra.mxu0 0.0
        %3277 = vmatprep.mubr.f32.mxu0 0.0
        %3278 = vmatmul.mubr.f32.gmra.mrb[0].mxu0 %v3209
        %v3279 = vpop.f32.mrb[0].mxu0
        %v3280 = vadd.f32 0.0, %v3279
        %v3281 = vpop.f32.mrb[0].mxu0
        %3282 = vdwg.mxu0
        %3283 = vrot.lane.b32.xlu0 %v2364, 112
        %v3284 = vpop.permute.xlu0 %3283
        %3285 = vrot.lane.b32.xlu0 %v2364, 80
        %v3286 = vpop.permute.xlu0 %3285
        %v3287 = vsel %vm2377, %v3284, 0
        %v3289 = vsel %vm2377, %v3286, 0
        %3291 = vmatprep.subr.mxu0 0.0
        %3292 = vmatpush1.xpose.msra.mxu0 %v3289
        %3293 = vmatprep.subr.mxu0 0.0
        %3294 = vmatpush1.xpose.msra.mxu0 0.0
        %3295 = vmatprep.subr.mxu0 0.0
        %3296 = vmatpush1.xpose.msra.mxu0 0.0
        %3297 = vmatprep.subr.mxu0 0.0
        %3298 = vmatpush1.xpose.msra.mxu0 0.0
        %3299 = vmatprep.subr.mxu0 0.0
        %3300 = vmatpush1.xpose.msra.mxu0 0.0
        %3301 = vmatprep.subr.mxu0 0.0
        %3302 = vmatpush1.xpose.msra.mxu0 0.0
        %3303 = vmatprep.subr.mxu0 0.0
        %3304 = vmatpush1.xpose.msra.mxu0 0.0
        %3305 = vmatprep.subr.mxu0 0.0
        %3306 = vmatpush1.xpose.msra.mxu0 0.0
        %3307 = vmatprep.subr.mxu0 0.0
        %3308 = vmatpush1.xpose.msra.mxu0 0.0
        %3309 = vmatprep.subr.mxu0 0.0
        %3310 = vmatpush1.xpose.msra.mxu0 0.0
        %3311 = vmatprep.subr.mxu0 0.0
        %3312 = vmatpush1.xpose.msra.mxu0 0.0
        %3313 = vmatprep.subr.mxu0 0.0
        %3314 = vmatpush1.xpose.msra.mxu0 0.0
        %3315 = vmatprep.subr.mxu0 0.0
        %3316 = vmatpush1.xpose.msra.mxu0 0.0
        %3317 = vmatprep.subr.mxu0 0.0
        %3318 = vmatpush1.xpose.msra.mxu0 0.0
        %3319 = vmatprep.subr.mxu0 0.0
        %3320 = vmatpush1.xpose.msra.mxu0 0.0
        %3321 = vmatprep.subr.mxu0 0.0
        %3322 = vmatpush1.xpose.msra.mxu0 0.0
        %3323 = vmatprep.subr.mxu0 0.0
        %3324 = vmatpush1.xpose.msra.mxu0 0.0
        %3325 = vmatprep.subr.mxu0 0.0
        %3326 = vmatpush1.xpose.msra.mxu0 0.0
        %3327 = vmatprep.subr.mxu0 0.0
        %3328 = vmatpush1.xpose.msra.mxu0 0.0
        %3329 = vmatprep.subr.mxu0 0.0
        %3330 = vmatpush1.xpose.msra.mxu0 0.0
        %3331 = vmatprep.subr.mxu0 0.0
        %3332 = vmatpush1.xpose.msra.mxu0 0.0
        %3333 = vmatprep.subr.mxu0 0.0
        %3334 = vmatpush1.xpose.msra.mxu0 0.0
        %3335 = vmatprep.subr.mxu0 0.0
        %3336 = vmatpush1.xpose.msra.mxu0 0.0
        %3337 = vmatprep.subr.mxu0 0.0
        %3338 = vmatpush1.xpose.msra.mxu0 0.0
        %3339 = vmatprep.subr.mxu0 0.0
        %3340 = vmatpush1.xpose.msra.mxu0 0.0
        %3341 = vmatprep.subr.mxu0 0.0
        %3342 = vmatpush1.xpose.msra.mxu0 0.0
        %3343 = vmatprep.subr.mxu0 0.0
        %3344 = vmatpush1.xpose.msra.mxu0 0.0
        %3345 = vmatprep.subr.mxu0 0.0
        %3346 = vmatpush1.xpose.msra.mxu0 0.0
        %3347 = vmatprep.subr.mxu0 0.0
        %3348 = vmatpush1.xpose.msra.mxu0 0.0
        %3349 = vmatprep.subr.mxu0 0.0
        %3350 = vmatpush1.xpose.msra.mxu0 0.0
        %3351 = vmatprep.subr.mxu0 0.0
        %3352 = vmatpush1.xpose.msra.mxu0 0.0
        %3353 = vmatprep.subr.mxu0 0.0
        %3354 = vmatpush1.xpose.msra.mxu0 0.0
        %3355 = vmatprep.mubr.f32.mxu0 0.0
        %3356 = vmatmul.mubr.f32.gmra.mrb[0].mxu0 %v3287
        %v3357 = vpop.f32.mrb[0].mxu0
        %v3358 = vadd.f32 0.0, %v3357
        %v3359 = vpop.f32.mrb[0].mxu0
        %3360 = vdwg.mxu0
        %v3361 = vmul.f32 %v3280, 0.35355338
        %v3362 = vmul.f32 %v3358, 0.35355338
        %v3363 = vsel %vm2531, %v3361, -1e+09
        %v3364 = vsel %vm2532, %v3362, -1e+09
        %v3365 = vsel %vm2377, %v3363, -inf
        %3366 = vmax.xlane.f32.xlu0 %v3365
        %v3367 = vpop.xlane.xlu0 %3366
        %v3368 = vsel %vm2377, %v3364, -inf
        %3369 = vmax.xlane.f32.xlu0 %v3368
        %v3370 = vpop.xlane.xlu0 %3369
        %v3371 = vsub.f32 %v3363, %v3367
        %v3372 = vsub.f32 %v3364, %v3370
        %v3373 = vmul.f32 %v3371, 1.442695
        %v3374 = vpow.pop %v3373
        %v3375 = vmul.f32 %v3372, 1.442695
        %v3376 = vpow.pop %v3375
        %v3377 = vsel %vm2377, %v3374, 0.0
        %3378 = vadd.xlane.f32.xlu0 %v3377
        %v3379 = vpop.xlane.xlu0 %3378
        %v3380 = vsel %vm2377, %v3376, 0.0
        %3381 = vadd.xlane.f32.xlu0 %v3380
        %v3382 = vpop.xlane.xlu0 %3381
        %v3383 = vrcp.pop %v3379
        %v3384 = vrcp.pop %v3382
        %v3385 = vmul.f32 %v3374, %v3383
        %v3386 = vmul.f32 %v3376, %v3384
        %3387 = vrot.lane.b32.xlu0 %v2359, 48
        %v3388 = vpop.permute.xlu0 %3387
        %v3391 = vsel %vm2377, %v3385, 0
        %3393 = vmatprep.subr.mxu0 0.0
        %3394 = vmatpush1.msra.mxu0 %v3388
        %3395 = vmatprep.subr.mxu0 0.0
        %3396 = vmatpush1.msra.mxu0 0.0
        %3397 = vmatprep.subr.mxu0 0.0
        %3398 = vmatpush1.msra.mxu0 0.0
        %3399 = vmatprep.subr.mxu0 0.0
        %3400 = vmatpush1.msra.mxu0 0.0
        %3401 = vmatprep.subr.mxu0 0.0
        %3402 = vmatpush1.msra.mxu0 0.0
        %3403 = vmatprep.subr.mxu0 0.0
        %3404 = vmatpush1.msra.mxu0 0.0
        %3405 = vmatprep.subr.mxu0 0.0
        %3406 = vmatpush1.msra.mxu0 0.0
        %3407 = vmatprep.subr.mxu0 0.0
        %3408 = vmatpush1.msra.mxu0 0.0
        %3409 = vmatprep.subr.mxu0 0.0
        %3410 = vmatpush1.msra.mxu0 0.0
        %3411 = vmatprep.subr.mxu0 0.0
        %3412 = vmatpush1.msra.mxu0 0.0
        %3413 = vmatprep.subr.mxu0 0.0
        %3414 = vmatpush1.msra.mxu0 0.0
        %3415 = vmatprep.subr.mxu0 0.0
        %3416 = vmatpush1.msra.mxu0 0.0
        %3417 = vmatprep.subr.mxu0 0.0
        %3418 = vmatpush1.msra.mxu0 0.0
        %3419 = vmatprep.subr.mxu0 0.0
        %3420 = vmatpush1.msra.mxu0 0.0
        %3421 = vmatprep.subr.mxu0 0.0
        %3422 = vmatpush1.msra.mxu0 0.0
        %3423 = vmatprep.subr.mxu0 0.0
        %3424 = vmatpush1.msra.mxu0 0.0
        %3425 = vmatprep.subr.mxu0 0.0
        %3426 = vmatpush1.msra.mxu0 0.0
        %3427 = vmatprep.subr.mxu0 0.0
        %3428 = vmatpush1.msra.mxu0 0.0
        %3429 = vmatprep.subr.mxu0 0.0
        %3430 = vmatpush1.msra.mxu0 0.0
        %3431 = vmatprep.subr.mxu0 0.0
        %3432 = vmatpush1.msra.mxu0 0.0
        %3433 = vmatprep.subr.mxu0 0.0
        %3434 = vmatpush1.msra.mxu0 0.0
        %3435 = vmatprep.subr.mxu0 0.0
        %3436 = vmatpush1.msra.mxu0 0.0
        %3437 = vmatprep.subr.mxu0 0.0
        %3438 = vmatpush1.msra.mxu0 0.0
        %3439 = vmatprep.subr.mxu0 0.0
        %3440 = vmatpush1.msra.mxu0 0.0
        %3441 = vmatprep.subr.mxu0 0.0
        %3442 = vmatpush1.msra.mxu0 0.0
        %3443 = vmatprep.subr.mxu0 0.0
        %3444 = vmatpush1.msra.mxu0 0.0
        %3445 = vmatprep.subr.mxu0 0.0
        %3446 = vmatpush1.msra.mxu0 0.0
        %3447 = vmatprep.subr.mxu0 0.0
        %3448 = vmatpush1.msra.mxu0 0.0
        %3449 = vmatprep.subr.mxu0 0.0
        %3450 = vmatpush1.msra.mxu0 0.0
        %3451 = vmatprep.subr.mxu0 0.0
        %3452 = vmatpush1.msra.mxu0 0.0
        %3453 = vmatprep.subr.mxu0 0.0
        %3454 = vmatpush1.msra.mxu0 0.0
        %3455 = vmatprep.subr.mxu0 0.0
        %3456 = vmatpush1.msra.mxu0 0.0
        %3457 = vmatprep.mubr.f32.mxu0 0.0
        %3458 = vmatmul.mubr.f32.gmra.mrb[0].mxu0 %v3391
        %v3459 = vpop.f32.mrb[0].mxu0
        %v3460 = vadd.f32 0.0, %v3459
        %v3461 = vpop.f32.mrb[0].mxu0
        %3462 = vdwg.mxu0
        %3463 = vrot.lane.b32.xlu0 %v2364, 48
        %v3464 = vpop.permute.xlu0 %3463
        %v3467 = vsel %vm2377, %v3386, 0
        %3469 = vmatprep.subr.mxu0 0.0
        %3470 = vmatpush1.msra.mxu0 %v3464
        %3471 = vmatprep.subr.mxu0 0.0
        %3472 = vmatpush1.msra.mxu0 0.0
        %3473 = vmatprep.subr.mxu0 0.0
        %3474 = vmatpush1.msra.mxu0 0.0
        %3475 = vmatprep.subr.mxu0 0.0
        %3476 = vmatpush1.msra.mxu0 0.0
        %3477 = vmatprep.subr.mxu0 0.0
        %3478 = vmatpush1.msra.mxu0 0.0
        %3479 = vmatprep.subr.mxu0 0.0
        %3480 = vmatpush1.msra.mxu0 0.0
        %3481 = vmatprep.subr.mxu0 0.0
        %3482 = vmatpush1.msra.mxu0 0.0
        %3483 = vmatprep.subr.mxu0 0.0
        %3484 = vmatpush1.msra.mxu0 0.0
        %3485 = vmatprep.subr.mxu0 0.0
        %3486 = vmatpush1.msra.mxu0 0.0
        %3487 = vmatprep.subr.mxu0 0.0
        %3488 = vmatpush1.msra.mxu0 0.0
        %3489 = vmatprep.subr.mxu0 0.0
        %3490 = vmatpush1.msra.mxu0 0.0
        %3491 = vmatprep.subr.mxu0 0.0
        %3492 = vmatpush1.msra.mxu0 0.0
        %3493 = vmatprep.subr.mxu0 0.0
        %3494 = vmatpush1.msra.mxu0 0.0
        %3495 = vmatprep.subr.mxu0 0.0
        %3496 = vmatpush1.msra.mxu0 0.0
        %3497 = vmatprep.subr.mxu0 0.0
        %3498 = vmatpush1.msra.mxu0 0.0
        %3499 = vmatprep.subr.mxu0 0.0
        %3500 = vmatpush1.msra.mxu0 0.0
        %3501 = vmatprep.subr.mxu0 0.0
        %3502 = vmatpush1.msra.mxu0 0.0
        %3503 = vmatprep.subr.mxu0 0.0
        %3504 = vmatpush1.msra.mxu0 0.0
        %3505 = vmatprep.subr.mxu0 0.0
        %3506 = vmatpush1.msra.mxu0 0.0
        %3507 = vmatprep.subr.mxu0 0.0
        %3508 = vmatpush1.msra.mxu0 0.0
        %3509 = vmatprep.subr.mxu0 0.0
        %3510 = vmatpush1.msra.mxu0 0.0
        %3511 = vmatprep.subr.mxu0 0.0
        %3512 = vmatpush1.msra.mxu0 0.0
        %3513 = vmatprep.subr.mxu0 0.0
        %3514 = vmatpush1.msra.mxu0 0.0
        %3515 = vmatprep.subr.mxu0 0.0
        %3516 = vmatpush1.msra.mxu0 0.0
        %3517 = vmatprep.subr.mxu0 0.0
        %3518 = vmatpush1.msra.mxu0 0.0
        %3519 = vmatprep.subr.mxu0 0.0
        %3520 = vmatpush1.msra.mxu0 0.0
        %3521 = vmatprep.subr.mxu0 0.0
        %3522 = vmatpush1.msra.mxu0 0.0
        %3523 = vmatprep.subr.mxu0 0.0
        %3524 = vmatpush1.msra.mxu0 0.0
        %3525 = vmatprep.subr.mxu0 0.0
        %3526 = vmatpush1.msra.mxu0 0.0
        %3527 = vmatprep.subr.mxu0 0.0
        %3528 = vmatpush1.msra.mxu0 0.0
        %3529 = vmatprep.subr.mxu0 0.0
        %3530 = vmatpush1.msra.mxu0 0.0
        %3531 = vmatprep.subr.mxu0 0.0
        %3532 = vmatpush1.msra.mxu0 0.0
        %3533 = vmatprep.mubr.f32.mxu0 0.0
        %3534 = vmatmul.mubr.f32.gmra.mrb[0].mxu0 %v3467
        %v3535 = vpop.f32.mrb[0].mxu0
        %v3536 = vadd.f32 0.0, %v3535
        %v3537 = vpop.f32.mrb[0].mxu0
        %3538 = vdwg.mxu0
        %v3540 = vsel %vm2377, %v3460, 0
        %v3543 = vsel %vm2377, %v3536, 0
        %3545 = vmatprep.subr.mxu0 0.0
        %3546 = vmatpush1.msra.mxu0 %v2369
        %3547 = vmatprep.subr.mxu0 0.0
        %3548 = vmatpush1.msra.mxu0 0.0
        %3549 = vmatprep.subr.mxu0 0.0
        %3550 = vmatpush1.msra.mxu0 0.0
        %3551 = vmatprep.subr.mxu0 0.0
        %3552 = vmatpush1.msra.mxu0 0.0
        %3553 = vmatprep.subr.mxu0 0.0
        %3554 = vmatpush1.msra.mxu0 0.0
        %3555 = vmatprep.subr.mxu0 0.0
        %3556 = vmatpush1.msra.mxu0 0.0
        %3557 = vmatprep.subr.mxu0 0.0
        %3558 = vmatpush1.msra.mxu0 0.0
        %3559 = vmatprep.subr.mxu0 0.0
        %3560 = vmatpush1.msra.mxu0 0.0
        %3561 = vmatprep.subr.mxu0 0.0
        %3562 = vmatpush1.msra.mxu0 0.0
        %3563 = vmatprep.subr.mxu0 0.0
        %3564 = vmatpush1.msra.mxu0 0.0
        %3565 = vmatprep.subr.mxu0 0.0
        %3566 = vmatpush1.msra.mxu0 0.0
        %3567 = vmatprep.subr.mxu0 0.0
        %3568 = vmatpush1.msra.mxu0 0.0
        %3569 = vmatprep.subr.mxu0 0.0
        %3570 = vmatpush1.msra.mxu0 0.0
        %3571 = vmatprep.subr.mxu0 0.0
        %3572 = vmatpush1.msra.mxu0 0.0
        %3573 = vmatprep.subr.mxu0 0.0
        %3574 = vmatpush1.msra.mxu0 0.0
        %3575 = vmatprep.subr.mxu0 0.0
        %3576 = vmatpush1.msra.mxu0 0.0
        %3577 = vmatprep.subr.mxu0 0.0
        %3578 = vmatpush1.msra.mxu0 0.0
        %3579 = vmatprep.subr.mxu0 0.0
        %3580 = vmatpush1.msra.mxu0 0.0
        %3581 = vmatprep.subr.mxu0 0.0
        %3582 = vmatpush1.msra.mxu0 0.0
        %3583 = vmatprep.subr.mxu0 0.0
        %3584 = vmatpush1.msra.mxu0 0.0
        %3585 = vmatprep.subr.mxu0 0.0
        %3586 = vmatpush1.msra.mxu0 0.0
        %3587 = vmatprep.subr.mxu0 0.0
        %3588 = vmatpush1.msra.mxu0 0.0
        %3589 = vmatprep.subr.mxu0 0.0
        %3590 = vmatpush1.msra.mxu0 0.0
        %3591 = vmatprep.subr.mxu0 0.0
        %3592 = vmatpush1.msra.mxu0 0.0
        %3593 = vmatprep.subr.mxu0 0.0
        %3594 = vmatpush1.msra.mxu0 0.0
        %3595 = vmatprep.subr.mxu0 0.0
        %3596 = vmatpush1.msra.mxu0 0.0
        %3597 = vmatprep.subr.mxu0 0.0
        %3598 = vmatpush1.msra.mxu0 0.0
        %3599 = vmatprep.subr.mxu0 0.0
        %3600 = vmatpush1.msra.mxu0 0.0
        %3601 = vmatprep.subr.mxu0 0.0
        %3602 = vmatpush1.msra.mxu0 0.0
        %3603 = vmatprep.subr.mxu0 0.0
        %3604 = vmatpush1.msra.mxu0 0.0
        %3605 = vmatprep.subr.mxu0 0.0
        %3606 = vmatpush1.msra.mxu0 0.0
        %3607 = vmatprep.subr.mxu0 0.0
        %3608 = vmatpush1.msra.mxu0 0.0
        %3609 = vmatprep.mubr.f32.mxu0 0.0
        %3610 = vmatmul.mubr.f32.gmra.mrb[0].mxu0 %v3540
        %v3611 = vpop.f32.mrb[0].mxu0
        %v3612 = vadd.f32 0.0, %v3611
        %v3613 = vpop.f32.mrb[0].mxu0
        %3614 = vmatprep.mubr.f32.mxu0 0.0
        %3615 = vmatmul.mubr.f32.gmra.mrb[0].mxu0 %v3543
        %v3616 = vpop.f32.mrb[0].mxu0
        %v3617 = vadd.f32 0.0, %v3616
        %v3618 = vpop.f32.mrb[0].mxu0
        %3619 = vdwg.mxu0
        %v3620 = vadd.f32 %v3197, %v3612
        %v3621 = vadd.f32 %v3202, %v3617
        %3622 = vrot.lane.b32.xlu0 %v2359, 104
        %v3623 = vpop.permute.xlu0 %3622
        %3624 = vrot.lane.b32.xlu0 %v2359, 72
        %v3625 = vpop.permute.xlu0 %3624
        %v3626 = vsel %vm2377, %v3623, 0
        %v3628 = vsel %vm2377, %v3625, 0
        %3630 = vmatprep.subr.mxu0 0.0
        %3631 = vmatpush1.xpose.msra.mxu0 %v3628
        %3632 = vmatprep.subr.mxu0 0.0
        %3633 = vmatpush1.xpose.msra.mxu0 0.0
        %3634 = vmatprep.subr.mxu0 0.0
        %3635 = vmatpush1.xpose.msra.mxu0 0.0
        %3636 = vmatprep.subr.mxu0 0.0
        %3637 = vmatpush1.xpose.msra.mxu0 0.0
        %3638 = vmatprep.subr.mxu0 0.0
        %3639 = vmatpush1.xpose.msra.mxu0 0.0
        %3640 = vmatprep.subr.mxu0 0.0
        %3641 = vmatpush1.xpose.msra.mxu0 0.0
        %3642 = vmatprep.subr.mxu0 0.0
        %3643 = vmatpush1.xpose.msra.mxu0 0.0
        %3644 = vmatprep.subr.mxu0 0.0
        %3645 = vmatpush1.xpose.msra.mxu0 0.0
        %3646 = vmatprep.subr.mxu0 0.0
        %3647 = vmatpush1.xpose.msra.mxu0 0.0
        %3648 = vmatprep.subr.mxu0 0.0
        %3649 = vmatpush1.xpose.msra.mxu0 0.0
        %3650 = vmatprep.subr.mxu0 0.0
        %3651 = vmatpush1.xpose.msra.mxu0 0.0
        %3652 = vmatprep.subr.mxu0 0.0
        %3653 = vmatpush1.xpose.msra.mxu0 0.0
        %3654 = vmatprep.subr.mxu0 0.0
        %3655 = vmatpush1.xpose.msra.mxu0 0.0
        %3656 = vmatprep.subr.mxu0 0.0
        %3657 = vmatpush1.xpose.msra.mxu0 0.0
        %3658 = vmatprep.subr.mxu0 0.0
        %3659 = vmatpush1.xpose.msra.mxu0 0.0
        %3660 = vmatprep.subr.mxu0 0.0
        %3661 = vmatpush1.xpose.msra.mxu0 0.0
        %3662 = vmatprep.subr.mxu0 0.0
        %3663 = vmatpush1.xpose.msra.mxu0 0.0
        %3664 = vmatprep.subr.mxu0 0.0
        %3665 = vmatpush1.xpose.msra.mxu0 0.0
        %3666 = vmatprep.subr.mxu0 0.0
        %3667 = vmatpush1.xpose.msra.mxu0 0.0
        %3668 = vmatprep.subr.mxu0 0.0
        %3669 = vmatpush1.xpose.msra.mxu0 0.0
        %3670 = vmatprep.subr.mxu0 0.0
        %3671 = vmatpush1.xpose.msra.mxu0 0.0
        %3672 = vmatprep.subr.mxu0 0.0
        %3673 = vmatpush1.xpose.msra.mxu0 0.0
        %3674 = vmatprep.subr.mxu0 0.0
        %3675 = vmatpush1.xpose.msra.mxu0 0.0
        %3676 = vmatprep.subr.mxu0 0.0
        %3677 = vmatpush1.xpose.msra.mxu0 0.0
        %3678 = vmatprep.subr.mxu0 0.0
        %3679 = vmatpush1.xpose.msra.mxu0 0.0
        %3680 = vmatprep.subr.mxu0 0.0
        %3681 = vmatpush1.xpose.msra.mxu0 0.0
        %3682 = vmatprep.subr.mxu0 0.0
        %3683 = vmatpush1.xpose.msra.mxu0 0.0
        %3684 = vmatprep.subr.mxu0 0.0
        %3685 = vmatpush1.xpose.msra.mxu0 0.0
        %3686 = vmatprep.subr.mxu0 0.0
        %3687 = vmatpush1.xpose.msra.mxu0 0.0
        %3688 = vmatprep.subr.mxu0 0.0
        %3689 = vmatpush1.xpose.msra.mxu0 0.0
        %3690 = vmatprep.subr.mxu0 0.0
        %3691 = vmatpush1.xpose.msra.mxu0 0.0
        %3692 = vmatprep.subr.mxu0 0.0
        %3693 = vmatpush1.xpose.msra.mxu0 0.0
        %3694 = vmatprep.mubr.f32.mxu0 0.0
        %3695 = vmatmul.mubr.f32.gmra.mrb[0].mxu0 %v3626
        %v3696 = vpop.f32.mrb[0].mxu0
        %v3697 = vadd.f32 0.0, %v3696
        %v3698 = vpop.f32.mrb[0].mxu0
        %3699 = vdwg.mxu0
        %3700 = vrot.lane.b32.xlu0 %v2364, 104
        %v3701 = vpop.permute.xlu0 %3700
        %3702 = vrot.lane.b32.xlu0 %v2364, 72
        %v3703 = vpop.permute.xlu0 %3702
        %v3704 = vsel %vm2377, %v3701, 0
        %v3706 = vsel %vm2377, %v3703, 0
        %3708 = vmatprep.subr.mxu0 0.0
        %3709 = vmatpush1.xpose.msra.mxu0 %v3706
        %3710 = vmatprep.subr.mxu0 0.0
        %3711 = vmatpush1.xpose.msra.mxu0 0.0
        %3712 = vmatprep.subr.mxu0 0.0
        %3713 = vmatpush1.xpose.msra.mxu0 0.0
        %3714 = vmatprep.subr.mxu0 0.0
        %3715 = vmatpush1.xpose.msra.mxu0 0.0
        %3716 = vmatprep.subr.mxu0 0.0
        %3717 = vmatpush1.xpose.msra.mxu0 0.0
        %3718 = vmatprep.subr.mxu0 0.0
        %3719 = vmatpush1.xpose.msra.mxu0 0.0
        %3720 = vmatprep.subr.mxu0 0.0
        %3721 = vmatpush1.xpose.msra.mxu0 0.0
        %3722 = vmatprep.subr.mxu0 0.0
        %3723 = vmatpush1.xpose.msra.mxu0 0.0
        %3724 = vmatprep.subr.mxu0 0.0
        %3725 = vmatpush1.xpose.msra.mxu0 0.0
        %3726 = vmatprep.subr.mxu0 0.0
        %3727 = vmatpush1.xpose.msra.mxu0 0.0
        %3728 = vmatprep.subr.mxu0 0.0
        %3729 = vmatpush1.xpose.msra.mxu0 0.0
        %3730 = vmatprep.subr.mxu0 0.0
        %3731 = vmatpush1.xpose.msra.mxu0 0.0
        %3732 = vmatprep.subr.mxu0 0.0
        %3733 = vmatpush1.xpose.msra.mxu0 0.0
        %3734 = vmatprep.subr.mxu0 0.0
        %3735 = vmatpush1.xpose.msra.mxu0 0.0
        %3736 = vmatprep.subr.mxu0 0.0
        %3737 = vmatpush1.xpose.msra.mxu0 0.0
        %3738 = vmatprep.subr.mxu0 0.0
        %3739 = vmatpush1.xpose.msra.mxu0 0.0
        %3740 = vmatprep.subr.mxu0 0.0
        %3741 = vmatpush1.xpose.msra.mxu0 0.0
        %3742 = vmatprep.subr.mxu0 0.0
        %3743 = vmatpush1.xpose.msra.mxu0 0.0
        %3744 = vmatprep.subr.mxu0 0.0
        %3745 = vmatpush1.xpose.msra.mxu0 0.0
        %3746 = vmatprep.subr.mxu0 0.0
        %3747 = vmatpush1.xpose.msra.mxu0 0.0
        %3748 = vmatprep.subr.mxu0 0.0
        %3749 = vmatpush1.xpose.msra.mxu0 0.0
        %3750 = vmatprep.subr.mxu0 0.0
        %3751 = vmatpush1.xpose.msra.mxu0 0.0
        %3752 = vmatprep.subr.mxu0 0.0
        %3753 = vmatpush1.xpose.msra.mxu0 0.0
        %3754 = vmatprep.subr.mxu0 0.0
        %3755 = vmatpush1.xpose.msra.mxu0 0.0
        %3756 = vmatprep.subr.mxu0 0.0
        %3757 = vmatpush1.xpose.msra.mxu0 0.0
        %3758 = vmatprep.subr.mxu0 0.0
        %3759 = vmatpush1.xpose.msra.mxu0 0.0
        %3760 = vmatprep.subr.mxu0 0.0
        %3761 = vmatpush1.xpose.msra.mxu0 0.0
        %3762 = vmatprep.subr.mxu0 0.0
        %3763 = vmatpush1.xpose.msra.mxu0 0.0
        %3764 = vmatprep.subr.mxu0 0.0
        %3765 = vmatpush1.xpose.msra.mxu0 0.0
        %3766 = vmatprep.subr.mxu0 0.0
        %3767 = vmatpush1.xpose.msra.mxu0 0.0
        %3768 = vmatprep.subr.mxu0 0.0
        %3769 = vmatpush1.xpose.msra.mxu0 0.0
        %3770 = vmatprep.subr.mxu0 0.0
        %3771 = vmatpush1.xpose.msra.mxu0 0.0
        %3772 = vmatprep.mubr.f32.mxu0 0.0
        %3773 = vmatmul.mubr.f32.gmra.mrb[0].mxu0 %v3704
        %v3774 = vpop.f32.mrb[0].mxu0
        %v3775 = vadd.f32 0.0, %v3774
        %v3776 = vpop.f32.mrb[0].mxu0
        %3777 = vdwg.mxu0
        %v3778 = vmul.f32 %v3697, 0.35355338
        %v3779 = vmul.f32 %v3775, 0.35355338
        %v3780 = vsel %vm2531, %v3778, -1e+09
        %v3781 = vsel %vm2532, %v3779, -1e+09
        %v3782 = vsel %vm2377, %v3780, -inf
        %3783 = vmax.xlane.f32.xlu0 %v3782
        %v3784 = vpop.xlane.xlu0 %3783
        %v3785 = vsel %vm2377, %v3781, -inf
        %3786 = vmax.xlane.f32.xlu0 %v3785
        %v3787 = vpop.xlane.xlu0 %3786
        %v3788 = vsub.f32 %v3780, %v3784
        %v3789 = vsub.f32 %v3781, %v3787
        %v3790 = vmul.f32 %v3788, 1.442695
        %v3791 = vpow.pop %v3790
        %v3792 = vmul.f32 %v3789, 1.442695
        %v3793 = vpow.pop %v3792
        %v3794 = vsel %vm2377, %v3791, 0.0
        %3795 = vadd.xlane.f32.xlu0 %v3794
        %v3796 = vpop.xlane.xlu0 %3795
        %v3797 = vsel %vm2377, %v3793, 0.0
        %3798 = vadd.xlane.f32.xlu0 %v3797
        %v3799 = vpop.xlane.xlu0 %3798
        %v3800 = vrcp.pop %v3796
        %v3801 = vrcp.pop %v3799
        %v3802 = vmul.f32 %v3791, %v3800
        %v3803 = vmul.f32 %v3793, %v3801
        %3804 = vrot.lane.b32.xlu0 %v2359, 40
        %v3805 = vpop.permute.xlu0 %3804
        %v3808 = vsel %vm2377, %v3802, 0
        %3810 = vmatprep.subr.mxu0 0.0
        %3811 = vmatpush1.msra.mxu0 %v3805
        %3812 = vmatprep.subr.mxu0 0.0
        %3813 = vmatpush1.msra.mxu0 0.0
        %3814 = vmatprep.subr.mxu0 0.0
        %3815 = vmatpush1.msra.mxu0 0.0
        %3816 = vmatprep.subr.mxu0 0.0
        %3817 = vmatpush1.msra.mxu0 0.0
        %3818 = vmatprep.subr.mxu0 0.0
        %3819 = vmatpush1.msra.mxu0 0.0
        %3820 = vmatprep.subr.mxu0 0.0
        %3821 = vmatpush1.msra.mxu0 0.0
        %3822 = vmatprep.subr.mxu0 0.0
        %3823 = vmatpush1.msra.mxu0 0.0
        %3824 = vmatprep.subr.mxu0 0.0
        %3825 = vmatpush1.msra.mxu0 0.0
        %3826 = vmatprep.subr.mxu0 0.0
        %3827 = vmatpush1.msra.mxu0 0.0
        %3828 = vmatprep.subr.mxu0 0.0
        %3829 = vmatpush1.msra.mxu0 0.0
        %3830 = vmatprep.subr.mxu0 0.0
        %3831 = vmatpush1.msra.mxu0 0.0
        %3832 = vmatprep.subr.mxu0 0.0
        %3833 = vmatpush1.msra.mxu0 0.0
        %3834 = vmatprep.subr.mxu0 0.0
        %3835 = vmatpush1.msra.mxu0 0.0
        %3836 = vmatprep.subr.mxu0 0.0
        %3837 = vmatpush1.msra.mxu0 0.0
        %3838 = vmatprep.subr.mxu0 0.0
        %3839 = vmatpush1.msra.mxu0 0.0
        %3840 = vmatprep.subr.mxu0 0.0
        %3841 = vmatpush1.msra.mxu0 0.0
        %3842 = vmatprep.subr.mxu0 0.0
        %3843 = vmatpush1.msra.mxu0 0.0
        %3844 = vmatprep.subr.mxu0 0.0
        %3845 = vmatpush1.msra.mxu0 0.0
        %3846 = vmatprep.subr.mxu0 0.0
        %3847 = vmatpush1.msra.mxu0 0.0
        %3848 = vmatprep.subr.mxu0 0.0
        %3849 = vmatpush1.msra.mxu0 0.0
        %3850 = vmatprep.subr.mxu0 0.0
        %3851 = vmatpush1.msra.mxu0 0.0
        %3852 = vmatprep.subr.mxu0 0.0
        %3853 = vmatpush1.msra.mxu0 0.0
        %3854 = vmatprep.subr.mxu0 0.0
        %3855 = vmatpush1.msra.mxu0 0.0
        %3856 = vmatprep.subr.mxu0 0.0
        %3857 = vmatpush1.msra.mxu0 0.0
        %3858 = vmatprep.subr.mxu0 0.0
        %3859 = vmatpush1.msra.mxu0 0.0
        %3860 = vmatprep.subr.mxu0 0.0
        %3861 = vmatpush1.msra.mxu0 0.0
        %3862 = vmatprep.subr.mxu0 0.0
        %3863 = vmatpush1.msra.mxu0 0.0
        %3864 = vmatprep.subr.mxu0 0.0
        %3865 = vmatpush1.msra.mxu0 0.0
        %3866 = vmatprep.subr.mxu0 0.0
        %3867 = vmatpush1.msra.mxu0 0.0
        %3868 = vmatprep.subr.mxu0 0.0
        %3869 = vmatpush1.msra.mxu0 0.0
        %3870 = vmatprep.subr.mxu0 0.0
        %3871 = vmatpush1.msra.mxu0 0.0
        %3872 = vmatprep.subr.mxu0 0.0
        %3873 = vmatpush1.msra.mxu0 0.0
        %3874 = vmatprep.mubr.f32.mxu0 0.0
        %3875 = vmatmul.mubr.f32.gmra.mrb[0].mxu0 %v3808
        %v3876 = vpop.f32.mrb[0].mxu0
        %v3877 = vadd.f32 0.0, %v3876
        %v3878 = vpop.f32.mrb[0].mxu0
        %3879 = vdwg.mxu0
        %3880 = vrot.lane.b32.xlu0 %v2364, 40
        %v3881 = vpop.permute.xlu0 %3880
        %v3884 = vsel %vm2377, %v3803, 0
        %3886 = vmatprep.subr.mxu0 0.0
        %3887 = vmatpush1.msra.mxu0 %v3881
        %3888 = vmatprep.subr.mxu0 0.0
        %3889 = vmatpush1.msra.mxu0 0.0
        %3890 = vmatprep.subr.mxu0 0.0
        %3891 = vmatpush1.msra.mxu0 0.0
        %3892 = vmatprep.subr.mxu0 0.0
        %3893 = vmatpush1.msra.mxu0 0.0
        %3894 = vmatprep.subr.mxu0 0.0
        %3895 = vmatpush1.msra.mxu0 0.0
        %3896 = vmatprep.subr.mxu0 0.0
        %3897 = vmatpush1.msra.mxu0 0.0
        %3898 = vmatprep.subr.mxu0 0.0
        %3899 = vmatpush1.msra.mxu0 0.0
        %3900 = vmatprep.subr.mxu0 0.0
        %3901 = vmatpush1.msra.mxu0 0.0
        %3902 = vmatprep.subr.mxu0 0.0
        %3903 = vmatpush1.msra.mxu0 0.0
        %3904 = vmatprep.subr.mxu0 0.0
        %3905 = vmatpush1.msra.mxu0 0.0
        %3906 = vmatprep.subr.mxu0 0.0
        %3907 = vmatpush1.msra.mxu0 0.0
        %3908 = vmatprep.subr.mxu0 0.0
        %3909 = vmatpush1.msra.mxu0 0.0
        %3910 = vmatprep.subr.mxu0 0.0
        %3911 = vmatpush1.msra.mxu0 0.0
        %3912 = vmatprep.subr.mxu0 0.0
        %3913 = vmatpush1.msra.mxu0 0.0
        %3914 = vmatprep.subr.mxu0 0.0
        %3915 = vmatpush1.msra.mxu0 0.0
        %3916 = vmatprep.subr.mxu0 0.0
        %3917 = vmatpush1.msra.mxu0 0.0
        %3918 = vmatprep.subr.mxu0 0.0
        %3919 = vmatpush1.msra.mxu0 0.0
        %3920 = vmatprep.subr.mxu0 0.0
        %3921 = vmatpush1.msra.mxu0 0.0
        %3922 = vmatprep.subr.mxu0 0.0
        %3923 = vmatpush1.msra.mxu0 0.0
        %3924 = vmatprep.subr.mxu0 0.0
        %3925 = vmatpush1.msra.mxu0 0.0
        %3926 = vmatprep.subr.mxu0 0.0
        %3927 = vmatpush1.msra.mxu0 0.0
        %3928 = vmatprep.subr.mxu0 0.0
        %3929 = vmatpush1.msra.mxu0 0.0
        %3930 = vmatprep.subr.mxu0 0.0
        %3931 = vmatpush1.msra.mxu0 0.0
        %3932 = vmatprep.subr.mxu0 0.0
        %3933 = vmatpush1.msra.mxu0 0.0
        %3934 = vmatprep.subr.mxu0 0.0
        %3935 = vmatpush1.msra.mxu0 0.0
        %3936 = vmatprep.subr.mxu0 0.0
        %3937 = vmatpush1.msra.mxu0 0.0
        %3938 = vmatprep.subr.mxu0 0.0
        %3939 = vmatpush1.msra.mxu0 0.0
        %3940 = vmatprep.subr.mxu0 0.0
        %3941 = vmatpush1.msra.mxu0 0.0
        %3942 = vmatprep.subr.mxu0 0.0
        %3943 = vmatpush1.msra.mxu0 0.0
        %3944 = vmatprep.subr.mxu0 0.0
        %3945 = vmatpush1.msra.mxu0 0.0
        %3946 = vmatprep.subr.mxu0 0.0
        %3947 = vmatpush1.msra.mxu0 0.0
        %3948 = vmatprep.subr.mxu0 0.0
        %3949 = vmatpush1.msra.mxu0 0.0
        %3950 = vmatprep.mubr.f32.mxu0 0.0
        %3951 = vmatmul.mubr.f32.gmra.mrb[0].mxu0 %v3884
        %v3952 = vpop.f32.mrb[0].mxu0
        %v3953 = vadd.f32 0.0, %v3952
        %v3954 = vpop.f32.mrb[0].mxu0
        %3955 = vdwg.mxu0
        %v3957 = vsel %vm2377, %v3877, 0
        %v3960 = vsel %vm2377, %v3953, 0
        %3962 = vmatprep.subr.mxu0 0.0
        %3963 = vmatpush1.msra.mxu0 %v2370
        %3964 = vmatprep.subr.mxu0 0.0
        %3965 = vmatpush1.msra.mxu0 0.0
        %3966 = vmatprep.subr.mxu0 0.0
        %3967 = vmatpush1.msra.mxu0 0.0
        %3968 = vmatprep.subr.mxu0 0.0
        %3969 = vmatpush1.msra.mxu0 0.0
        %3970 = vmatprep.subr.mxu0 0.0
        %3971 = vmatpush1.msra.mxu0 0.0
        %3972 = vmatprep.subr.mxu0 0.0
        %3973 = vmatpush1.msra.mxu0 0.0
        %3974 = vmatprep.subr.mxu0 0.0
        %3975 = vmatpush1.msra.mxu0 0.0
        %3976 = vmatprep.subr.mxu0 0.0
        %3977 = vmatpush1.msra.mxu0 0.0
        %3978 = vmatprep.subr.mxu0 0.0
        %3979 = vmatpush1.msra.mxu0 0.0
        %3980 = vmatprep.subr.mxu0 0.0
        %3981 = vmatpush1.msra.mxu0 0.0
        %3982 = vmatprep.subr.mxu0 0.0
        %3983 = vmatpush1.msra.mxu0 0.0
        %3984 = vmatprep.subr.mxu0 0.0
        %3985 = vmatpush1.msra.mxu0 0.0
        %3986 = vmatprep.subr.mxu0 0.0
        %3987 = vmatpush1.msra.mxu0 0.0
        %3988 = vmatprep.subr.mxu0 0.0
        %3989 = vmatpush1.msra.mxu0 0.0
        %3990 = vmatprep.subr.mxu0 0.0
        %3991 = vmatpush1.msra.mxu0 0.0
        %3992 = vmatprep.subr.mxu0 0.0
        %3993 = vmatpush1.msra.mxu0 0.0
        %3994 = vmatprep.subr.mxu0 0.0
        %3995 = vmatpush1.msra.mxu0 0.0
        %3996 = vmatprep.subr.mxu0 0.0
        %3997 = vmatpush1.msra.mxu0 0.0
        %3998 = vmatprep.subr.mxu0 0.0
        %3999 = vmatpush1.msra.mxu0 0.0
        %4000 = vmatprep.subr.mxu0 0.0
        %4001 = vmatpush1.msra.mxu0 0.0
        %4002 = vmatprep.subr.mxu0 0.0
        %4003 = vmatpush1.msra.mxu0 0.0
        %4004 = vmatprep.subr.mxu0 0.0
        %4005 = vmatpush1.msra.mxu0 0.0
        %4006 = vmatprep.subr.mxu0 0.0
        %4007 = vmatpush1.msra.mxu0 0.0
        %4008 = vmatprep.subr.mxu0 0.0
        %4009 = vmatpush1.msra.mxu0 0.0
        %4010 = vmatprep.subr.mxu0 0.0
        %4011 = vmatpush1.msra.mxu0 0.0
        %4012 = vmatprep.subr.mxu0 0.0
        %4013 = vmatpush1.msra.mxu0 0.0
        %4014 = vmatprep.subr.mxu0 0.0
        %4015 = vmatpush1.msra.mxu0 0.0
        %4016 = vmatprep.subr.mxu0 0.0
        %4017 = vmatpush1.msra.mxu0 0.0
        %4018 = vmatprep.subr.mxu0 0.0
        %4019 = vmatpush1.msra.mxu0 0.0
        %4020 = vmatprep.subr.mxu0 0.0
        %4021 = vmatpush1.msra.mxu0 0.0
        %4022 = vmatprep.subr.mxu0 0.0
        %4023 = vmatpush1.msra.mxu0 0.0
        %4024 = vmatprep.subr.mxu0 0.0
        %4025 = vmatpush1.msra.mxu0 0.0
        %4026 = vmatprep.mubr.f32.mxu0 0.0
        %4027 = vmatmul.mubr.f32.gmra.mrb[0].mxu0 %v3957
        %v4028 = vpop.f32.mrb[0].mxu0
        %v4029 = vadd.f32 0.0, %v4028
        %v4030 = vpop.f32.mrb[0].mxu0
        %4031 = vmatprep.mubr.f32.mxu0 0.0
        %4032 = vmatmul.mubr.f32.gmra.mrb[0].mxu0 %v3960
        %v4033 = vpop.f32.mrb[0].mxu0
        %v4034 = vadd.f32 0.0, %v4033
        %v4035 = vpop.f32.mrb[0].mxu0
        %4036 = vdwg.mxu0
        %v4037 = vadd.f32 %v3620, %v4029
        %v4038 = vadd.f32 %v3621, %v4034
        %v4040 = vlaneseq
        %v4041 = vshrl.u32 %v4040, 7
        %v4042 = vsub.s32 0, %v4041
        %v4043 = vrot.slane %v2371, %v4042
        %v4045 = vadd.f32 %v4037, %v4043
        %v4046 = vadd.f32 %v4038, %v4043
        %v4047 = vadd.f32 %v2272, %v4045
        %v4048 = vadd.f32 %v2273, %v4046
        %v4049 = vld [vmem:[%s2000] sm:$0x1]
        %v4050 = vld [vmem:[%s2007] sm:$0x1]
        %v4051 = vsel %vm2285, %v4047, 0.0
        %4052 = vadd.xlane.f32.xlu0 %v4051
        %v4053 = vpop.xlane.xlu0 %4052
        %v4054 = vsel %vm2285, %v4048, 0.0
        %4055 = vadd.xlane.f32.xlu0 %v4054
        %v4056 = vpop.xlane.xlu0 %4055
        %v4057 = vrcp.pop 32.0
        %v4058 = vmul.f32 %v4053, %v4057
        %v4059 = vmul.f32 %v4056, %v4057
        %v4060 = vsub.f32 %v4047, %v4058
        %v4061 = vsub.f32 %v4048, %v4059
        %v4062 = vmul.f32 %v4060, %v4060
        %v4063 = vmul.f32 %v4061, %v4061
        %v4064 = vsel %vm2285, %v4062, 0.0
        %4065 = vadd.xlane.f32.xlu0 %v4064
        %v4066 = vpop.xlane.xlu0 %4065
        %v4067 = vsel %vm2285, %v4063, 0.0
        %4068 = vadd.xlane.f32.xlu0 %v4067
        %v4069 = vpop.xlane.xlu0 %4068
        %v4070 = vmul.f32 %v4066, %v4057
        %v4071 = vmul.f32 %v4069, %v4057
        %v4072 = vadd.f32 %v4070, 1e-05
        %v4073 = vadd.f32 %v4071, 1e-05
        %v4074 = vrsqrt.pop %v4072
        %v4075 = vrsqrt.pop %v4073
        %v4076 = vmul.f32 %v4060, %v4074
        %v4077 = vmul.f32 %v4061, %v4075
        %v4079 = vlaneseq
        %v4080 = vshrl.u32 %v4079, 7
        %v4081 = vsub.s32 0, %v4080
        %v4082 = vrot.slane %v4049, %v4081
        %v4084 = vmul.f32 %v4076, %v4082
        %v4085 = vmul.f32 %v4077, %v4082
        %v4087 = vlaneseq
        %v4088 = vshrl.u32 %v4087, 7
        %v4089 = vsub.s32 0, %v4088
        %v4090 = vrot.slane %v4050, %v4089
        %v4092 = vadd.f32 %v4084, %v4090
        %v4093 = vadd.f32 %v4085, %v4090
        %v4094 = vld [vmem:[%s2016] sm:$0xff]
        %v4095 = vld [vmem:[%s2016 + $0x8] sm:$0xff]
        %v4096 = vld [vmem:[%s2016 + $0x10] sm:$0xff]
        %v4097 = vld [vmem:[%s2016 + $0x18] sm:$0xff]
        %v4098 = vld [vmem:[%s2023] sm:$0x1]
        %v4100 = vlaneseq
        %v4101 = vshrl.u32 %v4100, 7
        %v4102 = vsub.s32 0, %v4101
        %v4103 = vrot.slane %v4098, %v4102
        %v4106 = vsel %vm2285, %v4092, 0
        %v4109 = vsel %vm2285, %v4093, 0
        %4111 = vmatprep.subr.mxu0 0.0
        %4112 = vmatpush1.msra.mxu0 %v4094
        %4113 = vmatprep.subr.mxu0 0.0
        %4114 = vmatpush1.msra.mxu0 %v4095
        %4115 = vmatprep.subr.mxu0 0.0
        %4116 = vmatpush1.msra.mxu0 %v4096
        %4117 = vmatprep.subr.mxu0 0.0
        %4118 = vmatpush1.msra.mxu0 %v4097
        %4119 = vmatprep.subr.mxu0 0.0
        %4120 = vmatpush1.msra.mxu0 0.0
        %4121 = vmatprep.subr.mxu0 0.0
        %4122 = vmatpush1.msra.mxu0 0.0
        %4123 = vmatprep.subr.mxu0 0.0
        %4124 = vmatpush1.msra.mxu0 0.0
        %4125 = vmatprep.subr.mxu0 0.0
        %4126 = vmatpush1.msra.mxu0 0.0
        %4127 = vmatprep.subr.mxu0 0.0
        %4128 = vmatpush1.msra.mxu0 0.0
        %4129 = vmatprep.subr.mxu0 0.0
        %4130 = vmatpush1.msra.mxu0 0.0
        %4131 = vmatprep.subr.mxu0 0.0
        %4132 = vmatpush1.msra.mxu0 0.0
        %4133 = vmatprep.subr.mxu0 0.0
        %4134 = vmatpush1.msra.mxu0 0.0
        %4135 = vmatprep.subr.mxu0 0.0
        %4136 = vmatpush1.msra.mxu0 0.0
        %4137 = vmatprep.subr.mxu0 0.0
        %4138 = vmatpush1.msra.mxu0 0.0
        %4139 = vmatprep.subr.mxu0 0.0
        %4140 = vmatpush1.msra.mxu0 0.0
        %4141 = vmatprep.subr.mxu0 0.0
        %4142 = vmatpush1.msra.mxu0 0.0
        %4143 = vmatprep.subr.mxu0 0.0
        %4144 = vmatpush1.msra.mxu0 0.0
        %4145 = vmatprep.subr.mxu0 0.0
        %4146 = vmatpush1.msra.mxu0 0.0
        %4147 = vmatprep.subr.mxu0 0.0
        %4148 = vmatpush1.msra.mxu0 0.0
        %4149 = vmatprep.subr.mxu0 0.0
        %4150 = vmatpush1.msra.mxu0 0.0
        %4151 = vmatprep.subr.mxu0 0.0
        %4152 = vmatpush1.msra.mxu0 0.0
        %4153 = vmatprep.subr.mxu0 0.0
        %4154 = vmatpush1.msra.mxu0 0.0
        %4155 = vmatprep.subr.mxu0 0.0
        %4156 = vmatpush1.msra.mxu0 0.0
        %4157 = vmatprep.subr.mxu0 0.0
        %4158 = vmatpush1.msra.mxu0 0.0
        %4159 = vmatprep.subr.mxu0 0.0
        %4160 = vmatpush1.msra.mxu0 0.0
        %4161 = vmatprep.subr.mxu0 0.0
        %4162 = vmatpush1.msra.mxu0 0.0
        %4163 = vmatprep.subr.mxu0 0.0
        %4164 = vmatpush1.msra.mxu0 0.0
        %4165 = vmatprep.subr.mxu0 0.0
        %4166 = vmatpush1.msra.mxu0 0.0
        %4167 = vmatprep.subr.mxu0 0.0
        %4168 = vmatpush1.msra.mxu0 0.0
        %4169 = vmatprep.subr.mxu0 0.0
        %4170 = vmatpush1.msra.mxu0 0.0
        %4171 = vmatprep.subr.mxu0 0.0
        %4172 = vmatpush1.msra.mxu0 0.0
        %4173 = vmatprep.subr.mxu0 0.0
        %4174 = vmatpush1.msra.mxu0 0.0
        %4175 = vmatprep.mubr.f32.mxu0 0.0
        %4176 = vmatmul.mubr.f32.gmra.mrb[0].mxu0 %v4106
        %v4177 = vpop.f32.mrb[0].mxu0
        %v4178 = vadd.f32 %v4103, %v4177
        %v4179 = vpop.f32.mrb[0].mxu0
        %4180 = vmatprep.mubr.f32.mxu0 0.0
        %4181 = vmatmul.mubr.f32.gmra.mrb[0].mxu0 %v4109
        %v4182 = vpop.f32.mrb[0].mxu0
        %v4183 = vadd.f32 %v4103, %v4182
        %v4184 = vpop.f32.mrb[0].mxu0
        %4185 = vdwg.mxu0
        %v4186 = vmax.f32 %v4178, 0.0
        %v4187 = vmax.f32 %v4183, 0.0
        %v4188 = vld [vmem:[%s2032] sm:$0xff]
        %v4189 = vld [vmem:[%s2032 + $0x8] sm:$0xff]
        %v4190 = vld [vmem:[%s2032 + $0x10] sm:$0xff]
        %v4191 = vld [vmem:[%s2032 + $0x18] sm:$0xff]
        %v4192 = vld [vmem:[%s2032 + $0x20] sm:$0xff]
        %v4193 = vld [vmem:[%s2032 + $0x28] sm:$0xff]
        %v4194 = vld [vmem:[%s2032 + $0x30] sm:$0xff]
        %v4195 = vld [vmem:[%s2032 + $0x38] sm:$0xff]
        %v4196 = vld [vmem:[%s2039] sm:$0x1]
        %v4198 = vlaneseq
        %v4199 = vshrl.u32 %v4198, 7
        %v4200 = vsub.s32 0, %v4199
        %v4201 = vrot.slane %v4196, %v4200
        %vm4203 = vcmask 523264
        %v4205 = vsel %vm4203, %v4186, 0
        %v4208 = vsel %vm4203, %v4187, 0
        %4210 = vmatprep.subr.mxu0 0.0
        %4211 = vmatpush1.msra.mxu0 %v4188
        %4212 = vmatprep.subr.mxu0 0.0
        %4213 = vmatpush1.msra.mxu0 %v4189
        %4214 = vmatprep.subr.mxu0 0.0
        %4215 = vmatpush1.msra.mxu0 %v4190
        %4216 = vmatprep.subr.mxu0 0.0
        %4217 = vmatpush1.msra.mxu0 %v4191
        %4218 = vmatprep.subr.mxu0 0.0
        %4219 = vmatpush1.msra.mxu0 %v4192
        %4220 = vmatprep.subr.mxu0 0.0
        %4221 = vmatpush1.msra.mxu0 %v4193
        %4222 = vmatprep.subr.mxu0 0.0
        %4223 = vmatpush1.msra.mxu0 %v4194
        %4224 = vmatprep.subr.mxu0 0.0
        %4225 = vmatpush1.msra.mxu0 %v4195
        %4226 = vmatprep.subr.mxu0 0.0
        %4227 = vmatpush1.msra.mxu0 0.0
        %4228 = vmatprep.subr.mxu0 0.0
        %4229 = vmatpush1.msra.mxu0 0.0
        %4230 = vmatprep.subr.mxu0 0.0
        %4231 = vmatpush1.msra.mxu0 0.0
        %4232 = vmatprep.subr.mxu0 0.0
        %4233 = vmatpush1.msra.mxu0 0.0
        %4234 = vmatprep.subr.mxu0 0.0
        %4235 = vmatpush1.msra.mxu0 0.0
        %4236 = vmatprep.subr.mxu0 0.0
        %4237 = vmatpush1.msra.mxu0 0.0
        %4238 = vmatprep.subr.mxu0 0.0
        %4239 = vmatpush1.msra.mxu0 0.0
        %4240 = vmatprep.subr.mxu0 0.0
        %4241 = vmatpush1.msra.mxu0 0.0
        %4242 = vmatprep.subr.mxu0 0.0
        %4243 = vmatpush1.msra.mxu0 0.0
        %4244 = vmatprep.subr.mxu0 0.0
        %4245 = vmatpush1.msra.mxu0 0.0
        %4246 = vmatprep.subr.mxu0 0.0
        %4247 = vmatpush1.msra.mxu0 0.0
        %4248 = vmatprep.subr.mxu0 0.0
        %4249 = vmatpush1.msra.mxu0 0.0
        %4250 = vmatprep.subr.mxu0 0.0
        %4251 = vmatpush1.msra.mxu0 0.0
        %4252 = vmatprep.subr.mxu0 0.0
        %4253 = vmatpush1.msra.mxu0 0.0
        %4254 = vmatprep.subr.mxu0 0.0
        %4255 = vmatpush1.msra.mxu0 0.0
        %4256 = vmatprep.subr.mxu0 0.0
        %4257 = vmatpush1.msra.mxu0 0.0
        %4258 = vmatprep.subr.mxu0 0.0
        %4259 = vmatpush1.msra.mxu0 0.0
        %4260 = vmatprep.subr.mxu0 0.0
        %4261 = vmatpush1.msra.mxu0 0.0
        %4262 = vmatprep.subr.mxu0 0.0
        %4263 = vmatpush1.msra.mxu0 0.0
        %4264 = vmatprep.subr.mxu0 0.0
        %4265 = vmatpush1.msra.mxu0 0.0
        %4266 = vmatprep.subr.mxu0 0.0
        %4267 = vmatpush1.msra.mxu0 0.0
        %4268 = vmatprep.subr.mxu0 0.0
        %4269 = vmatpush1.msra.mxu0 0.0
        %4270 = vmatprep.subr.mxu0 0.0
        %4271 = vmatpush1.msra.mxu0 0.0
        %4272 = vmatprep.subr.mxu0 0.0
        %4273 = vmatpush1.msra.mxu0 0.0
        %4274 = vmatprep.mubr.f32.mxu0 0.0
        %4275 = vmatmul.mubr.f32.gmra.mrb[0].mxu0 %v4205
        %v4276 = vpop.f32.mrb[0].mxu0
        %v4277 = vadd.f32 %v4201, %v4276
        %v4278 = vpop.f32.mrb[0].mxu0
        %4279 = vmatprep.mubr.f32.mxu0 0.0
        %4280 = vmatmul.mubr.f32.gmra.mrb[0].mxu0 %v4208
        %v4281 = vpop.f32.mrb[0].mxu0
        %v4282 = vadd.f32 %v4201, %v4281
        %v4283 = vpop.f32.mrb[0].mxu0
        %4284 = vdwg.mxu0
        %v4285 = vadd.f32 %v4092, %v4277
        %v4286 = vadd.f32 %v4093, %v4282
        %v4287 = vld [vmem:[%s2046] sm:$0x1]
        %v4288 = vld [vmem:[%s2053] sm:$0x1]
        %v4289 = vsel %vm2285, %v4285, 0.0
        %4290 = vadd.xlane.f32.xlu0 %v4289
        %v4291 = vpop.xlane.xlu0 %4290
        %v4292 = vsel %vm2285, %v4286, 0.0
        %4293 = vadd.xlane.f32.xlu0 %v4292
        %v4294 = vpop.xlane.xlu0 %4293
        %v4295 = vmul.f32 %v4291, %v4057
        %v4296 = vmul.f32 %v4294, %v4057
        %v4297 = vsub.f32 %v4285, %v4295
        %v4298 = vsub.f32 %v4286, %v4296
        %v4299 = vmul.f32 %v4297, %v4297
        %v4300 = vmul.f32 %v4298, %v4298
        %v4301 = vsel %vm2285, %v4299, 0.0
        %4302 = vadd.xlane.f32.xlu0 %v4301
        %v4303 = vpop.xlane.xlu0 %4302
        %v4304 = vsel %vm2285, %v4300, 0.0
        %4305 = vadd.xlane.f32.xlu0 %v4304
        %v4306 = vpop.xlane.xlu0 %4305
        %v4307 = vmul.f32 %v4303, %v4057
        %v4308 = vmul.f32 %v4306, %v4057
        %v4309 = vadd.f32 %v4307, 1e-05
        %v4310 = vadd.f32 %v4308, 1e-05
        %v4311 = vrsqrt.pop %v4309
        %v4312 = vrsqrt.pop %v4310
        %v4313 = vmul.f32 %v4297, %v4311
        %v4314 = vmul.f32 %v4298, %v4312
        %v4316 = vlaneseq
        %v4317 = vshrl.u32 %v4316, 7
        %v4318 = vsub.s32 0, %v4317
        %v4319 = vrot.slane %v4287, %v4318
        %v4321 = vmul.f32 %v4313, %v4319
        %v4322 = vmul.f32 %v4314, %v4319
        %v4324 = vlaneseq
        %v4325 = vshrl.u32 %v4324, 7
        %v4326 = vsub.s32 0, %v4325
        %v4327 = vrot.slane %v4288, %v4326
        %v4329 = vadd.f32 %v4321, %v4327
        %v4330 = vadd.f32 %v4322, %v4327
        %4331 = vst.msk [vmem:[#allocation2] sm:$0xff] %vm2285, %v4329
        %4332 = vst.msk [vmem:[#allocation2 + $0x8] sm:$0xff] %vm2285, %v4330
      $region188: #{transformer_forward.1} parent=175 // pred_fallthru
        _
      %p4333 = scmp.ge.s32.totalorder %s90, 2
      // Predicated region
      $region189: #{transformer_forward.1} parent=175 // pred_check
        %p4334 = pneg %p4333
      $region190: #{transformer_forward.1} parent=175 // pred_check_branch
        %4336 = sbr.rel (%p4334) target = $region192
      $region191: #{transformer_forward.1} parent=175 // pred_region
        %v4337 = vld [vmem:[#allocation3] sm:$0xff]
        %v4338 = vld [vmem:[#allocation3 + $0x8] sm:$0xff]
        %v4339 = vld [vmem:[#allocation2] sm:$0xff]
        %v4340 = vld [vmem:[#allocation2 + $0x8] sm:$0xff]
        %v4341 = vld [vmem:[%s2063] sm:$0xff]
        %v4342 = vld [vmem:[%s2063 + $0x8] sm:$0xff]
        %v4343 = vld [vmem:[%s2063 + $0x10] sm:$0xff]
        %v4344 = vld [vmem:[%s2063 + $0x18] sm:$0xff]
        %v4345 = vld [vmem:[%s2072] sm:$0x1]
        %v4347 = vlaneseq
        %v4348 = vshrl.u32 %v4347, 7
        %v4349 = vsub.s32 0, %v4348
        %v4350 = vrot.slane %v4345, %v4349
        %vm4352 = vcmask 261120
        %v4354 = vsel %vm4352, %v4337, 0
        %v4357 = vsel %vm4352, %v4338, 0
        %4359 = vmatprep.subr.mxu0 0.0
        %4360 = vmatpush1.msra.mxu0 %v4341
        %4361 = vmatprep.subr.mxu0 0.0
        %4362 = vmatpush1.msra.mxu0 %v4342
        %4363 = vmatprep.subr.mxu0 0.0
        %4364 = vmatpush1.msra.mxu0 %v4343
        %4365 = vmatprep.subr.mxu0 0.0
        %4366 = vmatpush1.msra.mxu0 %v4344
        %4367 = vmatprep.subr.mxu0 0.0
        %4368 = vmatpush1.msra.mxu0 0.0
        %4369 = vmatprep.subr.mxu0 0.0
        %4370 = vmatpush1.msra.mxu0 0.0
        %4371 = vmatprep.subr.mxu0 0.0
        %4372 = vmatpush1.msra.mxu0 0.0
        %4373 = vmatprep.subr.mxu0 0.0
        %4374 = vmatpush1.msra.mxu0 0.0
        %4375 = vmatprep.subr.mxu0 0.0
        %4376 = vmatpush1.msra.mxu0 0.0
        %4377 = vmatprep.subr.mxu0 0.0
        %4378 = vmatpush1.msra.mxu0 0.0
        %4379 = vmatprep.subr.mxu0 0.0
        %4380 = vmatpush1.msra.mxu0 0.0
        %4381 = vmatprep.subr.mxu0 0.0
        %4382 = vmatpush1.msra.mxu0 0.0
        %4383 = vmatprep.subr.mxu0 0.0
        %4384 = vmatpush1.msra.mxu0 0.0
        %4385 = vmatprep.subr.mxu0 0.0
        %4386 = vmatpush1.msra.mxu0 0.0
        %4387 = vmatprep.subr.mxu0 0.0
        %4388 = vmatpush1.msra.mxu0 0.0
        %4389 = vmatprep.subr.mxu0 0.0
        %4390 = vmatpush1.msra.mxu0 0.0
        %4391 = vmatprep.subr.mxu0 0.0
        %4392 = vmatpush1.msra.mxu0 0.0
        %4393 = vmatprep.subr.mxu0 0.0
        %4394 = vmatpush1.msra.mxu0 0.0
        %4395 = vmatprep.subr.mxu0 0.0
        %4396 = vmatpush1.msra.mxu0 0.0
        %4397 = vmatprep.subr.mxu0 0.0
        %4398 = vmatpush1.msra.mxu0 0.0
        %4399 = vmatprep.subr.mxu0 0.0
        %4400 = vmatpush1.msra.mxu0 0.0
        %4401 = vmatprep.subr.mxu0 0.0
        %4402 = vmatpush1.msra.mxu0 0.0
        %4403 = vmatprep.subr.mxu0 0.0
        %4404 = vmatpush1.msra.mxu0 0.0
        %4405 = vmatprep.subr.mxu0 0.0
        %4406 = vmatpush1.msra.mxu0 0.0
        %4407 = vmatprep.subr.mxu0 0.0
        %4408 = vmatpush1.msra.mxu0 0.0
        %4409 = vmatprep.subr.mxu0 0.0
        %4410 = vmatpush1.msra.mxu0 0.0
        %4411 = vmatprep.subr.mxu0 0.0
        %4412 = vmatpush1.msra.mxu0 0.0
        %4413 = vmatprep.subr.mxu0 0.0
        %4414 = vmatpush1.msra.mxu0 0.0
        %4415 = vmatprep.subr.mxu0 0.0
        %4416 = vmatpush1.msra.mxu0 0.0
        %4417 = vmatprep.subr.mxu0 0.0
        %4418 = vmatpush1.msra.mxu0 0.0
        %4419 = vmatprep.subr.mxu0 0.0
        %4420 = vmatpush1.msra.mxu0 0.0
        %4421 = vmatprep.subr.mxu0 0.0
        %4422 = vmatpush1.msra.mxu0 0.0
        %4423 = vmatprep.mubr.f32.mxu0 0.0
        %4424 = vmatmul.mubr.f32.gmra.mrb[0].mxu0 %v4354
        %v4425 = vpop.f32.mrb[0].mxu0
        %v4426 = vadd.f32 %v4350, %v4425
        %v4427 = vpop.f32.mrb[0].mxu0
        %4428 = vmatprep.mubr.f32.mxu0 0.0
        %4429 = vmatmul.mubr.f32.gmra.mrb[0].mxu0 %v4357
        %v4430 = vpop.f32.mrb[0].mxu0
        %v4431 = vadd.f32 %v4350, %v4430
        %v4432 = vpop.f32.mrb[0].mxu0
        %4433 = vdwg.mxu0
        %v4434 = vld [vmem:[%s2083] sm:$0xff]
        %v4435 = vld [vmem:[%s2083 + $0x8] sm:$0xff]
        %v4436 = vld [vmem:[%s2083 + $0x10] sm:$0xff]
        %v4437 = vld [vmem:[%s2083 + $0x18] sm:$0xff]
        %v4438 = vld [vmem:[%s2092] sm:$0x1]
        %v4439 = vld [vmem:[%s7] sm:$0xff]
        %v4440 = vld [vmem:[%s7 + $0x8] sm:$0xff]
        %4442 = vrot.lane.b32.xlu0 %v4426, 96
        %v4443 = vpop.permute.xlu0 %4442
        %vm4444 = vcmask 64512
        %v4445 = vsel %vm4444, %v4426, 0
        %v4447 = vsel %vm4444, %v4443, 0
        %4449 = vmatprep.subr.mxu0 0.0
        %4450 = vmatpush1.xpose.msra.mxu0 %v4447
        %4451 = vmatprep.subr.mxu0 0.0
        %4452 = vmatpush1.xpose.msra.mxu0 0.0
        %4453 = vmatprep.subr.mxu0 0.0
        %4454 = vmatpush1.xpose.msra.mxu0 0.0
        %4455 = vmatprep.subr.mxu0 0.0
        %4456 = vmatpush1.xpose.msra.mxu0 0.0
        %4457 = vmatprep.subr.mxu0 0.0
        %4458 = vmatpush1.xpose.msra.mxu0 0.0
        %4459 = vmatprep.subr.mxu0 0.0
        %4460 = vmatpush1.xpose.msra.mxu0 0.0
        %4461 = vmatprep.subr.mxu0 0.0
        %4462 = vmatpush1.xpose.msra.mxu0 0.0
        %4463 = vmatprep.subr.mxu0 0.0
        %4464 = vmatpush1.xpose.msra.mxu0 0.0
        %4465 = vmatprep.subr.mxu0 0.0
        %4466 = vmatpush1.xpose.msra.mxu0 0.0
        %4467 = vmatprep.subr.mxu0 0.0
        %4468 = vmatpush1.xpose.msra.mxu0 0.0
        %4469 = vmatprep.subr.mxu0 0.0
        %4470 = vmatpush1.xpose.msra.mxu0 0.0
        %4471 = vmatprep.subr.mxu0 0.0
        %4472 = vmatpush1.xpose.msra.mxu0 0.0
        %4473 = vmatprep.subr.mxu0 0.0
        %4474 = vmatpush1.xpose.msra.mxu0 0.0
        %4475 = vmatprep.subr.mxu0 0.0
        %4476 = vmatpush1.xpose.msra.mxu0 0.0
        %4477 = vmatprep.subr.mxu0 0.0
        %4478 = vmatpush1.xpose.msra.mxu0 0.0
        %4479 = vmatprep.subr.mxu0 0.0
        %4480 = vmatpush1.xpose.msra.mxu0 0.0
        %4481 = vmatprep.subr.mxu0 0.0
        %4482 = vmatpush1.xpose.msra.mxu0 0.0
        %4483 = vmatprep.subr.mxu0 0.0
        %4484 = vmatpush1.xpose.msra.mxu0 0.0
        %4485 = vmatprep.subr.mxu0 0.0
        %4486 = vmatpush1.xpose.msra.mxu0 0.0
        %4487 = vmatprep.subr.mxu0 0.0
        %4488 = vmatpush1.xpose.msra.mxu0 0.0
        %4489 = vmatprep.subr.mxu0 0.0
        %4490 = vmatpush1.xpose.msra.mxu0 0.0
        %4491 = vmatprep.subr.mxu0 0.0
        %4492 = vmatpush1.xpose.msra.mxu0 0.0
        %4493 = vmatprep.subr.mxu0 0.0
        %4494 = vmatpush1.xpose.msra.mxu0 0.0
        %4495 = vmatprep.subr.mxu0 0.0
        %4496 = vmatpush1.xpose.msra.mxu0 0.0
        %4497 = vmatprep.subr.mxu0 0.0
        %4498 = vmatpush1.xpose.msra.mxu0 0.0
        %4499 = vmatprep.subr.mxu0 0.0
        %4500 = vmatpush1.xpose.msra.mxu0 0.0
        %4501 = vmatprep.subr.mxu0 0.0
        %4502 = vmatpush1.xpose.msra.mxu0 0.0
        %4503 = vmatprep.subr.mxu0 0.0
        %4504 = vmatpush1.xpose.msra.mxu0 0.0
        %4505 = vmatprep.subr.mxu0 0.0
        %4506 = vmatpush1.xpose.msra.mxu0 0.0
        %4507 = vmatprep.subr.mxu0 0.0
        %4508 = vmatpush1.xpose.msra.mxu0 0.0
        %4509 = vmatprep.subr.mxu0 0.0
        %4510 = vmatpush1.xpose.msra.mxu0 0.0
        %4511 = vmatprep.subr.mxu0 0.0
        %4512 = vmatpush1.xpose.msra.mxu0 0.0
        %4513 = vmatprep.mubr.f32.mxu0 0.0
        %4514 = vmatmul.mubr.f32.gmra.mrb[0].mxu0 %v4445
        %v4515 = vpop.f32.mrb[0].mxu0
        %v4516 = vadd.f32 0.0, %v4515
        %v4517 = vpop.f32.mrb[0].mxu0
        %4518 = vdwg.mxu0
        %4520 = vrot.lane.b32.xlu0 %v4431, 96
        %v4521 = vpop.permute.xlu0 %4520
        %v4522 = vsel %vm4444, %v4431, 0
        %v4524 = vsel %vm4444, %v4521, 0
        %4526 = vmatprep.subr.mxu0 0.0
        %4527 = vmatpush1.xpose.msra.mxu0 %v4524
        %4528 = vmatprep.subr.mxu0 0.0
        %4529 = vmatpush1.xpose.msra.mxu0 0.0
        %4530 = vmatprep.subr.mxu0 0.0
        %4531 = vmatpush1.xpose.msra.mxu0 0.0
        %4532 = vmatprep.subr.mxu0 0.0
        %4533 = vmatpush1.xpose.msra.mxu0 0.0
        %4534 = vmatprep.subr.mxu0 0.0
        %4535 = vmatpush1.xpose.msra.mxu0 0.0
        %4536 = vmatprep.subr.mxu0 0.0
        %4537 = vmatpush1.xpose.msra.mxu0 0.0
        %4538 = vmatprep.subr.mxu0 0.0
        %4539 = vmatpush1.xpose.msra.mxu0 0.0
        %4540 = vmatprep.subr.mxu0 0.0
        %4541 = vmatpush1.xpose.msra.mxu0 0.0
        %4542 = vmatprep.subr.mxu0 0.0
        %4543 = vmatpush1.xpose.msra.mxu0 0.0
        %4544 = vmatprep.subr.mxu0 0.0
        %4545 = vmatpush1.xpose.msra.mxu0 0.0
        %4546 = vmatprep.subr.mxu0 0.0
        %4547 = vmatpush1.xpose.msra.mxu0 0.0
        %4548 = vmatprep.subr.mxu0 0.0
        %4549 = vmatpush1.xpose.msra.mxu0 0.0
        %4550 = vmatprep.subr.mxu0 0.0
        %4551 = vmatpush1.xpose.msra.mxu0 0.0
        %4552 = vmatprep.subr.mxu0 0.0
        %4553 = vmatpush1.xpose.msra.mxu0 0.0
        %4554 = vmatprep.subr.mxu0 0.0
        %4555 = vmatpush1.xpose.msra.mxu0 0.0
        %4556 = vmatprep.subr.mxu0 0.0
        %4557 = vmatpush1.xpose.msra.mxu0 0.0
        %4558 = vmatprep.subr.mxu0 0.0
        %4559 = vmatpush1.xpose.msra.mxu0 0.0
        %4560 = vmatprep.subr.mxu0 0.0
        %4561 = vmatpush1.xpose.msra.mxu0 0.0
        %4562 = vmatprep.subr.mxu0 0.0
        %4563 = vmatpush1.xpose.msra.mxu0 0.0
        %4564 = vmatprep.subr.mxu0 0.0
        %4565 = vmatpush1.xpose.msra.mxu0 0.0
        %4566 = vmatprep.subr.mxu0 0.0
        %4567 = vmatpush1.xpose.msra.mxu0 0.0
        %4568 = vmatprep.subr.mxu0 0.0
        %4569 = vmatpush1.xpose.msra.mxu0 0.0
        %4570 = vmatprep.subr.mxu0 0.0
        %4571 = vmatpush1.xpose.msra.mxu0 0.0
        %4572 = vmatprep.subr.mxu0 0.0
        %4573 = vmatpush1.xpose.msra.mxu0 0.0
        %4574 = vmatprep.subr.mxu0 0.0
        %4575 = vmatpush1.xpose.msra.mxu0 0.0
        %4576 = vmatprep.subr.mxu0 0.0
        %4577 = vmatpush1.xpose.msra.mxu0 0.0
        %4578 = vmatprep.subr.mxu0 0.0
        %4579 = vmatpush1.xpose.msra.mxu0 0.0
        %4580 = vmatprep.subr.mxu0 0.0
        %4581 = vmatpush1.xpose.msra.mxu0 0.0
        %4582 = vmatprep.subr.mxu0 0.0
        %4583 = vmatpush1.xpose.msra.mxu0 0.0
        %4584 = vmatprep.subr.mxu0 0.0
        %4585 = vmatpush1.xpose.msra.mxu0 0.0
        %4586 = vmatprep.subr.mxu0 0.0
        %4587 = vmatpush1.xpose.msra.mxu0 0.0
        %4588 = vmatprep.subr.mxu0 0.0
        %4589 = vmatpush1.xpose.msra.mxu0 0.0
        %4590 = vmatprep.mubr.f32.mxu0 0.0
        %4591 = vmatmul.mubr.f32.gmra.mrb[0].mxu0 %v4522
        %v4592 = vpop.f32.mrb[0].mxu0
        %v4593 = vadd.f32 0.0, %v4592
        %v4594 = vpop.f32.mrb[0].mxu0
        %4595 = vdwg.mxu0
        %v4596 = vmul.f32 %v4516, 0.35355338
        %v4597 = vmul.f32 %v4593, 0.35355338
        %vm4598 = vcmp.gt.f32.partialorder %v4439, 0.5
        %vm4599 = vcmp.gt.f32.partialorder %v4440, 0.5
        %v4600 = vsel %vm4598, %v4596, -1e+09
        %v4601 = vsel %vm4599, %v4597, -1e+09
        %v4602 = vsel %vm4444, %v4600, -inf
        %4603 = vmax.xlane.f32.xlu0 %v4602
        %v4604 = vpop.xlane.xlu0 %4603
        %v4605 = vsel %vm4444, %v4601, -inf
        %4606 = vmax.xlane.f32.xlu0 %v4605
        %v4607 = vpop.xlane.xlu0 %4606
        %v4608 = vsub.f32 %v4600, %v4604
        %v4609 = vsub.f32 %v4601, %v4607
        %v4610 = vmul.f32 %v4608, 1.442695
        %v4611 = vpow.pop %v4610
        %v4612 = vmul.f32 %v4609, 1.442695
        %v4613 = vpow.pop %v4612
        %v4614 = vsel %vm4444, %v4611, 0.0
        %4615 = vadd.xlane.f32.xlu0 %v4614
        %v4616 = vpop.xlane.xlu0 %4615
        %v4617 = vsel %vm4444, %v4613, 0.0
        %4618 = vadd.xlane.f32.xlu0 %v4617
        %v4619 = vpop.xlane.xlu0 %4618
        %v4620 = vrcp.pop %v4616
        %v4621 = vrcp.pop %v4619
        %v4622 = vmul.f32 %v4611, %v4620
        %v4623 = vmul.f32 %v4613, %v4621
        %4624 = vrot.lane.b32.xlu0 %v4426, 64
        %v4625 = vpop.permute.xlu0 %4624
        %v4628 = vsel %vm4444, %v4622, 0
        %4630 = vmatprep.subr.mxu0 0.0
        %4631 = vmatpush1.msra.mxu0 %v4625
        %4632 = vmatprep.subr.mxu0 0.0
        %4633 = vmatpush1.msra.mxu0 0.0
        %4634 = vmatprep.subr.mxu0 0.0
        %4635 = vmatpush1.msra.mxu0 0.0
        %4636 = vmatprep.subr.mxu0 0.0
        %4637 = vmatpush1.msra.mxu0 0.0
        %4638 = vmatprep.subr.mxu0 0.0
        %4639 = vmatpush1.msra.mxu0 0.0
        %4640 = vmatprep.subr.mxu0 0.0
        %4641 = vmatpush1.msra.mxu0 0.0
        %4642 = vmatprep.subr.mxu0 0.0
        %4643 = vmatpush1.msra.mxu0 0.0
        %4644 = vmatprep.subr.mxu0 0.0
        %4645 = vmatpush1.msra.mxu0 0.0
        %4646 = vmatprep.subr.mxu0 0.0
        %4647 = vmatpush1.msra.mxu0 0.0
        %4648 = vmatprep.subr.mxu0 0.0
        %4649 = vmatpush1.msra.mxu0 0.0
        %4650 = vmatprep.subr.mxu0 0.0
        %4651 = vmatpush1.msra.mxu0 0.0
        %4652 = vmatprep.subr.mxu0 0.0
        %4653 = vmatpush1.msra.mxu0 0.0
        %4654 = vmatprep.subr.mxu0 0.0
        %4655 = vmatpush1.msra.mxu0 0.0
        %4656 = vmatprep.subr.mxu0 0.0
        %4657 = vmatpush1.msra.mxu0 0.0
        %4658 = vmatprep.subr.mxu0 0.0
        %4659 = vmatpush1.msra.mxu0 0.0
        %4660 = vmatprep.subr.mxu0 0.0
        %4661 = vmatpush1.msra.mxu0 0.0
        %4662 = vmatprep.subr.mxu0 0.0
        %4663 = vmatpush1.msra.mxu0 0.0
        %4664 = vmatprep.subr.mxu0 0.0
        %4665 = vmatpush1.msra.mxu0 0.0
        %4666 = vmatprep.subr.mxu0 0.0
        %4667 = vmatpush1.msra.mxu0 0.0
        %4668 = vmatprep.subr.mxu0 0.0
        %4669 = vmatpush1.msra.mxu0 0.0
        %4670 = vmatprep.subr.mxu0 0.0
        %4671 = vmatpush1.msra.mxu0 0.0
        %4672 = vmatprep.subr.mxu0 0.0
        %4673 = vmatpush1.msra.mxu0 0.0
        %4674 = vmatprep.subr.mxu0 0.0
        %4675 = vmatpush1.msra.mxu0 0.0
        %4676 = vmatprep.subr.mxu0 0.0
        %4677 = vmatpush1.msra.mxu0 0.0
        %4678 = vmatprep.subr.mxu0 0.0
        %4679 = vmatpush1.msra.mxu0 0.0
        %4680 = vmatprep.subr.mxu0 0.0
        %4681 = vmatpush1.msra.mxu0 0.0
        %4682 = vmatprep.subr.mxu0 0.0
        %4683 = vmatpush1.msra.mxu0 0.0
        %4684 = vmatprep.subr.mxu0 0.0
        %4685 = vmatpush1.msra.mxu0 0.0
        %4686 = vmatprep.subr.mxu0 0.0
        %4687 = vmatpush1.msra.mxu0 0.0
        %4688 = vmatprep.subr.mxu0 0.0
        %4689 = vmatpush1.msra.mxu0 0.0
        %4690 = vmatprep.subr.mxu0 0.0
        %4691 = vmatpush1.msra.mxu0 0.0
        %4692 = vmatprep.subr.mxu0 0.0
        %4693 = vmatpush1.msra.mxu0 0.0
        %4694 = vmatprep.mubr.f32.mxu0 0.0
        %4695 = vmatmul.mubr.f32.gmra.mrb[0].mxu0 %v4628
        %v4696 = vpop.f32.mrb[0].mxu0
        %v4697 = vadd.f32 0.0, %v4696
        %v4698 = vpop.f32.mrb[0].mxu0
        %4699 = vdwg.mxu0
        %4700 = vrot.lane.b32.xlu0 %v4431, 64
        %v4701 = vpop.permute.xlu0 %4700
        %v4704 = vsel %vm4444, %v4623, 0
        %4706 = vmatprep.subr.mxu0 0.0
        %4707 = vmatpush1.msra.mxu0 %v4701
        %4708 = vmatprep.subr.mxu0 0.0
        %4709 = vmatpush1.msra.mxu0 0.0
        %4710 = vmatprep.subr.mxu0 0.0
        %4711 = vmatpush1.msra.mxu0 0.0
        %4712 = vmatprep.subr.mxu0 0.0
        %4713 = vmatpush1.msra.mxu0 0.0
        %4714 = vmatprep.subr.mxu0 0.0
        %4715 = vmatpush1.msra.mxu0 0.0
        %4716 = vmatprep.subr.mxu0 0.0
        %4717 = vmatpush1.msra.mxu0 0.0
        %4718 = vmatprep.subr.mxu0 0.0
        %4719 = vmatpush1.msra.mxu0 0.0
        %4720 = vmatprep.subr.mxu0 0.0
        %4721 = vmatpush1.msra.mxu0 0.0
        %4722 = vmatprep.subr.mxu0 0.0
        %4723 = vmatpush1.msra.mxu0 0.0
        %4724 = vmatprep.subr.mxu0 0.0
        %4725 = vmatpush1.msra.mxu0 0.0
        %4726 = vmatprep.subr.mxu0 0.0
        %4727 = vmatpush1.msra.mxu0 0.0
        %4728 = vmatprep.subr.mxu0 0.0
        %4729 = vmatpush1.msra.mxu0 0.0
        %4730 = vmatprep.subr.mxu0 0.0
        %4731 = vmatpush1.msra.mxu0 0.0
        %4732 = vmatprep.subr.mxu0 0.0
        %4733 = vmatpush1.msra.mxu0 0.0
        %4734 = vmatprep.subr.mxu0 0.0
        %4735 = vmatpush1.msra.mxu0 0.0
        %4736 = vmatprep.subr.mxu0 0.0
        %4737 = vmatpush1.msra.mxu0 0.0
        %4738 = vmatprep.subr.mxu0 0.0
        %4739 = vmatpush1.msra.mxu0 0.0
        %4740 = vmatprep.subr.mxu0 0.0
        %4741 = vmatpush1.msra.mxu0 0.0
        %4742 = vmatprep.subr.mxu0 0.0
        %4743 = vmatpush1.msra.mxu0 0.0
        %4744 = vmatprep.subr.mxu0 0.0
        %4745 = vmatpush1.msra.mxu0 0.0
        %4746 = vmatprep.subr.mxu0 0.0
        %4747 = vmatpush1.msra.mxu0 0.0
        %4748 = vmatprep.subr.mxu0 0.0
        %4749 = vmatpush1.msra.mxu0 0.0
        %4750 = vmatprep.subr.mxu0 0.0
        %4751 = vmatpush1.msra.mxu0 0.0
        %4752 = vmatprep.subr.mxu0 0.0
        %4753 = vmatpush1.msra.mxu0 0.0
        %4754 = vmatprep.subr.mxu0 0.0
        %4755 = vmatpush1.msra.mxu0 0.0
        %4756 = vmatprep.subr.mxu0 0.0
        %4757 = vmatpush1.msra.mxu0 0.0
        %4758 = vmatprep.subr.mxu0 0.0
        %4759 = vmatpush1.msra.mxu0 0.0
        %4760 = vmatprep.subr.mxu0 0.0
        %4761 = vmatpush1.msra.mxu0 0.0
        %4762 = vmatprep.subr.mxu0 0.0
        %4763 = vmatpush1.msra.mxu0 0.0
        %4764 = vmatprep.subr.mxu0 0.0
        %4765 = vmatpush1.msra.mxu0 0.0
        %4766 = vmatprep.subr.mxu0 0.0
        %4767 = vmatpush1.msra.mxu0 0.0
        %4768 = vmatprep.subr.mxu0 0.0
        %4769 = vmatpush1.msra.mxu0 0.0
        %4770 = vmatprep.mubr.f32.mxu0 0.0
        %4771 = vmatmul.mubr.f32.gmra.mrb[0].mxu0 %v4704
        %v4772 = vpop.f32.mrb[0].mxu0
        %v4773 = vadd.f32 0.0, %v4772
        %v4774 = vpop.f32.mrb[0].mxu0
        %4775 = vdwg.mxu0
        %4776 = vrot.lane.b32.xlu0 %v4426, 120
        %v4777 = vpop.permute.xlu0 %4776
        %4778 = vrot.lane.b32.xlu0 %v4426, 88
        %v4779 = vpop.permute.xlu0 %4778
        %v4780 = vsel %vm4444, %v4777, 0
        %v4782 = vsel %vm4444, %v4779, 0
        %4784 = vmatprep.subr.mxu0 0.0
        %4785 = vmatpush1.xpose.msra.mxu0 %v4782
        %4786 = vmatprep.subr.mxu0 0.0
        %4787 = vmatpush1.xpose.msra.mxu0 0.0
        %4788 = vmatprep.subr.mxu0 0.0
        %4789 = vmatpush1.xpose.msra.mxu0 0.0
        %4790 = vmatprep.subr.mxu0 0.0
        %4791 = vmatpush1.xpose.msra.mxu0 0.0
        %4792 = vmatprep.subr.mxu0 0.0
        %4793 = vmatpush1.xpose.msra.mxu0 0.0
        %4794 = vmatprep.subr.mxu0 0.0
        %4795 = vmatpush1.xpose.msra.mxu0 0.0
        %4796 = vmatprep.subr.mxu0 0.0
        %4797 = vmatpush1.xpose.msra.mxu0 0.0
        %4798 = vmatprep.subr.mxu0 0.0
        %4799 = vmatpush1.xpose.msra.mxu0 0.0
        %4800 = vmatprep.subr.mxu0 0.0
        %4801 = vmatpush1.xpose.msra.mxu0 0.0
        %4802 = vmatprep.subr.mxu0 0.0
        %4803 = vmatpush1.xpose.msra.mxu0 0.0
        %4804 = vmatprep.subr.mxu0 0.0
        %4805 = vmatpush1.xpose.msra.mxu0 0.0
        %4806 = vmatprep.subr.mxu0 0.0
        %4807 = vmatpush1.xpose.msra.mxu0 0.0
        %4808 = vmatprep.subr.mxu0 0.0
        %4809 = vmatpush1.xpose.msra.mxu0 0.0
        %4810 = vmatprep.subr.mxu0 0.0
        %4811 = vmatpush1.xpose.msra.mxu0 0.0
        %4812 = vmatprep.subr.mxu0 0.0
        %4813 = vmatpush1.xpose.msra.mxu0 0.0
        %4814 = vmatprep.subr.mxu0 0.0
        %4815 = vmatpush1.xpose.msra.mxu0 0.0
        %4816 = vmatprep.subr.mxu0 0.0
        %4817 = vmatpush1.xpose.msra.mxu0 0.0
        %4818 = vmatprep.subr.mxu0 0.0
        %4819 = vmatpush1.xpose.msra.mxu0 0.0
        %4820 = vmatprep.subr.mxu0 0.0
        %4821 = vmatpush1.xpose.msra.mxu0 0.0
        %4822 = vmatprep.subr.mxu0 0.0
        %4823 = vmatpush1.xpose.msra.mxu0 0.0
        %4824 = vmatprep.subr.mxu0 0.0
        %4825 = vmatpush1.xpose.msra.mxu0 0.0
        %4826 = vmatprep.subr.mxu0 0.0
        %4827 = vmatpush1.xpose.msra.mxu0 0.0
        %4828 = vmatprep.subr.mxu0 0.0
        %4829 = vmatpush1.xpose.msra.mxu0 0.0
        %4830 = vmatprep.subr.mxu0 0.0
        %4831 = vmatpush1.xpose.msra.mxu0 0.0
        %4832 = vmatprep.subr.mxu0 0.0
        %4833 = vmatpush1.xpose.msra.mxu0 0.0
        %4834 = vmatprep.subr.mxu0 0.0
        %4835 = vmatpush1.xpose.msra.mxu0 0.0
        %4836 = vmatprep.subr.mxu0 0.0
        %4837 = vmatpush1.xpose.msra.mxu0 0.0
        %4838 = vmatprep.subr.mxu0 0.0
        %4839 = vmatpush1.xpose.msra.mxu0 0.0
        %4840 = vmatprep.subr.mxu0 0.0
        %4841 = vmatpush1.xpose.msra.mxu0 0.0
        %4842 = vmatprep.subr.mxu0 0.0
        %4843 = vmatpush1.xpose.msra.mxu0 0.0
        %4844 = vmatprep.subr.mxu0 0.0
        %4845 = vmatpush1.xpose.msra.mxu0 0.0
        %4846 = vmatprep.subr.mxu0 0.0
        %4847 = vmatpush1.xpose.msra.mxu0 0.0
        %4848 = vmatprep.mubr.f32.mxu0 0.0
        %4849 = vmatmul.mubr.f32.gmra.mrb[0].mxu0 %v4780
        %v4850 = vpop.f32.mrb[0].mxu0
        %v4851 = vadd.f32 0.0, %v4850
        %v4852 = vpop.f32.mrb[0].mxu0
        %4853 = vdwg.mxu0
        %4854 = vrot.lane.b32.xlu0 %v4431, 120
        %v4855 = vpop.permute.xlu0 %4854
        %4856 = vrot.lane.b32.xlu0 %v4431, 88
        %v4857 = vpop.permute.xlu0 %4856
        %v4858 = vsel %vm4444, %v4855, 0
        %v4860 = vsel %vm4444, %v4857, 0
        %4862 = vmatprep.subr.mxu0 0.0
        %4863 = vmatpush1.xpose.msra.mxu0 %v4860
        %4864 = vmatprep.subr.mxu0 0.0
        %4865 = vmatpush1.xpose.msra.mxu0 0.0
        %4866 = vmatprep.subr.mxu0 0.0
        %4867 = vmatpush1.xpose.msra.mxu0 0.0
        %4868 = vmatprep.subr.mxu0 0.0
        %4869 = vmatpush1.xpose.msra.mxu0 0.0
        %4870 = vmatprep.subr.mxu0 0.0
        %4871 = vmatpush1.xpose.msra.mxu0 0.0
        %4872 = vmatprep.subr.mxu0 0.0
        %4873 = vmatpush1.xpose.msra.mxu0 0.0
        %4874 = vmatprep.subr.mxu0 0.0
        %4875 = vmatpush1.xpose.msra.mxu0 0.0
        %4876 = vmatprep.subr.mxu0 0.0
        %4877 = vmatpush1.xpose.msra.mxu0 0.0
        %4878 = vmatprep.subr.mxu0 0.0
        %4879 = vmatpush1.xpose.msra.mxu0 0.0
        %4880 = vmatprep.subr.mxu0 0.0
        %4881 = vmatpush1.xpose.msra.mxu0 0.0
        %4882 = vmatprep.subr.mxu0 0.0
        %4883 = vmatpush1.xpose.msra.mxu0 0.0
        %4884 = vmatprep.subr.mxu0 0.0
        %4885 = vmatpush1.xpose.msra.mxu0 0.0
        %4886 = vmatprep.subr.mxu0 0.0
        %4887 = vmatpush1.xpose.msra.mxu0 0.0
        %4888 = vmatprep.subr.mxu0 0.0
        %4889 = vmatpush1.xpose.msra.mxu0 0.0
        %4890 = vmatprep.subr.mxu0 0.0
        %4891 = vmatpush1.xpose.msra.mxu0 0.0
        %4892 = vmatprep.subr.mxu0 0.0
        %4893 = vmatpush1.xpose.msra.mxu0 0.0
        %4894 = vmatprep.subr.mxu0 0.0
        %4895 = vmatpush1.xpose.msra.mxu0 0.0
        %4896 = vmatprep.subr.mxu0 0.0
        %4897 = vmatpush1.xpose.msra.mxu0 0.0
        %4898 = vmatprep.subr.mxu0 0.0
        %4899 = vmatpush1.xpose.msra.mxu0 0.0
        %4900 = vmatprep.subr.mxu0 0.0
        %4901 = vmatpush1.xpose.msra.mxu0 0.0
        %4902 = vmatprep.subr.mxu0 0.0
        %4903 = vmatpush1.xpose.msra.mxu0 0.0
        %4904 = vmatprep.subr.mxu0 0.0
        %4905 = vmatpush1.xpose.msra.mxu0 0.0
        %4906 = vmatprep.subr.mxu0 0.0
        %4907 = vmatpush1.xpose.msra.mxu0 0.0
        %4908 = vmatprep.subr.mxu0 0.0
        %4909 = vmatpush1.xpose.msra.mxu0 0.0
        %4910 = vmatprep.subr.mxu0 0.0
        %4911 = vmatpush1.xpose.msra.mxu0 0.0
        %4912 = vmatprep.subr.mxu0 0.0
        %4913 = vmatpush1.xpose.msra.mxu0 0.0
        %4914 = vmatprep.subr.mxu0 0.0
        %4915 = vmatpush1.xpose.msra.mxu0 0.0
        %4916 = vmatprep.subr.mxu0 0.0
        %4917 = vmatpush1.xpose.msra.mxu0 0.0
        %4918 = vmatprep.subr.mxu0 0.0
        %4919 = vmatpush1.xpose.msra.mxu0 0.0
        %4920 = vmatprep.subr.mxu0 0.0
        %4921 = vmatpush1.xpose.msra.mxu0 0.0
        %4922 = vmatprep.subr.mxu0 0.0
        %4923 = vmatpush1.xpose.msra.mxu0 0.0
        %4924 = vmatprep.subr.mxu0 0.0
        %4925 = vmatpush1.xpose.msra.mxu0 0.0
        %4926 = vmatprep.mubr.f32.mxu0 0.0
        %4927 = vmatmul.mubr.f32.gmra.mrb[0].mxu0 %v4858
        %v4928 = vpop.f32.mrb[0].mxu0
        %v4929 = vadd.f32 0.0, %v4928
        %v4930 = vpop.f32.mrb[0].mxu0
        %4931 = vdwg.mxu0
        %v4932 = vmul.f32 %v4851, 0.35355338
        %v4933 = vmul.f32 %v4929, 0.35355338
        %v4934 = vsel %vm4598, %v4932, -1e+09
        %v4935 = vsel %vm4599, %v4933, -1e+09
        %v4936 = vsel %vm4444, %v4934, -inf
        %4937 = vmax.xlane.f32.xlu0 %v4936
        %v4938 = vpop.xlane.xlu0 %4937
        %v4939 = vsel %vm4444, %v4935, -inf
        %4940 = vmax.xlane.f32.xlu0 %v4939
        %v4941 = vpop.xlane.xlu0 %4940
        %v4942 = vsub.f32 %v4934, %v4938
        %v4943 = vsub.f32 %v4935, %v4941
        %v4944 = vmul.f32 %v4942, 1.442695
        %v4945 = vpow.pop %v4944
        %v4946 = vmul.f32 %v4943, 1.442695
        %v4947 = vpow.pop %v4946
        %v4948 = vsel %vm4444, %v4945, 0.0
        %4949 = vadd.xlane.f32.xlu0 %v4948
        %v4950 = vpop.xlane.xlu0 %4949
        %v4951 = vsel %vm4444, %v4947, 0.0
        %4952 = vadd.xlane.f32.xlu0 %v4951
        %v4953 = vpop.xlane.xlu0 %4952
        %v4954 = vrcp.pop %v4950
        %v4955 = vrcp.pop %v4953
        %v4956 = vmul.f32 %v4945, %v4954
        %v4957 = vmul.f32 %v4947, %v4955
        %4958 = vrot.lane.b32.xlu0 %v4426, 56
        %v4959 = vpop.permute.xlu0 %4958
        %v4962 = vsel %vm4444, %v4956, 0
        %4964 = vmatprep.subr.mxu0 0.0
        %4965 = vmatpush1.msra.mxu0 %v4959
        %4966 = vmatprep.subr.mxu0 0.0
        %4967 = vmatpush1.msra.mxu0 0.0
        %4968 = vmatprep.subr.mxu0 0.0
        %4969 = vmatpush1.msra.mxu0 0.0
        %4970 = vmatprep.subr.mxu0 0.0
        %4971 = vmatpush1.msra.mxu0 0.0
        %4972 = vmatprep.subr.mxu0 0.0
        %4973 = vmatpush1.msra.mxu0 0.0
        %4974 = vmatprep.subr.mxu0 0.0
        %4975 = vmatpush1.msra.mxu0 0.0
        %4976 = vmatprep.subr.mxu0 0.0
        %4977 = vmatpush1.msra.mxu0 0.0
        %4978 = vmatprep.subr.mxu0 0.0
        %4979 = vmatpush1.msra.mxu0 0.0
        %4980 = vmatprep.subr.mxu0 0.0
        %4981 = vmatpush1.msra.mxu0 0.0
        %4982 = vmatprep.subr.mxu0 0.0
        %4983 = vmatpush1.msra.mxu0 0.0
        %4984 = vmatprep.subr.mxu0 0.0
        %4985 = vmatpush1.msra.mxu0 0.0
        %4986 = vmatprep.subr.mxu0 0.0
        %4987 = vmatpush1.msra.mxu0 0.0
        %4988 = vmatprep.subr.mxu0 0.0
        %4989 = vmatpush1.msra.mxu0 0.0
        %4990 = vmatprep.subr.mxu0 0.0
        %4991 = vmatpush1.msra.mxu0 0.0
        %4992 = vmatprep.subr.mxu0 0.0
        %4993 = vmatpush1.msra.mxu0 0.0
        %4994 = vmatprep.subr.mxu0 0.0
        %4995 = vmatpush1.msra.mxu0 0.0
        %4996 = vmatprep.subr.mxu0 0.0
        %4997 = vmatpush1.msra.mxu0 0.0
        %4998 = vmatprep.subr.mxu0 0.0
        %4999 = vmatpush1.msra.mxu0 0.0
        %5000 = vmatprep.subr.mxu0 0.0
        %5001 = vmatpush1.msra.mxu0 0.0
        %5002 = vmatprep.subr.mxu0 0.0
        %5003 = vmatpush1.msra.mxu0 0.0
        %5004 = vmatprep.subr.mxu0 0.0
        %5005 = vmatpush1.msra.mxu0 0.0
        %5006 = vmatprep.subr.mxu0 0.0
        %5007 = vmatpush1.msra.mxu0 0.0
        %5008 = vmatprep.subr.mxu0 0.0
        %5009 = vmatpush1.msra.mxu0 0.0
        %5010 = vmatprep.subr.mxu0 0.0
        %5011 = vmatpush1.msra.mxu0 0.0
        %5012 = vmatprep.subr.mxu0 0.0
        %5013 = vmatpush1.msra.mxu0 0.0
        %5014 = vmatprep.subr.mxu0 0.0
        %5015 = vmatpush1.msra.mxu0 0.0
        %5016 = vmatprep.subr.mxu0 0.0
        %5017 = vmatpush1.msra.mxu0 0.0
        %5018 = vmatprep.subr.mxu0 0.0
        %5019 = vmatpush1.msra.mxu0 0.0
        %5020 = vmatprep.subr.mxu0 0.0
        %5021 = vmatpush1.msra.mxu0 0.0
        %5022 = vmatprep.subr.mxu0 0.0
        %5023 = vmatpush1.msra.mxu0 0.0
        %5024 = vmatprep.subr.mxu0 0.0
        %5025 = vmatpush1.msra.mxu0 0.0
        %5026 = vmatprep.subr.mxu0 0.0
        %5027 = vmatpush1.msra.mxu0 0.0
        %5028 = vmatprep.mubr.f32.mxu0 0.0
        %5029 = vmatmul.mubr.f32.gmra.mrb[0].mxu0 %v4962
        %v5030 = vpop.f32.mrb[0].mxu0
        %v5031 = vadd.f32 0.0, %v5030
        %v5032 = vpop.f32.mrb[0].mxu0
        %5033 = vdwg.mxu0
        %5034 = vrot.lane.b32.xlu0 %v4431, 56
        %v5035 = vpop.permute.xlu0 %5034
        %v5038 = vsel %vm4444, %v4957, 0
        %5040 = vmatprep.subr.mxu0 0.0
        %5041 = vmatpush1.msra.mxu0 %v5035
        %5042 = vmatprep.subr.mxu0 0.0
        %5043 = vmatpush1.msra.mxu0 0.0
        %5044 = vmatprep.subr.mxu0 0.0
        %5045 = vmatpush1.msra.mxu0 0.0
        %5046 = vmatprep.subr.mxu0 0.0
        %5047 = vmatpush1.msra.mxu0 0.0
        %5048 = vmatprep.subr.mxu0 0.0
        %5049 = vmatpush1.msra.mxu0 0.0
        %5050 = vmatprep.subr.mxu0 0.0
        %5051 = vmatpush1.msra.mxu0 0.0
        %5052 = vmatprep.subr.mxu0 0.0
        %5053 = vmatpush1.msra.mxu0 0.0
        %5054 = vmatprep.subr.mxu0 0.0
        %5055 = vmatpush1.msra.mxu0 0.0
        %5056 = vmatprep.subr.mxu0 0.0
        %5057 = vmatpush1.msra.mxu0 0.0
        %5058 = vmatprep.subr.mxu0 0.0
        %5059 = vmatpush1.msra.mxu0 0.0
        %5060 = vmatprep.subr.mxu0 0.0
        %5061 = vmatpush1.msra.mxu0 0.0
        %5062 = vmatprep.subr.mxu0 0.0
        %5063 = vmatpush1.msra.mxu0 0.0
        %5064 = vmatprep.subr.mxu0 0.0
        %5065 = vmatpush1.msra.mxu0 0.0
        %5066 = vmatprep.subr.mxu0 0.0
        %5067 = vmatpush1.msra.mxu0 0.0
        %5068 = vmatprep.subr.mxu0 0.0
        %5069 = vmatpush1.msra.mxu0 0.0
        %5070 = vmatprep.subr.mxu0 0.0
        %5071 = vmatpush1.msra.mxu0 0.0
        %5072 = vmatprep.subr.mxu0 0.0
        %5073 = vmatpush1.msra.mxu0 0.0
        %5074 = vmatprep.subr.mxu0 0.0
        %5075 = vmatpush1.msra.mxu0 0.0
        %5076 = vmatprep.subr.mxu0 0.0
        %5077 = vmatpush1.msra.mxu0 0.0
        %5078 = vmatprep.subr.mxu0 0.0
        %5079 = vmatpush1.msra.mxu0 0.0
        %5080 = vmatprep.subr.mxu0 0.0
        %5081 = vmatpush1.msra.mxu0 0.0
        %5082 = vmatprep.subr.mxu0 0.0
        %5083 = vmatpush1.msra.mxu0 0.0
        %5084 = vmatprep.subr.mxu0 0.0
        %5085 = vmatpush1.msra.mxu0 0.0
        %5086 = vmatprep.subr.mxu0 0.0
        %5087 = vmatpush1.msra.mxu0 0.0
        %5088 = vmatprep.subr.mxu0 0.0
        %5089 = vmatpush1.msra.mxu0 0.0
        %5090 = vmatprep.subr.mxu0 0.0
        %5091 = vmatpush1.msra.mxu0 0.0
        %5092 = vmatprep.subr.mxu0 0.0
        %5093 = vmatpush1.msra.mxu0 0.0
        %5094 = vmatprep.subr.mxu0 0.0
        %5095 = vmatpush1.msra.mxu0 0.0
        %5096 = vmatprep.subr.mxu0 0.0
        %5097 = vmatpush1.msra.mxu0 0.0
        %5098 = vmatprep.subr.mxu0 0.0
        %5099 = vmatpush1.msra.mxu0 0.0
        %5100 = vmatprep.subr.mxu0 0.0
        %5101 = vmatpush1.msra.mxu0 0.0
        %5102 = vmatprep.subr.mxu0 0.0
        %5103 = vmatpush1.msra.mxu0 0.0
        %5104 = vmatprep.mubr.f32.mxu0 0.0
        %5105 = vmatmul.mubr.f32.gmra.mrb[0].mxu0 %v5038
        %v5106 = vpop.f32.mrb[0].mxu0
        %v5107 = vadd.f32 0.0, %v5106
        %v5108 = vpop.f32.mrb[0].mxu0
        %5109 = vdwg.mxu0
        %v5111 = vsel %vm4444, %v5031, 0
        %v5114 = vsel %vm4444, %v5107, 0
        %5116 = vmatprep.subr.mxu0 0.0
        %5117 = vmatpush1.msra.mxu0 %v4435
        %5118 = vmatprep.subr.mxu0 0.0
        %5119 = vmatpush1.msra.mxu0 0.0
        %5120 = vmatprep.subr.mxu0 0.0
        %5121 = vmatpush1.msra.mxu0 0.0
        %5122 = vmatprep.subr.mxu0 0.0
        %5123 = vmatpush1.msra.mxu0 0.0
        %5124 = vmatprep.subr.mxu0 0.0
        %5125 = vmatpush1.msra.mxu0 0.0
        %5126 = vmatprep.subr.mxu0 0.0
        %5127 = vmatpush1.msra.mxu0 0.0
        %5128 = vmatprep.subr.mxu0 0.0
        %5129 = vmatpush1.msra.mxu0 0.0
        %5130 = vmatprep.subr.mxu0 0.0
        %5131 = vmatpush1.msra.mxu0 0.0
        %5132 = vmatprep.subr.mxu0 0.0
        %5133 = vmatpush1.msra.mxu0 0.0
        %5134 = vmatprep.subr.mxu0 0.0
        %5135 = vmatpush1.msra.mxu0 0.0
        %5136 = vmatprep.subr.mxu0 0.0
        %5137 = vmatpush1.msra.mxu0 0.0
        %5138 = vmatprep.subr.mxu0 0.0
        %5139 = vmatpush1.msra.mxu0 0.0
        %5140 = vmatprep.subr.mxu0 0.0
        %5141 = vmatpush1.msra.mxu0 0.0
        %5142 = vmatprep.subr.mxu0 0.0
        %5143 = vmatpush1.msra.mxu0 0.0
        %5144 = vmatprep.subr.mxu0 0.0
        %5145 = vmatpush1.msra.mxu0 0.0
        %5146 = vmatprep.subr.mxu0 0.0
        %5147 = vmatpush1.msra.mxu0 0.0
        %5148 = vmatprep.subr.mxu0 0.0
        %5149 = vmatpush1.msra.mxu0 0.0
        %5150 = vmatprep.subr.mxu0 0.0
        %5151 = vmatpush1.msra.mxu0 0.0
        %5152 = vmatprep.subr.mxu0 0.0
        %5153 = vmatpush1.msra.mxu0 0.0
        %5154 = vmatprep.subr.mxu0 0.0
        %5155 = vmatpush1.msra.mxu0 0.0
        %5156 = vmatprep.subr.mxu0 0.0
        %5157 = vmatpush1.msra.mxu0 0.0
        %5158 = vmatprep.subr.mxu0 0.0
        %5159 = vmatpush1.msra.mxu0 0.0
        %5160 = vmatprep.subr.mxu0 0.0
        %5161 = vmatpush1.msra.mxu0 0.0
        %5162 = vmatprep.subr.mxu0 0.0
        %5163 = vmatpush1.msra.mxu0 0.0
        %5164 = vmatprep.subr.mxu0 0.0
        %5165 = vmatpush1.msra.mxu0 0.0
        %5166 = vmatprep.subr.mxu0 0.0
        %5167 = vmatpush1.msra.mxu0 0.0
        %5168 = vmatprep.subr.mxu0 0.0
        %5169 = vmatpush1.msra.mxu0 0.0
        %5170 = vmatprep.subr.mxu0 0.0
        %5171 = vmatpush1.msra.mxu0 0.0
        %5172 = vmatprep.subr.mxu0 0.0
        %5173 = vmatpush1.msra.mxu0 0.0
        %5174 = vmatprep.subr.mxu0 0.0
        %5175 = vmatpush1.msra.mxu0 0.0
        %5176 = vmatprep.subr.mxu0 0.0
        %5177 = vmatpush1.msra.mxu0 0.0
        %5178 = vmatprep.subr.mxu0 0.0
        %5179 = vmatpush1.msra.mxu0 0.0
        %5180 = vmatprep.mubr.f32.mxu0 0.0
        %5181 = vmatmul.mubr.f32.gmra.mrb[0].mxu0 %v5111
        %v5182 = vpop.f32.mrb[0].mxu0
        %v5183 = vadd.f32 0.0, %v5182
        %v5184 = vpop.f32.mrb[0].mxu0
        %5185 = vmatprep.mubr.f32.mxu0 0.0
        %5186 = vmatmul.mubr.f32.gmra.mrb[0].mxu0 %v5114
        %v5187 = vpop.f32.mrb[0].mxu0
        %v5188 = vadd.f32 0.0, %v5187
        %v5189 = vpop.f32.mrb[0].mxu0
        %5190 = vdwg.mxu0
        %v5192 = vsel %vm4444, %v4697, 0
        %v5195 = vsel %vm4444, %v4773, 0
        %5197 = vmatprep.subr.mxu0 0.0
        %5198 = vmatpush1.msra.mxu0 %v4434
        %5199 = vmatprep.subr.mxu0 0.0
        %5200 = vmatpush1.msra.mxu0 0.0
        %5201 = vmatprep.subr.mxu0 0.0
        %5202 = vmatpush1.msra.mxu0 0.0
        %5203 = vmatprep.subr.mxu0 0.0
        %5204 = vmatpush1.msra.mxu0 0.0
        %5205 = vmatprep.subr.mxu0 0.0
        %5206 = vmatpush1.msra.mxu0 0.0
        %5207 = vmatprep.subr.mxu0 0.0
        %5208 = vmatpush1.msra.mxu0 0.0
        %5209 = vmatprep.subr.mxu0 0.0
        %5210 = vmatpush1.msra.mxu0 0.0
        %5211 = vmatprep.subr.mxu0 0.0
        %5212 = vmatpush1.msra.mxu0 0.0
        %5213 = vmatprep.subr.mxu0 0.0
        %5214 = vmatpush1.msra.mxu0 0.0
        %5215 = vmatprep.subr.mxu0 0.0
        %5216 = vmatpush1.msra.mxu0 0.0
        %5217 = vmatprep.subr.mxu0 0.0
        %5218 = vmatpush1.msra.mxu0 0.0
        %5219 = vmatprep.subr.mxu0 0.0
        %5220 = vmatpush1.msra.mxu0 0.0
        %5221 = vmatprep.subr.mxu0 0.0
        %5222 = vmatpush1.msra.mxu0 0.0
        %5223 = vmatprep.subr.mxu0 0.0
        %5224 = vmatpush1.msra.mxu0 0.0
        %5225 = vmatprep.subr.mxu0 0.0
        %5226 = vmatpush1.msra.mxu0 0.0
        %5227 = vmatprep.subr.mxu0 0.0
        %5228 = vmatpush1.msra.mxu0 0.0
        %5229 = vmatprep.subr.mxu0 0.0
        %5230 = vmatpush1.msra.mxu0 0.0
        %5231 = vmatprep.subr.mxu0 0.0
        %5232 = vmatpush1.msra.mxu0 0.0
        %5233 = vmatprep.subr.mxu0 0.0
        %5234 = vmatpush1.msra.mxu0 0.0
        %5235 = vmatprep.subr.mxu0 0.0
        %5236 = vmatpush1.msra.mxu0 0.0
        %5237 = vmatprep.subr.mxu0 0.0
        %5238 = vmatpush1.msra.mxu0 0.0
        %5239 = vmatprep.subr.mxu0 0.0
        %5240 = vmatpush1.msra.mxu0 0.0
        %5241 = vmatprep.subr.mxu0 0.0
        %5242 = vmatpush1.msra.mxu0 0.0
        %5243 = vmatprep.subr.mxu0 0.0
        %5244 = vmatpush1.msra.mxu0 0.0
        %5245 = vmatprep.subr.mxu0 0.0
        %5246 = vmatpush1.msra.mxu0 0.0
        %5247 = vmatprep.subr.mxu0 0.0
        %5248 = vmatpush1.msra.mxu0 0.0
        %5249 = vmatprep.subr.mxu0 0.0
        %5250 = vmatpush1.msra.mxu0 0.0
        %5251 = vmatprep.subr.mxu0 0.0
        %5252 = vmatpush1.msra.mxu0 0.0
        %5253 = vmatprep.subr.mxu0 0.0
        %5254 = vmatpush1.msra.mxu0 0.0
        %5255 = vmatprep.subr.mxu0 0.0
        %5256 = vmatpush1.msra.mxu0 0.0
        %5257 = vmatprep.subr.mxu0 0.0
        %5258 = vmatpush1.msra.mxu0 0.0
        %5259 = vmatprep.subr.mxu0 0.0
        %5260 = vmatpush1.msra.mxu0 0.0
        %5261 = vmatprep.mubr.f32.mxu0 0.0
        %5262 = vmatmul.mubr.f32.gmra.mrb[0].mxu0 %v5192
        %v5263 = vpop.f32.mrb[0].mxu0
        %v5264 = vadd.f32 %v5183, %v5263
        %v5265 = vpop.f32.mrb[0].mxu0
        %5266 = vmatprep.mubr.f32.mxu0 0.0
        %5267 = vmatmul.mubr.f32.gmra.mrb[0].mxu0 %v5195
        %v5268 = vpop.f32.mrb[0].mxu0
        %v5269 = vadd.f32 %v5188, %v5268
        %v5270 = vpop.f32.mrb[0].mxu0
        %5271 = vdwg.mxu0
        %5272 = vrot.lane.b32.xlu0 %v4426, 112
        %v5273 = vpop.permute.xlu0 %5272
        %5274 = vrot.lane.b32.xlu0 %v4426, 80
        %v5275 = vpop.permute.xlu0 %5274
        %v5276 = vsel %vm4444, %v5273, 0
        %v5278 = vsel %vm4444, %v5275, 0
        %5280 = vmatprep.subr.mxu0 0.0
        %5281 = vmatpush1.xpose.msra.mxu0 %v5278
        %5282 = vmatprep.subr.mxu0 0.0
        %5283 = vmatpush1.xpose.msra.mxu0 0.0
        %5284 = vmatprep.subr.mxu0 0.0
        %5285 = vmatpush1.xpose.msra.mxu0 0.0
        %5286 = vmatprep.subr.mxu0 0.0
        %5287 = vmatpush1.xpose.msra.mxu0 0.0
        %5288 = vmatprep.subr.mxu0 0.0
        %5289 = vmatpush1.xpose.msra.mxu0 0.0
        %5290 = vmatprep.subr.mxu0 0.0
        %5291 = vmatpush1.xpose.msra.mxu0 0.0
        %5292 = vmatprep.subr.mxu0 0.0
        %5293 = vmatpush1.xpose.msra.mxu0 0.0
        %5294 = vmatprep.subr.mxu0 0.0
        %5295 = vmatpush1.xpose.msra.mxu0 0.0
        %5296 = vmatprep.subr.mxu0 0.0
        %5297 = vmatpush1.xpose.msra.mxu0 0.0
        %5298 = vmatprep.subr.mxu0 0.0
        %5299 = vmatpush1.xpose.msra.mxu0 0.0
        %5300 = vmatprep.subr.mxu0 0.0
        %5301 = vmatpush1.xpose.msra.mxu0 0.0
        %5302 = vmatprep.subr.mxu0 0.0
        %5303 = vmatpush1.xpose.msra.mxu0 0.0
        %5304 = vmatprep.subr.mxu0 0.0
        %5305 = vmatpush1.xpose.msra.mxu0 0.0
        %5306 = vmatprep.subr.mxu0 0.0
        %5307 = vmatpush1.xpose.msra.mxu0 0.0
        %5308 = vmatprep.subr.mxu0 0.0
        %5309 = vmatpush1.xpose.msra.mxu0 0.0
        %5310 = vmatprep.subr.mxu0 0.0
        %5311 = vmatpush1.xpose.msra.mxu0 0.0
        %5312 = vmatprep.subr.mxu0 0.0
        %5313 = vmatpush1.xpose.msra.mxu0 0.0
        %5314 = vmatprep.subr.mxu0 0.0
        %5315 = vmatpush1.xpose.msra.mxu0 0.0
        %5316 = vmatprep.subr.mxu0 0.0
        %5317 = vmatpush1.xpose.msra.mxu0 0.0
        %5318 = vmatprep.subr.mxu0 0.0
        %5319 = vmatpush1.xpose.msra.mxu0 0.0
        %5320 = vmatprep.subr.mxu0 0.0
        %5321 = vmatpush1.xpose.msra.mxu0 0.0
        %5322 = vmatprep.subr.mxu0 0.0
        %5323 = vmatpush1.xpose.msra.mxu0 0.0
        %5324 = vmatprep.subr.mxu0 0.0
        %5325 = vmatpush1.xpose.msra.mxu0 0.0
        %5326 = vmatprep.subr.mxu0 0.0
        %5327 = vmatpush1.xpose.msra.mxu0 0.0
        %5328 = vmatprep.subr.mxu0 0.0
        %5329 = vmatpush1.xpose.msra.mxu0 0.0
        %5330 = vmatprep.subr.mxu0 0.0
        %5331 = vmatpush1.xpose.msra.mxu0 0.0
        %5332 = vmatprep.subr.mxu0 0.0
        %5333 = vmatpush1.xpose.msra.mxu0 0.0
        %5334 = vmatprep.subr.mxu0 0.0
        %5335 = vmatpush1.xpose.msra.mxu0 0.0
        %5336 = vmatprep.subr.mxu0 0.0
        %5337 = vmatpush1.xpose.msra.mxu0 0.0
        %5338 = vmatprep.subr.mxu0 0.0
        %5339 = vmatpush1.xpose.msra.mxu0 0.0
        %5340 = vmatprep.subr.mxu0 0.0
        %5341 = vmatpush1.xpose.msra.mxu0 0.0
        %5342 = vmatprep.subr.mxu0 0.0
        %5343 = vmatpush1.xpose.msra.mxu0 0.0
        %5344 = vmatprep.mubr.f32.mxu0 0.0
        %5345 = vmatmul.mubr.f32.gmra.mrb[0].mxu0 %v5276
        %v5346 = vpop.f32.mrb[0].mxu0
        %v5347 = vadd.f32 0.0, %v5346
        %v5348 = vpop.f32.mrb[0].mxu0
        %5349 = vdwg.mxu0
        %5350 = vrot.lane.b32.xlu0 %v4431, 112
        %v5351 = vpop.permute.xlu0 %5350
        %5352 = vrot.lane.b32.xlu0 %v4431, 80
        %v5353 = vpop.permute.xlu0 %5352
        %v5354 = vsel %vm4444, %v5351, 0
        %v5356 = vsel %vm4444, %v5353, 0
        %5358 = vmatprep.subr.mxu0 0.0
        %5359 = vmatpush1.xpose.msra.mxu0 %v5356
        %5360 = vmatprep.subr.mxu0 0.0
        %5361 = vmatpush1.xpose.msra.mxu0 0.0
        %5362 = vmatprep.subr.mxu0 0.0
        %5363 = vmatpush1.xpose.msra.mxu0 0.0
        %5364 = vmatprep.subr.mxu0 0.0
        %5365 = vmatpush1.xpose.msra.mxu0 0.0
        %5366 = vmatprep.subr.mxu0 0.0
        %5367 = vmatpush1.xpose.msra.mxu0 0.0
        %5368 = vmatprep.subr.mxu0 0.0
        %5369 = vmatpush1.xpose.msra.mxu0 0.0
        %5370 = vmatprep.subr.mxu0 0.0
        %5371 = vmatpush1.xpose.msra.mxu0 0.0
        %5372 = vmatprep.subr.mxu0 0.0
        %5373 = vmatpush1.xpose.msra.mxu0 0.0
        %5374 = vmatprep.subr.mxu0 0.0
        %5375 = vmatpush1.xpose.msra.mxu0 0.0
        %5376 = vmatprep.subr.mxu0 0.0
        %5377 = vmatpush1.xpose.msra.mxu0 0.0
        %5378 = vmatprep.subr.mxu0 0.0
        %5379 = vmatpush1.xpose.msra.mxu0 0.0
        %5380 = vmatprep.subr.mxu0 0.0
        %5381 = vmatpush1.xpose.msra.mxu0 0.0
        %5382 = vmatprep.subr.mxu0 0.0
        %5383 = vmatpush1.xpose.msra.mxu0 0.0
        %5384 = vmatprep.subr.mxu0 0.0
        %5385 = vmatpush1.xpose.msra.mxu0 0.0
        %5386 = vmatprep.subr.mxu0 0.0
        %5387 = vmatpush1.xpose.msra.mxu0 0.0
        %5388 = vmatprep.subr.mxu0 0.0
        %5389 = vmatpush1.xpose.msra.mxu0 0.0
        %5390 = vmatprep.subr.mxu0 0.0
        %5391 = vmatpush1.xpose.msra.mxu0 0.0
        %5392 = vmatprep.subr.mxu0 0.0
        %5393 = vmatpush1.xpose.msra.mxu0 0.0
        %5394 = vmatprep.subr.mxu0 0.0
        %5395 = vmatpush1.xpose.msra.mxu0 0.0
        %5396 = vmatprep.subr.mxu0 0.0
        %5397 = vmatpush1.xpose.msra.mxu0 0.0
        %5398 = vmatprep.subr.mxu0 0.0
        %5399 = vmatpush1.xpose.msra.mxu0 0.0
        %5400 = vmatprep.subr.mxu0 0.0
        %5401 = vmatpush1.xpose.msra.mxu0 0.0
        %5402 = vmatprep.subr.mxu0 0.0
        %5403 = vmatpush1.xpose.msra.mxu0 0.0
        %5404 = vmatprep.subr.mxu0 0.0
        %5405 = vmatpush1.xpose.msra.mxu0 0.0
        %5406 = vmatprep.subr.mxu0 0.0
        %5407 = vmatpush1.xpose.msra.mxu0 0.0
        %5408 = vmatprep.subr.mxu0 0.0
        %5409 = vmatpush1.xpose.msra.mxu0 0.0
        %5410 = vmatprep.subr.mxu0 0.0
        %5411 = vmatpush1.xpose.msra.mxu0 0.0
        %5412 = vmatprep.subr.mxu0 0.0
        %5413 = vmatpush1.xpose.msra.mxu0 0.0
        %5414 = vmatprep.subr.mxu0 0.0
        %5415 = vmatpush1.xpose.msra.mxu0 0.0
        %5416 = vmatprep.subr.mxu0 0.0
        %5417 = vmatpush1.xpose.msra.mxu0 0.0
        %5418 = vmatprep.subr.mxu0 0.0
        %5419 = vmatpush1.xpose.msra.mxu0 0.0
        %5420 = vmatprep.subr.mxu0 0.0
        %5421 = vmatpush1.xpose.msra.mxu0 0.0
        %5422 = vmatprep.mubr.f32.mxu0 0.0
        %5423 = vmatmul.mubr.f32.gmra.mrb[0].mxu0 %v5354
        %v5424 = vpop.f32.mrb[0].mxu0
        %v5425 = vadd.f32 0.0, %v5424
        %v5426 = vpop.f32.mrb[0].mxu0
        %5427 = vdwg.mxu0
        %v5428 = vmul.f32 %v5347, 0.35355338
        %v5429 = vmul.f32 %v5425, 0.35355338
        %v5430 = vsel %vm4598, %v5428, -1e+09
        %v5431 = vsel %vm4599, %v5429, -1e+09
        %v5432 = vsel %vm4444, %v5430, -inf
        %5433 = vmax.xlane.f32.xlu0 %v5432
        %v5434 = vpop.xlane.xlu0 %5433
        %v5435 = vsel %vm4444, %v5431, -inf
        %5436 = vmax.xlane.f32.xlu0 %v5435
        %v5437 = vpop.xlane.xlu0 %5436
        %v5438 = vsub.f32 %v5430, %v5434
        %v5439 = vsub.f32 %v5431, %v5437
        %v5440 = vmul.f32 %v5438, 1.442695
        %v5441 = vpow.pop %v5440
        %v5442 = vmul.f32 %v5439, 1.442695
        %v5443 = vpow.pop %v5442
        %v5444 = vsel %vm4444, %v5441, 0.0
        %5445 = vadd.xlane.f32.xlu0 %v5444
        %v5446 = vpop.xlane.xlu0 %5445
        %v5447 = vsel %vm4444, %v5443, 0.0
        %5448 = vadd.xlane.f32.xlu0 %v5447
        %v5449 = vpop.xlane.xlu0 %5448
        %v5450 = vrcp.pop %v5446
        %v5451 = vrcp.pop %v5449
        %v5452 = vmul.f32 %v5441, %v5450
        %v5453 = vmul.f32 %v5443, %v5451
        %5454 = vrot.lane.b32.xlu0 %v4426, 48
        %v5455 = vpop.permute.xlu0 %5454
        %v5458 = vsel %vm4444, %v5452, 0
        %5460 = vmatprep.subr.mxu0 0.0
        %5461 = vmatpush1.msra.mxu0 %v5455
        %5462 = vmatprep.subr.mxu0 0.0
        %5463 = vmatpush1.msra.mxu0 0.0
        %5464 = vmatprep.subr.mxu0 0.0
        %5465 = vmatpush1.msra.mxu0 0.0
        %5466 = vmatprep.subr.mxu0 0.0
        %5467 = vmatpush1.msra.mxu0 0.0
        %5468 = vmatprep.subr.mxu0 0.0
        %5469 = vmatpush1.msra.mxu0 0.0
        %5470 = vmatprep.subr.mxu0 0.0
        %5471 = vmatpush1.msra.mxu0 0.0
        %5472 = vmatprep.subr.mxu0 0.0
        %5473 = vmatpush1.msra.mxu0 0.0
        %5474 = vmatprep.subr.mxu0 0.0
        %5475 = vmatpush1.msra.mxu0 0.0
        %5476 = vmatprep.subr.mxu0 0.0
        %5477 = vmatpush1.msra.mxu0 0.0
        %5478 = vmatprep.subr.mxu0 0.0
        %5479 = vmatpush1.msra.mxu0 0.0
        %5480 = vmatprep.subr.mxu0 0.0
        %5481 = vmatpush1.msra.mxu0 0.0
        %5482 = vmatprep.subr.mxu0 0.0
        %5483 = vmatpush1.msra.mxu0 0.0
        %5484 = vmatprep.subr.mxu0 0.0
        %5485 = vmatpush1.msra.mxu0 0.0
        %5486 = vmatprep.subr.mxu0 0.0
        %5487 = vmatpush1.msra.mxu0 0.0
        %5488 = vmatprep.subr.mxu0 0.0
        %5489 = vmatpush1.msra.mxu0 0.0
        %5490 = vmatprep.subr.mxu0 0.0
        %5491 = vmatpush1.msra.mxu0 0.0
        %5492 = vmatprep.subr.mxu0 0.0
        %5493 = vmatpush1.msra.mxu0 0.0
        %5494 = vmatprep.subr.mxu0 0.0
        %5495 = vmatpush1.msra.mxu0 0.0
        %5496 = vmatprep.subr.mxu0 0.0
        %5497 = vmatpush1.msra.mxu0 0.0
        %5498 = vmatprep.subr.mxu0 0.0
        %5499 = vmatpush1.msra.mxu0 0.0
        %5500 = vmatprep.subr.mxu0 0.0
        %5501 = vmatpush1.msra.mxu0 0.0
        %5502 = vmatprep.subr.mxu0 0.0
        %5503 = vmatpush1.msra.mxu0 0.0
        %5504 = vmatprep.subr.mxu0 0.0
        %5505 = vmatpush1.msra.mxu0 0.0
        %5506 = vmatprep.subr.mxu0 0.0
        %5507 = vmatpush1.msra.mxu0 0.0
        %5508 = vmatprep.subr.mxu0 0.0
        %5509 = vmatpush1.msra.mxu0 0.0
        %5510 = vmatprep.subr.mxu0 0.0
        %5511 = vmatpush1.msra.mxu0 0.0
        %5512 = vmatprep.subr.mxu0 0.0
        %5513 = vmatpush1.msra.mxu0 0.0
        %5514 = vmatprep.subr.mxu0 0.0
        %5515 = vmatpush1.msra.mxu0 0.0
        %5516 = vmatprep.subr.mxu0 0.0
        %5517 = vmatpush1.msra.mxu0 0.0
        %5518 = vmatprep.subr.mxu0 0.0
        %5519 = vmatpush1.msra.mxu0 0.0
        %5520 = vmatprep.subr.mxu0 0.0
        %5521 = vmatpush1.msra.mxu0 0.0
        %5522 = vmatprep.subr.mxu0 0.0
        %5523 = vmatpush1.msra.mxu0 0.0
        %5524 = vmatprep.mubr.f32.mxu0 0.0
        %5525 = vmatmul.mubr.f32.gmra.mrb[0].mxu0 %v5458
        %v5526 = vpop.f32.mrb[0].mxu0
        %v5527 = vadd.f32 0.0, %v5526
        %v5528 = vpop.f32.mrb[0].mxu0
        %5529 = vdwg.mxu0
        %5530 = vrot.lane.b32.xlu0 %v4431, 48
        %v5531 = vpop.permute.xlu0 %5530
        %v5534 = vsel %vm4444, %v5453, 0
        %5536 = vmatprep.subr.mxu0 0.0
        %5537 = vmatpush1.msra.mxu0 %v5531
        %5538 = vmatprep.subr.mxu0 0.0
        %5539 = vmatpush1.msra.mxu0 0.0
        %5540 = vmatprep.subr.mxu0 0.0
        %5541 = vmatpush1.msra.mxu0 0.0
        %5542 = vmatprep.subr.mxu0 0.0
        %5543 = vmatpush1.msra.mxu0 0.0
        %5544 = vmatprep.subr.mxu0 0.0
        %5545 = vmatpush1.msra.mxu0 0.0
        %5546 = vmatprep.subr.mxu0 0.0
        %5547 = vmatpush1.msra.mxu0 0.0
        %5548 = vmatprep.subr.mxu0 0.0
        %5549 = vmatpush1.msra.mxu0 0.0
        %5550 = vmatprep.subr.mxu0 0.0
        %5551 = vmatpush1.msra.mxu0 0.0
        %5552 = vmatprep.subr.mxu0 0.0
        %5553 = vmatpush1.msra.mxu0 0.0
        %5554 = vmatprep.subr.mxu0 0.0
        %5555 = vmatpush1.msra.mxu0 0.0
        %5556 = vmatprep.subr.mxu0 0.0
        %5557 = vmatpush1.msra.mxu0 0.0
        %5558 = vmatprep.subr.mxu0 0.0
        %5559 = vmatpush1.msra.mxu0 0.0
        %5560 = vmatprep.subr.mxu0 0.0
        %5561 = vmatpush1.msra.mxu0 0.0
        %5562 = vmatprep.subr.mxu0 0.0
        %5563 = vmatpush1.msra.mxu0 0.0
        %5564 = vmatprep.subr.mxu0 0.0
        %5565 = vmatpush1.msra.mxu0 0.0
        %5566 = vmatprep.subr.mxu0 0.0
        %5567 = vmatpush1.msra.mxu0 0.0
        %5568 = vmatprep.subr.mxu0 0.0
        %5569 = vmatpush1.msra.mxu0 0.0
        %5570 = vmatprep.subr.mxu0 0.0
        %5571 = vmatpush1.msra.mxu0 0.0
        %5572 = vmatprep.subr.mxu0 0.0
        %5573 = vmatpush1.msra.mxu0 0.0
        %5574 = vmatprep.subr.mxu0 0.0
        %5575 = vmatpush1.msra.mxu0 0.0
        %5576 = vmatprep.subr.mxu0 0.0
        %5577 = vmatpush1.msra.mxu0 0.0
        %5578 = vmatprep.subr.mxu0 0.0
        %5579 = vmatpush1.msra.mxu0 0.0
        %5580 = vmatprep.subr.mxu0 0.0
        %5581 = vmatpush1.msra.mxu0 0.0
        %5582 = vmatprep.subr.mxu0 0.0
        %5583 = vmatpush1.msra.mxu0 0.0
        %5584 = vmatprep.subr.mxu0 0.0
        %5585 = vmatpush1.msra.mxu0 0.0
        %5586 = vmatprep.subr.mxu0 0.0
        %5587 = vmatpush1.msra.mxu0 0.0
        %5588 = vmatprep.subr.mxu0 0.0
        %5589 = vmatpush1.msra.mxu0 0.0
        %5590 = vmatprep.subr.mxu0 0.0
        %5591 = vmatpush1.msra.mxu0 0.0
        %5592 = vmatprep.subr.mxu0 0.0
        %5593 = vmatpush1.msra.mxu0 0.0
        %5594 = vmatprep.subr.mxu0 0.0
        %5595 = vmatpush1.msra.mxu0 0.0
        %5596 = vmatprep.subr.mxu0 0.0
        %5597 = vmatpush1.msra.mxu0 0.0
        %5598 = vmatprep.subr.mxu0 0.0
        %5599 = vmatpush1.msra.mxu0 0.0
        %5600 = vmatprep.mubr.f32.mxu0 0.0
        %5601 = vmatmul.mubr.f32.gmra.mrb[0].mxu0 %v5534
        %v5602 = vpop.f32.mrb[0].mxu0
        %v5603 = vadd.f32 0.0, %v5602
        %v5604 = vpop.f32.mrb[0].mxu0
        %5605 = vdwg.mxu0
        %v5607 = vsel %vm4444, %v5527, 0
        %v5610 = vsel %vm4444, %v5603, 0
        %5612 = vmatprep.subr.mxu0 0.0
        %5613 = vmatpush1.msra.mxu0 %v4436
        %5614 = vmatprep.subr.mxu0 0.0
        %5615 = vmatpush1.msra.mxu0 0.0
        %5616 = vmatprep.subr.mxu0 0.0
        %5617 = vmatpush1.msra.mxu0 0.0
        %5618 = vmatprep.subr.mxu0 0.0
        %5619 = vmatpush1.msra.mxu0 0.0
        %5620 = vmatprep.subr.mxu0 0.0
        %5621 = vmatpush1.msra.mxu0 0.0
        %5622 = vmatprep.subr.mxu0 0.0
        %5623 = vmatpush1.msra.mxu0 0.0
        %5624 = vmatprep.subr.mxu0 0.0
        %5625 = vmatpush1.msra.mxu0 0.0
        %5626 = vmatprep.subr.mxu0 0.0
        %5627 = vmatpush1.msra.mxu0 0.0
        %5628 = vmatprep.subr.mxu0 0.0
        %5629 = vmatpush1.msra.mxu0 0.0
        %5630 = vmatprep.subr.mxu0 0.0
        %5631 = vmatpush1.msra.mxu0 0.0
        %5632 = vmatprep.subr.mxu0 0.0
        %5633 = vmatpush1.msra.mxu0 0.0
        %5634 = vmatprep.subr.mxu0 0.0
        %5635 = vmatpush1.msra.mxu0 0.0
        %5636 = vmatprep.subr.mxu0 0.0
        %5637 = vmatpush1.msra.mxu0 0.0
        %5638 = vmatprep.subr.mxu0 0.0
        %5639 = vmatpush1.msra.mxu0 0.0
        %5640 = vmatprep.subr.mxu0 0.0
        %5641 = vmatpush1.msra.mxu0 0.0
        %5642 = vmatprep.subr.mxu0 0.0
        %5643 = vmatpush1.msra.mxu0 0.0
        %5644 = vmatprep.subr.mxu0 0.0
        %5645 = vmatpush1.msra.mxu0 0.0
        %5646 = vmatprep.subr.mxu0 0.0
        %5647 = vmatpush1.msra.mxu0 0.0
        %5648 = vmatprep.subr.mxu0 0.0
        %5649 = vmatpush1.msra.mxu0 0.0
        %5650 = vmatprep.subr.mxu0 0.0
        %5651 = vmatpush1.msra.mxu0 0.0
        %5652 = vmatprep.subr.mxu0 0.0
        %5653 = vmatpush1.msra.mxu0 0.0
        %5654 = vmatprep.subr.mxu0 0.0
        %5655 = vmatpush1.msra.mxu0 0.0
        %5656 = vmatprep.subr.mxu0 0.0
        %5657 = vmatpush1.msra.mxu0 0.0
        %5658 = vmatprep.subr.mxu0 0.0
        %5659 = vmatpush1.msra.mxu0 0.0
        %5660 = vmatprep.subr.mxu0 0.0
        %5661 = vmatpush1.msra.mxu0 0.0
        %5662 = vmatprep.subr.mxu0 0.0
        %5663 = vmatpush1.msra.mxu0 0.0
        %5664 = vmatprep.subr.mxu0 0.0
        %5665 = vmatpush1.msra.mxu0 0.0
        %5666 = vmatprep.subr.mxu0 0.0
        %5667 = vmatpush1.msra.mxu0 0.0
        %5668 = vmatprep.subr.mxu0 0.0
        %5669 = vmatpush1.msra.mxu0 0.0
        %5670 = vmatprep.subr.mxu0 0.0
        %5671 = vmatpush1.msra.mxu0 0.0
        %5672 = vmatprep.subr.mxu0 0.0
        %5673 = vmatpush1.msra.mxu0 0.0
        %5674 = vmatprep.subr.mxu0 0.0
        %5675 = vmatpush1.msra.mxu0 0.0
        %5676 = vmatprep.mubr.f32.mxu0 0.0
        %5677 = vmatmul.mubr.f32.gmra.mrb[0].mxu0 %v5607
        %v5678 = vpop.f32.mrb[0].mxu0
        %v5679 = vadd.f32 0.0, %v5678
        %v5680 = vpop.f32.mrb[0].mxu0
        %5681 = vmatprep.mubr.f32.mxu0 0.0
        %5682 = vmatmul.mubr.f32.gmra.mrb[0].mxu0 %v5610
        %v5683 = vpop.f32.mrb[0].mxu0
        %v5684 = vadd.f32 0.0, %v5683
        %v5685 = vpop.f32.mrb[0].mxu0
        %5686 = vdwg.mxu0
        %v5687 = vadd.f32 %v5264, %v5679
        %v5688 = vadd.f32 %v5269, %v5684
        %5689 = vrot.lane.b32.xlu0 %v4426, 104
        %v5690 = vpop.permute.xlu0 %5689
        %5691 = vrot.lane.b32.xlu0 %v4426, 72
        %v5692 = vpop.permute.xlu0 %5691
        %v5693 = vsel %vm4444, %v5690, 0
        %v5695 = vsel %vm4444, %v5692, 0
        %5697 = vmatprep.subr.mxu0 0.0
        %5698 = vmatpush1.xpose.msra.mxu0 %v5695
        %5699 = vmatprep.subr.mxu0 0.0
        %5700 = vmatpush1.xpose.msra.mxu0 0.0
        %5701 = vmatprep.subr.mxu0 0.0
        %5702 = vmatpush1.xpose.msra.mxu0 0.0
        %5703 = vmatprep.subr.mxu0 0.0
        %5704 = vmatpush1.xpose.msra.mxu0 0.0
        %5705 = vmatprep.subr.mxu0 0.0
        %5706 = vmatpush1.xpose.msra.mxu0 0.0
        %5707 = vmatprep.subr.mxu0 0.0
        %5708 = vmatpush1.xpose.msra.mxu0 0.0
        %5709 = vmatprep.subr.mxu0 0.0
        %5710 = vmatpush1.xpose.msra.mxu0 0.0
        %5711 = vmatprep.subr.mxu0 0.0
        %5712 = vmatpush1.xpose.msra.mxu0 0.0
        %5713 = vmatprep.subr.mxu0 0.0
        %5714 = vmatpush1.xpose.msra.mxu0 0.0
        %5715 = vmatprep.subr.mxu0 0.0
        %5716 = vmatpush1.xpose.msra.mxu0 0.0
        %5717 = vmatprep.subr.mxu0 0.0
        %5718 = vmatpush1.xpose.msra.mxu0 0.0
        %5719 = vmatprep.subr.mxu0 0.0
        %5720 = vmatpush1.xpose.msra.mxu0 0.0
        %5721 = vmatprep.subr.mxu0 0.0
        %5722 = vmatpush1.xpose.msra.mxu0 0.0
        %5723 = vmatprep.subr.mxu0 0.0
        %5724 = vmatpush1.xpose.msra.mxu0 0.0
        %5725 = vmatprep.subr.mxu0 0.0
        %5726 = vmatpush1.xpose.msra.mxu0 0.0
        %5727 = vmatprep.subr.mxu0 0.0
        %5728 = vmatpush1.xpose.msra.mxu0 0.0
        %5729 = vmatprep.subr.mxu0 0.0
        %5730 = vmatpush1.xpose.msra.mxu0 0.0
        %5731 = vmatprep.subr.mxu0 0.0
        %5732 = vmatpush1.xpose.msra.mxu0 0.0
        %5733 = vmatprep.subr.mxu0 0.0
        %5734 = vmatpush1.xpose.msra.mxu0 0.0
        %5735 = vmatprep.subr.mxu0 0.0
        %5736 = vmatpush1.xpose.msra.mxu0 0.0
        %5737 = vmatprep.subr.mxu0 0.0
        %5738 = vmatpush1.xpose.msra.mxu0 0.0
        %5739 = vmatprep.subr.mxu0 0.0
        %5740 = vmatpush1.xpose.msra.mxu0 0.0
        %5741 = vmatprep.subr.mxu0 0.0
        %5742 = vmatpush1.xpose.msra.mxu0 0.0
        %5743 = vmatprep.subr.mxu0 0.0
        %5744 = vmatpush1.xpose.msra.mxu0 0.0
        %5745 = vmatprep.subr.mxu0 0.0
        %5746 = vmatpush1.xpose.msra.mxu0 0.0
        %5747 = vmatprep.subr.mxu0 0.0
        %5748 = vmatpush1.xpose.msra.mxu0 0.0
        %5749 = vmatprep.subr.mxu0 0.0
        %5750 = vmatpush1.xpose.msra.mxu0 0.0
        %5751 = vmatprep.subr.mxu0 0.0
        %5752 = vmatpush1.xpose.msra.mxu0 0.0
        %5753 = vmatprep.subr.mxu0 0.0
        %5754 = vmatpush1.xpose.msra.mxu0 0.0
        %5755 = vmatprep.subr.mxu0 0.0
        %5756 = vmatpush1.xpose.msra.mxu0 0.0
        %5757 = vmatprep.subr.mxu0 0.0
        %5758 = vmatpush1.xpose.msra.mxu0 0.0
        %5759 = vmatprep.subr.mxu0 0.0
        %5760 = vmatpush1.xpose.msra.mxu0 0.0
        %5761 = vmatprep.mubr.f32.mxu0 0.0
        %5762 = vmatmul.mubr.f32.gmra.mrb[0].mxu0 %v5693
        %v5763 = vpop.f32.mrb[0].mxu0
        %v5764 = vadd.f32 0.0, %v5763
        %v5765 = vpop.f32.mrb[0].mxu0
        %5766 = vdwg.mxu0
        %5767 = vrot.lane.b32.xlu0 %v4431, 104
        %v5768 = vpop.permute.xlu0 %5767
        %5769 = vrot.lane.b32.xlu0 %v4431, 72
        %v5770 = vpop.permute.xlu0 %5769
        %v5771 = vsel %vm4444, %v5768, 0
        %v5773 = vsel %vm4444, %v5770, 0
        %5775 = vmatprep.subr.mxu0 0.0
        %5776 = vmatpush1.xpose.msra.mxu0 %v5773
        %5777 = vmatprep.subr.mxu0 0.0
        %5778 = vmatpush1.xpose.msra.mxu0 0.0
        %5779 = vmatprep.subr.mxu0 0.0
        %5780 = vmatpush1.xpose.msra.mxu0 0.0
        %5781 = vmatprep.subr.mxu0 0.0
        %5782 = vmatpush1.xpose.msra.mxu0 0.0
        %5783 = vmatprep.subr.mxu0 0.0
        %5784 = vmatpush1.xpose.msra.mxu0 0.0
        %5785 = vmatprep.subr.mxu0 0.0
        %5786 = vmatpush1.xpose.msra.mxu0 0.0
        %5787 = vmatprep.subr.mxu0 0.0
        %5788 = vmatpush1.xpose.msra.mxu0 0.0
        %5789 = vmatprep.subr.mxu0 0.0
        %5790 = vmatpush1.xpose.msra.mxu0 0.0
        %5791 = vmatprep.subr.mxu0 0.0
        %5792 = vmatpush1.xpose.msra.mxu0 0.0
        %5793 = vmatprep.subr.mxu0 0.0
        %5794 = vmatpush1.xpose.msra.mxu0 0.0
        %5795 = vmatprep.subr.mxu0 0.0
        %5796 = vmatpush1.xpose.msra.mxu0 0.0
        %5797 = vmatprep.subr.mxu0 0.0
        %5798 = vmatpush1.xpose.msra.mxu0 0.0
        %5799 = vmatprep.subr.mxu0 0.0
        %5800 = vmatpush1.xpose.msra.mxu0 0.0
        %5801 = vmatprep.subr.mxu0 0.0
        %5802 = vmatpush1.xpose.msra.mxu0 0.0
        %5803 = vmatprep.subr.mxu0 0.0
        %5804 = vmatpush1.xpose.msra.mxu0 0.0
        %5805 = vmatprep.subr.mxu0 0.0
        %5806 = vmatpush1.xpose.msra.mxu0 0.0
        %5807 = vmatprep.subr.mxu0 0.0
        %5808 = vmatpush1.xpose.msra.mxu0 0.0
        %5809 = vmatprep.subr.mxu0 0.0
        %5810 = vmatpush1.xpose.msra.mxu0 0.0
        %5811 = vmatprep.subr.mxu0 0.0
        %5812 = vmatpush1.xpose.msra.mxu0 0.0
        %5813 = vmatprep.subr.mxu0 0.0
        %5814 = vmatpush1.xpose.msra.mxu0 0.0
        %5815 = vmatprep.subr.mxu0 0.0
        %5816 = vmatpush1.xpose.msra.mxu0 0.0
        %5817 = vmatprep.subr.mxu0 0.0
        %5818 = vmatpush1.xpose.msra.mxu0 0.0
        %5819 = vmatprep.subr.mxu0 0.0
        %5820 = vmatpush1.xpose.msra.mxu0 0.0
        %5821 = vmatprep.subr.mxu0 0.0
        %5822 = vmatpush1.xpose.msra.mxu0 0.0
        %5823 = vmatprep.subr.mxu0 0.0
        %5824 = vmatpush1.xpose.msra.mxu0 0.0
        %5825 = vmatprep.subr.mxu0 0.0
        %5826 = vmatpush1.xpose.msra.mxu0 0.0
        %5827 = vmatprep.subr.mxu0 0.0
        %5828 = vmatpush1.xpose.msra.mxu0 0.0
        %5829 = vmatprep.subr.mxu0 0.0
        %5830 = vmatpush1.xpose.msra.mxu0 0.0
        %5831 = vmatprep.subr.mxu0 0.0
        %5832 = vmatpush1.xpose.msra.mxu0 0.0
        %5833 = vmatprep.subr.mxu0 0.0
        %5834 = vmatpush1.xpose.msra.mxu0 0.0
        %5835 = vmatprep.subr.mxu0 0.0
        %5836 = vmatpush1.xpose.msra.mxu0 0.0
        %5837 = vmatprep.subr.mxu0 0.0
        %5838 = vmatpush1.xpose.msra.mxu0 0.0
        %5839 = vmatprep.mubr.f32.mxu0 0.0
        %5840 = vmatmul.mubr.f32.gmra.mrb[0].mxu0 %v5771
        %v5841 = vpop.f32.mrb[0].mxu0
        %v5842 = vadd.f32 0.0, %v5841
        %v5843 = vpop.f32.mrb[0].mxu0
        %5844 = vdwg.mxu0
        %v5845 = vmul.f32 %v5764, 0.35355338
        %v5846 = vmul.f32 %v5842, 0.35355338
        %v5847 = vsel %vm4598, %v5845, -1e+09
        %v5848 = vsel %vm4599, %v5846, -1e+09
        %v5849 = vsel %vm4444, %v5847, -inf
        %5850 = vmax.xlane.f32.xlu0 %v5849
        %v5851 = vpop.xlane.xlu0 %5850
        %v5852 = vsel %vm4444, %v5848, -inf
        %5853 = vmax.xlane.f32.xlu0 %v5852
        %v5854 = vpop.xlane.xlu0 %5853
        %v5855 = vsub.f32 %v5847, %v5851
        %v5856 = vsub.f32 %v5848, %v5854
        %v5857 = vmul.f32 %v5855, 1.442695
        %v5858 = vpow.pop %v5857
        %v5859 = vmul.f32 %v5856, 1.442695
        %v5860 = vpow.pop %v5859
        %v5861 = vsel %vm4444, %v5858, 0.0
        %5862 = vadd.xlane.f32.xlu0 %v5861
        %v5863 = vpop.xlane.xlu0 %5862
        %v5864 = vsel %vm4444, %v5860, 0.0
        %5865 = vadd.xlane.f32.xlu0 %v5864
        %v5866 = vpop.xlane.xlu0 %5865
        %v5867 = vrcp.pop %v5863
        %v5868 = vrcp.pop %v5866
        %v5869 = vmul.f32 %v5858, %v5867
        %v5870 = vmul.f32 %v5860, %v5868
        %5871 = vrot.lane.b32.xlu0 %v4426, 40
        %v5872 = vpop.permute.xlu0 %5871
        %v5875 = vsel %vm4444, %v5869, 0
        %5877 = vmatprep.subr.mxu0 0.0
        %5878 = vmatpush1.msra.mxu0 %v5872
        %5879 = vmatprep.subr.mxu0 0.0
        %5880 = vmatpush1.msra.mxu0 0.0
        %5881 = vmatprep.subr.mxu0 0.0
        %5882 = vmatpush1.msra.mxu0 0.0
        %5883 = vmatprep.subr.mxu0 0.0
        %5884 = vmatpush1.msra.mxu0 0.0
        %5885 = vmatprep.subr.mxu0 0.0
        %5886 = vmatpush1.msra.mxu0 0.0
        %5887 = vmatprep.subr.mxu0 0.0
        %5888 = vmatpush1.msra.mxu0 0.0
        %5889 = vmatprep.subr.mxu0 0.0
        %5890 = vmatpush1.msra.mxu0 0.0
        %5891 = vmatprep.subr.mxu0 0.0
        %5892 = vmatpush1.msra.mxu0 0.0
        %5893 = vmatprep.subr.mxu0 0.0
        %5894 = vmatpush1.msra.mxu0 0.0
        %5895 = vmatprep.subr.mxu0 0.0
        %5896 = vmatpush1.msra.mxu0 0.0
        %5897 = vmatprep.subr.mxu0 0.0
        %5898 = vmatpush1.msra.mxu0 0.0
        %5899 = vmatprep.subr.mxu0 0.0
        %5900 = vmatpush1.msra.mxu0 0.0
        %5901 = vmatprep.subr.mxu0 0.0
        %5902 = vmatpush1.msra.mxu0 0.0
        %5903 = vmatprep.subr.mxu0 0.0
        %5904 = vmatpush1.msra.mxu0 0.0
        %5905 = vmatprep.subr.mxu0 0.0
        %5906 = vmatpush1.msra.mxu0 0.0
        %5907 = vmatprep.subr.mxu0 0.0
        %5908 = vmatpush1.msra.mxu0 0.0
        %5909 = vmatprep.subr.mxu0 0.0
        %5910 = vmatpush1.msra.mxu0 0.0
        %5911 = vmatprep.subr.mxu0 0.0
        %5912 = vmatpush1.msra.mxu0 0.0
        %5913 = vmatprep.subr.mxu0 0.0
        %5914 = vmatpush1.msra.mxu0 0.0
        %5915 = vmatprep.subr.mxu0 0.0
        %5916 = vmatpush1.msra.mxu0 0.0
        %5917 = vmatprep.subr.mxu0 0.0
        %5918 = vmatpush1.msra.mxu0 0.0
        %5919 = vmatprep.subr.mxu0 0.0
        %5920 = vmatpush1.msra.mxu0 0.0
        %5921 = vmatprep.subr.mxu0 0.0
        %5922 = vmatpush1.msra.mxu0 0.0
        %5923 = vmatprep.subr.mxu0 0.0
        %5924 = vmatpush1.msra.mxu0 0.0
        %5925 = vmatprep.subr.mxu0 0.0
        %5926 = vmatpush1.msra.mxu0 0.0
        %5927 = vmatprep.subr.mxu0 0.0
        %5928 = vmatpush1.msra.mxu0 0.0
        %5929 = vmatprep.subr.mxu0 0.0
        %5930 = vmatpush1.msra.mxu0 0.0
        %5931 = vmatprep.subr.mxu0 0.0
        %5932 = vmatpush1.msra.mxu0 0.0
        %5933 = vmatprep.subr.mxu0 0.0
        %5934 = vmatpush1.msra.mxu0 0.0
        %5935 = vmatprep.subr.mxu0 0.0
        %5936 = vmatpush1.msra.mxu0 0.0
        %5937 = vmatprep.subr.mxu0 0.0
        %5938 = vmatpush1.msra.mxu0 0.0
        %5939 = vmatprep.subr.mxu0 0.0
        %5940 = vmatpush1.msra.mxu0 0.0
        %5941 = vmatprep.mubr.f32.mxu0 0.0
        %5942 = vmatmul.mubr.f32.gmra.mrb[0].mxu0 %v5875
        %v5943 = vpop.f32.mrb[0].mxu0
        %v5944 = vadd.f32 0.0, %v5943
        %v5945 = vpop.f32.mrb[0].mxu0
        %5946 = vdwg.mxu0
        %5947 = vrot.lane.b32.xlu0 %v4431, 40
        %v5948 = vpop.permute.xlu0 %5947
        %v5951 = vsel %vm4444, %v5870, 0
        %5953 = vmatprep.subr.mxu0 0.0
        %5954 = vmatpush1.msra.mxu0 %v5948
        %5955 = vmatprep.subr.mxu0 0.0
        %5956 = vmatpush1.msra.mxu0 0.0
        %5957 = vmatprep.subr.mxu0 0.0
        %5958 = vmatpush1.msra.mxu0 0.0
        %5959 = vmatprep.subr.mxu0 0.0
        %5960 = vmatpush1.msra.mxu0 0.0
        %5961 = vmatprep.subr.mxu0 0.0
        %5962 = vmatpush1.msra.mxu0 0.0
        %5963 = vmatprep.subr.mxu0 0.0
        %5964 = vmatpush1.msra.mxu0 0.0
        %5965 = vmatprep.subr.mxu0 0.0
        %5966 = vmatpush1.msra.mxu0 0.0
        %5967 = vmatprep.subr.mxu0 0.0
        %5968 = vmatpush1.msra.mxu0 0.0
        %5969 = vmatprep.subr.mxu0 0.0
        %5970 = vmatpush1.msra.mxu0 0.0
        %5971 = vmatprep.subr.mxu0 0.0
        %5972 = vmatpush1.msra.mxu0 0.0
        %5973 = vmatprep.subr.mxu0 0.0
        %5974 = vmatpush1.msra.mxu0 0.0
        %5975 = vmatprep.subr.mxu0 0.0
        %5976 = vmatpush1.msra.mxu0 0.0
        %5977 = vmatprep.subr.mxu0 0.0
        %5978 = vmatpush1.msra.mxu0 0.0
        %5979 = vmatprep.subr.mxu0 0.0
        %5980 = vmatpush1.msra.mxu0 0.0
        %5981 = vmatprep.subr.mxu0 0.0
        %5982 = vmatpush1.msra.mxu0 0.0
        %5983 = vmatprep.subr.mxu0 0.0
        %5984 = vmatpush1.msra.mxu0 0.0
        %5985 = vmatprep.subr.mxu0 0.0
        %5986 = vmatpush1.msra.mxu0 0.0
        %5987 = vmatprep.subr.mxu0 0.0
        %5988 = vmatpush1.msra.mxu0 0.0
        %5989 = vmatprep.subr.mxu0 0.0
        %5990 = vmatpush1.msra.mxu0 0.0
        %5991 = vmatprep.subr.mxu0 0.0
        %5992 = vmatpush1.msra.mxu0 0.0
        %5993 = vmatprep.subr.mxu0 0.0
        %5994 = vmatpush1.msra.mxu0 0.0
        %5995 = vmatprep.subr.mxu0 0.0
        %5996 = vmatpush1.msra.mxu0 0.0
        %5997 = vmatprep.subr.mxu0 0.0
        %5998 = vmatpush1.msra.mxu0 0.0
        %5999 = vmatprep.subr.mxu0 0.0
        %6000 = vmatpush1.msra.mxu0 0.0
        %6001 = vmatprep.subr.mxu0 0.0
        %6002 = vmatpush1.msra.mxu0 0.0
        %6003 = vmatprep.subr.mxu0 0.0
        %6004 = vmatpush1.msra.mxu0 0.0
        %6005 = vmatprep.subr.mxu0 0.0
        %6006 = vmatpush1.msra.mxu0 0.0
        %6007 = vmatprep.subr.mxu0 0.0
        %6008 = vmatpush1.msra.mxu0 0.0
        %6009 = vmatprep.subr.mxu0 0.0
        %6010 = vmatpush1.msra.mxu0 0.0
        %6011 = vmatprep.subr.mxu0 0.0
        %6012 = vmatpush1.msra.mxu0 0.0
        %6013 = vmatprep.subr.mxu0 0.0
        %6014 = vmatpush1.msra.mxu0 0.0
        %6015 = vmatprep.subr.mxu0 0.0
        %6016 = vmatpush1.msra.mxu0 0.0
        %6017 = vmatprep.mubr.f32.mxu0 0.0
        %6018 = vmatmul.mubr.f32.gmra.mrb[0].mxu0 %v5951
        %v6019 = vpop.f32.mrb[0].mxu0
        %v6020 = vadd.f32 0.0, %v6019
        %v6021 = vpop.f32.mrb[0].mxu0
        %6022 = vdwg.mxu0
        %v6024 = vsel %vm4444, %v5944, 0
        %v6027 = vsel %vm4444, %v6020, 0
        %6029 = vmatprep.subr.mxu0 0.0
        %6030 = vmatpush1.msra.mxu0 %v4437
        %6031 = vmatprep.subr.mxu0 0.0
        %6032 = vmatpush1.msra.mxu0 0.0
        %6033 = vmatprep.subr.mxu0 0.0
        %6034 = vmatpush1.msra.mxu0 0.0
        %6035 = vmatprep.subr.mxu0 0.0
        %6036 = vmatpush1.msra.mxu0 0.0
        %6037 = vmatprep.subr.mxu0 0.0
        %6038 = vmatpush1.msra.mxu0 0.0
        %6039 = vmatprep.subr.mxu0 0.0
        %6040 = vmatpush1.msra.mxu0 0.0
        %6041 = vmatprep.subr.mxu0 0.0
        %6042 = vmatpush1.msra.mxu0 0.0
        %6043 = vmatprep.subr.mxu0 0.0
        %6044 = vmatpush1.msra.mxu0 0.0
        %6045 = vmatprep.subr.mxu0 0.0
        %6046 = vmatpush1.msra.mxu0 0.0
        %6047 = vmatprep.subr.mxu0 0.0
        %6048 = vmatpush1.msra.mxu0 0.0
        %6049 = vmatprep.subr.mxu0 0.0
        %6050 = vmatpush1.msra.mxu0 0.0
        %6051 = vmatprep.subr.mxu0 0.0
        %6052 = vmatpush1.msra.mxu0 0.0
        %6053 = vmatprep.subr.mxu0 0.0
        %6054 = vmatpush1.msra.mxu0 0.0
        %6055 = vmatprep.subr.mxu0 0.0
        %6056 = vmatpush1.msra.mxu0 0.0
        %6057 = vmatprep.subr.mxu0 0.0
        %6058 = vmatpush1.msra.mxu0 0.0
        %6059 = vmatprep.subr.mxu0 0.0
        %6060 = vmatpush1.msra.mxu0 0.0
        %6061 = vmatprep.subr.mxu0 0.0
        %6062 = vmatpush1.msra.mxu0 0.0
        %6063 = vmatprep.subr.mxu0 0.0
        %6064 = vmatpush1.msra.mxu0 0.0
        %6065 = vmatprep.subr.mxu0 0.0
        %6066 = vmatpush1.msra.mxu0 0.0
        %6067 = vmatprep.subr.mxu0 0.0
        %6068 = vmatpush1.msra.mxu0 0.0
        %6069 = vmatprep.subr.mxu0 0.0
        %6070 = vmatpush1.msra.mxu0 0.0
        %6071 = vmatprep.subr.mxu0 0.0
        %6072 = vmatpush1.msra.mxu0 0.0
        %6073 = vmatprep.subr.mxu0 0.0
        %6074 = vmatpush1.msra.mxu0 0.0
        %6075 = vmatprep.subr.mxu0 0.0
        %6076 = vmatpush1.msra.mxu0 0.0
        %6077 = vmatprep.subr.mxu0 0.0
        %6078 = vmatpush1.msra.mxu0 0.0
        %6079 = vmatprep.subr.mxu0 0.0
        %6080 = vmatpush1.msra.mxu0 0.0
        %6081 = vmatprep.subr.mxu0 0.0
        %6082 = vmatpush1.msra.mxu0 0.0
        %6083 = vmatprep.subr.mxu0 0.0
        %6084 = vmatpush1.msra.mxu0 0.0
        %6085 = vmatprep.subr.mxu0 0.0
        %6086 = vmatpush1.msra.mxu0 0.0
        %6087 = vmatprep.subr.mxu0 0.0
        %6088 = vmatpush1.msra.mxu0 0.0
        %6089 = vmatprep.subr.mxu0 0.0
        %6090 = vmatpush1.msra.mxu0 0.0
        %6091 = vmatprep.subr.mxu0 0.0
        %6092 = vmatpush1.msra.mxu0 0.0
        %6093 = vmatprep.mubr.f32.mxu0 0.0
        %6094 = vmatmul.mubr.f32.gmra.mrb[0].mxu0 %v6024
        %v6095 = vpop.f32.mrb[0].mxu0
        %v6096 = vadd.f32 0.0, %v6095
        %v6097 = vpop.f32.mrb[0].mxu0
        %6098 = vmatprep.mubr.f32.mxu0 0.0
        %6099 = vmatmul.mubr.f32.gmra.mrb[0].mxu0 %v6027
        %v6100 = vpop.f32.mrb[0].mxu0
        %v6101 = vadd.f32 0.0, %v6100
        %v6102 = vpop.f32.mrb[0].mxu0
        %6103 = vdwg.mxu0
        %v6104 = vadd.f32 %v5687, %v6096
        %v6105 = vadd.f32 %v5688, %v6101
        %v6107 = vlaneseq
        %v6108 = vshrl.u32 %v6107, 7
        %v6109 = vsub.s32 0, %v6108
        %v6110 = vrot.slane %v4438, %v6109
        %v6112 = vadd.f32 %v6104, %v6110
        %v6113 = vadd.f32 %v6105, %v6110
        %v6114 = vadd.f32 %v4337, %v6112
        %v6115 = vadd.f32 %v4338, %v6113
        %v6116 = vld [vmem:[%s2101] sm:$0x1]
        %v6117 = vld [vmem:[%s2110] sm:$0x1]
        %v6118 = vsel %vm4352, %v6114, 0.0
        %6119 = vadd.xlane.f32.xlu0 %v6118
        %v6120 = vpop.xlane.xlu0 %6119
        %v6121 = vsel %vm4352, %v6115, 0.0
        %6122 = vadd.xlane.f32.xlu0 %v6121
        %v6123 = vpop.xlane.xlu0 %6122
        %v6124 = vrcp.pop 32.0
        %v6125 = vmul.f32 %v6120, %v6124
        %v6126 = vmul.f32 %v6123, %v6124
        %v6127 = vsub.f32 %v6114, %v6125
        %v6128 = vsub.f32 %v6115, %v6126
        %v6129 = vmul.f32 %v6127, %v6127
        %v6130 = vmul.f32 %v6128, %v6128
        %v6131 = vsel %vm4352, %v6129, 0.0
        %6132 = vadd.xlane.f32.xlu0 %v6131
        %v6133 = vpop.xlane.xlu0 %6132
        %v6134 = vsel %vm4352, %v6130, 0.0
        %6135 = vadd.xlane.f32.xlu0 %v6134
        %v6136 = vpop.xlane.xlu0 %6135
        %v6137 = vmul.f32 %v6133, %v6124
        %v6138 = vmul.f32 %v6136, %v6124
        %v6139 = vadd.f32 %v6137, 1e-05
        %v6140 = vadd.f32 %v6138, 1e-05
        %v6141 = vrsqrt.pop %v6139
        %v6142 = vrsqrt.pop %v6140
        %v6143 = vmul.f32 %v6127, %v6141
        %v6144 = vmul.f32 %v6128, %v6142
        %v6146 = vlaneseq
        %v6147 = vshrl.u32 %v6146, 7
        %v6148 = vsub.s32 0, %v6147
        %v6149 = vrot.slane %v6116, %v6148
        %v6151 = vmul.f32 %v6143, %v6149
        %v6152 = vmul.f32 %v6144, %v6149
        %v6154 = vlaneseq
        %v6155 = vshrl.u32 %v6154, 7
        %v6156 = vsub.s32 0, %v6155
        %v6157 = vrot.slane %v6117, %v6156
        %v6159 = vadd.f32 %v6151, %v6157
        %v6160 = vadd.f32 %v6152, %v6157
        %v6161 = vld [vmem:[%s2121] sm:$0xff]
        %v6162 = vld [vmem:[%s2121 + $0x8] sm:$0xff]
        %v6163 = vld [vmem:[%s2121 + $0x10] sm:$0xff]
        %v6164 = vld [vmem:[%s2121 + $0x18] sm:$0xff]
        %v6165 = vld [vmem:[%s2130] sm:$0x1]
        %v6167 = vlaneseq
        %v6168 = vshrl.u32 %v6167, 7
        %v6169 = vsub.s32 0, %v6168
        %v6170 = vrot.slane %v6165, %v6169
        %v6173 = vsel %vm4352, %v6159, 0
        %v6176 = vsel %vm4352, %v6160, 0
        %6178 = vmatprep.subr.mxu0 0.0
        %6179 = vmatpush1.msra.mxu0 %v6161
        %6180 = vmatprep.subr.mxu0 0.0
        %6181 = vmatpush1.msra.mxu0 %v6162
        %6182 = vmatprep.subr.mxu0 0.0
        %6183 = vmatpush1.msra.mxu0 %v6163
        %6184 = vmatprep.subr.mxu0 0.0
        %6185 = vmatpush1.msra.mxu0 %v6164
        %6186 = vmatprep.subr.mxu0 0.0
        %6187 = vmatpush1.msra.mxu0 0.0
        %6188 = vmatprep.subr.mxu0 0.0
        %6189 = vmatpush1.msra.mxu0 0.0
        %6190 = vmatprep.subr.mxu0 0.0
        %6191 = vmatpush1.msra.mxu0 0.0
        %6192 = vmatprep.subr.mxu0 0.0
        %6193 = vmatpush1.msra.mxu0 0.0
        %6194 = vmatprep.subr.mxu0 0.0
        %6195 = vmatpush1.msra.mxu0 0.0
        %6196 = vmatprep.subr.mxu0 0.0
        %6197 = vmatpush1.msra.mxu0 0.0
        %6198 = vmatprep.subr.mxu0 0.0
        %6199 = vmatpush1.msra.mxu0 0.0
        %6200 = vmatprep.subr.mxu0 0.0
        %6201 = vmatpush1.msra.mxu0 0.0
        %6202 = vmatprep.subr.mxu0 0.0
        %6203 = vmatpush1.msra.mxu0 0.0
        %6204 = vmatprep.subr.mxu0 0.0
        %6205 = vmatpush1.msra.mxu0 0.0
        %6206 = vmatprep.subr.mxu0 0.0
        %6207 = vmatpush1.msra.mxu0 0.0
        %6208 = vmatprep.subr.mxu0 0.0
        %6209 = vmatpush1.msra.mxu0 0.0
        %6210 = vmatprep.subr.mxu0 0.0
        %6211 = vmatpush1.msra.mxu0 0.0
        %6212 = vmatprep.subr.mxu0 0.0
        %6213 = vmatpush1.msra.mxu0 0.0
        %6214 = vmatprep.subr.mxu0 0.0
        %6215 = vmatpush1.msra.mxu0 0.0
        %6216 = vmatprep.subr.mxu0 0.0
        %6217 = vmatpush1.msra.mxu0 0.0
        %6218 = vmatprep.subr.mxu0 0.0
        %6219 = vmatpush1.msra.mxu0 0.0
        %6220 = vmatprep.subr.mxu0 0.0
        %6221 = vmatpush1.msra.mxu0 0.0
        %6222 = vmatprep.subr.mxu0 0.0
        %6223 = vmatpush1.msra.mxu0 0.0
        %6224 = vmatprep.subr.mxu0 0.0
        %6225 = vmatpush1.msra.mxu0 0.0
        %6226 = vmatprep.subr.mxu0 0.0
        %6227 = vmatpush1.msra.mxu0 0.0
        %6228 = vmatprep.subr.mxu0 0.0
        %6229 = vmatpush1.msra.mxu0 0.0
        %6230 = vmatprep.subr.mxu0 0.0
        %6231 = vmatpush1.msra.mxu0 0.0
        %6232 = vmatprep.subr.mxu0 0.0
        %6233 = vmatpush1.msra.mxu0 0.0
        %6234 = vmatprep.subr.mxu0 0.0
        %6235 = vmatpush1.msra.mxu0 0.0
        %6236 = vmatprep.subr.mxu0 0.0
        %6237 = vmatpush1.msra.mxu0 0.0
        %6238 = vmatprep.subr.mxu0 0.0
        %6239 = vmatpush1.msra.mxu0 0.0
        %6240 = vmatprep.subr.mxu0 0.0
        %6241 = vmatpush1.msra.mxu0 0.0
        %6242 = vmatprep.mubr.f32.mxu0 0.0
        %6243 = vmatmul.mubr.f32.gmra.mrb[0].mxu0 %v6173
        %v6244 = vpop.f32.mrb[0].mxu0
        %v6245 = vadd.f32 %v6170, %v6244
        %v6246 = vpop.f32.mrb[0].mxu0
        %6247 = vmatprep.mubr.f32.mxu0 0.0
        %6248 = vmatmul.mubr.f32.gmra.mrb[0].mxu0 %v6176
        %v6249 = vpop.f32.mrb[0].mxu0
        %v6250 = vadd.f32 %v6170, %v6249
        %v6251 = vpop.f32.mrb[0].mxu0
        %6252 = vdwg.mxu0
        %v6253 = vld [vmem:[%s2141] sm:$0xff]
        %v6254 = vld [vmem:[%s2141 + $0x8] sm:$0xff]
        %v6255 = vld [vmem:[%s2141 + $0x10] sm:$0xff]
        %v6256 = vld [vmem:[%s2141 + $0x18] sm:$0xff]
        %v6257 = vld [vmem:[%s2150] sm:$0x1]
        %v6259 = vlaneseq
        %v6260 = vshrl.u32 %v6259, 7
        %v6261 = vsub.s32 0, %v6260
        %v6262 = vrot.slane %v6257, %v6261
        %v6265 = vsel %vm4352, %v4339, 0
        %v6268 = vsel %vm4352, %v4340, 0
        %6270 = vmatprep.subr.mxu0 0.0
        %6271 = vmatpush1.msra.mxu0 %v6253
        %6272 = vmatprep.subr.mxu0 0.0
        %6273 = vmatpush1.msra.mxu0 %v6254
        %6274 = vmatprep.subr.mxu0 0.0
        %6275 = vmatpush1.msra.mxu0 %v6255
        %6276 = vmatprep.subr.mxu0 0.0
        %6277 = vmatpush1.msra.mxu0 %v6256
        %6278 = vmatprep.subr.mxu0 0.0
        %6279 = vmatpush1.msra.mxu0 0.0
        %6280 = vmatprep.subr.mxu0 0.0
        %6281 = vmatpush1.msra.mxu0 0.0
        %6282 = vmatprep.subr.mxu0 0.0
        %6283 = vmatpush1.msra.mxu0 0.0
        %6284 = vmatprep.subr.mxu0 0.0
        %6285 = vmatpush1.msra.mxu0 0.0
        %6286 = vmatprep.subr.mxu0 0.0
        %6287 = vmatpush1.msra.mxu0 0.0
        %6288 = vmatprep.subr.mxu0 0.0
        %6289 = vmatpush1.msra.mxu0 0.0
        %6290 = vmatprep.subr.mxu0 0.0
        %6291 = vmatpush1.msra.mxu0 0.0
        %6292 = vmatprep.subr.mxu0 0.0
        %6293 = vmatpush1.msra.mxu0 0.0
        %6294 = vmatprep.subr.mxu0 0.0
        %6295 = vmatpush1.msra.mxu0 0.0
        %6296 = vmatprep.subr.mxu0 0.0
        %6297 = vmatpush1.msra.mxu0 0.0
        %6298 = vmatprep.subr.mxu0 0.0
        %6299 = vmatpush1.msra.mxu0 0.0
        %6300 = vmatprep.subr.mxu0 0.0
        %6301 = vmatpush1.msra.mxu0 0.0
        %6302 = vmatprep.subr.mxu0 0.0
        %6303 = vmatpush1.msra.mxu0 0.0
        %6304 = vmatprep.subr.mxu0 0.0
        %6305 = vmatpush1.msra.mxu0 0.0
        %6306 = vmatprep.subr.mxu0 0.0
        %6307 = vmatpush1.msra.mxu0 0.0
        %6308 = vmatprep.subr.mxu0 0.0
        %6309 = vmatpush1.msra.mxu0 0.0
        %6310 = vmatprep.subr.mxu0 0.0
        %6311 = vmatpush1.msra.mxu0 0.0
        %6312 = vmatprep.subr.mxu0 0.0
        %6313 = vmatpush1.msra.mxu0 0.0
        %6314 = vmatprep.subr.mxu0 0.0
        %6315 = vmatpush1.msra.mxu0 0.0
        %6316 = vmatprep.subr.mxu0 0.0
        %6317 = vmatpush1.msra.mxu0 0.0
        %6318 = vmatprep.subr.mxu0 0.0
        %6319 = vmatpush1.msra.mxu0 0.0
        %6320 = vmatprep.subr.mxu0 0.0
        %6321 = vmatpush1.msra.mxu0 0.0
        %6322 = vmatprep.subr.mxu0 0.0
        %6323 = vmatpush1.msra.mxu0 0.0
        %6324 = vmatprep.subr.mxu0 0.0
        %6325 = vmatpush1.msra.mxu0 0.0
        %6326 = vmatprep.subr.mxu0 0.0
        %6327 = vmatpush1.msra.mxu0 0.0
        %6328 = vmatprep.subr.mxu0 0.0
        %6329 = vmatpush1.msra.mxu0 0.0
        %6330 = vmatprep.subr.mxu0 0.0
        %6331 = vmatpush1.msra.mxu0 0.0
        %6332 = vmatprep.subr.mxu0 0.0
        %6333 = vmatpush1.msra.mxu0 0.0
        %6334 = vmatprep.mubr.f32.mxu0 0.0
        %6335 = vmatmul.mubr.f32.gmra.mrb[0].mxu0 %v6265
        %v6336 = vpop.f32.mrb[0].mxu0
        %v6337 = vadd.f32 %v6262, %v6336
        %v6338 = vpop.f32.mrb[0].mxu0
        %6339 = vmatprep.mubr.f32.mxu0 0.0
        %6340 = vmatmul.mubr.f32.gmra.mrb[0].mxu0 %v6268
        %v6341 = vpop.f32.mrb[0].mxu0
        %v6342 = vadd.f32 %v6262, %v6341
        %v6343 = vpop.f32.mrb[0].mxu0
        %6344 = vdwg.mxu0
        %v6345 = vld [vmem:[%s2161] sm:$0xff]
        %v6346 = vld [vmem:[%s2161 + $0x8] sm:$0xff]
        %v6347 = vld [vmem:[%s2161 + $0x10] sm:$0xff]
        %v6348 = vld [vmem:[%s2161 + $0x18] sm:$0xff]
        %v6349 = vld [vmem:[%s2170] sm:$0x1]
        %v6350 = vld [vmem:[%s9] sm:$0xff]
        %v6351 = vld [vmem:[%s9 + $0x8] sm:$0xff]
        %v6353 = vsel %vm4444, %v6245, 0
        %v6356 = vsel %vm4444, %v6337, 0
        %6358 = vmatprep.subr.mxu0 0.0
        %6359 = vmatpush1.xpose.msra.mxu0 %v6356
        %6360 = vmatprep.subr.mxu0 0.0
        %6361 = vmatpush1.xpose.msra.mxu0 0.0
        %6362 = vmatprep.subr.mxu0 0.0
        %6363 = vmatpush1.xpose.msra.mxu0 0.0
        %6364 = vmatprep.subr.mxu0 0.0
        %6365 = vmatpush1.xpose.msra.mxu0 0.0
        %6366 = vmatprep.subr.mxu0 0.0
        %6367 = vmatpush1.xpose.msra.mxu0 0.0
        %6368 = vmatprep.subr.mxu0 0.0
        %6369 = vmatpush1.xpose.msra.mxu0 0.0
        %6370 = vmatprep.subr.mxu0 0.0
        %6371 = vmatpush1.xpose.msra.mxu0 0.0
        %6372 = vmatprep.subr.mxu0 0.0
        %6373 = vmatpush1.xpose.msra.mxu0 0.0
        %6374 = vmatprep.subr.mxu0 0.0
        %6375 = vmatpush1.xpose.msra.mxu0 0.0
        %6376 = vmatprep.subr.mxu0 0.0
        %6377 = vmatpush1.xpose.msra.mxu0 0.0
        %6378 = vmatprep.subr.mxu0 0.0
        %6379 = vmatpush1.xpose.msra.mxu0 0.0
        %6380 = vmatprep.subr.mxu0 0.0
        %6381 = vmatpush1.xpose.msra.mxu0 0.0
        %6382 = vmatprep.subr.mxu0 0.0
        %6383 = vmatpush1.xpose.msra.mxu0 0.0
        %6384 = vmatprep.subr.mxu0 0.0
        %6385 = vmatpush1.xpose.msra.mxu0 0.0
        %6386 = vmatprep.subr.mxu0 0.0
        %6387 = vmatpush1.xpose.msra.mxu0 0.0
        %6388 = vmatprep.subr.mxu0 0.0
        %6389 = vmatpush1.xpose.msra.mxu0 0.0
        %6390 = vmatprep.subr.mxu0 0.0
        %6391 = vmatpush1.xpose.msra.mxu0 0.0
        %6392 = vmatprep.subr.mxu0 0.0
        %6393 = vmatpush1.xpose.msra.mxu0 0.0
        %6394 = vmatprep.subr.mxu0 0.0
        %6395 = vmatpush1.xpose.msra.mxu0 0.0
        %6396 = vmatprep.subr.mxu0 0.0
        %6397 = vmatpush1.xpose.msra.mxu0 0.0
        %6398 = vmatprep.subr.mxu0 0.0
        %6399 = vmatpush1.xpose.msra.mxu0 0.0
        %6400 = vmatprep.subr.mxu0 0.0
        %6401 = vmatpush1.xpose.msra.mxu0 0.0
        %6402 = vmatprep.subr.mxu0 0.0
        %6403 = vmatpush1.xpose.msra.mxu0 0.0
        %6404 = vmatprep.subr.mxu0 0.0
        %6405 = vmatpush1.xpose.msra.mxu0 0.0
        %6406 = vmatprep.subr.mxu0 0.0
        %6407 = vmatpush1.xpose.msra.mxu0 0.0
        %6408 = vmatprep.subr.mxu0 0.0
        %6409 = vmatpush1.xpose.msra.mxu0 0.0
        %6410 = vmatprep.subr.mxu0 0.0
        %6411 = vmatpush1.xpose.msra.mxu0 0.0
        %6412 = vmatprep.subr.mxu0 0.0
        %6413 = vmatpush1.xpose.msra.mxu0 0.0
        %6414 = vmatprep.subr.mxu0 0.0
        %6415 = vmatpush1.xpose.msra.mxu0 0.0
        %6416 = vmatprep.subr.mxu0 0.0
        %6417 = vmatpush1.xpose.msra.mxu0 0.0
        %6418 = vmatprep.subr.mxu0 0.0
        %6419 = vmatpush1.xpose.msra.mxu0 0.0
        %6420 = vmatprep.subr.mxu0 0.0
        %6421 = vmatpush1.xpose.msra.mxu0 0.0
        %6422 = vmatprep.mubr.f32.mxu0 0.0
        %6423 = vmatmul.mubr.f32.gmra.mrb[0].mxu0 %v6353
        %v6424 = vpop.f32.mrb[0].mxu0
        %v6425 = vadd.f32 0.0, %v6424
        %v6426 = vpop.f32.mrb[0].mxu0
        %6427 = vdwg.mxu0
        %v6429 = vsel %vm4444, %v6250, 0
        %v6432 = vsel %vm4444, %v6342, 0
        %6434 = vmatprep.subr.mxu0 0.0
        %6435 = vmatpush1.xpose.msra.mxu0 %v6432
        %6436 = vmatprep.subr.mxu0 0.0
        %6437 = vmatpush1.xpose.msra.mxu0 0.0
        %6438 = vmatprep.subr.mxu0 0.0
        %6439 = vmatpush1.xpose.msra.mxu0 0.0
        %6440 = vmatprep.subr.mxu0 0.0
        %6441 = vmatpush1.xpose.msra.mxu0 0.0
        %6442 = vmatprep.subr.mxu0 0.0
        %6443 = vmatpush1.xpose.msra.mxu0 0.0
        %6444 = vmatprep.subr.mxu0 0.0
        %6445 = vmatpush1.xpose.msra.mxu0 0.0
        %6446 = vmatprep.subr.mxu0 0.0
        %6447 = vmatpush1.xpose.msra.mxu0 0.0
        %6448 = vmatprep.subr.mxu0 0.0
        %6449 = vmatpush1.xpose.msra.mxu0 0.0
        %6450 = vmatprep.subr.mxu0 0.0
        %6451 = vmatpush1.xpose.msra.mxu0 0.0
        %6452 = vmatprep.subr.mxu0 0.0
        %6453 = vmatpush1.xpose.msra.mxu0 0.0
        %6454 = vmatprep.subr.mxu0 0.0
        %6455 = vmatpush1.xpose.msra.mxu0 0.0
        %6456 = vmatprep.subr.mxu0 0.0
        %6457 = vmatpush1.xpose.msra.mxu0 0.0
        %6458 = vmatprep.subr.mxu0 0.0
        %6459 = vmatpush1.xpose.msra.mxu0 0.0
        %6460 = vmatprep.subr.mxu0 0.0
        %6461 = vmatpush1.xpose.msra.mxu0 0.0
        %6462 = vmatprep.subr.mxu0 0.0
        %6463 = vmatpush1.xpose.msra.mxu0 0.0
        %6464 = vmatprep.subr.mxu0 0.0
        %6465 = vmatpush1.xpose.msra.mxu0 0.0
        %6466 = vmatprep.subr.mxu0 0.0
        %6467 = vmatpush1.xpose.msra.mxu0 0.0
        %6468 = vmatprep.subr.mxu0 0.0
        %6469 = vmatpush1.xpose.msra.mxu0 0.0
        %6470 = vmatprep.subr.mxu0 0.0
        %6471 = vmatpush1.xpose.msra.mxu0 0.0
        %6472 = vmatprep.subr.mxu0 0.0
        %6473 = vmatpush1.xpose.msra.mxu0 0.0
        %6474 = vmatprep.subr.mxu0 0.0
        %6475 = vmatpush1.xpose.msra.mxu0 0.0
        %6476 = vmatprep.subr.mxu0 0.0
        %6477 = vmatpush1.xpose.msra.mxu0 0.0
        %6478 = vmatprep.subr.mxu0 0.0
        %6479 = vmatpush1.xpose.msra.mxu0 0.0
        %6480 = vmatprep.subr.mxu0 0.0
        %6481 = vmatpush1.xpose.msra.mxu0 0.0
        %6482 = vmatprep.subr.mxu0 0.0
        %6483 = vmatpush1.xpose.msra.mxu0 0.0
        %6484 = vmatprep.subr.mxu0 0.0
        %6485 = vmatpush1.xpose.msra.mxu0 0.0
        %6486 = vmatprep.subr.mxu0 0.0
        %6487 = vmatpush1.xpose.msra.mxu0 0.0
        %6488 = vmatprep.subr.mxu0 0.0
        %6489 = vmatpush1.xpose.msra.mxu0 0.0
        %6490 = vmatprep.subr.mxu0 0.0
        %6491 = vmatpush1.xpose.msra.mxu0 0.0
        %6492 = vmatprep.subr.mxu0 0.0
        %6493 = vmatpush1.xpose.msra.mxu0 0.0
        %6494 = vmatprep.subr.mxu0 0.0
        %6495 = vmatpush1.xpose.msra.mxu0 0.0
        %6496 = vmatprep.subr.mxu0 0.0
        %6497 = vmatpush1.xpose.msra.mxu0 0.0
        %6498 = vmatprep.mubr.f32.mxu0 0.0
        %6499 = vmatmul.mubr.f32.gmra.mrb[0].mxu0 %v6429
        %v6500 = vpop.f32.mrb[0].mxu0
        %v6501 = vadd.f32 0.0, %v6500
        %v6502 = vpop.f32.mrb[0].mxu0
        %6503 = vdwg.mxu0
        %v6504 = vmul.f32 %v6425, 0.35355338
        %v6505 = vmul.f32 %v6501, 0.35355338
        %vm6506 = vcmp.gt.f32.partialorder %v6350, 0.5
        %vm6507 = vcmp.gt.f32.partialorder %v6351, 0.5
        %v6508 = vsel %vm6506, %v6504, -1e+09
        %v6509 = vsel %vm6507, %v6505, -1e+09
        %v6510 = vsel %vm4444, %v6508, -inf
        %6511 = vmax.xlane.f32.xlu0 %v6510
        %v6512 = vpop.xlane.xlu0 %6511
        %v6513 = vsel %vm4444, %v6509, -inf
        %6514 = vmax.xlane.f32.xlu0 %v6513
        %v6515 = vpop.xlane.xlu0 %6514
        %v6516 = vsub.f32 %v6508, %v6512
        %v6517 = vsub.f32 %v6509, %v6515
        %v6518 = vmul.f32 %v6516, 1.442695
        %v6519 = vpow.pop %v6518
        %v6520 = vmul.f32 %v6517, 1.442695
        %v6521 = vpow.pop %v6520
        %v6522 = vsel %vm4444, %v6519, 0.0
        %6523 = vadd.xlane.f32.xlu0 %v6522
        %v6524 = vpop.xlane.xlu0 %6523
        %v6525 = vsel %vm4444, %v6521, 0.0
        %6526 = vadd.xlane.f32.xlu0 %v6525
        %v6527 = vpop.xlane.xlu0 %6526
        %v6528 = vrcp.pop %v6524
        %v6529 = vrcp.pop %v6527
        %v6530 = vmul.f32 %v6519, %v6528
        %v6531 = vmul.f32 %v6521, %v6529
        %6532 = vrot.lane.b32.xlu0 %v6337, 96
        %v6533 = vpop.permute.xlu0 %6532
        %v6536 = vsel %vm4444, %v6530, 0
        %6538 = vmatprep.subr.mxu0 0.0
        %6539 = vmatpush1.msra.mxu0 %v6533
        %6540 = vmatprep.subr.mxu0 0.0
        %6541 = vmatpush1.msra.mxu0 0.0
        %6542 = vmatprep.subr.mxu0 0.0
        %6543 = vmatpush1.msra.mxu0 0.0
        %6544 = vmatprep.subr.mxu0 0.0
        %6545 = vmatpush1.msra.mxu0 0.0
        %6546 = vmatprep.subr.mxu0 0.0
        %6547 = vmatpush1.msra.mxu0 0.0
        %6548 = vmatprep.subr.mxu0 0.0
        %6549 = vmatpush1.msra.mxu0 0.0
        %6550 = vmatprep.subr.mxu0 0.0
        %6551 = vmatpush1.msra.mxu0 0.0
        %6552 = vmatprep.subr.mxu0 0.0
        %6553 = vmatpush1.msra.mxu0 0.0
        %6554 = vmatprep.subr.mxu0 0.0
        %6555 = vmatpush1.msra.mxu0 0.0
        %6556 = vmatprep.subr.mxu0 0.0
        %6557 = vmatpush1.msra.mxu0 0.0
        %6558 = vmatprep.subr.mxu0 0.0
        %6559 = vmatpush1.msra.mxu0 0.0
        %6560 = vmatprep.subr.mxu0 0.0
        %6561 = vmatpush1.msra.mxu0 0.0
        %6562 = vmatprep.subr.mxu0 0.0
        %6563 = vmatpush1.msra.mxu0 0.0
        %6564 = vmatprep.subr.mxu0 0.0
        %6565 = vmatpush1.msra.mxu0 0.0
        %6566 = vmatprep.subr.mxu0 0.0
        %6567 = vmatpush1.msra.mxu0 0.0
        %6568 = vmatprep.subr.mxu0 0.0
        %6569 = vmatpush1.msra.mxu0 0.0
        %6570 = vmatprep.subr.mxu0 0.0
        %6571 = vmatpush1.msra.mxu0 0.0
        %6572 = vmatprep.subr.mxu0 0.0
        %6573 = vmatpush1.msra.mxu0 0.0
        %6574 = vmatprep.subr.mxu0 0.0
        %6575 = vmatpush1.msra.mxu0 0.0
        %6576 = vmatprep.subr.mxu0 0.0
        %6577 = vmatpush1.msra.mxu0 0.0
        %6578 = vmatprep.subr.mxu0 0.0
        %6579 = vmatpush1.msra.mxu0 0.0
        %6580 = vmatprep.subr.mxu0 0.0
        %6581 = vmatpush1.msra.mxu0 0.0
        %6582 = vmatprep.subr.mxu0 0.0
        %6583 = vmatpush1.msra.mxu0 0.0
        %6584 = vmatprep.subr.mxu0 0.0
        %6585 = vmatpush1.msra.mxu0 0.0
        %6586 = vmatprep.subr.mxu0 0.0
        %6587 = vmatpush1.msra.mxu0 0.0
        %6588 = vmatprep.subr.mxu0 0.0
        %6589 = vmatpush1.msra.mxu0 0.0
        %6590 = vmatprep.subr.mxu0 0.0
        %6591 = vmatpush1.msra.mxu0 0.0
        %6592 = vmatprep.subr.mxu0 0.0
        %6593 = vmatpush1.msra.mxu0 0.0
        %6594 = vmatprep.subr.mxu0 0.0
        %6595 = vmatpush1.msra.mxu0 0.0
        %6596 = vmatprep.subr.mxu0 0.0
        %6597 = vmatpush1.msra.mxu0 0.0
        %6598 = vmatprep.subr.mxu0 0.0
        %6599 = vmatpush1.msra.mxu0 0.0
        %6600 = vmatprep.subr.mxu0 0.0
        %6601 = vmatpush1.msra.mxu0 0.0
        %6602 = vmatprep.mubr.f32.mxu0 0.0
        %6603 = vmatmul.mubr.f32.gmra.mrb[0].mxu0 %v6536
        %v6604 = vpop.f32.mrb[0].mxu0
        %v6605 = vadd.f32 0.0, %v6604
        %v6606 = vpop.f32.mrb[0].mxu0
        %6607 = vdwg.mxu0
        %6608 = vrot.lane.b32.xlu0 %v6342, 96
        %v6609 = vpop.permute.xlu0 %6608
        %v6612 = vsel %vm4444, %v6531, 0
        %6614 = vmatprep.subr.mxu0 0.0
        %6615 = vmatpush1.msra.mxu0 %v6609
        %6616 = vmatprep.subr.mxu0 0.0
        %6617 = vmatpush1.msra.mxu0 0.0
        %6618 = vmatprep.subr.mxu0 0.0
        %6619 = vmatpush1.msra.mxu0 0.0
        %6620 = vmatprep.subr.mxu0 0.0
        %6621 = vmatpush1.msra.mxu0 0.0
        %6622 = vmatprep.subr.mxu0 0.0
        %6623 = vmatpush1.msra.mxu0 0.0
        %6624 = vmatprep.subr.mxu0 0.0
        %6625 = vmatpush1.msra.mxu0 0.0
        %6626 = vmatprep.subr.mxu0 0.0
        %6627 = vmatpush1.msra.mxu0 0.0
        %6628 = vmatprep.subr.mxu0 0.0
        %6629 = vmatpush1.msra.mxu0 0.0
        %6630 = vmatprep.subr.mxu0 0.0
        %6631 = vmatpush1.msra.mxu0 0.0
        %6632 = vmatprep.subr.mxu0 0.0
        %6633 = vmatpush1.msra.mxu0 0.0
        %6634 = vmatprep.subr.mxu0 0.0
        %6635 = vmatpush1.msra.mxu0 0.0
        %6636 = vmatprep.subr.mxu0 0.0
        %6637 = vmatpush1.msra.mxu0 0.0
        %6638 = vmatprep.subr.mxu0 0.0
        %6639 = vmatpush1.msra.mxu0 0.0
        %6640 = vmatprep.subr.mxu0 0.0
        %6641 = vmatpush1.msra.mxu0 0.0
        %6642 = vmatprep.subr.mxu0 0.0
        %6643 = vmatpush1.msra.mxu0 0.0
        %6644 = vmatprep.subr.mxu0 0.0
        %6645 = vmatpush1.msra.mxu0 0.0
        %6646 = vmatprep.subr.mxu0 0.0
        %6647 = vmatpush1.msra.mxu0 0.0
        %6648 = vmatprep.subr.mxu0 0.0
        %6649 = vmatpush1.msra.mxu0 0.0
        %6650 = vmatprep.subr.mxu0 0.0
        %6651 = vmatpush1.msra.mxu0 0.0
        %6652 = vmatprep.subr.mxu0 0.0
        %6653 = vmatpush1.msra.mxu0 0.0
        %6654 = vmatprep.subr.mxu0 0.0
        %6655 = vmatpush1.msra.mxu0 0.0
        %6656 = vmatprep.subr.mxu0 0.0
        %6657 = vmatpush1.msra.mxu0 0.0
        %6658 = vmatprep.subr.mxu0 0.0
        %6659 = vmatpush1.msra.mxu0 0.0
        %6660 = vmatprep.subr.mxu0 0.0
        %6661 = vmatpush1.msra.mxu0 0.0
        %6662 = vmatprep.subr.mxu0 0.0
        %6663 = vmatpush1.msra.mxu0 0.0
        %6664 = vmatprep.subr.mxu0 0.0
        %6665 = vmatpush1.msra.mxu0 0.0
        %6666 = vmatprep.subr.mxu0 0.0
        %6667 = vmatpush1.msra.mxu0 0.0
        %6668 = vmatprep.subr.mxu0 0.0
        %6669 = vmatpush1.msra.mxu0 0.0
        %6670 = vmatprep.subr.mxu0 0.0
        %6671 = vmatpush1.msra.mxu0 0.0
        %6672 = vmatprep.subr.mxu0 0.0
        %6673 = vmatpush1.msra.mxu0 0.0
        %6674 = vmatprep.subr.mxu0 0.0
        %6675 = vmatpush1.msra.mxu0 0.0
        %6676 = vmatprep.subr.mxu0 0.0
        %6677 = vmatpush1.msra.mxu0 0.0
        %6678 = vmatprep.mubr.f32.mxu0 0.0
        %6679 = vmatmul.mubr.f32.gmra.mrb[0].mxu0 %v6612
        %v6680 = vpop.f32.mrb[0].mxu0
        %v6681 = vadd.f32 0.0, %v6680
        %v6682 = vpop.f32.mrb[0].mxu0
        %6683 = vdwg.mxu0
        %6684 = vrot.lane.b32.xlu0 %v6245, 120
        %v6685 = vpop.permute.xlu0 %6684
        %6686 = vrot.lane.b32.xlu0 %v6337, 120
        %v6687 = vpop.permute.xlu0 %6686
        %v6688 = vsel %vm4444, %v6685, 0
        %v6690 = vsel %vm4444, %v6687, 0
        %6692 = vmatprep.subr.mxu0 0.0
        %6693 = vmatpush1.xpose.msra.mxu0 %v6690
        %6694 = vmatprep.subr.mxu0 0.0
        %6695 = vmatpush1.xpose.msra.mxu0 0.0
        %6696 = vmatprep.subr.mxu0 0.0
        %6697 = vmatpush1.xpose.msra.mxu0 0.0
        %6698 = vmatprep.subr.mxu0 0.0
        %6699 = vmatpush1.xpose.msra.mxu0 0.0
        %6700 = vmatprep.subr.mxu0 0.0
        %6701 = vmatpush1.xpose.msra.mxu0 0.0
        %6702 = vmatprep.subr.mxu0 0.0
        %6703 = vmatpush1.xpose.msra.mxu0 0.0
        %6704 = vmatprep.subr.mxu0 0.0
        %6705 = vmatpush1.xpose.msra.mxu0 0.0
        %6706 = vmatprep.subr.mxu0 0.0
        %6707 = vmatpush1.xpose.msra.mxu0 0.0
        %6708 = vmatprep.subr.mxu0 0.0
        %6709 = vmatpush1.xpose.msra.mxu0 0.0
        %6710 = vmatprep.subr.mxu0 0.0
        %6711 = vmatpush1.xpose.msra.mxu0 0.0
        %6712 = vmatprep.subr.mxu0 0.0
        %6713 = vmatpush1.xpose.msra.mxu0 0.0
        %6714 = vmatprep.subr.mxu0 0.0
        %6715 = vmatpush1.xpose.msra.mxu0 0.0
        %6716 = vmatprep.subr.mxu0 0.0
        %6717 = vmatpush1.xpose.msra.mxu0 0.0
        %6718 = vmatprep.subr.mxu0 0.0
        %6719 = vmatpush1.xpose.msra.mxu0 0.0
        %6720 = vmatprep.subr.mxu0 0.0
        %6721 = vmatpush1.xpose.msra.mxu0 0.0
        %6722 = vmatprep.subr.mxu0 0.0
        %6723 = vmatpush1.xpose.msra.mxu0 0.0
        %6724 = vmatprep.subr.mxu0 0.0
        %6725 = vmatpush1.xpose.msra.mxu0 0.0
        %6726 = vmatprep.subr.mxu0 0.0
        %6727 = vmatpush1.xpose.msra.mxu0 0.0
        %6728 = vmatprep.subr.mxu0 0.0
        %6729 = vmatpush1.xpose.msra.mxu0 0.0
        %6730 = vmatprep.subr.mxu0 0.0
        %6731 = vmatpush1.xpose.msra.mxu0 0.0
        %6732 = vmatprep.subr.mxu0 0.0
        %6733 = vmatpush1.xpose.msra.mxu0 0.0
        %6734 = vmatprep.subr.mxu0 0.0
        %6735 = vmatpush1.xpose.msra.mxu0 0.0
        %6736 = vmatprep.subr.mxu0 0.0
        %6737 = vmatpush1.xpose.msra.mxu0 0.0
        %6738 = vmatprep.subr.mxu0 0.0
        %6739 = vmatpush1.xpose.msra.mxu0 0.0
        %6740 = vmatprep.subr.mxu0 0.0
        %6741 = vmatpush1.xpose.msra.mxu0 0.0
        %6742 = vmatprep.subr.mxu0 0.0
        %6743 = vmatpush1.xpose.msra.mxu0 0.0
        %6744 = vmatprep.subr.mxu0 0.0
        %6745 = vmatpush1.xpose.msra.mxu0 0.0
        %6746 = vmatprep.subr.mxu0 0.0
        %6747 = vmatpush1.xpose.msra.mxu0 0.0
        %6748 = vmatprep.subr.mxu0 0.0
        %6749 = vmatpush1.xpose.msra.mxu0 0.0
        %6750 = vmatprep.subr.mxu0 0.0
        %6751 = vmatpush1.xpose.msra.mxu0 0.0
        %6752 = vmatprep.subr.mxu0 0.0
        %6753 = vmatpush1.xpose.msra.mxu0 0.0
        %6754 = vmatprep.subr.mxu0 0.0
        %6755 = vmatpush1.xpose.msra.mxu0 0.0
        %6756 = vmatprep.mubr.f32.mxu0 0.0
        %6757 = vmatmul.mubr.f32.gmra.mrb[0].mxu0 %v6688
        %v6758 = vpop.f32.mrb[0].mxu0
        %v6759 = vadd.f32 0.0, %v6758
        %v6760 = vpop.f32.mrb[0].mxu0
        %6761 = vdwg.mxu0
        %6762 = vrot.lane.b32.xlu0 %v6250, 120
        %v6763 = vpop.permute.xlu0 %6762
        %6764 = vrot.lane.b32.xlu0 %v6342, 120
        %v6765 = vpop.permute.xlu0 %6764
        %v6766 = vsel %vm4444, %v6763, 0
        %v6768 = vsel %vm4444, %v6765, 0
        %6770 = vmatprep.subr.mxu0 0.0
        %6771 = vmatpush1.xpose.msra.mxu0 %v6768
        %6772 = vmatprep.subr.mxu0 0.0
        %6773 = vmatpush1.xpose.msra.mxu0 0.0
        %6774 = vmatprep.subr.mxu0 0.0
        %6775 = vmatpush1.xpose.msra.mxu0 0.0
        %6776 = vmatprep.subr.mxu0 0.0
        %6777 = vmatpush1.xpose.msra.mxu0 0.0
        %6778 = vmatprep.subr.mxu0 0.0
        %6779 = vmatpush1.xpose.msra.mxu0 0.0
        %6780 = vmatprep.subr.mxu0 0.0
        %6781 = vmatpush1.xpose.msra.mxu0 0.0
        %6782 = vmatprep.subr.mxu0 0.0
        %6783 = vmatpush1.xpose.msra.mxu0 0.0
        %6784 = vmatprep.subr.mxu0 0.0
        %6785 = vmatpush1.xpose.msra.mxu0 0.0
        %6786 = vmatprep.subr.mxu0 0.0
        %6787 = vmatpush1.xpose.msra.mxu0 0.0
        %6788 = vmatprep.subr.mxu0 0.0
        %6789 = vmatpush1.xpose.msra.mxu0 0.0
        %6790 = vmatprep.subr.mxu0 0.0
        %6791 = vmatpush1.xpose.msra.mxu0 0.0
        %6792 = vmatprep.subr.mxu0 0.0
        %6793 = vmatpush1.xpose.msra.mxu0 0.0
        %6794 = vmatprep.subr.mxu0 0.0
        %6795 = vmatpush1.xpose.msra.mxu0 0.0
        %6796 = vmatprep.subr.mxu0 0.0
        %6797 = vmatpush1.xpose.msra.mxu0 0.0
        %6798 = vmatprep.subr.mxu0 0.0
        %6799 = vmatpush1.xpose.msra.mxu0 0.0
        %6800 = vmatprep.subr.mxu0 0.0
        %6801 = vmatpush1.xpose.msra.mxu0 0.0
        %6802 = vmatprep.subr.mxu0 0.0
        %6803 = vmatpush1.xpose.msra.mxu0 0.0
        %6804 = vmatprep.subr.mxu0 0.0
        %6805 = vmatpush1.xpose.msra.mxu0 0.0
        %6806 = vmatprep.subr.mxu0 0.0
        %6807 = vmatpush1.xpose.msra.mxu0 0.0
        %6808 = vmatprep.subr.mxu0 0.0
        %6809 = vmatpush1.xpose.msra.mxu0 0.0
        %6810 = vmatprep.subr.mxu0 0.0
        %6811 = vmatpush1.xpose.msra.mxu0 0.0
        %6812 = vmatprep.subr.mxu0 0.0
        %6813 = vmatpush1.xpose.msra.mxu0 0.0
        %6814 = vmatprep.subr.mxu0 0.0
        %6815 = vmatpush1.xpose.msra.mxu0 0.0
        %6816 = vmatprep.subr.mxu0 0.0
        %6817 = vmatpush1.xpose.msra.mxu0 0.0
        %6818 = vmatprep.subr.mxu0 0.0
        %6819 = vmatpush1.xpose.msra.mxu0 0.0
        %6820 = vmatprep.subr.mxu0 0.0
        %6821 = vmatpush1.xpose.msra.mxu0 0.0
        %6822 = vmatprep.subr.mxu0 0.0
        %6823 = vmatpush1.xpose.msra.mxu0 0.0
        %6824 = vmatprep.subr.mxu0 0.0
        %6825 = vmatpush1.xpose.msra.mxu0 0.0
        %6826 = vmatprep.subr.mxu0 0.0
        %6827 = vmatpush1.xpose.msra.mxu0 0.0
        %6828 = vmatprep.subr.mxu0 0.0
        %6829 = vmatpush1.xpose.msra.mxu0 0.0
        %6830 = vmatprep.subr.mxu0 0.0
        %6831 = vmatpush1.xpose.msra.mxu0 0.0
        %6832 = vmatprep.subr.mxu0 0.0
        %6833 = vmatpush1.xpose.msra.mxu0 0.0
        %6834 = vmatprep.mubr.f32.mxu0 0.0
        %6835 = vmatmul.mubr.f32.gmra.mrb[0].mxu0 %v6766
        %v6836 = vpop.f32.mrb[0].mxu0
        %v6837 = vadd.f32 0.0, %v6836
        %v6838 = vpop.f32.mrb[0].mxu0
        %6839 = vdwg.mxu0
        %v6840 = vmul.f32 %v6759, 0.35355338
        %v6841 = vmul.f32 %v6837, 0.35355338
        %v6842 = vsel %vm6506, %v6840, -1e+09
        %v6843 = vsel %vm6507, %v6841, -1e+09
        %v6844 = vsel %vm4444, %v6842, -inf
        %6845 = vmax.xlane.f32.xlu0 %v6844
        %v6846 = vpop.xlane.xlu0 %6845
        %v6847 = vsel %vm4444, %v6843, -inf
        %6848 = vmax.xlane.f32.xlu0 %v6847
        %v6849 = vpop.xlane.xlu0 %6848
        %v6850 = vsub.f32 %v6842, %v6846
        %v6851 = vsub.f32 %v6843, %v6849
        %v6852 = vmul.f32 %v6850, 1.442695
        %v6853 = vpow.pop %v6852
        %v6854 = vmul.f32 %v6851, 1.442695
        %v6855 = vpow.pop %v6854
        %v6856 = vsel %vm4444, %v6853, 0.0
        %6857 = vadd.xlane.f32.xlu0 %v6856
        %v6858 = vpop.xlane.xlu0 %6857
        %v6859 = vsel %vm4444, %v6855, 0.0
        %6860 = vadd.xlane.f32.xlu0 %v6859
        %v6861 = vpop.xlane.xlu0 %6860
        %v6862 = vrcp.pop %v6858
        %v6863 = vrcp.pop %v6861
        %v6864 = vmul.f32 %v6853, %v6862
        %v6865 = vmul.f32 %v6855, %v6863
        %6866 = vrot.lane.b32.xlu0 %v6337, 88
        %v6867 = vpop.permute.xlu0 %6866
        %v6870 = vsel %vm4444, %v6864, 0
        %6872 = vmatprep.subr.mxu0 0.0
        %6873 = vmatpush1.msra.mxu0 %v6867
        %6874 = vmatprep.subr.mxu0 0.0
        %6875 = vmatpush1.msra.mxu0 0.0
        %6876 = vmatprep.subr.mxu0 0.0
        %6877 = vmatpush1.msra.mxu0 0.0
        %6878 = vmatprep.subr.mxu0 0.0
        %6879 = vmatpush1.msra.mxu0 0.0
        %6880 = vmatprep.subr.mxu0 0.0
        %6881 = vmatpush1.msra.mxu0 0.0
        %6882 = vmatprep.subr.mxu0 0.0
        %6883 = vmatpush1.msra.mxu0 0.0
        %6884 = vmatprep.subr.mxu0 0.0
        %6885 = vmatpush1.msra.mxu0 0.0
        %6886 = vmatprep.subr.mxu0 0.0
        %6887 = vmatpush1.msra.mxu0 0.0
        %6888 = vmatprep.subr.mxu0 0.0
        %6889 = vmatpush1.msra.mxu0 0.0
        %6890 = vmatprep.subr.mxu0 0.0
        %6891 = vmatpush1.msra.mxu0 0.0
        %6892 = vmatprep.subr.mxu0 0.0
        %6893 = vmatpush1.msra.mxu0 0.0
        %6894 = vmatprep.subr.mxu0 0.0
        %6895 = vmatpush1.msra.mxu0 0.0
        %6896 = vmatprep.subr.mxu0 0.0
        %6897 = vmatpush1.msra.mxu0 0.0
        %6898 = vmatprep.subr.mxu0 0.0
        %6899 = vmatpush1.msra.mxu0 0.0
        %6900 = vmatprep.subr.mxu0 0.0
        %6901 = vmatpush1.msra.mxu0 0.0
        %6902 = vmatprep.subr.mxu0 0.0
        %6903 = vmatpush1.msra.mxu0 0.0
        %6904 = vmatprep.subr.mxu0 0.0
        %6905 = vmatpush1.msra.mxu0 0.0
        %6906 = vmatprep.subr.mxu0 0.0
        %6907 = vmatpush1.msra.mxu0 0.0
        %6908 = vmatprep.subr.mxu0 0.0
        %6909 = vmatpush1.msra.mxu0 0.0
        %6910 = vmatprep.subr.mxu0 0.0
        %6911 = vmatpush1.msra.mxu0 0.0
        %6912 = vmatprep.subr.mxu0 0.0
        %6913 = vmatpush1.msra.mxu0 0.0
        %6914 = vmatprep.subr.mxu0 0.0
        %6915 = vmatpush1.msra.mxu0 0.0
        %6916 = vmatprep.subr.mxu0 0.0
        %6917 = vmatpush1.msra.mxu0 0.0
        %6918 = vmatprep.subr.mxu0 0.0
        %6919 = vmatpush1.msra.mxu0 0.0
        %6920 = vmatprep.subr.mxu0 0.0
        %6921 = vmatpush1.msra.mxu0 0.0
        %6922 = vmatprep.subr.mxu0 0.0
        %6923 = vmatpush1.msra.mxu0 0.0
        %6924 = vmatprep.subr.mxu0 0.0
        %6925 = vmatpush1.msra.mxu0 0.0
        %6926 = vmatprep.subr.mxu0 0.0
        %6927 = vmatpush1.msra.mxu0 0.0
        %6928 = vmatprep.subr.mxu0 0.0
        %6929 = vmatpush1.msra.mxu0 0.0
        %6930 = vmatprep.subr.mxu0 0.0
        %6931 = vmatpush1.msra.mxu0 0.0
        %6932 = vmatprep.subr.mxu0 0.0
        %6933 = vmatpush1.msra.mxu0 0.0
        %6934 = vmatprep.subr.mxu0 0.0
        %6935 = vmatpush1.msra.mxu0 0.0
        %6936 = vmatprep.mubr.f32.mxu0 0.0
        %6937 = vmatmul.mubr.f32.gmra.mrb[0].mxu0 %v6870
        %v6938 = vpop.f32.mrb[0].mxu0
        %v6939 = vadd.f32 0.0, %v6938
        %v6940 = vpop.f32.mrb[0].mxu0
        %6941 = vdwg.mxu0
        %6942 = vrot.lane.b32.xlu0 %v6342, 88
        %v6943 = vpop.permute.xlu0 %6942
        %v6946 = vsel %vm4444, %v6865, 0
        %6948 = vmatprep.subr.mxu0 0.0
        %6949 = vmatpush1.msra.mxu0 %v6943
        %6950 = vmatprep.subr.mxu0 0.0
        %6951 = vmatpush1.msra.mxu0 0.0
        %6952 = vmatprep.subr.mxu0 0.0
        %6953 = vmatpush1.msra.mxu0 0.0
        %6954 = vmatprep.subr.mxu0 0.0
        %6955 = vmatpush1.msra.mxu0 0.0
        %6956 = vmatprep.subr.mxu0 0.0
        %6957 = vmatpush1.msra.mxu0 0.0
        %6958 = vmatprep.subr.mxu0 0.0
        %6959 = vmatpush1.msra.mxu0 0.0
        %6960 = vmatprep.subr.mxu0 0.0
        %6961 = vmatpush1.msra.mxu0 0.0
        %6962 = vmatprep.subr.mxu0 0.0
        %6963 = vmatpush1.msra.mxu0 0.0
        %6964 = vmatprep.subr.mxu0 0.0
        %6965 = vmatpush1.msra.mxu0 0.0
        %6966 = vmatprep.subr.mxu0 0.0
        %6967 = vmatpush1.msra.mxu0 0.0
        %6968 = vmatprep.subr.mxu0 0.0
        %6969 = vmatpush1.msra.mxu0 0.0
        %6970 = vmatprep.subr.mxu0 0.0
        %6971 = vmatpush1.msra.mxu0 0.0
        %6972 = vmatprep.subr.mxu0 0.0
        %6973 = vmatpush1.msra.mxu0 0.0
        %6974 = vmatprep.subr.mxu0 0.0
        %6975 = vmatpush1.msra.mxu0 0.0
        %6976 = vmatprep.subr.mxu0 0.0
        %6977 = vmatpush1.msra.mxu0 0.0
        %6978 = vmatprep.subr.mxu0 0.0
        %6979 = vmatpush1.msra.mxu0 0.0
        %6980 = vmatprep.subr.mxu0 0.0
        %6981 = vmatpush1.msra.mxu0 0.0
        %6982 = vmatprep.subr.mxu0 0.0
        %6983 = vmatpush1.msra.mxu0 0.0
        %6984 = vmatprep.subr.mxu0 0.0
        %6985 = vmatpush1.msra.mxu0 0.0
        %6986 = vmatprep.subr.mxu0 0.0
        %6987 = vmatpush1.msra.mxu0 0.0
        %6988 = vmatprep.subr.mxu0 0.0
        %6989 = vmatpush1.msra.mxu0 0.0
        %6990 = vmatprep.subr.mxu0 0.0
        %6991 = vmatpush1.msra.mxu0 0.0
        %6992 = vmatprep.subr.mxu0 0.0
        %6993 = vmatpush1.msra.mxu0 0.0
        %6994 = vmatprep.subr.mxu0 0.0
        %6995 = vmatpush1.msra.mxu0 0.0
        %6996 = vmatprep.subr.mxu0 0.0
        %6997 = vmatpush1.msra.mxu0 0.0
        %6998 = vmatprep.subr.mxu0 0.0
        %6999 = vmatpush1.msra.mxu0 0.0
        %7000 = vmatprep.subr.mxu0 0.0
        %7001 = vmatpush1.msra.mxu0 0.0
        %7002 = vmatprep.subr.mxu0 0.0
        %7003 = vmatpush1.msra.mxu0 0.0
        %7004 = vmatprep.subr.mxu0 0.0
        %7005 = vmatpush1.msra.mxu0 0.0
        %7006 = vmatprep.subr.mxu0 0.0
        %7007 = vmatpush1.msra.mxu0 0.0
        %7008 = vmatprep.subr.mxu0 0.0
        %7009 = vmatpush1.msra.mxu0 0.0
        %7010 = vmatprep.subr.mxu0 0.0
        %7011 = vmatpush1.msra.mxu0 0.0
        %7012 = vmatprep.mubr.f32.mxu0 0.0
        %7013 = vmatmul.mubr.f32.gmra.mrb[0].mxu0 %v6946
        %v7014 = vpop.f32.mrb[0].mxu0
        %v7015 = vadd.f32 0.0, %v7014
        %v7016 = vpop.f32.mrb[0].mxu0
        %7017 = vdwg.mxu0
        %v7019 = vsel %vm4444, %v6939, 0
        %v7022 = vsel %vm4444, %v7015, 0
        %7024 = vmatprep.subr.mxu0 0.0
        %7025 = vmatpush1.msra.mxu0 %v6346
        %7026 = vmatprep.subr.mxu0 0.0
        %7027 = vmatpush1.msra.mxu0 0.0
        %7028 = vmatprep.subr.mxu0 0.0
        %7029 = vmatpush1.msra.mxu0 0.0
        %7030 = vmatprep.subr.mxu0 0.0
        %7031 = vmatpush1.msra.mxu0 0.0
        %7032 = vmatprep.subr.mxu0 0.0
        %7033 = vmatpush1.msra.mxu0 0.0
        %7034 = vmatprep.subr.mxu0 0.0
        %7035 = vmatpush1.msra.mxu0 0.0
        %7036 = vmatprep.subr.mxu0 0.0
        %7037 = vmatpush1.msra.mxu0 0.0
        %7038 = vmatprep.subr.mxu0 0.0
        %7039 = vmatpush1.msra.mxu0 0.0
        %7040 = vmatprep.subr.mxu0 0.0
        %7041 = vmatpush1.msra.mxu0 0.0
        %7042 = vmatprep.subr.mxu0 0.0
        %7043 = vmatpush1.msra.mxu0 0.0
        %7044 = vmatprep.subr.mxu0 0.0
        %7045 = vmatpush1.msra.mxu0 0.0
        %7046 = vmatprep.subr.mxu0 0.0
        %7047 = vmatpush1.msra.mxu0 0.0
        %7048 = vmatprep.subr.mxu0 0.0
        %7049 = vmatpush1.msra.mxu0 0.0
        %7050 = vmatprep.subr.mxu0 0.0
        %7051 = vmatpush1.msra.mxu0 0.0
        %7052 = vmatprep.subr.mxu0 0.0
        %7053 = vmatpush1.msra.mxu0 0.0
        %7054 = vmatprep.subr.mxu0 0.0
        %7055 = vmatpush1.msra.mxu0 0.0
        %7056 = vmatprep.subr.mxu0 0.0
        %7057 = vmatpush1.msra.mxu0 0.0
        %7058 = vmatprep.subr.mxu0 0.0
        %7059 = vmatpush1.msra.mxu0 0.0
        %7060 = vmatprep.subr.mxu0 0.0
        %7061 = vmatpush1.msra.mxu0 0.0
        %7062 = vmatprep.subr.mxu0 0.0
        %7063 = vmatpush1.msra.mxu0 0.0
        %7064 = vmatprep.subr.mxu0 0.0
        %7065 = vmatpush1.msra.mxu0 0.0
        %7066 = vmatprep.subr.mxu0 0.0
        %7067 = vmatpush1.msra.mxu0 0.0
        %7068 = vmatprep.subr.mxu0 0.0
        %7069 = vmatpush1.msra.mxu0 0.0
        %7070 = vmatprep.subr.mxu0 0.0
        %7071 = vmatpush1.msra.mxu0 0.0
        %7072 = vmatprep.subr.mxu0 0.0
        %7073 = vmatpush1.msra.mxu0 0.0
        %7074 = vmatprep.subr.mxu0 0.0
        %7075 = vmatpush1.msra.mxu0 0.0
        %7076 = vmatprep.subr.mxu0 0.0
        %7077 = vmatpush1.msra.mxu0 0.0
        %7078 = vmatprep.subr.mxu0 0.0
        %7079 = vmatpush1.msra.mxu0 0.0
        %7080 = vmatprep.subr.mxu0 0.0
        %7081 = vmatpush1.msra.mxu0 0.0
        %7082 = vmatprep.subr.mxu0 0.0
        %7083 = vmatpush1.msra.mxu0 0.0
        %7084 = vmatprep.subr.mxu0 0.0
        %7085 = vmatpush1.msra.mxu0 0.0
        %7086 = vmatprep.subr.mxu0 0.0
        %7087 = vmatpush1.msra.mxu0 0.0
        %7088 = vmatprep.mubr.f32.mxu0 0.0
        %7089 = vmatmul.mubr.f32.gmra.mrb[0].mxu0 %v7019
        %v7090 = vpop.f32.mrb[0].mxu0
        %v7091 = vadd.f32 0.0, %v7090
        %v7092 = vpop.f32.mrb[0].mxu0
        %7093 = vmatprep.mubr.f32.mxu0 0.0
        %7094 = vmatmul.mubr.f32.gmra.mrb[0].mxu0 %v7022
        %v7095 = vpop.f32.mrb[0].mxu0
        %v7096 = vadd.f32 0.0, %v7095
        %v7097 = vpop.f32.mrb[0].mxu0
        %7098 = vdwg.mxu0
        %v7100 = vsel %vm4444, %v6605, 0
        %v7103 = vsel %vm4444, %v6681, 0
        %7105 = vmatprep.subr.mxu0 0.0
        %7106 = vmatpush1.msra.mxu0 %v6345
        %7107 = vmatprep.subr.mxu0 0.0
        %7108 = vmatpush1.msra.mxu0 0.0
        %7109 = vmatprep.subr.mxu0 0.0
        %7110 = vmatpush1.msra.mxu0 0.0
        %7111 = vmatprep.subr.mxu0 0.0
        %7112 = vmatpush1.msra.mxu0 0.0
        %7113 = vmatprep.subr.mxu0 0.0
        %7114 = vmatpush1.msra.mxu0 0.0
        %7115 = vmatprep.subr.mxu0 0.0
        %7116 = vmatpush1.msra.mxu0 0.0
        %7117 = vmatprep.subr.mxu0 0.0
        %7118 = vmatpush1.msra.mxu0 0.0
        %7119 = vmatprep.subr.mxu0 0.0
        %7120 = vmatpush1.msra.mxu0 0.0
        %7121 = vmatprep.subr.mxu0 0.0
        %7122 = vmatpush1.msra.mxu0 0.0
        %7123 = vmatprep.subr.mxu0 0.0
        %7124 = vmatpush1.msra.mxu0 0.0
        %7125 = vmatprep.subr.mxu0 0.0
        %7126 = vmatpush1.msra.mxu0 0.0
        %7127 = vmatprep.subr.mxu0 0.0
        %7128 = vmatpush1.msra.mxu0 0.0
        %7129 = vmatprep.subr.mxu0 0.0
        %7130 = vmatpush1.msra.mxu0 0.0
        %7131 = vmatprep.subr.mxu0 0.0
        %7132 = vmatpush1.msra.mxu0 0.0
        %7133 = vmatprep.subr.mxu0 0.0
        %7134 = vmatpush1.msra.mxu0 0.0
        %7135 = vmatprep.subr.mxu0 0.0
        %7136 = vmatpush1.msra.mxu0 0.0
        %7137 = vmatprep.subr.mxu0 0.0
        %7138 = vmatpush1.msra.mxu0 0.0
        %7139 = vmatprep.subr.mxu0 0.0
        %7140 = vmatpush1.msra.mxu0 0.0
        %7141 = vmatprep.subr.mxu0 0.0
        %7142 = vmatpush1.msra.mxu0 0.0
        %7143 = vmatprep.subr.mxu0 0.0
        %7144 = vmatpush1.msra.mxu0 0.0
        %7145 = vmatprep.subr.mxu0 0.0
        %7146 = vmatpush1.msra.mxu0 0.0
        %7147 = vmatprep.subr.mxu0 0.0
        %7148 = vmatpush1.msra.mxu0 0.0
        %7149 = vmatprep.subr.mxu0 0.0
        %7150 = vmatpush1.msra.mxu0 0.0
        %7151 = vmatprep.subr.mxu0 0.0
        %7152 = vmatpush1.msra.mxu0 0.0
        %7153 = vmatprep.subr.mxu0 0.0
        %7154 = vmatpush1.msra.mxu0 0.0
        %7155 = vmatprep.subr.mxu0 0.0
        %7156 = vmatpush1.msra.mxu0 0.0
        %7157 = vmatprep.subr.mxu0 0.0
        %7158 = vmatpush1.msra.mxu0 0.0
        %7159 = vmatprep.subr.mxu0 0.0
        %7160 = vmatpush1.msra.mxu0 0.0
        %7161 = vmatprep.subr.mxu0 0.0
        %7162 = vmatpush1.msra.mxu0 0.0
        %7163 = vmatprep.subr.mxu0 0.0
        %7164 = vmatpush1.msra.mxu0 0.0
        %7165 = vmatprep.subr.mxu0 0.0
        %7166 = vmatpush1.msra.mxu0 0.0
        %7167 = vmatprep.subr.mxu0 0.0
        %7168 = vmatpush1.msra.mxu0 0.0
        %7169 = vmatprep.mubr.f32.mxu0 0.0
        %7170 = vmatmul.mubr.f32.gmra.mrb[0].mxu0 %v7100
        %v7171 = vpop.f32.mrb[0].mxu0
        %v7172 = vadd.f32 %v7091, %v7171
        %v7173 = vpop.f32.mrb[0].mxu0
        %7174 = vmatprep.mubr.f32.mxu0 0.0
        %7175 = vmatmul.mubr.f32.gmra.mrb[0].mxu0 %v7103
        %v7176 = vpop.f32.mrb[0].mxu0
        %v7177 = vadd.f32 %v7096, %v7176
        %v7178 = vpop.f32.mrb[0].mxu0
        %7179 = vdwg.mxu0
        %7180 = vrot.lane.b32.xlu0 %v6245, 112
        %v7181 = vpop.permute.xlu0 %7180
        %7182 = vrot.lane.b32.xlu0 %v6337, 112
        %v7183 = vpop.permute.xlu0 %7182
        %v7184 = vsel %vm4444, %v7181, 0
        %v7186 = vsel %vm4444, %v7183, 0
        %7188 = vmatprep.subr.mxu0 0.0
        %7189 = vmatpush1.xpose.msra.mxu0 %v7186
        %7190 = vmatprep.subr.mxu0 0.0
        %7191 = vmatpush1.xpose.msra.mxu0 0.0
        %7192 = vmatprep.subr.mxu0 0.0
        %7193 = vmatpush1.xpose.msra.mxu0 0.0
        %7194 = vmatprep.subr.mxu0 0.0
        %7195 = vmatpush1.xpose.msra.mxu0 0.0
        %7196 = vmatprep.subr.mxu0 0.0
        %7197 = vmatpush1.xpose.msra.mxu0 0.0
        %7198 = vmatprep.subr.mxu0 0.0
        %7199 = vmatpush1.xpose.msra.mxu0 0.0
        %7200 = vmatprep.subr.mxu0 0.0
        %7201 = vmatpush1.xpose.msra.mxu0 0.0
        %7202 = vmatprep.subr.mxu0 0.0
        %7203 = vmatpush1.xpose.msra.mxu0 0.0
        %7204 = vmatprep.subr.mxu0 0.0
        %7205 = vmatpush1.xpose.msra.mxu0 0.0
        %7206 = vmatprep.subr.mxu0 0.0
        %7207 = vmatpush1.xpose.msra.mxu0 0.0
        %7208 = vmatprep.subr.mxu0 0.0
        %7209 = vmatpush1.xpose.msra.mxu0 0.0
        %7210 = vmatprep.subr.mxu0 0.0
        %7211 = vmatpush1.xpose.msra.mxu0 0.0
        %7212 = vmatprep.subr.mxu0 0.0
        %7213 = vmatpush1.xpose.msra.mxu0 0.0
        %7214 = vmatprep.subr.mxu0 0.0
        %7215 = vmatpush1.xpose.msra.mxu0 0.0
        %7216 = vmatprep.subr.mxu0 0.0
        %7217 = vmatpush1.xpose.msra.mxu0 0.0
        %7218 = vmatprep.subr.mxu0 0.0
        %7219 = vmatpush1.xpose.msra.mxu0 0.0
        %7220 = vmatprep.subr.mxu0 0.0
        %7221 = vmatpush1.xpose.msra.mxu0 0.0
        %7222 = vmatprep.subr.mxu0 0.0
        %7223 = vmatpush1.xpose.msra.mxu0 0.0
        %7224 = vmatprep.subr.mxu0 0.0
        %7225 = vmatpush1.xpose.msra.mxu0 0.0
        %7226 = vmatprep.subr.mxu0 0.0
        %7227 = vmatpush1.xpose.msra.mxu0 0.0
        %7228 = vmatprep.subr.mxu0 0.0
        %7229 = vmatpush1.xpose.msra.mxu0 0.0
        %7230 = vmatprep.subr.mxu0 0.0
        %7231 = vmatpush1.xpose.msra.mxu0 0.0
        %7232 = vmatprep.subr.mxu0 0.0
        %7233 = vmatpush1.xpose.msra.mxu0 0.0
        %7234 = vmatprep.subr.mxu0 0.0
        %7235 = vmatpush1.xpose.msra.mxu0 0.0
        %7236 = vmatprep.subr.mxu0 0.0
        %7237 = vmatpush1.xpose.msra.mxu0 0.0
        %7238 = vmatprep.subr.mxu0 0.0
        %7239 = vmatpush1.xpose.msra.mxu0 0.0
        %7240 = vmatprep.subr.mxu0 0.0
        %7241 = vmatpush1.xpose.msra.mxu0 0.0
        %7242 = vmatprep.subr.mxu0 0.0
        %7243 = vmatpush1.xpose.msra.mxu0 0.0
        %7244 = vmatprep.subr.mxu0 0.0
        %7245 = vmatpush1.xpose.msra.mxu0 0.0
        %7246 = vmatprep.subr.mxu0 0.0
        %7247 = vmatpush1.xpose.msra.mxu0 0.0
        %7248 = vmatprep.subr.mxu0 0.0
        %7249 = vmatpush1.xpose.msra.mxu0 0.0
        %7250 = vmatprep.subr.mxu0 0.0
        %7251 = vmatpush1.xpose.msra.mxu0 0.0
        %7252 = vmatprep.mubr.f32.mxu0 0.0
        %7253 = vmatmul.mubr.f32.gmra.mrb[0].mxu0 %v7184
        %v7254 = vpop.f32.mrb[0].mxu0
        %v7255 = vadd.f32 0.0, %v7254
        %v7256 = vpop.f32.mrb[0].mxu0
        %7257 = vdwg.mxu0
        %7258 = vrot.lane.b32.xlu0 %v6250, 112
        %v7259 = vpop.permute.xlu0 %7258
        %7260 = vrot.lane.b32.xlu0 %v6342, 112
        %v7261 = vpop.permute.xlu0 %7260
        %v7262 = vsel %vm4444, %v7259, 0
        %v7264 = vsel %vm4444, %v7261, 0
        %7266 = vmatprep.subr.mxu0 0.0
        %7267 = vmatpush1.xpose.msra.mxu0 %v7264
        %7268 = vmatprep.subr.mxu0 0.0
        %7269 = vmatpush1.xpose.msra.mxu0 0.0
        %7270 = vmatprep.subr.mxu0 0.0
        %7271 = vmatpush1.xpose.msra.mxu0 0.0
        %7272 = vmatprep.subr.mxu0 0.0
        %7273 = vmatpush1.xpose.msra.mxu0 0.0
        %7274 = vmatprep.subr.mxu0 0.0
        %7275 = vmatpush1.xpose.msra.mxu0 0.0
        %7276 = vmatprep.subr.mxu0 0.0
        %7277 = vmatpush1.xpose.msra.mxu0 0.0
        %7278 = vmatprep.subr.mxu0 0.0
        %7279 = vmatpush1.xpose.msra.mxu0 0.0
        %7280 = vmatprep.subr.mxu0 0.0
        %7281 = vmatpush1.xpose.msra.mxu0 0.0
        %7282 = vmatprep.subr.mxu0 0.0
        %7283 = vmatpush1.xpose.msra.mxu0 0.0
        %7284 = vmatprep.subr.mxu0 0.0
        %7285 = vmatpush1.xpose.msra.mxu0 0.0
        %7286 = vmatprep.subr.mxu0 0.0
        %7287 = vmatpush1.xpose.msra.mxu0 0.0
        %7288 = vmatprep.subr.mxu0 0.0
        %7289 = vmatpush1.xpose.msra.mxu0 0.0
        %7290 = vmatprep.subr.mxu0 0.0
        %7291 = vmatpush1.xpose.msra.mxu0 0.0
        %7292 = vmatprep.subr.mxu0 0.0
        %7293 = vmatpush1.xpose.msra.mxu0 0.0
        %7294 = vmatprep.subr.mxu0 0.0
        %7295 = vmatpush1.xpose.msra.mxu0 0.0
        %7296 = vmatprep.subr.mxu0 0.0
        %7297 = vmatpush1.xpose.msra.mxu0 0.0
        %7298 = vmatprep.subr.mxu0 0.0
        %7299 = vmatpush1.xpose.msra.mxu0 0.0
        %7300 = vmatprep.subr.mxu0 0.0
        %7301 = vmatpush1.xpose.msra.mxu0 0.0
        %7302 = vmatprep.subr.mxu0 0.0
        %7303 = vmatpush1.xpose.msra.mxu0 0.0
        %7304 = vmatprep.subr.mxu0 0.0
        %7305 = vmatpush1.xpose.msra.mxu0 0.0
        %7306 = vmatprep.subr.mxu0 0.0
        %7307 = vmatpush1.xpose.msra.mxu0 0.0
        %7308 = vmatprep.subr.mxu0 0.0
        %7309 = vmatpush1.xpose.msra.mxu0 0.0
        %7310 = vmatprep.subr.mxu0 0.0
        %7311 = vmatpush1.xpose.msra.mxu0 0.0
        %7312 = vmatprep.subr.mxu0 0.0
        %7313 = vmatpush1.xpose.msra.mxu0 0.0
        %7314 = vmatprep.subr.mxu0 0.0
        %7315 = vmatpush1.xpose.msra.mxu0 0.0
        %7316 = vmatprep.subr.mxu0 0.0
        %7317 = vmatpush1.xpose.msra.mxu0 0.0
        %7318 = vmatprep.subr.mxu0 0.0
        %7319 = vmatpush1.xpose.msra.mxu0 0.0
        %7320 = vmatprep.subr.mxu0 0.0
        %7321 = vmatpush1.xpose.msra.mxu0 0.0
        %7322 = vmatprep.subr.mxu0 0.0
        %7323 = vmatpush1.xpose.msra.mxu0 0.0
        %7324 = vmatprep.subr.mxu0 0.0
        %7325 = vmatpush1.xpose.msra.mxu0 0.0
        %7326 = vmatprep.subr.mxu0 0.0
        %7327 = vmatpush1.xpose.msra.mxu0 0.0
        %7328 = vmatprep.subr.mxu0 0.0
        %7329 = vmatpush1.xpose.msra.mxu0 0.0
        %7330 = vmatprep.mubr.f32.mxu0 0.0
        %7331 = vmatmul.mubr.f32.gmra.mrb[0].mxu0 %v7262
        %v7332 = vpop.f32.mrb[0].mxu0
        %v7333 = vadd.f32 0.0, %v7332
        %v7334 = vpop.f32.mrb[0].mxu0
        %7335 = vdwg.mxu0
        %v7336 = vmul.f32 %v7255, 0.35355338
        %v7337 = vmul.f32 %v7333, 0.35355338
        %v7338 = vsel %vm6506, %v7336, -1e+09
        %v7339 = vsel %vm6507, %v7337, -1e+09
        %v7340 = vsel %vm4444, %v7338, -inf
        %7341 = vmax.xlane.f32.xlu0 %v7340
        %v7342 = vpop.xlane.xlu0 %7341
        %v7343 = vsel %vm4444, %v7339, -inf
        %7344 = vmax.xlane.f32.xlu0 %v7343
        %v7345 = vpop.xlane.xlu0 %7344
        %v7346 = vsub.f32 %v7338, %v7342
        %v7347 = vsub.f32 %v7339, %v7345
        %v7348 = vmul.f32 %v7346, 1.442695
        %v7349 = vpow.pop %v7348
        %v7350 = vmul.f32 %v7347, 1.442695
        %v7351 = vpow.pop %v7350
        %v7352 = vsel %vm4444, %v7349, 0.0
        %7353 = vadd.xlane.f32.xlu0 %v7352
        %v7354 = vpop.xlane.xlu0 %7353
        %v7355 = vsel %vm4444, %v7351, 0.0
        %7356 = vadd.xlane.f32.xlu0 %v7355
        %v7357 = vpop.xlane.xlu0 %7356
        %v7358 = vrcp.pop %v7354
        %v7359 = vrcp.pop %v7357
        %v7360 = vmul.f32 %v7349, %v7358
        %v7361 = vmul.f32 %v7351, %v7359
        %7362 = vrot.lane.b32.xlu0 %v6337, 80
        %v7363 = vpop.permute.xlu0 %7362
        %v7366 = vsel %vm4444, %v7360, 0
        %7368 = vmatprep.subr.mxu0 0.0
        %7369 = vmatpush1.msra.mxu0 %v7363
        %7370 = vmatprep.subr.mxu0 0.0
        %7371 = vmatpush1.msra.mxu0 0.0
        %7372 = vmatprep.subr.mxu0 0.0
        %7373 = vmatpush1.msra.mxu0 0.0
        %7374 = vmatprep.subr.mxu0 0.0
        %7375 = vmatpush1.msra.mxu0 0.0
        %7376 = vmatprep.subr.mxu0 0.0
        %7377 = vmatpush1.msra.mxu0 0.0
        %7378 = vmatprep.subr.mxu0 0.0
        %7379 = vmatpush1.msra.mxu0 0.0
        %7380 = vmatprep.subr.mxu0 0.0
        %7381 = vmatpush1.msra.mxu0 0.0
        %7382 = vmatprep.subr.mxu0 0.0
        %7383 = vmatpush1.msra.mxu0 0.0
        %7384 = vmatprep.subr.mxu0 0.0
        %7385 = vmatpush1.msra.mxu0 0.0
        %7386 = vmatprep.subr.mxu0 0.0
        %7387 = vmatpush1.msra.mxu0 0.0
        %7388 = vmatprep.subr.mxu0 0.0
        %7389 = vmatpush1.msra.mxu0 0.0
        %7390 = vmatprep.subr.mxu0 0.0
        %7391 = vmatpush1.msra.mxu0 0.0
        %7392 = vmatprep.subr.mxu0 0.0
        %7393 = vmatpush1.msra.mxu0 0.0
        %7394 = vmatprep.subr.mxu0 0.0
        %7395 = vmatpush1.msra.mxu0 0.0
        %7396 = vmatprep.subr.mxu0 0.0
        %7397 = vmatpush1.msra.mxu0 0.0
        %7398 = vmatprep.subr.mxu0 0.0
        %7399 = vmatpush1.msra.mxu0 0.0
        %7400 = vmatprep.subr.mxu0 0.0
        %7401 = vmatpush1.msra.mxu0 0.0
        %7402 = vmatprep.subr.mxu0 0.0
        %7403 = vmatpush1.msra.mxu0 0.0
        %7404 = vmatprep.subr.mxu0 0.0
        %7405 = vmatpush1.msra.mxu0 0.0
        %7406 = vmatprep.subr.mxu0 0.0
        %7407 = vmatpush1.msra.mxu0 0.0
        %7408 = vmatprep.subr.mxu0 0.0
        %7409 = vmatpush1.msra.mxu0 0.0
        %7410 = vmatprep.subr.mxu0 0.0
        %7411 = vmatpush1.msra.mxu0 0.0
        %7412 = vmatprep.subr.mxu0 0.0
        %7413 = vmatpush1.msra.mxu0 0.0
        %7414 = vmatprep.subr.mxu0 0.0
        %7415 = vmatpush1.msra.mxu0 0.0
        %7416 = vmatprep.subr.mxu0 0.0
        %7417 = vmatpush1.msra.mxu0 0.0
        %7418 = vmatprep.subr.mxu0 0.0
        %7419 = vmatpush1.msra.mxu0 0.0
        %7420 = vmatprep.subr.mxu0 0.0
        %7421 = vmatpush1.msra.mxu0 0.0
        %7422 = vmatprep.subr.mxu0 0.0
        %7423 = vmatpush1.msra.mxu0 0.0
        %7424 = vmatprep.subr.mxu0 0.0
        %7425 = vmatpush1.msra.mxu0 0.0
        %7426 = vmatprep.subr.mxu0 0.0
        %7427 = vmatpush1.msra.mxu0 0.0
        %7428 = vmatprep.subr.mxu0 0.0
        %7429 = vmatpush1.msra.mxu0 0.0
        %7430 = vmatprep.subr.mxu0 0.0
        %7431 = vmatpush1.msra.mxu0 0.0
        %7432 = vmatprep.mubr.f32.mxu0 0.0
        %7433 = vmatmul.mubr.f32.gmra.mrb[0].mxu0 %v7366
        %v7434 = vpop.f32.mrb[0].mxu0
        %v7435 = vadd.f32 0.0, %v7434
        %v7436 = vpop.f32.mrb[0].mxu0
        %7437 = vdwg.mxu0
        %7438 = vrot.lane.b32.xlu0 %v6342, 80
        %v7439 = vpop.permute.xlu0 %7438
        %v7442 = vsel %vm4444, %v7361, 0
        %7444 = vmatprep.subr.mxu0 0.0
        %7445 = vmatpush1.msra.mxu0 %v7439
        %7446 = vmatprep.subr.mxu0 0.0
        %7447 = vmatpush1.msra.mxu0 0.0
        %7448 = vmatprep.subr.mxu0 0.0
        %7449 = vmatpush1.msra.mxu0 0.0
        %7450 = vmatprep.subr.mxu0 0.0
        %7451 = vmatpush1.msra.mxu0 0.0
        %7452 = vmatprep.subr.mxu0 0.0
        %7453 = vmatpush1.msra.mxu0 0.0
        %7454 = vmatprep.subr.mxu0 0.0
        %7455 = vmatpush1.msra.mxu0 0.0
        %7456 = vmatprep.subr.mxu0 0.0
        %7457 = vmatpush1.msra.mxu0 0.0
        %7458 = vmatprep.subr.mxu0 0.0
        %7459 = vmatpush1.msra.mxu0 0.0
        %7460 = vmatprep.subr.mxu0 0.0
        %7461 = vmatpush1.msra.mxu0 0.0
        %7462 = vmatprep.subr.mxu0 0.0
        %7463 = vmatpush1.msra.mxu0 0.0
        %7464 = vmatprep.subr.mxu0 0.0
        %7465 = vmatpush1.msra.mxu0 0.0
        %7466 = vmatprep.subr.mxu0 0.0
        %7467 = vmatpush1.msra.mxu0 0.0
        %7468 = vmatprep.subr.mxu0 0.0
        %7469 = vmatpush1.msra.mxu0 0.0
        %7470 = vmatprep.subr.mxu0 0.0
        %7471 = vmatpush1.msra.mxu0 0.0
        %7472 = vmatprep.subr.mxu0 0.0
        %7473 = vmatpush1.msra.mxu0 0.0
        %7474 = vmatprep.subr.mxu0 0.0
        %7475 = vmatpush1.msra.mxu0 0.0
        %7476 = vmatprep.subr.mxu0 0.0
        %7477 = vmatpush1.msra.mxu0 0.0
        %7478 = vmatprep.subr.mxu0 0.0
        %7479 = vmatpush1.msra.mxu0 0.0
        %7480 = vmatprep.subr.mxu0 0.0
        %7481 = vmatpush1.msra.mxu0 0.0
        %7482 = vmatprep.subr.mxu0 0.0
        %7483 = vmatpush1.msra.mxu0 0.0
        %7484 = vmatprep.subr.mxu0 0.0
        %7485 = vmatpush1.msra.mxu0 0.0
        %7486 = vmatprep.subr.mxu0 0.0
        %7487 = vmatpush1.msra.mxu0 0.0
        %7488 = vmatprep.subr.mxu0 0.0
        %7489 = vmatpush1.msra.mxu0 0.0
        %7490 = vmatprep.subr.mxu0 0.0
        %7491 = vmatpush1.msra.mxu0 0.0
        %7492 = vmatprep.subr.mxu0 0.0
        %7493 = vmatpush1.msra.mxu0 0.0
        %7494 = vmatprep.subr.mxu0 0.0
        %7495 = vmatpush1.msra.mxu0 0.0
        %7496 = vmatprep.subr.mxu0 0.0
        %7497 = vmatpush1.msra.mxu0 0.0
        %7498 = vmatprep.subr.mxu0 0.0
        %7499 = vmatpush1.msra.mxu0 0.0
        %7500 = vmatprep.subr.mxu0 0.0
        %7501 = vmatpush1.msra.mxu0 0.0
        %7502 = vmatprep.subr.mxu0 0.0
        %7503 = vmatpush1.msra.mxu0 0.0
        %7504 = vmatprep.subr.mxu0 0.0
        %7505 = vmatpush1.msra.mxu0 0.0
        %7506 = vmatprep.subr.mxu0 0.0
        %7507 = vmatpush1.msra.mxu0 0.0
        %7508 = vmatprep.mubr.f32.mxu0 0.0
        %7509 = vmatmul.mubr.f32.gmra.mrb[0].mxu0 %v7442
        %v7510 = vpop.f32.mrb[0].mxu0
        %v7511 = vadd.f32 0.0, %v7510
        %v7512 = vpop.f32.mrb[0].mxu0
        %7513 = vdwg.mxu0
        %v7515 = vsel %vm4444, %v7435, 0
        %v7518 = vsel %vm4444, %v7511, 0
        %7520 = vmatprep.subr.mxu0 0.0
        %7521 = vmatpush1.msra.mxu0 %v6347
        %7522 = vmatprep.subr.mxu0 0.0
        %7523 = vmatpush1.msra.mxu0 0.0
        %7524 = vmatprep.subr.mxu0 0.0
        %7525 = vmatpush1.msra.mxu0 0.0
        %7526 = vmatprep.subr.mxu0 0.0
        %7527 = vmatpush1.msra.mxu0 0.0
        %7528 = vmatprep.subr.mxu0 0.0
        %7529 = vmatpush1.msra.mxu0 0.0
        %7530 = vmatprep.subr.mxu0 0.0
        %7531 = vmatpush1.msra.mxu0 0.0
        %7532 = vmatprep.subr.mxu0 0.0
        %7533 = vmatpush1.msra.mxu0 0.0
        %7534 = vmatprep.subr.mxu0 0.0
        %7535 = vmatpush1.msra.mxu0 0.0
        %7536 = vmatprep.subr.mxu0 0.0
        %7537 = vmatpush1.msra.mxu0 0.0
        %7538 = vmatprep.subr.mxu0 0.0
        %7539 = vmatpush1.msra.mxu0 0.0
        %7540 = vmatprep.subr.mxu0 0.0
        %7541 = vmatpush1.msra.mxu0 0.0
        %7542 = vmatprep.subr.mxu0 0.0
        %7543 = vmatpush1.msra.mxu0 0.0
        %7544 = vmatprep.subr.mxu0 0.0
        %7545 = vmatpush1.msra.mxu0 0.0
        %7546 = vmatprep.subr.mxu0 0.0
        %7547 = vmatpush1.msra.mxu0 0.0
        %7548 = vmatprep.subr.mxu0 0.0
        %7549 = vmatpush1.msra.mxu0 0.0
        %7550 = vmatprep.subr.mxu0 0.0
        %7551 = vmatpush1.msra.mxu0 0.0
        %7552 = vmatprep.subr.mxu0 0.0
        %7553 = vmatpush1.msra.mxu0 0.0
        %7554 = vmatprep.subr.mxu0 0.0
        %7555 = vmatpush1.msra.mxu0 0.0
        %7556 = vmatprep.subr.mxu0 0.0
        %7557 = vmatpush1.msra.mxu0 0.0
        %7558 = vmatprep.subr.mxu0 0.0
        %7559 = vmatpush1.msra.mxu0 0.0
        %7560 = vmatprep.subr.mxu0 0.0
        %7561 = vmatpush1.msra.mxu0 0.0
        %7562 = vmatprep.subr.mxu0 0.0
        %7563 = vmatpush1.msra.mxu0 0.0
        %7564 = vmatprep.subr.mxu0 0.0
        %7565 = vmatpush1.msra.mxu0 0.0
        %7566 = vmatprep.subr.mxu0 0.0
        %7567 = vmatpush1.msra.mxu0 0.0
        %7568 = vmatprep.subr.mxu0 0.0
        %7569 = vmatpush1.msra.mxu0 0.0
        %7570 = vmatprep.subr.mxu0 0.0
        %7571 = vmatpush1.msra.mxu0 0.0
        %7572 = vmatprep.subr.mxu0 0.0
        %7573 = vmatpush1.msra.mxu0 0.0
        %7574 = vmatprep.subr.mxu0 0.0
        %7575 = vmatpush1.msra.mxu0 0.0
        %7576 = vmatprep.subr.mxu0 0.0
        %7577 = vmatpush1.msra.mxu0 0.0
        %7578 = vmatprep.subr.mxu0 0.0
        %7579 = vmatpush1.msra.mxu0 0.0
        %7580 = vmatprep.subr.mxu0 0.0
        %7581 = vmatpush1.msra.mxu0 0.0
        %7582 = vmatprep.subr.mxu0 0.0
        %7583 = vmatpush1.msra.mxu0 0.0
        %7584 = vmatprep.mubr.f32.mxu0 0.0
        %7585 = vmatmul.mubr.f32.gmra.mrb[0].mxu0 %v7515
        %v7586 = vpop.f32.mrb[0].mxu0
        %v7587 = vadd.f32 0.0, %v7586
        %v7588 = vpop.f32.mrb[0].mxu0
        %7589 = vmatprep.mubr.f32.mxu0 0.0
        %7590 = vmatmul.mubr.f32.gmra.mrb[0].mxu0 %v7518
        %v7591 = vpop.f32.mrb[0].mxu0
        %v7592 = vadd.f32 0.0, %v7591
        %v7593 = vpop.f32.mrb[0].mxu0
        %7594 = vdwg.mxu0
        %v7595 = vadd.f32 %v7172, %v7587
        %v7596 = vadd.f32 %v7177, %v7592
        %7597 = vrot.lane.b32.xlu0 %v6245, 104
        %v7598 = vpop.permute.xlu0 %7597
        %7599 = vrot.lane.b32.xlu0 %v6337, 104
        %v7600 = vpop.permute.xlu0 %7599
        %v7601 = vsel %vm4444, %v7598, 0
        %v7603 = vsel %vm4444, %v7600, 0
        %7605 = vmatprep.subr.mxu0 0.0
        %7606 = vmatpush1.xpose.msra.mxu0 %v7603
        %7607 = vmatprep.subr.mxu0 0.0
        %7608 = vmatpush1.xpose.msra.mxu0 0.0
        %7609 = vmatprep.subr.mxu0 0.0
        %7610 = vmatpush1.xpose.msra.mxu0 0.0
        %7611 = vmatprep.subr.mxu0 0.0
        %7612 = vmatpush1.xpose.msra.mxu0 0.0
        %7613 = vmatprep.subr.mxu0 0.0
        %7614 = vmatpush1.xpose.msra.mxu0 0.0
        %7615 = vmatprep.subr.mxu0 0.0
        %7616 = vmatpush1.xpose.msra.mxu0 0.0
        %7617 = vmatprep.subr.mxu0 0.0
        %7618 = vmatpush1.xpose.msra.mxu0 0.0
        %7619 = vmatprep.subr.mxu0 0.0
        %7620 = vmatpush1.xpose.msra.mxu0 0.0
        %7621 = vmatprep.subr.mxu0 0.0
        %7622 = vmatpush1.xpose.msra.mxu0 0.0
        %7623 = vmatprep.subr.mxu0 0.0
        %7624 = vmatpush1.xpose.msra.mxu0 0.0
        %7625 = vmatprep.subr.mxu0 0.0
        %7626 = vmatpush1.xpose.msra.mxu0 0.0
        %7627 = vmatprep.subr.mxu0 0.0
        %7628 = vmatpush1.xpose.msra.mxu0 0.0
        %7629 = vmatprep.subr.mxu0 0.0
        %7630 = vmatpush1.xpose.msra.mxu0 0.0
        %7631 = vmatprep.subr.mxu0 0.0
        %7632 = vmatpush1.xpose.msra.mxu0 0.0
        %7633 = vmatprep.subr.mxu0 0.0
        %7634 = vmatpush1.xpose.msra.mxu0 0.0
        %7635 = vmatprep.subr.mxu0 0.0
        %7636 = vmatpush1.xpose.msra.mxu0 0.0
        %7637 = vmatprep.subr.mxu0 0.0
        %7638 = vmatpush1.xpose.msra.mxu0 0.0
        %7639 = vmatprep.subr.mxu0 0.0
        %7640 = vmatpush1.xpose.msra.mxu0 0.0
        %7641 = vmatprep.subr.mxu0 0.0
        %7642 = vmatpush1.xpose.msra.mxu0 0.0
        %7643 = vmatprep.subr.mxu0 0.0
        %7644 = vmatpush1.xpose.msra.mxu0 0.0
        %7645 = vmatprep.subr.mxu0 0.0
        %7646 = vmatpush1.xpose.msra.mxu0 0.0
        %7647 = vmatprep.subr.mxu0 0.0
        %7648 = vmatpush1.xpose.msra.mxu0 0.0
        %7649 = vmatprep.subr.mxu0 0.0
        %7650 = vmatpush1.xpose.msra.mxu0 0.0
        %7651 = vmatprep.subr.mxu0 0.0
        %7652 = vmatpush1.xpose.msra.mxu0 0.0
        %7653 = vmatprep.subr.mxu0 0.0
        %7654 = vmatpush1.xpose.msra.mxu0 0.0
        %7655 = vmatprep.subr.mxu0 0.0
        %7656 = vmatpush1.xpose.msra.mxu0 0.0
        %7657 = vmatprep.subr.mxu0 0.0
        %7658 = vmatpush1.xpose.msra.mxu0 0.0
        %7659 = vmatprep.subr.mxu0 0.0
        %7660 = vmatpush1.xpose.msra.mxu0 0.0
        %7661 = vmatprep.subr.mxu0 0.0
        %7662 = vmatpush1.xpose.msra.mxu0 0.0
        %7663 = vmatprep.subr.mxu0 0.0
        %7664 = vmatpush1.xpose.msra.mxu0 0.0
        %7665 = vmatprep.subr.mxu0 0.0
        %7666 = vmatpush1.xpose.msra.mxu0 0.0
        %7667 = vmatprep.subr.mxu0 0.0
        %7668 = vmatpush1.xpose.msra.mxu0 0.0
        %7669 = vmatprep.mubr.f32.mxu0 0.0
        %7670 = vmatmul.mubr.f32.gmra.mrb[0].mxu0 %v7601
        %v7671 = vpop.f32.mrb[0].mxu0
        %v7672 = vadd.f32 0.0, %v7671
        %v7673 = vpop.f32.mrb[0].mxu0
        %7674 = vdwg.mxu0
        %7675 = vrot.lane.b32.xlu0 %v6250, 104
        %v7676 = vpop.permute.xlu0 %7675
        %7677 = vrot.lane.b32.xlu0 %v6342, 104
        %v7678 = vpop.permute.xlu0 %7677
        %v7679 = vsel %vm4444, %v7676, 0
        %v7681 = vsel %vm4444, %v7678, 0
        %7683 = vmatprep.subr.mxu0 0.0
        %7684 = vmatpush1.xpose.msra.mxu0 %v7681
        %7685 = vmatprep.subr.mxu0 0.0
        %7686 = vmatpush1.xpose.msra.mxu0 0.0
        %7687 = vmatprep.subr.mxu0 0.0
        %7688 = vmatpush1.xpose.msra.mxu0 0.0
        %7689 = vmatprep.subr.mxu0 0.0
        %7690 = vmatpush1.xpose.msra.mxu0 0.0
        %7691 = vmatprep.subr.mxu0 0.0
        %7692 = vmatpush1.xpose.msra.mxu0 0.0
        %7693 = vmatprep.subr.mxu0 0.0
        %7694 = vmatpush1.xpose.msra.mxu0 0.0
        %7695 = vmatprep.subr.mxu0 0.0
        %7696 = vmatpush1.xpose.msra.mxu0 0.0
        %7697 = vmatprep.subr.mxu0 0.0
        %7698 = vmatpush1.xpose.msra.mxu0 0.0
        %7699 = vmatprep.subr.mxu0 0.0
        %7700 = vmatpush1.xpose.msra.mxu0 0.0
        %7701 = vmatprep.subr.mxu0 0.0
        %7702 = vmatpush1.xpose.msra.mxu0 0.0
        %7703 = vmatprep.subr.mxu0 0.0
        %7704 = vmatpush1.xpose.msra.mxu0 0.0
        %7705 = vmatprep.subr.mxu0 0.0
        %7706 = vmatpush1.xpose.msra.mxu0 0.0
        %7707 = vmatprep.subr.mxu0 0.0
        %7708 = vmatpush1.xpose.msra.mxu0 0.0
        %7709 = vmatprep.subr.mxu0 0.0
        %7710 = vmatpush1.xpose.msra.mxu0 0.0
        %7711 = vmatprep.subr.mxu0 0.0
        %7712 = vmatpush1.xpose.msra.mxu0 0.0
        %7713 = vmatprep.subr.mxu0 0.0
        %7714 = vmatpush1.xpose.msra.mxu0 0.0
        %7715 = vmatprep.subr.mxu0 0.0
        %7716 = vmatpush1.xpose.msra.mxu0 0.0
        %7717 = vmatprep.subr.mxu0 0.0
        %7718 = vmatpush1.xpose.msra.mxu0 0.0
        %7719 = vmatprep.subr.mxu0 0.0
        %7720 = vmatpush1.xpose.msra.mxu0 0.0
        %7721 = vmatprep.subr.mxu0 0.0
        %7722 = vmatpush1.xpose.msra.mxu0 0.0
        %7723 = vmatprep.subr.mxu0 0.0
        %7724 = vmatpush1.xpose.msra.mxu0 0.0
        %7725 = vmatprep.subr.mxu0 0.0
        %7726 = vmatpush1.xpose.msra.mxu0 0.0
        %7727 = vmatprep.subr.mxu0 0.0
        %7728 = vmatpush1.xpose.msra.mxu0 0.0
        %7729 = vmatprep.subr.mxu0 0.0
        %7730 = vmatpush1.xpose.msra.mxu0 0.0
        %7731 = vmatprep.subr.mxu0 0.0
        %7732 = vmatpush1.xpose.msra.mxu0 0.0
        %7733 = vmatprep.subr.mxu0 0.0
        %7734 = vmatpush1.xpose.msra.mxu0 0.0
        %7735 = vmatprep.subr.mxu0 0.0
        %7736 = vmatpush1.xpose.msra.mxu0 0.0
        %7737 = vmatprep.subr.mxu0 0.0
        %7738 = vmatpush1.xpose.msra.mxu0 0.0
        %7739 = vmatprep.subr.mxu0 0.0
        %7740 = vmatpush1.xpose.msra.mxu0 0.0
        %7741 = vmatprep.subr.mxu0 0.0
        %7742 = vmatpush1.xpose.msra.mxu0 0.0
        %7743 = vmatprep.subr.mxu0 0.0
        %7744 = vmatpush1.xpose.msra.mxu0 0.0
        %7745 = vmatprep.subr.mxu0 0.0
        %7746 = vmatpush1.xpose.msra.mxu0 0.0
        %7747 = vmatprep.mubr.f32.mxu0 0.0
        %7748 = vmatmul.mubr.f32.gmra.mrb[0].mxu0 %v7679
        %v7749 = vpop.f32.mrb[0].mxu0
        %v7750 = vadd.f32 0.0, %v7749
        %v7751 = vpop.f32.mrb[0].mxu0
        %7752 = vdwg.mxu0
        %v7753 = vmul.f32 %v7672, 0.35355338
        %v7754 = vmul.f32 %v7750, 0.35355338
        %v7755 = vsel %vm6506, %v7753, -1e+09
        %v7756 = vsel %vm6507, %v7754, -1e+09
        %v7757 = vsel %vm4444, %v7755, -inf
        %7758 = vmax.xlane.f32.xlu0 %v7757
        %v7759 = vpop.xlane.xlu0 %7758
        %v7760 = vsel %vm4444, %v7756, -inf
        %7761 = vmax.xlane.f32.xlu0 %v7760
        %v7762 = vpop.xlane.xlu0 %7761
        %v7763 = vsub.f32 %v7755, %v7759
        %v7764 = vsub.f32 %v7756, %v7762
        %v7765 = vmul.f32 %v7763, 1.442695
        %v7766 = vpow.pop %v7765
        %v7767 = vmul.f32 %v7764, 1.442695
        %v7768 = vpow.pop %v7767
        %v7769 = vsel %vm4444, %v7766, 0.0
        %7770 = vadd.xlane.f32.xlu0 %v7769
        %v7771 = vpop.xlane.xlu0 %7770
        %v7772 = vsel %vm4444, %v7768, 0.0
        %7773 = vadd.xlane.f32.xlu0 %v7772
        %v7774 = vpop.xlane.xlu0 %7773
        %v7775 = vrcp.pop %v7771
        %v7776 = vrcp.pop %v7774
        %v7777 = vmul.f32 %v7766, %v7775
        %v7778 = vmul.f32 %v7768, %v7776
        %7779 = vrot.lane.b32.xlu0 %v6337, 72
        %v7780 = vpop.permute.xlu0 %7779
        %v7783 = vsel %vm4444, %v7777, 0
        %7785 = vmatprep.subr.mxu0 0.0
        %7786 = vmatpush1.msra.mxu0 %v7780
        %7787 = vmatprep.subr.mxu0 0.0
        %7788 = vmatpush1.msra.mxu0 0.0
        %7789 = vmatprep.subr.mxu0 0.0
        %7790 = vmatpush1.msra.mxu0 0.0
        %7791 = vmatprep.subr.mxu0 0.0
        %7792 = vmatpush1.msra.mxu0 0.0
        %7793 = vmatprep.subr.mxu0 0.0
        %7794 = vmatpush1.msra.mxu0 0.0
        %7795 = vmatprep.subr.mxu0 0.0
        %7796 = vmatpush1.msra.mxu0 0.0
        %7797 = vmatprep.subr.mxu0 0.0
        %7798 = vmatpush1.msra.mxu0 0.0
        %7799 = vmatprep.subr.mxu0 0.0
        %7800 = vmatpush1.msra.mxu0 0.0
        %7801 = vmatprep.subr.mxu0 0.0
        %7802 = vmatpush1.msra.mxu0 0.0
        %7803 = vmatprep.subr.mxu0 0.0
        %7804 = vmatpush1.msra.mxu0 0.0
        %7805 = vmatprep.subr.mxu0 0.0
        %7806 = vmatpush1.msra.mxu0 0.0
        %7807 = vmatprep.subr.mxu0 0.0
        %7808 = vmatpush1.msra.mxu0 0.0
        %7809 = vmatprep.subr.mxu0 0.0
        %7810 = vmatpush1.msra.mxu0 0.0
        %7811 = vmatprep.subr.mxu0 0.0
        %7812 = vmatpush1.msra.mxu0 0.0
        %7813 = vmatprep.subr.mxu0 0.0
        %7814 = vmatpush1.msra.mxu0 0.0
        %7815 = vmatprep.subr.mxu0 0.0
        %7816 = vmatpush1.msra.mxu0 0.0
        %7817 = vmatprep.subr.mxu0 0.0
        %7818 = vmatpush1.msra.mxu0 0.0
        %7819 = vmatprep.subr.mxu0 0.0
        %7820 = vmatpush1.msra.mxu0 0.0
        %7821 = vmatprep.subr.mxu0 0.0
        %7822 = vmatpush1.msra.mxu0 0.0
        %7823 = vmatprep.subr.mxu0 0.0
        %7824 = vmatpush1.msra.mxu0 0.0
        %7825 = vmatprep.subr.mxu0 0.0
        %7826 = vmatpush1.msra.mxu0 0.0
        %7827 = vmatprep.subr.mxu0 0.0
        %7828 = vmatpush1.msra.mxu0 0.0
        %7829 = vmatprep.subr.mxu0 0.0
        %7830 = vmatpush1.msra.mxu0 0.0
        %7831 = vmatprep.subr.mxu0 0.0
        %7832 = vmatpush1.msra.mxu0 0.0
        %7833 = vmatprep.subr.mxu0 0.0
        %7834 = vmatpush1.msra.mxu0 0.0
        %7835 = vmatprep.subr.mxu0 0.0
        %7836 = vmatpush1.msra.mxu0 0.0
        %7837 = vmatprep.subr.mxu0 0.0
        %7838 = vmatpush1.msra.mxu0 0.0
        %7839 = vmatprep.subr.mxu0 0.0
        %7840 = vmatpush1.msra.mxu0 0.0
        %7841 = vmatprep.subr.mxu0 0.0
        %7842 = vmatpush1.msra.mxu0 0.0
        %7843 = vmatprep.subr.mxu0 0.0
        %7844 = vmatpush1.msra.mxu0 0.0
        %7845 = vmatprep.subr.mxu0 0.0
        %7846 = vmatpush1.msra.mxu0 0.0
        %7847 = vmatprep.subr.mxu0 0.0
        %7848 = vmatpush1.msra.mxu0 0.0
        %7849 = vmatprep.mubr.f32.mxu0 0.0
        %7850 = vmatmul.mubr.f32.gmra.mrb[0].mxu0 %v7783
        %v7851 = vpop.f32.mrb[0].mxu0
        %v7852 = vadd.f32 0.0, %v7851
        %v7853 = vpop.f32.mrb[0].mxu0
        %7854 = vdwg.mxu0
        %7855 = vrot.lane.b32.xlu0 %v6342, 72
        %v7856 = vpop.permute.xlu0 %7855
        %v7859 = vsel %vm4444, %v7778, 0
        %7861 = vmatprep.subr.mxu0 0.0
        %7862 = vmatpush1.msra.mxu0 %v7856
        %7863 = vmatprep.subr.mxu0 0.0
        %7864 = vmatpush1.msra.mxu0 0.0
        %7865 = vmatprep.subr.mxu0 0.0
        %7866 = vmatpush1.msra.mxu0 0.0
        %7867 = vmatprep.subr.mxu0 0.0
        %7868 = vmatpush1.msra.mxu0 0.0
        %7869 = vmatprep.subr.mxu0 0.0
        %7870 = vmatpush1.msra.mxu0 0.0
        %7871 = vmatprep.subr.mxu0 0.0
        %7872 = vmatpush1.msra.mxu0 0.0
        %7873 = vmatprep.subr.mxu0 0.0
        %7874 = vmatpush1.msra.mxu0 0.0
        %7875 = vmatprep.subr.mxu0 0.0
        %7876 = vmatpush1.msra.mxu0 0.0
        %7877 = vmatprep.subr.mxu0 0.0
        %7878 = vmatpush1.msra.mxu0 0.0
        %7879 = vmatprep.subr.mxu0 0.0
        %7880 = vmatpush1.msra.mxu0 0.0
        %7881 = vmatprep.subr.mxu0 0.0
        %7882 = vmatpush1.msra.mxu0 0.0
        %7883 = vmatprep.subr.mxu0 0.0
        %7884 = vmatpush1.msra.mxu0 0.0
        %7885 = vmatprep.subr.mxu0 0.0
        %7886 = vmatpush1.msra.mxu0 0.0
        %7887 = vmatprep.subr.mxu0 0.0
        %7888 = vmatpush1.msra.mxu0 0.0
        %7889 = vmatprep.subr.mxu0 0.0
        %7890 = vmatpush1.msra.mxu0 0.0
        %7891 = vmatprep.subr.mxu0 0.0
        %7892 = vmatpush1.msra.mxu0 0.0
        %7893 = vmatprep.subr.mxu0 0.0
        %7894 = vmatpush1.msra.mxu0 0.0
        %7895 = vmatprep.subr.mxu0 0.0
        %7896 = vmatpush1.msra.mxu0 0.0
        %7897 = vmatprep.subr.mxu0 0.0
        %7898 = vmatpush1.msra.mxu0 0.0
        %7899 = vmatprep.subr.mxu0 0.0
        %7900 = vmatpush1.msra.mxu0 0.0
        %7901 = vmatprep.subr.mxu0 0.0
        %7902 = vmatpush1.msra.mxu0 0.0
        %7903 = vmatprep.subr.mxu0 0.0
        %7904 = vmatpush1.msra.mxu0 0.0
        %7905 = vmatprep.subr.mxu0 0.0
        %7906 = vmatpush1.msra.mxu0 0.0
        %7907 = vmatprep.subr.mxu0 0.0
        %7908 = vmatpush1.msra.mxu0 0.0
        %7909 = vmatprep.subr.mxu0 0.0
        %7910 = vmatpush1.msra.mxu0 0.0
        %7911 = vmatprep.subr.mxu0 0.0
        %7912 = vmatpush1.msra.mxu0 0.0
        %7913 = vmatprep.subr.mxu0 0.0
        %7914 = vmatpush1.msra.mxu0 0.0
        %7915 = vmatprep.subr.mxu0 0.0
        %7916 = vmatpush1.msra.mxu0 0.0
        %7917 = vmatprep.subr.mxu0 0.0
        %7918 = vmatpush1.msra.mxu0 0.0
        %7919 = vmatprep.subr.mxu0 0.0
        %7920 = vmatpush1.msra.mxu0 0.0
        %7921 = vmatprep.subr.mxu0 0.0
        %7922 = vmatpush1.msra.mxu0 0.0
        %7923 = vmatprep.subr.mxu0 0.0
        %7924 = vmatpush1.msra.mxu0 0.0
        %7925 = vmatprep.mubr.f32.mxu0 0.0
        %7926 = vmatmul.mubr.f32.gmra.mrb[0].mxu0 %v7859
        %v7927 = vpop.f32.mrb[0].mxu0
        %v7928 = vadd.f32 0.0, %v7927
        %v7929 = vpop.f32.mrb[0].mxu0
        %7930 = vdwg.mxu0
        %v7932 = vsel %vm4444, %v7852, 0
        %v7935 = vsel %vm4444, %v7928, 0
        %7937 = vmatprep.subr.mxu0 0.0
        %7938 = vmatpush1.msra.mxu0 %v6348
        %7939 = vmatprep.subr.mxu0 0.0
        %7940 = vmatpush1.msra.mxu0 0.0
        %7941 = vmatprep.subr.mxu0 0.0
        %7942 = vmatpush1.msra.mxu0 0.0
        %7943 = vmatprep.subr.mxu0 0.0
        %7944 = vmatpush1.msra.mxu0 0.0
        %7945 = vmatprep.subr.mxu0 0.0
        %7946 = vmatpush1.msra.mxu0 0.0
        %7947 = vmatprep.subr.mxu0 0.0
        %7948 = vmatpush1.msra.mxu0 0.0
        %7949 = vmatprep.subr.mxu0 0.0
        %7950 = vmatpush1.msra.mxu0 0.0
        %7951 = vmatprep.subr.mxu0 0.0
        %7952 = vmatpush1.msra.mxu0 0.0
        %7953 = vmatprep.subr.mxu0 0.0
        %7954 = vmatpush1.msra.mxu0 0.0
        %7955 = vmatprep.subr.mxu0 0.0
        %7956 = vmatpush1.msra.mxu0 0.0
        %7957 = vmatprep.subr.mxu0 0.0
        %7958 = vmatpush1.msra.mxu0 0.0
        %7959 = vmatprep.subr.mxu0 0.0
        %7960 = vmatpush1.msra.mxu0 0.0
        %7961 = vmatprep.subr.mxu0 0.0
        %7962 = vmatpush1.msra.mxu0 0.0
        %7963 = vmatprep.subr.mxu0 0.0
        %7964 = vmatpush1.msra.mxu0 0.0
        %7965 = vmatprep.subr.mxu0 0.0
        %7966 = vmatpush1.msra.mxu0 0.0
        %7967 = vmatprep.subr.mxu0 0.0
        %7968 = vmatpush1.msra.mxu0 0.0
        %7969 = vmatprep.subr.mxu0 0.0
        %7970 = vmatpush1.msra.mxu0 0.0
        %7971 = vmatprep.subr.mxu0 0.0
        %7972 = vmatpush1.msra.mxu0 0.0
        %7973 = vmatprep.subr.mxu0 0.0
        %7974 = vmatpush1.msra.mxu0 0.0
        %7975 = vmatprep.subr.mxu0 0.0
        %7976 = vmatpush1.msra.mxu0 0.0
        %7977 = vmatprep.subr.mxu0 0.0
        %7978 = vmatpush1.msra.mxu0 0.0
        %7979 = vmatprep.subr.mxu0 0.0
        %7980 = vmatpush1.msra.mxu0 0.0
        %7981 = vmatprep.subr.mxu0 0.0
        %7982 = vmatpush1.msra.mxu0 0.0
        %7983 = vmatprep.subr.mxu0 0.0
        %7984 = vmatpush1.msra.mxu0 0.0
        %7985 = vmatprep.subr.mxu0 0.0
        %7986 = vmatpush1.msra.mxu0 0.0
        %7987 = vmatprep.subr.mxu0 0.0
        %7988 = vmatpush1.msra.mxu0 0.0
        %7989 = vmatprep.subr.mxu0 0.0
        %7990 = vmatpush1.msra.mxu0 0.0
        %7991 = vmatprep.subr.mxu0 0.0
        %7992 = vmatpush1.msra.mxu0 0.0
        %7993 = vmatprep.subr.mxu0 0.0
        %7994 = vmatpush1.msra.mxu0 0.0
        %7995 = vmatprep.subr.mxu0 0.0
        %7996 = vmatpush1.msra.mxu0 0.0
        %7997 = vmatprep.subr.mxu0 0.0
        %7998 = vmatpush1.msra.mxu0 0.0
        %7999 = vmatprep.subr.mxu0 0.0
        %8000 = vmatpush1.msra.mxu0 0.0
        %8001 = vmatprep.mubr.f32.mxu0 0.0
        %8002 = vmatmul.mubr.f32.gmra.mrb[0].mxu0 %v7932
        %v8003 = vpop.f32.mrb[0].mxu0
        %v8004 = vadd.f32 0.0, %v8003
        %v8005 = vpop.f32.mrb[0].mxu0
        %8006 = vmatprep.mubr.f32.mxu0 0.0
        %8007 = vmatmul.mubr.f32.gmra.mrb[0].mxu0 %v7935
        %v8008 = vpop.f32.mrb[0].mxu0
        %v8009 = vadd.f32 0.0, %v8008
        %v8010 = vpop.f32.mrb[0].mxu0
        %8011 = vdwg.mxu0
        %v8012 = vadd.f32 %v7595, %v8004
        %v8013 = vadd.f32 %v7596, %v8009
        %v8015 = vlaneseq
        %v8016 = vshrl.u32 %v8015, 7
        %v8017 = vsub.s32 0, %v8016
        %v8018 = vrot.slane %v6349, %v8017
        %v8020 = vadd.f32 %v8012, %v8018
        %v8021 = vadd.f32 %v8013, %v8018
        %v8022 = vadd.f32 %v6159, %v8020
        %v8023 = vadd.f32 %v6160, %v8021
        %v8024 = vld [vmem:[%s2179] sm:$0x1]
        %v8025 = vld [vmem:[%s2188] sm:$0x1]
        %v8026 = vsel %vm4352, %v8022, 0.0
        %8027 = vadd.xlane.f32.xlu0 %v8026
        %v8028 = vpop.xlane.xlu0 %8027
        %v8029 = vsel %vm4352, %v8023, 0.0
        %8030 = vadd.xlane.f32.xlu0 %v8029
        %v8031 = vpop.xlane.xlu0 %8030
        %v8032 = vmul.f32 %v8028, %v6124
        %v8033 = vmul.f32 %v8031, %v6124
        %v8034 = vsub.f32 %v8022, %v8032
        %v8035 = vsub.f32 %v8023, %v8033
        %v8036 = vmul.f32 %v8034, %v8034
        %v8037 = vmul.f32 %v8035, %v8035
        %v8038 = vsel %vm4352, %v8036, 0.0
        %8039 = vadd.xlane.f32.xlu0 %v8038
        %v8040 = vpop.xlane.xlu0 %8039
        %v8041 = vsel %vm4352, %v8037, 0.0
        %8042 = vadd.xlane.f32.xlu0 %v8041
        %v8043 = vpop.xlane.xlu0 %8042
        %v8044 = vmul.f32 %v8040, %v6124
        %v8045 = vmul.f32 %v8043, %v6124
        %v8046 = vadd.f32 %v8044, 1e-05
        %v8047 = vadd.f32 %v8045, 1e-05
        %v8048 = vrsqrt.pop %v8046
        %v8049 = vrsqrt.pop %v8047
        %v8050 = vmul.f32 %v8034, %v8048
        %v8051 = vmul.f32 %v8035, %v8049
        %v8053 = vlaneseq
        %v8054 = vshrl.u32 %v8053, 7
        %v8055 = vsub.s32 0, %v8054
        %v8056 = vrot.slane %v8024, %v8055
        %v8058 = vmul.f32 %v8050, %v8056
        %v8059 = vmul.f32 %v8051, %v8056
        %v8061 = vlaneseq
        %v8062 = vshrl.u32 %v8061, 7
        %v8063 = vsub.s32 0, %v8062
        %v8064 = vrot.slane %v8025, %v8063
        %v8066 = vadd.f32 %v8058, %v8064
        %v8067 = vadd.f32 %v8059, %v8064
        %v8068 = vld [vmem:[%s2199] sm:$0xff]
        %v8069 = vld [vmem:[%s2199 + $0x8] sm:$0xff]
        %v8070 = vld [vmem:[%s2199 + $0x10] sm:$0xff]
        %v8071 = vld [vmem:[%s2199 + $0x18] sm:$0xff]
        %v8072 = vld [vmem:[%s2208] sm:$0x1]
        %v8074 = vlaneseq
        %v8075 = vshrl.u32 %v8074, 7
        %v8076 = vsub.s32 0, %v8075
        %v8077 = vrot.slane %v8072, %v8076
        %v8080 = vsel %vm4352, %v8066, 0
        %v8083 = vsel %vm4352, %v8067, 0
        %8085 = vmatprep.subr.mxu0 0.0
        %8086 = vmatpush1.msra.mxu0 %v8068
        %8087 = vmatprep.subr.mxu0 0.0
        %8088 = vmatpush1.msra.mxu0 %v8069
        %8089 = vmatprep.subr.mxu0 0.0
        %8090 = vmatpush1.msra.mxu0 %v8070
        %8091 = vmatprep.subr.mxu0 0.0
        %8092 = vmatpush1.msra.mxu0 %v8071
        %8093 = vmatprep.subr.mxu0 0.0
        %8094 = vmatpush1.msra.mxu0 0.0
        %8095 = vmatprep.subr.mxu0 0.0
        %8096 = vmatpush1.msra.mxu0 0.0
        %8097 = vmatprep.subr.mxu0 0.0
        %8098 = vmatpush1.msra.mxu0 0.0
        %8099 = vmatprep.subr.mxu0 0.0
        %8100 = vmatpush1.msra.mxu0 0.0
        %8101 = vmatprep.subr.mxu0 0.0
        %8102 = vmatpush1.msra.mxu0 0.0
        %8103 = vmatprep.subr.mxu0 0.0
        %8104 = vmatpush1.msra.mxu0 0.0
        %8105 = vmatprep.subr.mxu0 0.0
        %8106 = vmatpush1.msra.mxu0 0.0
        %8107 = vmatprep.subr.mxu0 0.0
        %8108 = vmatpush1.msra.mxu0 0.0
        %8109 = vmatprep.subr.mxu0 0.0
        %8110 = vmatpush1.msra.mxu0 0.0
        %8111 = vmatprep.subr.mxu0 0.0
        %8112 = vmatpush1.msra.mxu0 0.0
        %8113 = vmatprep.subr.mxu0 0.0
        %8114 = vmatpush1.msra.mxu0 0.0
        %8115 = vmatprep.subr.mxu0 0.0
        %8116 = vmatpush1.msra.mxu0 0.0
        %8117 = vmatprep.subr.mxu0 0.0
        %8118 = vmatpush1.msra.mxu0 0.0
        %8119 = vmatprep.subr.mxu0 0.0
        %8120 = vmatpush1.msra.mxu0 0.0
        %8121 = vmatprep.subr.mxu0 0.0
        %8122 = vmatpush1.msra.mxu0 0.0
        %8123 = vmatprep.subr.mxu0 0.0
        %8124 = vmatpush1.msra.mxu0 0.0
        %8125 = vmatprep.subr.mxu0 0.0
        %8126 = vmatpush1.msra.mxu0 0.0
        %8127 = vmatprep.subr.mxu0 0.0
        %8128 = vmatpush1.msra.mxu0 0.0
        %8129 = vmatprep.subr.mxu0 0.0
        %8130 = vmatpush1.msra.mxu0 0.0
        %8131 = vmatprep.subr.mxu0 0.0
        %8132 = vmatpush1.msra.mxu0 0.0
        %8133 = vmatprep.subr.mxu0 0.0
        %8134 = vmatpush1.msra.mxu0 0.0
        %8135 = vmatprep.subr.mxu0 0.0
        %8136 = vmatpush1.msra.mxu0 0.0
        %8137 = vmatprep.subr.mxu0 0.0
        %8138 = vmatpush1.msra.mxu0 0.0
        %8139 = vmatprep.subr.mxu0 0.0
        %8140 = vmatpush1.msra.mxu0 0.0
        %8141 = vmatprep.subr.mxu0 0.0
        %8142 = vmatpush1.msra.mxu0 0.0
        %8143 = vmatprep.subr.mxu0 0.0
        %8144 = vmatpush1.msra.mxu0 0.0
        %8145 = vmatprep.subr.mxu0 0.0
        %8146 = vmatpush1.msra.mxu0 0.0
        %8147 = vmatprep.subr.mxu0 0.0
        %8148 = vmatpush1.msra.mxu0 0.0
        %8149 = vmatprep.mubr.f32.mxu0 0.0
        %8150 = vmatmul.mubr.f32.gmra.mrb[0].mxu0 %v8080
        %v8151 = vpop.f32.mrb[0].mxu0
        %v8152 = vadd.f32 %v8077, %v8151
        %v8153 = vpop.f32.mrb[0].mxu0
        %8154 = vmatprep.mubr.f32.mxu0 0.0
        %8155 = vmatmul.mubr.f32.gmra.mrb[0].mxu0 %v8083
        %v8156 = vpop.f32.mrb[0].mxu0
        %v8157 = vadd.f32 %v8077, %v8156
        %v8158 = vpop.f32.mrb[0].mxu0
        %8159 = vdwg.mxu0
        %v8160 = vmax.f32 %v8152, 0.0
        %v8161 = vmax.f32 %v8157, 0.0
        %v8162 = vld [vmem:[%s2219] sm:$0xff]
        %v8163 = vld [vmem:[%s2219 + $0x8] sm:$0xff]
        %v8164 = vld [vmem:[%s2219 + $0x10] sm:$0xff]
        %v8165 = vld [vmem:[%s2219 + $0x18] sm:$0xff]
        %v8166 = vld [vmem:[%s2219 + $0x20] sm:$0xff]
        %v8167 = vld [vmem:[%s2219 + $0x28] sm:$0xff]
        %v8168 = vld [vmem:[%s2219 + $0x30] sm:$0xff]
        %v8169 = vld [vmem:[%s2219 + $0x38] sm:$0xff]
        %v8170 = vld [vmem:[%s2228] sm:$0x1]
        %v8172 = vlaneseq
        %v8173 = vshrl.u32 %v8172, 7
        %v8174 = vsub.s32 0, %v8173
        %v8175 = vrot.slane %v8170, %v8174
        %vm8177 = vcmask 523264
        %v8179 = vsel %vm8177, %v8160, 0
        %v8182 = vsel %vm8177, %v8161, 0
        %8184 = vmatprep.subr.mxu0 0.0
        %8185 = vmatpush1.msra.mxu0 %v8162
        %8186 = vmatprep.subr.mxu0 0.0
        %8187 = vmatpush1.msra.mxu0 %v8163
        %8188 = vmatprep.subr.mxu0 0.0
        %8189 = vmatpush1.msra.mxu0 %v8164
        %8190 = vmatprep.subr.mxu0 0.0
        %8191 = vmatpush1.msra.mxu0 %v8165
        %8192 = vmatprep.subr.mxu0 0.0
        %8193 = vmatpush1.msra.mxu0 %v8166
        %8194 = vmatprep.subr.mxu0 0.0
        %8195 = vmatpush1.msra.mxu0 %v8167
        %8196 = vmatprep.subr.mxu0 0.0
        %8197 = vmatpush1.msra.mxu0 %v8168
        %8198 = vmatprep.subr.mxu0 0.0
        %8199 = vmatpush1.msra.mxu0 %v8169
        %8200 = vmatprep.subr.mxu0 0.0
        %8201 = vmatpush1.msra.mxu0 0.0
        %8202 = vmatprep.subr.mxu0 0.0
        %8203 = vmatpush1.msra.mxu0 0.0
        %8204 = vmatprep.subr.mxu0 0.0
        %8205 = vmatpush1.msra.mxu0 0.0
        %8206 = vmatprep.subr.mxu0 0.0
        %8207 = vmatpush1.msra.mxu0 0.0
        %8208 = vmatprep.subr.mxu0 0.0
        %8209 = vmatpush1.msra.mxu0 0.0
        %8210 = vmatprep.subr.mxu0 0.0
        %8211 = vmatpush1.msra.mxu0 0.0
        %8212 = vmatprep.subr.mxu0 0.0
        %8213 = vmatpush1.msra.mxu0 0.0
        %8214 = vmatprep.subr.mxu0 0.0
        %8215 = vmatpush1.msra.mxu0 0.0
        %8216 = vmatprep.subr.mxu0 0.0
        %8217 = vmatpush1.msra.mxu0 0.0
        %8218 = vmatprep.subr.mxu0 0.0
        %8219 = vmatpush1.msra.mxu0 0.0
        %8220 = vmatprep.subr.mxu0 0.0
        %8221 = vmatpush1.msra.mxu0 0.0
        %8222 = vmatprep.subr.mxu0 0.0
        %8223 = vmatpush1.msra.mxu0 0.0
        %8224 = vmatprep.subr.mxu0 0.0
        %8225 = vmatpush1.msra.mxu0 0.0
        %8226 = vmatprep.subr.mxu0 0.0
        %8227 = vmatpush1.msra.mxu0 0.0
        %8228 = vmatprep.subr.mxu0 0.0
        %8229 = vmatpush1.msra.mxu0 0.0
        %8230 = vmatprep.subr.mxu0 0.0
        %8231 = vmatpush1.msra.mxu0 0.0
        %8232 = vmatprep.subr.mxu0 0.0
        %8233 = vmatpush1.msra.mxu0 0.0
        %8234 = vmatprep.subr.mxu0 0.0
        %8235 = vmatpush1.msra.mxu0 0.0
        %8236 = vmatprep.subr.mxu0 0.0
        %8237 = vmatpush1.msra.mxu0 0.0
        %8238 = vmatprep.subr.mxu0 0.0
        %8239 = vmatpush1.msra.mxu0 0.0
        %8240 = vmatprep.subr.mxu0 0.0
        %8241 = vmatpush1.msra.mxu0 0.0
        %8242 = vmatprep.subr.mxu0 0.0
        %8243 = vmatpush1.msra.mxu0 0.0
        %8244 = vmatprep.subr.mxu0 0.0
        %8245 = vmatpush1.msra.mxu0 0.0
        %8246 = vmatprep.subr.mxu0 0.0
        %8247 = vmatpush1.msra.mxu0 0.0
        %8248 = vmatprep.mubr.f32.mxu0 0.0
        %8249 = vmatmul.mubr.f32.gmra.mrb[0].mxu0 %v8179
        %v8250 = vpop.f32.mrb[0].mxu0
        %v8251 = vadd.f32 %v8175, %v8250
        %v8252 = vpop.f32.mrb[0].mxu0
        %8253 = vmatprep.mubr.f32.mxu0 0.0
        %8254 = vmatmul.mubr.f32.gmra.mrb[0].mxu0 %v8182
        %v8255 = vpop.f32.mrb[0].mxu0
        %v8256 = vadd.f32 %v8175, %v8255
        %v8257 = vpop.f32.mrb[0].mxu0
        %8258 = vdwg.mxu0
        %v8259 = vadd.f32 %v8066, %v8251
        %v8260 = vadd.f32 %v8067, %v8256
        %v8261 = vld [vmem:[%s2237] sm:$0x1]
        %v8262 = vld [vmem:[%s2246] sm:$0x1]
        %v8263 = vsel %vm4352, %v8259, 0.0
        %8264 = vadd.xlane.f32.xlu0 %v8263
        %v8265 = vpop.xlane.xlu0 %8264
        %v8266 = vsel %vm4352, %v8260, 0.0
        %8267 = vadd.xlane.f32.xlu0 %v8266
        %v8268 = vpop.xlane.xlu0 %8267
        %v8269 = vmul.f32 %v8265, %v6124
        %v8270 = vmul.f32 %v8268, %v6124
        %v8271 = vsub.f32 %v8259, %v8269
        %v8272 = vsub.f32 %v8260, %v8270
        %v8273 = vmul.f32 %v8271, %v8271
        %v8274 = vmul.f32 %v8272, %v8272
        %v8275 = vsel %vm4352, %v8273, 0.0
        %8276 = vadd.xlane.f32.xlu0 %v8275
        %v8277 = vpop.xlane.xlu0 %8276
        %v8278 = vsel %vm4352, %v8274, 0.0
        %8279 = vadd.xlane.f32.xlu0 %v8278
        %v8280 = vpop.xlane.xlu0 %8279
        %v8281 = vmul.f32 %v8277, %v6124
        %v8282 = vmul.f32 %v8280, %v6124
        %v8283 = vadd.f32 %v8281, 1e-05
        %v8284 = vadd.f32 %v8282, 1e-05
        %v8285 = vrsqrt.pop %v8283
        %v8286 = vrsqrt.pop %v8284
        %v8287 = vmul.f32 %v8271, %v8285
        %v8288 = vmul.f32 %v8272, %v8286
        %v8290 = vlaneseq
        %v8291 = vshrl.u32 %v8290, 7
        %v8292 = vsub.s32 0, %v8291
        %v8293 = vrot.slane %v8261, %v8292
        %v8295 = vmul.f32 %v8287, %v8293
        %v8296 = vmul.f32 %v8288, %v8293
        %v8298 = vlaneseq
        %v8299 = vshrl.u32 %v8298, 7
        %v8300 = vsub.s32 0, %v8299
        %v8301 = vrot.slane %v8262, %v8300
        %v8303 = vadd.f32 %v8295, %v8301
        %v8304 = vadd.f32 %v8296, %v8301
        %8305 = vst.msk [vmem:[#allocation3] sm:$0xff] %vm4352, %v8303
        %8306 = vst.msk [vmem:[#allocation3 + $0x8] sm:$0xff] %vm4352, %v8304
      $region192: #{transformer_forward.1} parent=175 // pred_fallthru
        _
      %p8307 = scmp.eq.s32.totalorder %s90, 3
      // Predicated region
      $region193: #{transformer_forward.1} parent=175 // pred_check
        %p8308 = pneg %p8307
      $region194: #{transformer_forward.1} parent=175 // pred_check_branch
        %8310 = sbr.rel (%p8308) target = $region196
      $region195: #{transformer_forward.1} parent=175 // pred_region
        %v8311 = vld [vmem:[#allocation3] sm:$0xff]
        %v8312 = vld [vmem:[#allocation3 + $0x8] sm:$0xff]
        %v8313 = vld [vmem:[%s75] sm:$0xff]
        %v8314 = vld [vmem:[%s75 + $0x8] sm:$0xff]
        %v8315 = vld [vmem:[%s75 + $0x10] sm:$0xff]
        %v8316 = vld [vmem:[%s75 + $0x18] sm:$0xff]
        %v8317 = vld [vmem:[%s77] sm:$0x1]
        %v8319 = vlaneseq
        %v8320 = vshrl.u32 %v8319, 7
        %v8321 = vsub.s32 0, %v8320
        %v8322 = vrot.slane %v8317, %v8321
        %vm8324 = vcmask 261120
        %v8326 = vsel %vm8324, %v8311, 0
        %v8329 = vsel %vm8324, %v8312, 0
        %8331 = vmatprep.subr.mxu0 0.0
        %8332 = vmatpush1.msra.mxu0 %v8313
        %8333 = vmatprep.subr.mxu0 0.0
        %8334 = vmatpush1.msra.mxu0 %v8314
        %8335 = vmatprep.subr.mxu0 0.0
        %8336 = vmatpush1.msra.mxu0 %v8315
        %8337 = vmatprep.subr.mxu0 0.0
        %8338 = vmatpush1.msra.mxu0 %v8316
        %8339 = vmatprep.subr.mxu0 0.0
        %8340 = vmatpush1.msra.mxu0 0.0
        %8341 = vmatprep.subr.mxu0 0.0
        %8342 = vmatpush1.msra.mxu0 0.0
        %8343 = vmatprep.subr.mxu0 0.0
        %8344 = vmatpush1.msra.mxu0 0.0
        %8345 = vmatprep.subr.mxu0 0.0
        %8346 = vmatpush1.msra.mxu0 0.0
        %8347 = vmatprep.subr.mxu0 0.0
        %8348 = vmatpush1.msra.mxu0 0.0
        %8349 = vmatprep.subr.mxu0 0.0
        %8350 = vmatpush1.msra.mxu0 0.0
        %8351 = vmatprep.subr.mxu0 0.0
        %8352 = vmatpush1.msra.mxu0 0.0
        %8353 = vmatprep.subr.mxu0 0.0
        %8354 = vmatpush1.msra.mxu0 0.0
        %8355 = vmatprep.subr.mxu0 0.0
        %8356 = vmatpush1.msra.mxu0 0.0
        %8357 = vmatprep.subr.mxu0 0.0
        %8358 = vmatpush1.msra.mxu0 0.0
        %8359 = vmatprep.subr.mxu0 0.0
        %8360 = vmatpush1.msra.mxu0 0.0
        %8361 = vmatprep.subr.mxu0 0.0
        %8362 = vmatpush1.msra.mxu0 0.0
        %8363 = vmatprep.subr.mxu0 0.0
        %8364 = vmatpush1.msra.mxu0 0.0
        %8365 = vmatprep.subr.mxu0 0.0
        %8366 = vmatpush1.msra.mxu0 0.0
        %8367 = vmatprep.subr.mxu0 0.0
        %8368 = vmatpush1.msra.mxu0 0.0
        %8369 = vmatprep.subr.mxu0 0.0
        %8370 = vmatpush1.msra.mxu0 0.0
        %8371 = vmatprep.subr.mxu0 0.0
        %8372 = vmatpush1.msra.mxu0 0.0
        %8373 = vmatprep.subr.mxu0 0.0
        %8374 = vmatpush1.msra.mxu0 0.0
        %8375 = vmatprep.subr.mxu0 0.0
        %8376 = vmatpush1.msra.mxu0 0.0
        %8377 = vmatprep.subr.mxu0 0.0
        %8378 = vmatpush1.msra.mxu0 0.0
        %8379 = vmatprep.subr.mxu0 0.0
        %8380 = vmatpush1.msra.mxu0 0.0
        %8381 = vmatprep.subr.mxu0 0.0
        %8382 = vmatpush1.msra.mxu0 0.0
        %8383 = vmatprep.subr.mxu0 0.0
        %8384 = vmatpush1.msra.mxu0 0.0
        %8385 = vmatprep.subr.mxu0 0.0
        %8386 = vmatpush1.msra.mxu0 0.0
        %8387 = vmatprep.subr.mxu0 0.0
        %8388 = vmatpush1.msra.mxu0 0.0
        %8389 = vmatprep.subr.mxu0 0.0
        %8390 = vmatpush1.msra.mxu0 0.0
        %8391 = vmatprep.subr.mxu0 0.0
        %8392 = vmatpush1.msra.mxu0 0.0
        %8393 = vmatprep.subr.mxu0 0.0
        %8394 = vmatpush1.msra.mxu0 0.0
        %8395 = vmatprep.mubr.f32.mxu0 0.0
        %8396 = vmatmul.mubr.f32.gmra.mrb[0].mxu0 %v8326
        %v8397 = vpop.f32.mrb[0].mxu0
        %v8398 = vadd.f32 %v8322, %v8397
        %v8399 = vpop.f32.mrb[0].mxu0
        %8400 = vmatprep.mubr.f32.mxu0 0.0
        %8401 = vmatmul.mubr.f32.gmra.mrb[0].mxu0 %v8329
        %v8402 = vpop.f32.mrb[0].mxu0
        %v8403 = vadd.f32 %v8322, %v8402
        %v8404 = vpop.f32.mrb[0].mxu0
        %8405 = vdwg.mxu0
        %8406 = vst [vmem:[%s79] sm:$0xff] %v8398
        %8407 = vst [vmem:[%s79 + $0x8] sm:$0xff] %v8403
      $region196: #{transformer_forward.1} parent=175 // pred_fallthru
        _
      // Predicated region
      $region197: #{transformer_forward.1} parent=175 // pred_check
        %p8408 = pneg %p1250
      $region198: #{transformer_forward.1} parent=175 // pred_check_branch
        %8410 = sbr.rel (%p8408) target = $region200
      $region199: #{transformer_forward.1} parent=175 // pred_region
        _
      $region200: #{transformer_forward.1} parent=175 // pred_fallthru
        _
      // Predicated region
      $region201: #{transformer_forward.1} parent=175 // pred_check
        %p8411 = pneg %p1250
      $region202: #{transformer_forward.1} parent=175 // pred_check_branch
        %8413 = sbr.rel (%p8411) target = $region204
      $region203: #{transformer_forward.1} parent=175 // pred_region
        _
      $region204: #{transformer_forward.1} parent=175 // pred_fallthru
        _
    $region176: #{transformer_forward.1} parent=5 // pred_fallthru
      _
    %p8414 = scmp.le.s32.totalorder 2, %s85
    // Predicated region
    $region205: #{transformer_forward.1} parent=5 // pred_check
      %p8415 = pneg %p8414
    $region206: #{transformer_forward.1} parent=5 // pred_check_branch
      %8417 = sbr.rel (%p8415) target = $region208
    $region207: #{transformer_forward.1} parent=5 // pred_region
      %s8418 = ssub.s32 %s85, 2
    $region208: #{transformer_forward.1} parent=5 // pred_fallthru
      _
  $region6: #{transformer_forward.1} parent=0 // loop_footer
    %s89 = sadd.s32 1, %s85
  $region7: #{transformer_forward.1} parent=0 // loop_footer_branch
    %84 = sbr.rel target = $region3
  $region8: #{transformer_forward.1} parent=0 // loop_exit
    _

</llo_original>
